<compile_context>
chip_gen: v7x
topology: tpu7x:2x2x1
jax: 0.10.0
libtpu: 0.0.40
codegen_flags: <defaults>
</compile_context>

<pallas_src>
import functools

import jax
import jax.numpy as jnp
from jax.experimental import pallas as pl
from jax.experimental.pallas import tpu as pltpu


# ------------------------------ Pallas kernel ---------------------------------
def decoder_seq_kernel(emb_ref, h0_ref,
                       wx0_ref, wh0_ref, b0_ref,
                       wx1_ref, wh1_ref, b1_ref,
                       wout_ref, bout_ref,
                       out_ref, *, T, B, H):
    """Whole teacher-forced decode in one invocation.

    emb_ref : (T, B, E)   time-major embedded+ReLU'd tokens
    h0_ref  : (2, B, H)   encoder hidden state (2 GRU layers)
    wx*_ref : (3, Din, H) per-gate input-path weights  [r, z, n]
    wh*_ref : (3, H, H)   per-gate hidden-path weights [r, z, n]
    b*_ref  : (4, 1, H)   [b_r (ih+hh summed), b_z (summed), b_n_input, b_n_hidden]
    wout_ref: (H, Vp)     output projection (V padded to lane multiple)
    bout_ref: (1, Vp)
    out_ref : (T, B, Vp)
    """
    Vp = out_ref.shape[-1]

    # Hoisted bias broadcasts (JAX does not CSE broadcast_in_dim; do it once).
    b0r = jnp.broadcast_to(b0_ref[0], (B, H))
    b0z = jnp.broadcast_to(b0_ref[1], (B, H))
    b0nx = jnp.broadcast_to(b0_ref[2], (B, H))
    b0nh = jnp.broadcast_to(b0_ref[3], (B, H))
    b1r = jnp.broadcast_to(b1_ref[0], (B, H))
    b1z = jnp.broadcast_to(b1_ref[1], (B, H))
    b1nx = jnp.broadcast_to(b1_ref[2], (B, H))
    b1nh = jnp.broadcast_to(b1_ref[3], (B, H))

    def cell(x, h, wx_ref, wh_ref, br, bz, bnx, bnh):
        # Per-gate dots: all operands / gates at lane offset 0 -> no lane-axis
        # concat and no cross-lane shifts on the latency-critical chain.
        # Weight slabs are read from VMEM inside the step (keeps vreg pressure
        # under the 64-vreg budget; loads co-issue freely, MXU is ~idle here).
        dot = lambda a, w: jnp.dot(a, w, preferred_element_type=jnp.float32)
        r = jax.nn.sigmoid(dot(x, wx_ref[0]) + dot(h, wh_ref[0]) + br)
        z = jax.nn.sigmoid(dot(x, wx_ref[1]) + dot(h, wh_ref[1]) + bz)
        n = jnp.tanh(dot(x, wx_ref[2]) + bnx + r * (dot(h, wh_ref[2]) + bnh))
        return n + z * (h - n)        # == (1-z)*n + z*h  (PyTorch's own form)

    h1 = h0_ref[0]                    # (B, H) layer-0 hidden from the encoder
    h2 = h0_ref[1]                    # (B, H) layer-1 hidden from the encoder

    # Static unroll: the whole recurrence is one straight-line block, so the
    # LLO scheduler can overlap layer-0(t+1)'s dots with layer-1(t)'s
    # activation chain (wavefront for free inside one basic block).
    # NOTE: for large T switch to lax.fori_loop(unroll=k) with a (T,B,H) VMEM
    # scratch slab for the per-step h2 values (caps vreg pressure / compile).
    h2_steps = []
    for t in range(T):
        x = emb_ref[t]                                            # (B, E)
        h1 = cell(x, h1, wx0_ref, wh0_ref, b0r, b0z, b0nx, b0nh)
        # TODO(synk): nn.GRU inter-layer dropout is train-only; eval-mode forward omits it.
        h2 = cell(h1, h2, wx1_ref, wh1_ref, b1r, b1z, b1nx, b1nh)
        h2_steps.append(h2)

    # Deferred output projection: B is a multiple of 8, so the stack/reshape is
    # sublane-aligned and layout-free; ONE full-lane MXU call + ONE bulk store.
    h2_all = jnp.stack(h2_steps).reshape(T * B, H)                # (T*B, H)
    proj = jnp.dot(h2_all, wout_ref[...], preferred_element_type=jnp.float32)
    out_ref[...] = (proj + bout_ref[...]).reshape(T, B, Vp)       # (T, B, Vp)


def run_decoder_steps(emb_seq, h0, packed):
    """emb_seq: (T, B, E) time-major; h0: (2, B, H). Returns logits (T, B, V)."""
    T, B, _ = emb_seq.shape
    H = h0.shape[-1]
    Vp = packed["w_out_p"].shape[-1]
    V = packed["vocab_size"]

    # Fill sublanes: pad batch up to a multiple of 8 (vregs are (8,128)).
    B_pad = max(8, ((B + 7) // 8) * 8)
    if B_pad != B:
        emb_seq = jnp.pad(emb_seq, ((0, 0), (0, B_pad - B), (0, 0)))
        h0 = jnp.pad(h0, ((0, 0), (0, B_pad - B), (0, 0)))

    # TODO(synk): at realistic H/V, grid the output projection in a second
    # pallas_call (row-tile x V-tile) and set vmem_limit_bytes; at these toy
    # sizes (<1 MiB resident) a single all-resident invocation is optimal.
    kernel = functools.partial(decoder_seq_kernel, T=T, B=B_pad, H=H)
    vmem = pl.BlockSpec(memory_space=pltpu.MemorySpace.VMEM)
    logits = pl.pallas_call(
        kernel,
        out_shape=jax.ShapeDtypeStruct((T, B_pad, Vp), jnp.float32),
        in_specs=[vmem] * 10,
        out_specs=vmem,
    )(emb_seq, h0,
      packed["wx0"], packed["wh0"], packed["b0"],
      packed["wx1"], packed["wh1"], packed["b1"],
      packed["w_out_p"], packed["b_out_p"])
    return logits[:, :B, :V]                                      # (T, B, V)


# ------------------------- One-time weight packing -----------------------------
def pack_decoder_params(params, hidden_size, lane=128):
    """Pack PyTorch-style GRU/Linear weights for the kernel. Call ONCE at init."""
    H = hidden_size

    def pack_layer(wih_T, whh_T, bih, bhh):
        # Per-gate slabs [r, z, n] stacked on a leading axis so in-kernel
        # indexing is a free leading-axis select (no lane-offset slices).
        wx = jnp.stack([wih_T[:, 0:H], wih_T[:, H:2 * H], wih_T[:, 2 * H:3 * H]])
        wh = jnp.stack([whh_T[:, 0:H], whh_T[:, H:2 * H], whh_T[:, 2 * H:3 * H]])
        b = jnp.stack([bih[:, 0:H] + bhh[:, 0:H],          # r: ih+hh pre-summed
                       bih[:, H:2 * H] + bhh[:, H:2 * H],  # z: ih+hh pre-summed
                       bih[:, 2 * H:3 * H],                # n input path
                       bhh[:, 2 * H:3 * H]])               # n hidden path
        return wx, wh, b

    wx0, wh0, b0 = pack_layer(params["wih0_T"], params["whh0_T"],
                              params["bih0"], params["bhh0"])
    wx1, wh1, b1 = pack_layer(params["wih1_T"], params["whh1_T"],
                              params["bih1"], params["bhh1"])

    V = params["w_out_T"].shape[-1]
    Vp = ((V + lane - 1) // lane) * lane        # full-lane output projection
    w_out_p = jnp.pad(params["w_out_T"], ((0, 0), (0, Vp - V)))
    b_out_p = jnp.pad(params["b_out"], ((0, 0), (0, Vp - V)))

    return dict(embedding=params["embedding"],
                wx0=wx0, wh0=wh0, b0=b0, wx1=wx1, wh1=wh1, b1=b1,
                w_out_p=w_out_p, b_out_p=b_out_p, vocab_size=V)


# ----------------------------- Full Decoder.forward ---------------------------
def decoder_forward(packed, encoder_outputs, encoder_hidden, target_tensor,
                    max_length, pad_idx, sos_idx, teacher_force=1.0):
    """Mirrors Decoder.forward with target_tensor given and teacher_force=1.0
    (torch.rand(1) < 1.0 is always true -> deterministic teacher forcing)."""
    del teacher_force  # TODO(synk): teacher_force < 1.0 (argmax feedback) unsupported.
    del pad_idx        # padding row of the embedding table is already zero.
    B = encoder_outputs.shape[0]

    # torch.cat((target, ones), dim=-1)
    target_cat = jnp.concatenate(
        [target_tensor, jnp.ones((B, 1), jnp.int32)], axis=-1)
    # Tokens fed at steps i = 1 .. max_length-1: <sos>, then target_cat[:, i-1].
    sos = jnp.full((B, 1), sos_idx, dtype=jnp.int32)
    tokens = jnp.concatenate([sos, target_cat[:, 1:max_length - 1]], axis=1)  # (B, T)

    # Time-major embedding gather + ReLU (no (B,T,E) float transpose).
    emb_seq = jax.nn.relu(packed["embedding"][tokens.T]).astype(jnp.float32)  # (T,B,E)

    logits = run_decoder_steps(emb_seq, encoder_hidden, packed)   # (T, B, V)
    return jnp.transpose(logits, (1, 0, 2))                       # (B, max_length-1, V)


# ----------------------------- Pure-JAX reference -----------------------------
def _gru_cell_ref(x, h, wih_T, whh_T, bih, bhh, H):
    """PyTorch nn.GRU cell semantics (single step, single layer), unfused."""
    gi = jnp.dot(x, wih_T) + bih
    gh = jnp.dot(h, whh_T) + bhh
    r = jax.nn.sigmoid(gi[:, 0:H] + gh[:, 0:H])
    z = jax.nn.sigmoid(gi[:, H:2 * H] + gh[:, H:2 * H])
    n = jnp.tanh(gi[:, 2 * H:3 * H] + r * gh[:, 2 * H:3 * H])
    return n + z * (h - n)


def decoder_forward_ref(params, encoder_outputs, encoder_hidden, target_tensor,
                        max_length, pad_idx, sos_idx):
    B = encoder_outputs.shape[0]
    H = encoder_hidden.shape[-1]
    target_cat = jnp.concatenate(
        [target_tensor, jnp.ones((B, 1), jnp.int32)], axis=-1)
    sos = jnp.full((B, 1), sos_idx, dtype=jnp.int32)
    tokens = jnp.concatenate([sos, target_cat[:, 1:max_length - 1]], axis=1)
    emb = jax.nn.relu(params["embedding"][tokens]).astype(jnp.float32)

    def step(carry, x):
        h1, h2 = carry
        h1n = _gru_cell_ref(x, h1, params["wih0_T"], params["whh0_T"],
                            params["bih0"], params["bhh0"], H)
        h2n = _gru_cell_ref(h1n, h2, params["wih1_T"], params["whh1_T"],
                            params["bih1"], params["bhh1"], H)
        logits = jnp.dot(h2n, params["w_out_T"]) + params["b_out"]
        return (h1n, h2n), logits

    (_, _), outs = jax.lax.scan(
        step, (encoder_hidden[0], encoder_hidden[1]),
        jnp.transpose(emb, (1, 0, 2)))
    return jnp.transpose(outs, (1, 0, 2))


# ----------------------------- Params & demo ----------------------------------
def init_params(key, embed_size, hidden_size, output_size, pad_idx):
    ks = jax.random.split(key, 11)
    s = 1.0 / jnp.sqrt(hidden_size)

    def u(k, shape):
        return jax.random.uniform(k, shape, jnp.float32, -s, s)

    emb = jax.random.normal(ks[0], (output_size, embed_size), jnp.float32)
    emb = emb.at[pad_idx].set(0.0)  # padding_idx row is zero
    H, E = hidden_size, embed_size
    return dict(
        embedding=emb,
        wih0_T=u(ks[1], (E, 3 * H)), whh0_T=u(ks[2], (H, 3 * H)),
        bih0=u(ks[3], (1, 3 * H)), bhh0=u(ks[4], (1, 3 * H)),
        wih1_T=u(ks[5], (H, 3 * H)), whh1_T=u(ks[6], (H, 3 * H)),
        bih1=u(ks[7], (1, 3 * H)), bhh1=u(ks[8], (1, 3 * H)),
        w_out_T=u(ks[9], (H, output_size)), b_out=u(ks[10], (1, output_size)),
    )


if __name__ == "__main__":
    B = 2
    EMBED = 16
    HIDDEN = 32
    OUTPUT_SIZE = 64       # vocabulary size
    MAX_LENGTH = 8
    SRC_LEN = 5
    PAD_IDX = 0            # vocab.word2index['<pad>']
    SOS_IDX = 1            # vocab.word2index['<sos>']

    key = jax.random.PRNGKey(0)
    kp, k1, k2, k3 = jax.random.split(key, 4)

    params = init_params(kp, EMBED, HIDDEN, OUTPUT_SIZE, PAD_IDX)
    packed = pack_decoder_params(params, HIDDEN)   # packed ONCE, reused per call

    encoder_outputs = jax.random.normal(k1, (B, SRC_LEN, HIDDEN), jnp.float32)
    encoder_hidden = jax.random.normal(k2, (2, B, HIDDEN), jnp.float32)  # 2 GRU layers
    target_tensor = jax.random.randint(
        k3, (B, MAX_LENGTH - 1), minval=2, maxval=OUTPUT_SIZE, dtype=jnp.int32)

    out = decoder_forward(packed, encoder_outputs, encoder_hidden,
                          target_tensor, MAX_LENGTH, PAD_IDX, SOS_IDX)
    out = jax.block_until_ready(out)

    ref = decoder_forward_ref(params, encoder_outputs, encoder_hidden,
                              target_tensor, MAX_LENGTH, PAD_IDX, SOS_IDX)
    ref = jax.block_until_ready(ref)

    assert out.shape == (B, MAX_LENGTH - 1, OUTPUT_SIZE), out.shape
    assert jnp.allclose(out, ref, atol=1e-5, rtol=1e-5), \
        float(jnp.max(jnp.abs(out - ref)))

    print("KERNEL_OK")
</pallas_src>

<mosaic_0001>
module attributes {stable_mosaic.version = 11 : i64} {
  func.func @decoder_seq_kernel(%arg0: memref<7x8x16xf32, #tpu.memory_space<vmem>>, %arg1: memref<2x8x32xf32, #tpu.memory_space<vmem>>, %arg2: memref<3x16x32xf32, #tpu.memory_space<vmem>>, %arg3: memref<3x32x32xf32, #tpu.memory_space<vmem>>, %arg4: memref<4x1x32xf32, #tpu.memory_space<vmem>>, %arg5: memref<3x32x32xf32, #tpu.memory_space<vmem>>, %arg6: memref<3x32x32xf32, #tpu.memory_space<vmem>>, %arg7: memref<4x1x32xf32, #tpu.memory_space<vmem>>, %arg8: memref<32x128xf32, #tpu.memory_space<vmem>>, %arg9: memref<1x128xf32, #tpu.memory_space<vmem>>, %arg10: memref<7x8x128xf32, #tpu.memory_space<vmem>>) attributes {dimension_semantics = [], scalar_prefetch = 0 : i64, scratch_operands = 0 : i64, tpu.core_type = #tpu.core_type<tc>} {
    %c0 = arith.constant 0 : index
    %c0_0 = arith.constant 0 : index
    %c0_1 = arith.constant 0 : index
    %0 = vector.load %arg4[%c0, %c0_0, %c0_1] : memref<4x1x32xf32, #tpu.memory_space<vmem>>, vector<1x1x32xf32>
    %1 = vector.shape_cast %0 : vector<1x1x32xf32> to vector<1x32xf32>
    %2 = vector.shape_cast %1 : vector<1x32xf32> to vector<1x32xf32>
    %3 = vector.broadcast %2 : vector<1x32xf32> to vector<8x32xf32>
    %c1 = arith.constant 1 : index
    %c0_2 = arith.constant 0 : index
    %c0_3 = arith.constant 0 : index
    %4 = vector.load %arg4[%c1, %c0_2, %c0_3] : memref<4x1x32xf32, #tpu.memory_space<vmem>>, vector<1x1x32xf32>
    %5 = vector.shape_cast %4 : vector<1x1x32xf32> to vector<1x32xf32>
    %6 = vector.shape_cast %5 : vector<1x32xf32> to vector<1x32xf32>
    %7 = vector.broadcast %6 : vector<1x32xf32> to vector<8x32xf32>
    %c2 = arith.constant 2 : index
    %c0_4 = arith.constant 0 : index
    %c0_5 = arith.constant 0 : index
    %8 = vector.load %arg4[%c2, %c0_4, %c0_5] : memref<4x1x32xf32, #tpu.memory_space<vmem>>, vector<1x1x32xf32>
    %9 = vector.shape_cast %8 : vector<1x1x32xf32> to vector<1x32xf32>
    %10 = vector.shape_cast %9 : vector<1x32xf32> to vector<1x32xf32>
    %11 = vector.broadcast %10 : vector<1x32xf32> to vector<8x32xf32>
    %c3 = arith.constant 3 : index
    %c0_6 = arith.constant 0 : index
    %c0_7 = arith.constant 0 : index
    %12 = vector.load %arg4[%c3, %c0_6, %c0_7] : memref<4x1x32xf32, #tpu.memory_space<vmem>>, vector<1x1x32xf32>
    %13 = vector.shape_cast %12 : vector<1x1x32xf32> to vector<1x32xf32>
    %14 = vector.shape_cast %13 : vector<1x32xf32> to vector<1x32xf32>
    %15 = vector.broadcast %14 : vector<1x32xf32> to vector<8x32xf32>
    %c0_8 = arith.constant 0 : index
    %c0_9 = arith.constant 0 : index
    %c0_10 = arith.constant 0 : index
    %16 = vector.load %arg7[%c0_8, %c0_9, %c0_10] : memref<4x1x32xf32, #tpu.memory_space<vmem>>, vector<1x1x32xf32>
    %17 = vector.shape_cast %16 : vector<1x1x32xf32> to vector<1x32xf32>
    %18 = vector.shape_cast %17 : vector<1x32xf32> to vector<1x32xf32>
    %19 = vector.broadcast %18 : vector<1x32xf32> to vector<8x32xf32>
    %c1_11 = arith.constant 1 : index
    %c0_12 = arith.constant 0 : index
    %c0_13 = arith.constant 0 : index
    %20 = vector.load %arg7[%c1_11, %c0_12, %c0_13] : memref<4x1x32xf32, #tpu.memory_space<vmem>>, vector<1x1x32xf32>
    %21 = vector.shape_cast %20 : vector<1x1x32xf32> to vector<1x32xf32>
    %22 = vector.shape_cast %21 : vector<1x32xf32> to vector<1x32xf32>
    %23 = vector.broadcast %22 : vector<1x32xf32> to vector<8x32xf32>
    %c2_14 = arith.constant 2 : index
    %c0_15 = arith.constant 0 : index
    %c0_16 = arith.constant 0 : index
    %24 = vector.load %arg7[%c2_14, %c0_15, %c0_16] : memref<4x1x32xf32, #tpu.memory_space<vmem>>, vector<1x1x32xf32>
    %25 = vector.shape_cast %24 : vector<1x1x32xf32> to vector<1x32xf32>
    %26 = vector.shape_cast %25 : vector<1x32xf32> to vector<1x32xf32>
    %27 = vector.broadcast %26 : vector<1x32xf32> to vector<8x32xf32>
    %c3_17 = arith.constant 3 : index
    %c0_18 = arith.constant 0 : index
    %c0_19 = arith.constant 0 : index
    %28 = vector.load %arg7[%c3_17, %c0_18, %c0_19] : memref<4x1x32xf32, #tpu.memory_space<vmem>>, vector<1x1x32xf32>
    %29 = vector.shape_cast %28 : vector<1x1x32xf32> to vector<1x32xf32>
    %30 = vector.shape_cast %29 : vector<1x32xf32> to vector<1x32xf32>
    %31 = vector.broadcast %30 : vector<1x32xf32> to vector<8x32xf32>
    %c0_20 = arith.constant 0 : index
    %c0_21 = arith.constant 0 : index
    %c0_22 = arith.constant 0 : index
    %32 = vector.load %arg1[%c0_20, %c0_21, %c0_22] : memref<2x8x32xf32, #tpu.memory_space<vmem>>, vector<1x8x32xf32>
    %33 = vector.shape_cast %32 : vector<1x8x32xf32> to vector<8x32xf32>
    %c1_23 = arith.constant 1 : index
    %c0_24 = arith.constant 0 : index
    %c0_25 = arith.constant 0 : index
    %34 = vector.load %arg1[%c1_23, %c0_24, %c0_25] : memref<2x8x32xf32, #tpu.memory_space<vmem>>, vector<1x8x32xf32>
    %35 = vector.shape_cast %34 : vector<1x8x32xf32> to vector<8x32xf32>
    %c0_26 = arith.constant 0 : index
    %c0_27 = arith.constant 0 : index
    %c0_28 = arith.constant 0 : index
    %36 = vector.load %arg0[%c0_26, %c0_27, %c0_28] : memref<7x8x16xf32, #tpu.memory_space<vmem>>, vector<1x8x16xf32>
    %37 = vector.shape_cast %36 : vector<1x8x16xf32> to vector<8x16xf32>
    %c0_29 = arith.constant 0 : index
    %c0_30 = arith.constant 0 : index
    %c0_31 = arith.constant 0 : index
    %38 = vector.load %arg2[%c0_29, %c0_30, %c0_31] : memref<3x16x32xf32, #tpu.memory_space<vmem>>, vector<1x16x32xf32>
    %39 = vector.shape_cast %38 : vector<1x16x32xf32> to vector<16x32xf32>
    %cst = arith.constant dense<0.000000e+00> : vector<8x32xf32>
    %40 = tpu.matmul %37, %39, %cst {dimension_numbers = #tpu.dot_dimension_numbers<[1], [0], [0], [1], [0, 0, 1, 1], [], []>} : vector<8x16xf32>, vector<16x32xf32>, vector<8x32xf32> -> vector<8x32xf32>
    %c0_32 = arith.constant 0 : index
    %c0_33 = arith.constant 0 : index
    %c0_34 = arith.constant 0 : index
    %41 = vector.load %arg3[%c0_32, %c0_33, %c0_34] : memref<3x32x32xf32, #tpu.memory_space<vmem>>, vector<1x32x32xf32>
    %42 = vector.shape_cast %41 : vector<1x32x32xf32> to vector<32x32xf32>
    %cst_35 = arith.constant dense<0.000000e+00> : vector<8x32xf32>
    %43 = tpu.matmul %33, %42, %cst_35 {dimension_numbers = #tpu.dot_dimension_numbers<[1], [0], [0], [1], [0, 0, 1, 1], [], []>} : vector<8x32xf32>, vector<32x32xf32>, vector<8x32xf32> -> vector<8x32xf32>
    %44 = arith.addf %40, %43 : vector<8x32xf32>
    %45 = arith.addf %44, %3 : vector<8x32xf32>
    %46 = arith.negf %45 : vector<8x32xf32>
    %47 = math.exp %46 : vector<8x32xf32>
    %cst_36 = arith.constant 1.000000e+00 : f32
    %48 = vector.broadcast %cst_36 : f32 to vector<8x32xf32>
    %49 = arith.addf %48, %47 : vector<8x32xf32>
    %50 = arith.divf %48, %49 : vector<8x32xf32>
    %c1_37 = arith.constant 1 : index
    %c0_38 = arith.constant 0 : index
    %c0_39 = arith.constant 0 : index
    %51 = vector.load %arg2[%c1_37, %c0_38, %c0_39] : memref<3x16x32xf32, #tpu.memory_space<vmem>>, vector<1x16x32xf32>
    %52 = vector.shape_cast %51 : vector<1x16x32xf32> to vector<16x32xf32>
    %cst_40 = arith.constant dense<0.000000e+00> : vector<8x32xf32>
    %53 = tpu.matmul %37, %52, %cst_40 {dimension_numbers = #tpu.dot_dimension_numbers<[1], [0], [0], [1], [0, 0, 1, 1], [], []>} : vector<8x16xf32>, vector<16x32xf32>, vector<8x32xf32> -> vector<8x32xf32>
    %c1_41 = arith.constant 1 : index
    %c0_42 = arith.constant 0 : index
    %c0_43 = arith.constant 0 : index
    %54 = vector.load %arg3[%c1_41, %c0_42, %c0_43] : memref<3x32x32xf32, #tpu.memory_space<vmem>>, vector<1x32x32xf32>
    %55 = vector.shape_cast %54 : vector<1x32x32xf32> to vector<32x32xf32>
    %cst_44 = arith.constant dense<0.000000e+00> : vector<8x32xf32>
    %56 = tpu.matmul %33, %55, %cst_44 {dimension_numbers = #tpu.dot_dimension_numbers<[1], [0], [0], [1], [0, 0, 1, 1], [], []>} : vector<8x32xf32>, vector<32x32xf32>, vector<8x32xf32> -> vector<8x32xf32>
    %57 = arith.addf %53, %56 : vector<8x32xf32>
    %58 = arith.addf %57, %7 : vector<8x32xf32>
    %59 = arith.negf %58 : vector<8x32xf32>
    %60 = math.exp %59 : vector<8x32xf32>
    %cst_45 = arith.constant 1.000000e+00 : f32
    %61 = vector.broadcast %cst_45 : f32 to vector<8x32xf32>
    %62 = arith.addf %61, %60 : vector<8x32xf32>
    %63 = arith.divf %61, %62 : vector<8x32xf32>
    %c2_46 = arith.constant 2 : index
    %c0_47 = arith.constant 0 : index
    %c0_48 = arith.constant 0 : index
    %64 = vector.load %arg2[%c2_46, %c0_47, %c0_48] : memref<3x16x32xf32, #tpu.memory_space<vmem>>, vector<1x16x32xf32>
    %65 = vector.shape_cast %64 : vector<1x16x32xf32> to vector<16x32xf32>
    %cst_49 = arith.constant dense<0.000000e+00> : vector<8x32xf32>
    %66 = tpu.matmul %37, %65, %cst_49 {dimension_numbers = #tpu.dot_dimension_numbers<[1], [0], [0], [1], [0, 0, 1, 1], [], []>} : vector<8x16xf32>, vector<16x32xf32>, vector<8x32xf32> -> vector<8x32xf32>
    %67 = arith.addf %66, %11 : vector<8x32xf32>
    %c2_50 = arith.constant 2 : index
    %c0_51 = arith.constant 0 : index
    %c0_52 = arith.constant 0 : index
    %68 = vector.load %arg3[%c2_50, %c0_51, %c0_52] : memref<3x32x32xf32, #tpu.memory_space<vmem>>, vector<1x32x32xf32>
    %69 = vector.shape_cast %68 : vector<1x32x32xf32> to vector<32x32xf32>
    %cst_53 = arith.constant dense<0.000000e+00> : vector<8x32xf32>
    %70 = tpu.matmul %33, %69, %cst_53 {dimension_numbers = #tpu.dot_dimension_numbers<[1], [0], [0], [1], [0, 0, 1, 1], [], []>} : vector<8x32xf32>, vector<32x32xf32>, vector<8x32xf32> -> vector<8x32xf32>
    %71 = arith.addf %70, %15 : vector<8x32xf32>
    %72 = arith.mulf %50, %71 : vector<8x32xf32>
    %73 = arith.addf %67, %72 : vector<8x32xf32>
    %74 = math.tanh %73 : vector<8x32xf32>
    %75 = arith.subf %33, %74 : vector<8x32xf32>
    %76 = arith.mulf %63, %75 : vector<8x32xf32>
    %77 = arith.addf %74, %76 : vector<8x32xf32>
    %c0_54 = arith.constant 0 : index
    %c0_55 = arith.constant 0 : index
    %c0_56 = arith.constant 0 : index
    %78 = vector.load %arg5[%c0_54, %c0_55, %c0_56] : memref<3x32x32xf32, #tpu.memory_space<vmem>>, vector<1x32x32xf32>
    %79 = vector.shape_cast %78 : vector<1x32x32xf32> to vector<32x32xf32>
    %cst_57 = arith.constant dense<0.000000e+00> : vector<8x32xf32>
    %80 = tpu.matmul %77, %79, %cst_57 {dimension_numbers = #tpu.dot_dimension_numbers<[1], [0], [0], [1], [0, 0, 1, 1], [], []>} : vector<8x32xf32>, vector<32x32xf32>, vector<8x32xf32> -> vector<8x32xf32>
    %c0_58 = arith.constant 0 : index
    %c0_59 = arith.constant 0 : index
    %c0_60 = arith.constant 0 : index
    %81 = vector.load %arg6[%c0_58, %c0_59, %c0_60] : memref<3x32x32xf32, #tpu.memory_space<vmem>>, vector<1x32x32xf32>
    %82 = vector.shape_cast %81 : vector<1x32x32xf32> to vector<32x32xf32>
    %cst_61 = arith.constant dense<0.000000e+00> : vector<8x32xf32>
    %83 = tpu.matmul %35, %82, %cst_61 {dimension_numbers = #tpu.dot_dimension_numbers<[1], [0], [0], [1], [0, 0, 1, 1], [], []>} : vector<8x32xf32>, vector<32x32xf32>, vector<8x32xf32> -> vector<8x32xf32>
    %84 = arith.addf %80, %83 : vector<8x32xf32>
    %85 = arith.addf %84, %19 : vector<8x32xf32>
    %86 = arith.negf %85 : vector<8x32xf32>
    %87 = math.exp %86 : vector<8x32xf32>
    %cst_62 = arith.constant 1.000000e+00 : f32
    %88 = vector.broadcast %cst_62 : f32 to vector<8x32xf32>
    %89 = arith.addf %88, %87 : vector<8x32xf32>
    %90 = arith.divf %88, %89 : vector<8x32xf32>
    %c1_63 = arith.constant 1 : index
    %c0_64 = arith.constant 0 : index
    %c0_65 = arith.constant 0 : index
    %91 = vector.load %arg5[%c1_63, %c0_64, %c0_65] : memref<3x32x32xf32, #tpu.memory_space<vmem>>, vector<1x32x32xf32>
    %92 = vector.shape_cast %91 : vector<1x32x32xf32> to vector<32x32xf32>
    %cst_66 = arith.constant dense<0.000000e+00> : vector<8x32xf32>
    %93 = tpu.matmul %77, %92, %cst_66 {dimension_numbers = #tpu.dot_dimension_numbers<[1], [0], [0], [1], [0, 0, 1, 1], [], []>} : vector<8x32xf32>, vector<32x32xf32>, vector<8x32xf32> -> vector<8x32xf32>
    %c1_67 = arith.constant 1 : index
    %c0_68 = arith.constant 0 : index
    %c0_69 = arith.constant 0 : index
    %94 = vector.load %arg6[%c1_67, %c0_68, %c0_69] : memref<3x32x32xf32, #tpu.memory_space<vmem>>, vector<1x32x32xf32>
    %95 = vector.shape_cast %94 : vector<1x32x32xf32> to vector<32x32xf32>
    %cst_70 = arith.constant dense<0.000000e+00> : vector<8x32xf32>
    %96 = tpu.matmul %35, %95, %cst_70 {dimension_numbers = #tpu.dot_dimension_numbers<[1], [0], [0], [1], [0, 0, 1, 1], [], []>} : vector<8x32xf32>, vector<32x32xf32>, vector<8x32xf32> -> vector<8x32xf32>
    %97 = arith.addf %93, %96 : vector<8x32xf32>
    %98 = arith.addf %97, %23 : vector<8x32xf32>
    %99 = arith.negf %98 : vector<8x32xf32>
    %100 = math.exp %99 : vector<8x32xf32>
    %cst_71 = arith.constant 1.000000e+00 : f32
    %101 = vector.broadcast %cst_71 : f32 to vector<8x32xf32>
    %102 = arith.addf %101, %100 : vector<8x32xf32>
    %103 = arith.divf %101, %102 : vector<8x32xf32>
    %c2_72 = arith.constant 2 : index
    %c0_73 = arith.constant 0 : index
    %c0_74 = arith.constant 0 : index
    %104 = vector.load %arg5[%c2_72, %c0_73, %c0_74] : memref<3x32x32xf32, #tpu.memory_space<vmem>>, vector<1x32x32xf32>
    %105 = vector.shape_cast %104 : vector<1x32x32xf32> to vector<32x32xf32>
    %cst_75 = arith.constant dense<0.000000e+00> : vector<8x32xf32>
    %106 = tpu.matmul %77, %105, %cst_75 {dimension_numbers = #tpu.dot_dimension_numbers<[1], [0], [0], [1], [0, 0, 1, 1], [], []>} : vector<8x32xf32>, vector<32x32xf32>, vector<8x32xf32> -> vector<8x32xf32>
    %107 = arith.addf %106, %27 : vector<8x32xf32>
    %c2_76 = arith.constant 2 : index
    %c0_77 = arith.constant 0 : index
    %c0_78 = arith.constant 0 : index
    %108 = vector.load %arg6[%c2_76, %c0_77, %c0_78] : memref<3x32x32xf32, #tpu.memory_space<vmem>>, vector<1x32x32xf32>
    %109 = vector.shape_cast %108 : vector<1x32x32xf32> to vector<32x32xf32>
    %cst_79 = arith.constant dense<0.000000e+00> : vector<8x32xf32>
    %110 = tpu.matmul %35, %109, %cst_79 {dimension_numbers = #tpu.dot_dimension_numbers<[1], [0], [0], [1], [0, 0, 1, 1], [], []>} : vector<8x32xf32>, vector<32x32xf32>, vector<8x32xf32> -> vector<8x32xf32>
    %111 = arith.addf %110, %31 : vector<8x32xf32>
    %112 = arith.mulf %90, %111 : vector<8x32xf32>
    %113 = arith.addf %107, %112 : vector<8x32xf32>
    %114 = math.tanh %113 : vector<8x32xf32>
    %115 = arith.subf %35, %114 : vector<8x32xf32>
    %116 = arith.mulf %103, %115 : vector<8x32xf32>
    %117 = arith.addf %114, %116 : vector<8x32xf32>
    %c1_80 = arith.constant 1 : index
    %c0_81 = arith.constant 0 : index
    %c0_82 = arith.constant 0 : index
    %118 = vector.load %arg0[%c1_80, %c0_81, %c0_82] : memref<7x8x16xf32, #tpu.memory_space<vmem>>, vector<1x8x16xf32>
    %119 = vector.shape_cast %118 : vector<1x8x16xf32> to vector<8x16xf32>
    %c0_83 = arith.constant 0 : index
    %c0_84 = arith.constant 0 : index
    %c0_85 = arith.constant 0 : index
    %120 = vector.load %arg2[%c0_83, %c0_84, %c0_85] : memref<3x16x32xf32, #tpu.memory_space<vmem>>, vector<1x16x32xf32>
    %121 = vector.shape_cast %120 : vector<1x16x32xf32> to vector<16x32xf32>
    %cst_86 = arith.constant dense<0.000000e+00> : vector<8x32xf32>
    %122 = tpu.matmul %119, %121, %cst_86 {dimension_numbers = #tpu.dot_dimension_numbers<[1], [0], [0], [1], [0, 0, 1, 1], [], []>} : vector<8x16xf32>, vector<16x32xf32>, vector<8x32xf32> -> vector<8x32xf32>
    %c0_87 = arith.constant 0 : index
    %c0_88 = arith.constant 0 : index
    %c0_89 = arith.constant 0 : index
    %123 = vector.load %arg3[%c0_87, %c0_88, %c0_89] : memref<3x32x32xf32, #tpu.memory_space<vmem>>, vector<1x32x32xf32>
    %124 = vector.shape_cast %123 : vector<1x32x32xf32> to vector<32x32xf32>
    %cst_90 = arith.constant dense<0.000000e+00> : vector<8x32xf32>
    %125 = tpu.matmul %77, %124, %cst_90 {dimension_numbers = #tpu.dot_dimension_numbers<[1], [0], [0], [1], [0, 0, 1, 1], [], []>} : vector<8x32xf32>, vector<32x32xf32>, vector<8x32xf32> -> vector<8x32xf32>
    %126 = arith.addf %122, %125 : vector<8x32xf32>
    %127 = arith.addf %126, %3 : vector<8x32xf32>
    %128 = arith.negf %127 : vector<8x32xf32>
    %129 = math.exp %128 : vector<8x32xf32>
    %cst_91 = arith.constant 1.000000e+00 : f32
    %130 = vector.broadcast %cst_91 : f32 to vector<8x32xf32>
    %131 = arith.addf %130, %129 : vector<8x32xf32>
    %132 = arith.divf %130, %131 : vector<8x32xf32>
    %c1_92 = arith.constant 1 : index
    %c0_93 = arith.constant 0 : index
    %c0_94 = arith.constant 0 : index
    %133 = vector.load %arg2[%c1_92, %c0_93, %c0_94] : memref<3x16x32xf32, #tpu.memory_space<vmem>>, vector<1x16x32xf32>
    %134 = vector.shape_cast %133 : vector<1x16x32xf32> to vector<16x32xf32>
    %cst_95 = arith.constant dense<0.000000e+00> : vector<8x32xf32>
    %135 = tpu.matmul %119, %134, %cst_95 {dimension_numbers = #tpu.dot_dimension_numbers<[1], [0], [0], [1], [0, 0, 1, 1], [], []>} : vector<8x16xf32>, vector<16x32xf32>, vector<8x32xf32> -> vector<8x32xf32>
    %c1_96 = arith.constant 1 : index
    %c0_97 = arith.constant 0 : index
    %c0_98 = arith.constant 0 : index
    %136 = vector.load %arg3[%c1_96, %c0_97, %c0_98] : memref<3x32x32xf32, #tpu.memory_space<vmem>>, vector<1x32x32xf32>
    %137 = vector.shape_cast %136 : vector<1x32x32xf32> to vector<32x32xf32>
    %cst_99 = arith.constant dense<0.000000e+00> : vector<8x32xf32>
    %138 = tpu.matmul %77, %137, %cst_99 {dimension_numbers = #tpu.dot_dimension_numbers<[1], [0], [0], [1], [0, 0, 1, 1], [], []>} : vector<8x32xf32>, vector<32x32xf32>, vector<8x32xf32> -> vector<8x32xf32>
    %139 = arith.addf %135, %138 : vector<8x32xf32>
    %140 = arith.addf %139, %7 : vector<8x32xf32>
    %141 = arith.negf %140 : vector<8x32xf32>
    %142 = math.exp %141 : vector<8x32xf32>
    %cst_100 = arith.constant 1.000000e+00 : f32
    %143 = vector.broadcast %cst_100 : f32 to vector<8x32xf32>
    %144 = arith.addf %143, %142 : vector<8x32xf32>
    %145 = arith.divf %143, %144 : vector<8x32xf32>
    %c2_101 = arith.constant 2 : index
    %c0_102 = arith.constant 0 : index
    %c0_103 = arith.constant 0 : index
    %146 = vector.load %arg2[%c2_101, %c0_102, %c0_103] : memref<3x16x32xf32, #tpu.memory_space<vmem>>, vector<1x16x32xf32>
    %147 = vector.shape_cast %146 : vector<1x16x32xf32> to vector<16x32xf32>
    %cst_104 = arith.constant dense<0.000000e+00> : vector<8x32xf32>
    %148 = tpu.matmul %119, %147, %cst_104 {dimension_numbers = #tpu.dot_dimension_numbers<[1], [0], [0], [1], [0, 0, 1, 1], [], []>} : vector<8x16xf32>, vector<16x32xf32>, vector<8x32xf32> -> vector<8x32xf32>
    %149 = arith.addf %148, %11 : vector<8x32xf32>
    %c2_105 = arith.constant 2 : index
    %c0_106 = arith.constant 0 : index
    %c0_107 = arith.constant 0 : index
    %150 = vector.load %arg3[%c2_105, %c0_106, %c0_107] : memref<3x32x32xf32, #tpu.memory_space<vmem>>, vector<1x32x32xf32>
    %151 = vector.shape_cast %150 : vector<1x32x32xf32> to vector<32x32xf32>
    %cst_108 = arith.constant dense<0.000000e+00> : vector<8x32xf32>
    %152 = tpu.matmul %77, %151, %cst_108 {dimension_numbers = #tpu.dot_dimension_numbers<[1], [0], [0], [1], [0, 0, 1, 1], [], []>} : vector<8x32xf32>, vector<32x32xf32>, vector<8x32xf32> -> vector<8x32xf32>
    %153 = arith.addf %152, %15 : vector<8x32xf32>
    %154 = arith.mulf %132, %153 : vector<8x32xf32>
    %155 = arith.addf %149, %154 : vector<8x32xf32>
    %156 = math.tanh %155 : vector<8x32xf32>
    %157 = arith.subf %77, %156 : vector<8x32xf32>
    %158 = arith.mulf %145, %157 : vector<8x32xf32>
    %159 = arith.addf %156, %158 : vector<8x32xf32>
    %c0_109 = arith.constant 0 : index
    %c0_110 = arith.constant 0 : index
    %c0_111 = arith.constant 0 : index
    %160 = vector.load %arg5[%c0_109, %c0_110, %c0_111] : memref<3x32x32xf32, #tpu.memory_space<vmem>>, vector<1x32x32xf32>
    %161 = vector.shape_cast %160 : vector<1x32x32xf32> to vector<32x32xf32>
    %cst_112 = arith.constant dense<0.000000e+00> : vector<8x32xf32>
    %162 = tpu.matmul %159, %161, %cst_112 {dimension_numbers = #tpu.dot_dimension_numbers<[1], [0], [0], [1], [0, 0, 1, 1], [], []>} : vector<8x32xf32>, vector<32x32xf32>, vector<8x32xf32> -> vector<8x32xf32>
    %c0_113 = arith.constant 0 : index
    %c0_114 = arith.constant 0 : index
    %c0_115 = arith.constant 0 : index
    %163 = vector.load %arg6[%c0_113, %c0_114, %c0_115] : memref<3x32x32xf32, #tpu.memory_space<vmem>>, vector<1x32x32xf32>
    %164 = vector.shape_cast %163 : vector<1x32x32xf32> to vector<32x32xf32>
    %cst_116 = arith.constant dense<0.000000e+00> : vector<8x32xf32>
    %165 = tpu.matmul %117, %164, %cst_116 {dimension_numbers = #tpu.dot_dimension_numbers<[1], [0], [0], [1], [0, 0, 1, 1], [], []>} : vector<8x32xf32>, vector<32x32xf32>, vector<8x32xf32> -> vector<8x32xf32>
    %166 = arith.addf %162, %165 : vector<8x32xf32>
    %167 = arith.addf %166, %19 : vector<8x32xf32>
    %168 = arith.negf %167 : vector<8x32xf32>
    %169 = math.exp %168 : vector<8x32xf32>
    %cst_117 = arith.constant 1.000000e+00 : f32
    %170 = vector.broadcast %cst_117 : f32 to vector<8x32xf32>
    %171 = arith.addf %170, %169 : vector<8x32xf32>
    %172 = arith.divf %170, %171 : vector<8x32xf32>
    %c1_118 = arith.constant 1 : index
    %c0_119 = arith.constant 0 : index
    %c0_120 = arith.constant 0 : index
    %173 = vector.load %arg5[%c1_118, %c0_119, %c0_120] : memref<3x32x32xf32, #tpu.memory_space<vmem>>, vector<1x32x32xf32>
    %174 = vector.shape_cast %173 : vector<1x32x32xf32> to vector<32x32xf32>
    %cst_121 = arith.constant dense<0.000000e+00> : vector<8x32xf32>
    %175 = tpu.matmul %159, %174, %cst_121 {dimension_numbers = #tpu.dot_dimension_numbers<[1], [0], [0], [1], [0, 0, 1, 1], [], []>} : vector<8x32xf32>, vector<32x32xf32>, vector<8x32xf32> -> vector<8x32xf32>
    %c1_122 = arith.constant 1 : index
    %c0_123 = arith.constant 0 : index
    %c0_124 = arith.constant 0 : index
    %176 = vector.load %arg6[%c1_122, %c0_123, %c0_124] : memref<3x32x32xf32, #tpu.memory_space<vmem>>, vector<1x32x32xf32>
    %177 = vector.shape_cast %176 : vector<1x32x32xf32> to vector<32x32xf32>
    %cst_125 = arith.constant dense<0.000000e+00> : vector<8x32xf32>
    %178 = tpu.matmul %117, %177, %cst_125 {dimension_numbers = #tpu.dot_dimension_numbers<[1], [0], [0], [1], [0, 0, 1, 1], [], []>} : vector<8x32xf32>, vector<32x32xf32>, vector<8x32xf32> -> vector<8x32xf32>
    %179 = arith.addf %175, %178 : vector<8x32xf32>
    %180 = arith.addf %179, %23 : vector<8x32xf32>
    %181 = arith.negf %180 : vector<8x32xf32>
    %182 = math.exp %181 : vector<8x32xf32>
    %cst_126 = arith.constant 1.000000e+00 : f32
    %183 = vector.broadcast %cst_126 : f32 to vector<8x32xf32>
    %184 = arith.addf %183, %182 : vector<8x32xf32>
    %185 = arith.divf %183, %184 : vector<8x32xf32>
    %c2_127 = arith.constant 2 : index
    %c0_128 = arith.constant 0 : index
    %c0_129 = arith.constant 0 : index
    %186 = vector.load %arg5[%c2_127, %c0_128, %c0_129] : memref<3x32x32xf32, #tpu.memory_space<vmem>>, vector<1x32x32xf32>
    %187 = vector.shape_cast %186 : vector<1x32x32xf32> to vector<32x32xf32>
    %cst_130 = arith.constant dense<0.000000e+00> : vector<8x32xf32>
    %188 = tpu.matmul %159, %187, %cst_130 {dimension_numbers = #tpu.dot_dimension_numbers<[1], [0], [0], [1], [0, 0, 1, 1], [], []>} : vector<8x32xf32>, vector<32x32xf32>, vector<8x32xf32> -> vector<8x32xf32>
    %189 = arith.addf %188, %27 : vector<8x32xf32>
    %c2_131 = arith.constant 2 : index
    %c0_132 = arith.constant 0 : index
    %c0_133 = arith.constant 0 : index
    %190 = vector.load %arg6[%c2_131, %c0_132, %c0_133] : memref<3x32x32xf32, #tpu.memory_space<vmem>>, vector<1x32x32xf32>
    %191 = vector.shape_cast %190 : vector<1x32x32xf32> to vector<32x32xf32>
    %cst_134 = arith.constant dense<0.000000e+00> : vector<8x32xf32>
    %192 = tpu.matmul %117, %191, %cst_134 {dimension_numbers = #tpu.dot_dimension_numbers<[1], [0], [0], [1], [0, 0, 1, 1], [], []>} : vector<8x32xf32>, vector<32x32xf32>, vector<8x32xf32> -> vector<8x32xf32>
    %193 = arith.addf %192, %31 : vector<8x32xf32>
    %194 = arith.mulf %172, %193 : vector<8x32xf32>
    %195 = arith.addf %189, %194 : vector<8x32xf32>
    %196 = math.tanh %195 : vector<8x32xf32>
    %197 = arith.subf %117, %196 : vector<8x32xf32>
    %198 = arith.mulf %185, %197 : vector<8x32xf32>
    %199 = arith.addf %196, %198 : vector<8x32xf32>
    %c2_135 = arith.constant 2 : index
    %c0_136 = arith.constant 0 : index
    %c0_137 = arith.constant 0 : index
    %200 = vector.load %arg0[%c2_135, %c0_136, %c0_137] : memref<7x8x16xf32, #tpu.memory_space<vmem>>, vector<1x8x16xf32>
    %201 = vector.shape_cast %200 : vector<1x8x16xf32> to vector<8x16xf32>
    %c0_138 = arith.constant 0 : index
    %c0_139 = arith.constant 0 : index
    %c0_140 = arith.constant 0 : index
    %202 = vector.load %arg2[%c0_138, %c0_139, %c0_140] : memref<3x16x32xf32, #tpu.memory_space<vmem>>, vector<1x16x32xf32>
    %203 = vector.shape_cast %202 : vector<1x16x32xf32> to vector<16x32xf32>
    %cst_141 = arith.constant dense<0.000000e+00> : vector<8x32xf32>
    %204 = tpu.matmul %201, %203, %cst_141 {dimension_numbers = #tpu.dot_dimension_numbers<[1], [0], [0], [1], [0, 0, 1, 1], [], []>} : vector<8x16xf32>, vector<16x32xf32>, vector<8x32xf32> -> vector<8x32xf32>
    %c0_142 = arith.constant 0 : index
    %c0_143 = arith.constant 0 : index
    %c0_144 = arith.constant 0 : index
    %205 = vector.load %arg3[%c0_142, %c0_143, %c0_144] : memref<3x32x32xf32, #tpu.memory_space<vmem>>, vector<1x32x32xf32>
    %206 = vector.shape_cast %205 : vector<1x32x32xf32> to vector<32x32xf32>
    %cst_145 = arith.constant dense<0.000000e+00> : vector<8x32xf32>
    %207 = tpu.matmul %159, %206, %cst_145 {dimension_numbers = #tpu.dot_dimension_numbers<[1], [0], [0], [1], [0, 0, 1, 1], [], []>} : vector<8x32xf32>, vector<32x32xf32>, vector<8x32xf32> -> vector<8x32xf32>
    %208 = arith.addf %204, %207 : vector<8x32xf32>
    %209 = arith.addf %208, %3 : vector<8x32xf32>
    %210 = arith.negf %209 : vector<8x32xf32>
    %211 = math.exp %210 : vector<8x32xf32>
    %cst_146 = arith.constant 1.000000e+00 : f32
    %212 = vector.broadcast %cst_146 : f32 to vector<8x32xf32>
    %213 = arith.addf %212, %211 : vector<8x32xf32>
    %214 = arith.divf %212, %213 : vector<8x32xf32>
    %c1_147 = arith.constant 1 : index
    %c0_148 = arith.constant 0 : index
    %c0_149 = arith.constant 0 : index
    %215 = vector.load %arg2[%c1_147, %c0_148, %c0_149] : memref<3x16x32xf32, #tpu.memory_space<vmem>>, vector<1x16x32xf32>
    %216 = vector.shape_cast %215 : vector<1x16x32xf32> to vector<16x32xf32>
    %cst_150 = arith.constant dense<0.000000e+00> : vector<8x32xf32>
    %217 = tpu.matmul %201, %216, %cst_150 {dimension_numbers = #tpu.dot_dimension_numbers<[1], [0], [0], [1], [0, 0, 1, 1], [], []>} : vector<8x16xf32>, vector<16x32xf32>, vector<8x32xf32> -> vector<8x32xf32>
    %c1_151 = arith.constant 1 : index
    %c0_152 = arith.constant 0 : index
    %c0_153 = arith.constant 0 : index
    %218 = vector.load %arg3[%c1_151, %c0_152, %c0_153] : memref<3x32x32xf32, #tpu.memory_space<vmem>>, vector<1x32x32xf32>
    %219 = vector.shape_cast %218 : vector<1x32x32xf32> to vector<32x32xf32>
    %cst_154 = arith.constant dense<0.000000e+00> : vector<8x32xf32>
    %220 = tpu.matmul %159, %219, %cst_154 {dimension_numbers = #tpu.dot_dimension_numbers<[1], [0], [0], [1], [0, 0, 1, 1], [], []>} : vector<8x32xf32>, vector<32x32xf32>, vector<8x32xf32> -> vector<8x32xf32>
    %221 = arith.addf %217, %220 : vector<8x32xf32>
    %222 = arith.addf %221, %7 : vector<8x32xf32>
    %223 = arith.negf %222 : vector<8x32xf32>
    %224 = math.exp %223 : vector<8x32xf32>
    %cst_155 = arith.constant 1.000000e+00 : f32
    %225 = vector.broadcast %cst_155 : f32 to vector<8x32xf32>
    %226 = arith.addf %225, %224 : vector<8x32xf32>
    %227 = arith.divf %225, %226 : vector<8x32xf32>
    %c2_156 = arith.constant 2 : index
    %c0_157 = arith.constant 0 : index
    %c0_158 = arith.constant 0 : index
    %228 = vector.load %arg2[%c2_156, %c0_157, %c0_158] : memref<3x16x32xf32, #tpu.memory_space<vmem>>, vector<1x16x32xf32>
    %229 = vector.shape_cast %228 : vector<1x16x32xf32> to vector<16x32xf32>
    %cst_159 = arith.constant dense<0.000000e+00> : vector<8x32xf32>
    %230 = tpu.matmul %201, %229, %cst_159 {dimension_numbers = #tpu.dot_dimension_numbers<[1], [0], [0], [1], [0, 0, 1, 1], [], []>} : vector<8x16xf32>, vector<16x32xf32>, vector<8x32xf32> -> vector<8x32xf32>
    %231 = arith.addf %230, %11 : vector<8x32xf32>
    %c2_160 = arith.constant 2 : index
    %c0_161 = arith.constant 0 : index
    %c0_162 = arith.constant 0 : index
    %232 = vector.load %arg3[%c2_160, %c0_161, %c0_162] : memref<3x32x32xf32, #tpu.memory_space<vmem>>, vector<1x32x32xf32>
    %233 = vector.shape_cast %232 : vector<1x32x32xf32> to vector<32x32xf32>
    %cst_163 = arith.constant dense<0.000000e+00> : vector<8x32xf32>
    %234 = tpu.matmul %159, %233, %cst_163 {dimension_numbers = #tpu.dot_dimension_numbers<[1], [0], [0], [1], [0, 0, 1, 1], [], []>} : vector<8x32xf32>, vector<32x32xf32>, vector<8x32xf32> -> vector<8x32xf32>
    %235 = arith.addf %234, %15 : vector<8x32xf32>
    %236 = arith.mulf %214, %235 : vector<8x32xf32>
    %237 = arith.addf %231, %236 : vector<8x32xf32>
    %238 = math.tanh %237 : vector<8x32xf32>
    %239 = arith.subf %159, %238 : vector<8x32xf32>
    %240 = arith.mulf %227, %239 : vector<8x32xf32>
    %241 = arith.addf %238, %240 : vector<8x32xf32>
    %c0_164 = arith.constant 0 : index
    %c0_165 = arith.constant 0 : index
    %c0_166 = arith.constant 0 : index
    %242 = vector.load %arg5[%c0_164, %c0_165, %c0_166] : memref<3x32x32xf32, #tpu.memory_space<vmem>>, vector<1x32x32xf32>
    %243 = vector.shape_cast %242 : vector<1x32x32xf32> to vector<32x32xf32>
    %cst_167 = arith.constant dense<0.000000e+00> : vector<8x32xf32>
    %244 = tpu.matmul %241, %243, %cst_167 {dimension_numbers = #tpu.dot_dimension_numbers<[1], [0], [0], [1], [0, 0, 1, 1], [], []>} : vector<8x32xf32>, vector<32x32xf32>, vector<8x32xf32> -> vector<8x32xf32>
    %c0_168 = arith.constant 0 : index
    %c0_169 = arith.constant 0 : index
    %c0_170 = arith.constant 0 : index
    %245 = vector.load %arg6[%c0_168, %c0_169, %c0_170] : memref<3x32x32xf32, #tpu.memory_space<vmem>>, vector<1x32x32xf32>
    %246 = vector.shape_cast %245 : vector<1x32x32xf32> to vector<32x32xf32>
    %cst_171 = arith.constant dense<0.000000e+00> : vector<8x32xf32>
    %247 = tpu.matmul %199, %246, %cst_171 {dimension_numbers = #tpu.dot_dimension_numbers<[1], [0], [0], [1], [0, 0, 1, 1], [], []>} : vector<8x32xf32>, vector<32x32xf32>, vector<8x32xf32> -> vector<8x32xf32>
    %248 = arith.addf %244, %247 : vector<8x32xf32>
    %249 = arith.addf %248, %19 : vector<8x32xf32>
    %250 = arith.negf %249 : vector<8x32xf32>
    %251 = math.exp %250 : vector<8x32xf32>
    %cst_172 = arith.constant 1.000000e+00 : f32
    %252 = vector.broadcast %cst_172 : f32 to vector<8x32xf32>
    %253 = arith.addf %252, %251 : vector<8x32xf32>
    %254 = arith.divf %252, %253 : vector<8x32xf32>
    %c1_173 = arith.constant 1 : index
    %c0_174 = arith.constant 0 : index
    %c0_175 = arith.constant 0 : index
    %255 = vector.load %arg5[%c1_173, %c0_174, %c0_175] : memref<3x32x32xf32, #tpu.memory_space<vmem>>, vector<1x32x32xf32>
    %256 = vector.shape_cast %255 : vector<1x32x32xf32> to vector<32x32xf32>
    %cst_176 = arith.constant dense<0.000000e+00> : vector<8x32xf32>
    %257 = tpu.matmul %241, %256, %cst_176 {dimension_numbers = #tpu.dot_dimension_numbers<[1], [0], [0], [1], [0, 0, 1, 1], [], []>} : vector<8x32xf32>, vector<32x32xf32>, vector<8x32xf32> -> vector<8x32xf32>
    %c1_177 = arith.constant 1 : index
    %c0_178 = arith.constant 0 : index
    %c0_179 = arith.constant 0 : index
    %258 = vector.load %arg6[%c1_177, %c0_178, %c0_179] : memref<3x32x32xf32, #tpu.memory_space<vmem>>, vector<1x32x32xf32>
    %259 = vector.shape_cast %258 : vector<1x32x32xf32> to vector<32x32xf32>
    %cst_180 = arith.constant dense<0.000000e+00> : vector<8x32xf32>
    %260 = tpu.matmul %199, %259, %cst_180 {dimension_numbers = #tpu.dot_dimension_numbers<[1], [0], [0], [1], [0, 0, 1, 1], [], []>} : vector<8x32xf32>, vector<32x32xf32>, vector<8x32xf32> -> vector<8x32xf32>
    %261 = arith.addf %257, %260 : vector<8x32xf32>
    %262 = arith.addf %261, %23 : vector<8x32xf32>
    %263 = arith.negf %262 : vector<8x32xf32>
    %264 = math.exp %263 : vector<8x32xf32>
    %cst_181 = arith.constant 1.000000e+00 : f32
    %265 = vector.broadcast %cst_181 : f32 to vector<8x32xf32>
    %266 = arith.addf %265, %264 : vector<8x32xf32>
    %267 = arith.divf %265, %266 : vector<8x32xf32>
    %c2_182 = arith.constant 2 : index
    %c0_183 = arith.constant 0 : index
    %c0_184 = arith.constant 0 : index
    %268 = vector.load %arg5[%c2_182, %c0_183, %c0_184] : memref<3x32x32xf32, #tpu.memory_space<vmem>>, vector<1x32x32xf32>
    %269 = vector.shape_cast %268 : vector<1x32x32xf32> to vector<32x32xf32>
    %cst_185 = arith.constant dense<0.000000e+00> : vector<8x32xf32>
    %270 = tpu.matmul %241, %269, %cst_185 {dimension_numbers = #tpu.dot_dimension_numbers<[1], [0], [0], [1], [0, 0, 1, 1], [], []>} : vector<8x32xf32>, vector<32x32xf32>, vector<8x32xf32> -> vector<8x32xf32>
    %271 = arith.addf %270, %27 : vector<8x32xf32>
    %c2_186 = arith.constant 2 : index
    %c0_187 = arith.constant 0 : index
    %c0_188 = arith.constant 0 : index
    %272 = vector.load %arg6[%c2_186, %c0_187, %c0_188] : memref<3x32x32xf32, #tpu.memory_space<vmem>>, vector<1x32x32xf32>
    %273 = vector.shape_cast %272 : vector<1x32x32xf32> to vector<32x32xf32>
    %cst_189 = arith.constant dense<0.000000e+00> : vector<8x32xf32>
    %274 = tpu.matmul %199, %273, %cst_189 {dimension_numbers = #tpu.dot_dimension_numbers<[1], [0], [0], [1], [0, 0, 1, 1], [], []>} : vector<8x32xf32>, vector<32x32xf32>, vector<8x32xf32> -> vector<8x32xf32>
    %275 = arith.addf %274, %31 : vector<8x32xf32>
    %276 = arith.mulf %254, %275 : vector<8x32xf32>
    %277 = arith.addf %271, %276 : vector<8x32xf32>
    %278 = math.tanh %277 : vector<8x32xf32>
    %279 = arith.subf %199, %278 : vector<8x32xf32>
    %280 = arith.mulf %267, %279 : vector<8x32xf32>
    %281 = arith.addf %278, %280 : vector<8x32xf32>
    %c3_190 = arith.constant 3 : index
    %c0_191 = arith.constant 0 : index
    %c0_192 = arith.constant 0 : index
    %282 = vector.load %arg0[%c3_190, %c0_191, %c0_192] : memref<7x8x16xf32, #tpu.memory_space<vmem>>, vector<1x8x16xf32>
    %283 = vector.shape_cast %282 : vector<1x8x16xf32> to vector<8x16xf32>
    %c0_193 = arith.constant 0 : index
    %c0_194 = arith.constant 0 : index
    %c0_195 = arith.constant 0 : index
    %284 = vector.load %arg2[%c0_193, %c0_194, %c0_195] : memref<3x16x32xf32, #tpu.memory_space<vmem>>, vector<1x16x32xf32>
    %285 = vector.shape_cast %284 : vector<1x16x32xf32> to vector<16x32xf32>
    %cst_196 = arith.constant dense<0.000000e+00> : vector<8x32xf32>
    %286 = tpu.matmul %283, %285, %cst_196 {dimension_numbers = #tpu.dot_dimension_numbers<[1], [0], [0], [1], [0, 0, 1, 1], [], []>} : vector<8x16xf32>, vector<16x32xf32>, vector<8x32xf32> -> vector<8x32xf32>
    %c0_197 = arith.constant 0 : index
    %c0_198 = arith.constant 0 : index
    %c0_199 = arith.constant 0 : index
    %287 = vector.load %arg3[%c0_197, %c0_198, %c0_199] : memref<3x32x32xf32, #tpu.memory_space<vmem>>, vector<1x32x32xf32>
    %288 = vector.shape_cast %287 : vector<1x32x32xf32> to vector<32x32xf32>
    %cst_200 = arith.constant dense<0.000000e+00> : vector<8x32xf32>
    %289 = tpu.matmul %241, %288, %cst_200 {dimension_numbers = #tpu.dot_dimension_numbers<[1], [0], [0], [1], [0, 0, 1, 1], [], []>} : vector<8x32xf32>, vector<32x32xf32>, vector<8x32xf32> -> vector<8x32xf32>
    %290 = arith.addf %286, %289 : vector<8x32xf32>
    %291 = arith.addf %290, %3 : vector<8x32xf32>
    %292 = arith.negf %291 : vector<8x32xf32>
    %293 = math.exp %292 : vector<8x32xf32>
    %cst_201 = arith.constant 1.000000e+00 : f32
    %294 = vector.broadcast %cst_201 : f32 to vector<8x32xf32>
    %295 = arith.addf %294, %293 : vector<8x32xf32>
    %296 = arith.divf %294, %295 : vector<8x32xf32>
    %c1_202 = arith.constant 1 : index
    %c0_203 = arith.constant 0 : index
    %c0_204 = arith.constant 0 : index
    %297 = vector.load %arg2[%c1_202, %c0_203, %c0_204] : memref<3x16x32xf32, #tpu.memory_space<vmem>>, vector<1x16x32xf32>
    %298 = vector.shape_cast %297 : vector<1x16x32xf32> to vector<16x32xf32>
    %cst_205 = arith.constant dense<0.000000e+00> : vector<8x32xf32>
    %299 = tpu.matmul %283, %298, %cst_205 {dimension_numbers = #tpu.dot_dimension_numbers<[1], [0], [0], [1], [0, 0, 1, 1], [], []>} : vector<8x16xf32>, vector<16x32xf32>, vector<8x32xf32> -> vector<8x32xf32>
    %c1_206 = arith.constant 1 : index
    %c0_207 = arith.constant 0 : index
    %c0_208 = arith.constant 0 : index
    %300 = vector.load %arg3[%c1_206, %c0_207, %c0_208] : memref<3x32x32xf32, #tpu.memory_space<vmem>>, vector<1x32x32xf32>
    %301 = vector.shape_cast %300 : vector<1x32x32xf32> to vector<32x32xf32>
    %cst_209 = arith.constant dense<0.000000e+00> : vector<8x32xf32>
    %302 = tpu.matmul %241, %301, %cst_209 {dimension_numbers = #tpu.dot_dimension_numbers<[1], [0], [0], [1], [0, 0, 1, 1], [], []>} : vector<8x32xf32>, vector<32x32xf32>, vector<8x32xf32> -> vector<8x32xf32>
    %303 = arith.addf %299, %302 : vector<8x32xf32>
    %304 = arith.addf %303, %7 : vector<8x32xf32>
    %305 = arith.negf %304 : vector<8x32xf32>
    %306 = math.exp %305 : vector<8x32xf32>
    %cst_210 = arith.constant 1.000000e+00 : f32
    %307 = vector.broadcast %cst_210 : f32 to vector<8x32xf32>
    %308 = arith.addf %307, %306 : vector<8x32xf32>
    %309 = arith.divf %307, %308 : vector<8x32xf32>
    %c2_211 = arith.constant 2 : index
    %c0_212 = arith.constant 0 : index
    %c0_213 = arith.constant 0 : index
    %310 = vector.load %arg2[%c2_211, %c0_212, %c0_213] : memref<3x16x32xf32, #tpu.memory_space<vmem>>, vector<1x16x32xf32>
    %311 = vector.shape_cast %310 : vector<1x16x32xf32> to vector<16x32xf32>
    %cst_214 = arith.constant dense<0.000000e+00> : vector<8x32xf32>
    %312 = tpu.matmul %283, %311, %cst_214 {dimension_numbers = #tpu.dot_dimension_numbers<[1], [0], [0], [1], [0, 0, 1, 1], [], []>} : vector<8x16xf32>, vector<16x32xf32>, vector<8x32xf32> -> vector<8x32xf32>
    %313 = arith.addf %312, %11 : vector<8x32xf32>
    %c2_215 = arith.constant 2 : index
    %c0_216 = arith.constant 0 : index
    %c0_217 = arith.constant 0 : index
    %314 = vector.load %arg3[%c2_215, %c0_216, %c0_217] : memref<3x32x32xf32, #tpu.memory_space<vmem>>, vector<1x32x32xf32>
    %315 = vector.shape_cast %314 : vector<1x32x32xf32> to vector<32x32xf32>
    %cst_218 = arith.constant dense<0.000000e+00> : vector<8x32xf32>
    %316 = tpu.matmul %241, %315, %cst_218 {dimension_numbers = #tpu.dot_dimension_numbers<[1], [0], [0], [1], [0, 0, 1, 1], [], []>} : vector<8x32xf32>, vector<32x32xf32>, vector<8x32xf32> -> vector<8x32xf32>
    %317 = arith.addf %316, %15 : vector<8x32xf32>
    %318 = arith.mulf %296, %317 : vector<8x32xf32>
    %319 = arith.addf %313, %318 : vector<8x32xf32>
    %320 = math.tanh %319 : vector<8x32xf32>
    %321 = arith.subf %241, %320 : vector<8x32xf32>
    %322 = arith.mulf %309, %321 : vector<8x32xf32>
    %323 = arith.addf %320, %322 : vector<8x32xf32>
    %c0_219 = arith.constant 0 : index
    %c0_220 = arith.constant 0 : index
    %c0_221 = arith.constant 0 : index
    %324 = vector.load %arg5[%c0_219, %c0_220, %c0_221] : memref<3x32x32xf32, #tpu.memory_space<vmem>>, vector<1x32x32xf32>
    %325 = vector.shape_cast %324 : vector<1x32x32xf32> to vector<32x32xf32>
    %cst_222 = arith.constant dense<0.000000e+00> : vector<8x32xf32>
    %326 = tpu.matmul %323, %325, %cst_222 {dimension_numbers = #tpu.dot_dimension_numbers<[1], [0], [0], [1], [0, 0, 1, 1], [], []>} : vector<8x32xf32>, vector<32x32xf32>, vector<8x32xf32> -> vector<8x32xf32>
    %c0_223 = arith.constant 0 : index
    %c0_224 = arith.constant 0 : index
    %c0_225 = arith.constant 0 : index
    %327 = vector.load %arg6[%c0_223, %c0_224, %c0_225] : memref<3x32x32xf32, #tpu.memory_space<vmem>>, vector<1x32x32xf32>
    %328 = vector.shape_cast %327 : vector<1x32x32xf32> to vector<32x32xf32>
    %cst_226 = arith.constant dense<0.000000e+00> : vector<8x32xf32>
    %329 = tpu.matmul %281, %328, %cst_226 {dimension_numbers = #tpu.dot_dimension_numbers<[1], [0], [0], [1], [0, 0, 1, 1], [], []>} : vector<8x32xf32>, vector<32x32xf32>, vector<8x32xf32> -> vector<8x32xf32>
    %330 = arith.addf %326, %329 : vector<8x32xf32>
    %331 = arith.addf %330, %19 : vector<8x32xf32>
    %332 = arith.negf %331 : vector<8x32xf32>
    %333 = math.exp %332 : vector<8x32xf32>
    %cst_227 = arith.constant 1.000000e+00 : f32
    %334 = vector.broadcast %cst_227 : f32 to vector<8x32xf32>
    %335 = arith.addf %334, %333 : vector<8x32xf32>
    %336 = arith.divf %334, %335 : vector<8x32xf32>
    %c1_228 = arith.constant 1 : index
    %c0_229 = arith.constant 0 : index
    %c0_230 = arith.constant 0 : index
    %337 = vector.load %arg5[%c1_228, %c0_229, %c0_230] : memref<3x32x32xf32, #tpu.memory_space<vmem>>, vector<1x32x32xf32>
    %338 = vector.shape_cast %337 : vector<1x32x32xf32> to vector<32x32xf32>
    %cst_231 = arith.constant dense<0.000000e+00> : vector<8x32xf32>
    %339 = tpu.matmul %323, %338, %cst_231 {dimension_numbers = #tpu.dot_dimension_numbers<[1], [0], [0], [1], [0, 0, 1, 1], [], []>} : vector<8x32xf32>, vector<32x32xf32>, vector<8x32xf32> -> vector<8x32xf32>
    %c1_232 = arith.constant 1 : index
    %c0_233 = arith.constant 0 : index
    %c0_234 = arith.constant 0 : index
    %340 = vector.load %arg6[%c1_232, %c0_233, %c0_234] : memref<3x32x32xf32, #tpu.memory_space<vmem>>, vector<1x32x32xf32>
    %341 = vector.shape_cast %340 : vector<1x32x32xf32> to vector<32x32xf32>
    %cst_235 = arith.constant dense<0.000000e+00> : vector<8x32xf32>
    %342 = tpu.matmul %281, %341, %cst_235 {dimension_numbers = #tpu.dot_dimension_numbers<[1], [0], [0], [1], [0, 0, 1, 1], [], []>} : vector<8x32xf32>, vector<32x32xf32>, vector<8x32xf32> -> vector<8x32xf32>
    %343 = arith.addf %339, %342 : vector<8x32xf32>
    %344 = arith.addf %343, %23 : vector<8x32xf32>
    %345 = arith.negf %344 : vector<8x32xf32>
    %346 = math.exp %345 : vector<8x32xf32>
    %cst_236 = arith.constant 1.000000e+00 : f32
    %347 = vector.broadcast %cst_236 : f32 to vector<8x32xf32>
    %348 = arith.addf %347, %346 : vector<8x32xf32>
    %349 = arith.divf %347, %348 : vector<8x32xf32>
    %c2_237 = arith.constant 2 : index
    %c0_238 = arith.constant 0 : index
    %c0_239 = arith.constant 0 : index
    %350 = vector.load %arg5[%c2_237, %c0_238, %c0_239] : memref<3x32x32xf32, #tpu.memory_space<vmem>>, vector<1x32x32xf32>
    %351 = vector.shape_cast %350 : vector<1x32x32xf32> to vector<32x32xf32>
    %cst_240 = arith.constant dense<0.000000e+00> : vector<8x32xf32>
    %352 = tpu.matmul %323, %351, %cst_240 {dimension_numbers = #tpu.dot_dimension_numbers<[1], [0], [0], [1], [0, 0, 1, 1], [], []>} : vector<8x32xf32>, vector<32x32xf32>, vector<8x32xf32> -> vector<8x32xf32>
    %353 = arith.addf %352, %27 : vector<8x32xf32>
    %c2_241 = arith.constant 2 : index
    %c0_242 = arith.constant 0 : index
    %c0_243 = arith.constant 0 : index
    %354 = vector.load %arg6[%c2_241, %c0_242, %c0_243] : memref<3x32x32xf32, #tpu.memory_space<vmem>>, vector<1x32x32xf32>
    %355 = vector.shape_cast %354 : vector<1x32x32xf32> to vector<32x32xf32>
    %cst_244 = arith.constant dense<0.000000e+00> : vector<8x32xf32>
    %356 = tpu.matmul %281, %355, %cst_244 {dimension_numbers = #tpu.dot_dimension_numbers<[1], [0], [0], [1], [0, 0, 1, 1], [], []>} : vector<8x32xf32>, vector<32x32xf32>, vector<8x32xf32> -> vector<8x32xf32>
    %357 = arith.addf %356, %31 : vector<8x32xf32>
    %358 = arith.mulf %336, %357 : vector<8x32xf32>
    %359 = arith.addf %353, %358 : vector<8x32xf32>
    %360 = math.tanh %359 : vector<8x32xf32>
    %361 = arith.subf %281, %360 : vector<8x32xf32>
    %362 = arith.mulf %349, %361 : vector<8x32xf32>
    %363 = arith.addf %360, %362 : vector<8x32xf32>
    %c4 = arith.constant 4 : index
    %c0_245 = arith.constant 0 : index
    %c0_246 = arith.constant 0 : index
    %364 = vector.load %arg0[%c4, %c0_245, %c0_246] : memref<7x8x16xf32, #tpu.memory_space<vmem>>, vector<1x8x16xf32>
    %365 = vector.shape_cast %364 : vector<1x8x16xf32> to vector<8x16xf32>
    %c0_247 = arith.constant 0 : index
    %c0_248 = arith.constant 0 : index
    %c0_249 = arith.constant 0 : index
    %366 = vector.load %arg2[%c0_247, %c0_248, %c0_249] : memref<3x16x32xf32, #tpu.memory_space<vmem>>, vector<1x16x32xf32>
    %367 = vector.shape_cast %366 : vector<1x16x32xf32> to vector<16x32xf32>
    %cst_250 = arith.constant dense<0.000000e+00> : vector<8x32xf32>
    %368 = tpu.matmul %365, %367, %cst_250 {dimension_numbers = #tpu.dot_dimension_numbers<[1], [0], [0], [1], [0, 0, 1, 1], [], []>} : vector<8x16xf32>, vector<16x32xf32>, vector<8x32xf32> -> vector<8x32xf32>
    %c0_251 = arith.constant 0 : index
    %c0_252 = arith.constant 0 : index
    %c0_253 = arith.constant 0 : index
    %369 = vector.load %arg3[%c0_251, %c0_252, %c0_253] : memref<3x32x32xf32, #tpu.memory_space<vmem>>, vector<1x32x32xf32>
    %370 = vector.shape_cast %369 : vector<1x32x32xf32> to vector<32x32xf32>
    %cst_254 = arith.constant dense<0.000000e+00> : vector<8x32xf32>
    %371 = tpu.matmul %323, %370, %cst_254 {dimension_numbers = #tpu.dot_dimension_numbers<[1], [0], [0], [1], [0, 0, 1, 1], [], []>} : vector<8x32xf32>, vector<32x32xf32>, vector<8x32xf32> -> vector<8x32xf32>
    %372 = arith.addf %368, %371 : vector<8x32xf32>
    %373 = arith.addf %372, %3 : vector<8x32xf32>
    %374 = arith.negf %373 : vector<8x32xf32>
    %375 = math.exp %374 : vector<8x32xf32>
    %cst_255 = arith.constant 1.000000e+00 : f32
    %376 = vector.broadcast %cst_255 : f32 to vector<8x32xf32>
    %377 = arith.addf %376, %375 : vector<8x32xf32>
    %378 = arith.divf %376, %377 : vector<8x32xf32>
    %c1_256 = arith.constant 1 : index
    %c0_257 = arith.constant 0 : index
    %c0_258 = arith.constant 0 : index
    %379 = vector.load %arg2[%c1_256, %c0_257, %c0_258] : memref<3x16x32xf32, #tpu.memory_space<vmem>>, vector<1x16x32xf32>
    %380 = vector.shape_cast %379 : vector<1x16x32xf32> to vector<16x32xf32>
    %cst_259 = arith.constant dense<0.000000e+00> : vector<8x32xf32>
    %381 = tpu.matmul %365, %380, %cst_259 {dimension_numbers = #tpu.dot_dimension_numbers<[1], [0], [0], [1], [0, 0, 1, 1], [], []>} : vector<8x16xf32>, vector<16x32xf32>, vector<8x32xf32> -> vector<8x32xf32>
    %c1_260 = arith.constant 1 : index
    %c0_261 = arith.constant 0 : index
    %c0_262 = arith.constant 0 : index
    %382 = vector.load %arg3[%c1_260, %c0_261, %c0_262] : memref<3x32x32xf32, #tpu.memory_space<vmem>>, vector<1x32x32xf32>
    %383 = vector.shape_cast %382 : vector<1x32x32xf32> to vector<32x32xf32>
    %cst_263 = arith.constant dense<0.000000e+00> : vector<8x32xf32>
    %384 = tpu.matmul %323, %383, %cst_263 {dimension_numbers = #tpu.dot_dimension_numbers<[1], [0], [0], [1], [0, 0, 1, 1], [], []>} : vector<8x32xf32>, vector<32x32xf32>, vector<8x32xf32> -> vector<8x32xf32>
    %385 = arith.addf %381, %384 : vector<8x32xf32>
    %386 = arith.addf %385, %7 : vector<8x32xf32>
    %387 = arith.negf %386 : vector<8x32xf32>
    %388 = math.exp %387 : vector<8x32xf32>
    %cst_264 = arith.constant 1.000000e+00 : f32
    %389 = vector.broadcast %cst_264 : f32 to vector<8x32xf32>
    %390 = arith.addf %389, %388 : vector<8x32xf32>
    %391 = arith.divf %389, %390 : vector<8x32xf32>
    %c2_265 = arith.constant 2 : index
    %c0_266 = arith.constant 0 : index
    %c0_267 = arith.constant 0 : index
    %392 = vector.load %arg2[%c2_265, %c0_266, %c0_267] : memref<3x16x32xf32, #tpu.memory_space<vmem>>, vector<1x16x32xf32>
    %393 = vector.shape_cast %392 : vector<1x16x32xf32> to vector<16x32xf32>
    %cst_268 = arith.constant dense<0.000000e+00> : vector<8x32xf32>
    %394 = tpu.matmul %365, %393, %cst_268 {dimension_numbers = #tpu.dot_dimension_numbers<[1], [0], [0], [1], [0, 0, 1, 1], [], []>} : vector<8x16xf32>, vector<16x32xf32>, vector<8x32xf32> -> vector<8x32xf32>
    %395 = arith.addf %394, %11 : vector<8x32xf32>
    %c2_269 = arith.constant 2 : index
    %c0_270 = arith.constant 0 : index
    %c0_271 = arith.constant 0 : index
    %396 = vector.load %arg3[%c2_269, %c0_270, %c0_271] : memref<3x32x32xf32, #tpu.memory_space<vmem>>, vector<1x32x32xf32>
    %397 = vector.shape_cast %396 : vector<1x32x32xf32> to vector<32x32xf32>
    %cst_272 = arith.constant dense<0.000000e+00> : vector<8x32xf32>
    %398 = tpu.matmul %323, %397, %cst_272 {dimension_numbers = #tpu.dot_dimension_numbers<[1], [0], [0], [1], [0, 0, 1, 1], [], []>} : vector<8x32xf32>, vector<32x32xf32>, vector<8x32xf32> -> vector<8x32xf32>
    %399 = arith.addf %398, %15 : vector<8x32xf32>
    %400 = arith.mulf %378, %399 : vector<8x32xf32>
    %401 = arith.addf %395, %400 : vector<8x32xf32>
    %402 = math.tanh %401 : vector<8x32xf32>
    %403 = arith.subf %323, %402 : vector<8x32xf32>
    %404 = arith.mulf %391, %403 : vector<8x32xf32>
    %405 = arith.addf %402, %404 : vector<8x32xf32>
    %c0_273 = arith.constant 0 : index
    %c0_274 = arith.constant 0 : index
    %c0_275 = arith.constant 0 : index
    %406 = vector.load %arg5[%c0_273, %c0_274, %c0_275] : memref<3x32x32xf32, #tpu.memory_space<vmem>>, vector<1x32x32xf32>
    %407 = vector.shape_cast %406 : vector<1x32x32xf32> to vector<32x32xf32>
    %cst_276 = arith.constant dense<0.000000e+00> : vector<8x32xf32>
    %408 = tpu.matmul %405, %407, %cst_276 {dimension_numbers = #tpu.dot_dimension_numbers<[1], [0], [0], [1], [0, 0, 1, 1], [], []>} : vector<8x32xf32>, vector<32x32xf32>, vector<8x32xf32> -> vector<8x32xf32>
    %c0_277 = arith.constant 0 : index
    %c0_278 = arith.constant 0 : index
    %c0_279 = arith.constant 0 : index
    %409 = vector.load %arg6[%c0_277, %c0_278, %c0_279] : memref<3x32x32xf32, #tpu.memory_space<vmem>>, vector<1x32x32xf32>
    %410 = vector.shape_cast %409 : vector<1x32x32xf32> to vector<32x32xf32>
    %cst_280 = arith.constant dense<0.000000e+00> : vector<8x32xf32>
    %411 = tpu.matmul %363, %410, %cst_280 {dimension_numbers = #tpu.dot_dimension_numbers<[1], [0], [0], [1], [0, 0, 1, 1], [], []>} : vector<8x32xf32>, vector<32x32xf32>, vector<8x32xf32> -> vector<8x32xf32>
    %412 = arith.addf %408, %411 : vector<8x32xf32>
    %413 = arith.addf %412, %19 : vector<8x32xf32>
    %414 = arith.negf %413 : vector<8x32xf32>
    %415 = math.exp %414 : vector<8x32xf32>
    %cst_281 = arith.constant 1.000000e+00 : f32
    %416 = vector.broadcast %cst_281 : f32 to vector<8x32xf32>
    %417 = arith.addf %416, %415 : vector<8x32xf32>
    %418 = arith.divf %416, %417 : vector<8x32xf32>
    %c1_282 = arith.constant 1 : index
    %c0_283 = arith.constant 0 : index
    %c0_284 = arith.constant 0 : index
    %419 = vector.load %arg5[%c1_282, %c0_283, %c0_284] : memref<3x32x32xf32, #tpu.memory_space<vmem>>, vector<1x32x32xf32>
    %420 = vector.shape_cast %419 : vector<1x32x32xf32> to vector<32x32xf32>
    %cst_285 = arith.constant dense<0.000000e+00> : vector<8x32xf32>
    %421 = tpu.matmul %405, %420, %cst_285 {dimension_numbers = #tpu.dot_dimension_numbers<[1], [0], [0], [1], [0, 0, 1, 1], [], []>} : vector<8x32xf32>, vector<32x32xf32>, vector<8x32xf32> -> vector<8x32xf32>
    %c1_286 = arith.constant 1 : index
    %c0_287 = arith.constant 0 : index
    %c0_288 = arith.constant 0 : index
    %422 = vector.load %arg6[%c1_286, %c0_287, %c0_288] : memref<3x32x32xf32, #tpu.memory_space<vmem>>, vector<1x32x32xf32>
    %423 = vector.shape_cast %422 : vector<1x32x32xf32> to vector<32x32xf32>
    %cst_289 = arith.constant dense<0.000000e+00> : vector<8x32xf32>
    %424 = tpu.matmul %363, %423, %cst_289 {dimension_numbers = #tpu.dot_dimension_numbers<[1], [0], [0], [1], [0, 0, 1, 1], [], []>} : vector<8x32xf32>, vector<32x32xf32>, vector<8x32xf32> -> vector<8x32xf32>
    %425 = arith.addf %421, %424 : vector<8x32xf32>
    %426 = arith.addf %425, %23 : vector<8x32xf32>
    %427 = arith.negf %426 : vector<8x32xf32>
    %428 = math.exp %427 : vector<8x32xf32>
    %cst_290 = arith.constant 1.000000e+00 : f32
    %429 = vector.broadcast %cst_290 : f32 to vector<8x32xf32>
    %430 = arith.addf %429, %428 : vector<8x32xf32>
    %431 = arith.divf %429, %430 : vector<8x32xf32>
    %c2_291 = arith.constant 2 : index
    %c0_292 = arith.constant 0 : index
    %c0_293 = arith.constant 0 : index
    %432 = vector.load %arg5[%c2_291, %c0_292, %c0_293] : memref<3x32x32xf32, #tpu.memory_space<vmem>>, vector<1x32x32xf32>
    %433 = vector.shape_cast %432 : vector<1x32x32xf32> to vector<32x32xf32>
    %cst_294 = arith.constant dense<0.000000e+00> : vector<8x32xf32>
    %434 = tpu.matmul %405, %433, %cst_294 {dimension_numbers = #tpu.dot_dimension_numbers<[1], [0], [0], [1], [0, 0, 1, 1], [], []>} : vector<8x32xf32>, vector<32x32xf32>, vector<8x32xf32> -> vector<8x32xf32>
    %435 = arith.addf %434, %27 : vector<8x32xf32>
    %c2_295 = arith.constant 2 : index
    %c0_296 = arith.constant 0 : index
    %c0_297 = arith.constant 0 : index
    %436 = vector.load %arg6[%c2_295, %c0_296, %c0_297] : memref<3x32x32xf32, #tpu.memory_space<vmem>>, vector<1x32x32xf32>
    %437 = vector.shape_cast %436 : vector<1x32x32xf32> to vector<32x32xf32>
    %cst_298 = arith.constant dense<0.000000e+00> : vector<8x32xf32>
    %438 = tpu.matmul %363, %437, %cst_298 {dimension_numbers = #tpu.dot_dimension_numbers<[1], [0], [0], [1], [0, 0, 1, 1], [], []>} : vector<8x32xf32>, vector<32x32xf32>, vector<8x32xf32> -> vector<8x32xf32>
    %439 = arith.addf %438, %31 : vector<8x32xf32>
    %440 = arith.mulf %418, %439 : vector<8x32xf32>
    %441 = arith.addf %435, %440 : vector<8x32xf32>
    %442 = math.tanh %441 : vector<8x32xf32>
    %443 = arith.subf %363, %442 : vector<8x32xf32>
    %444 = arith.mulf %431, %443 : vector<8x32xf32>
    %445 = arith.addf %442, %444 : vector<8x32xf32>
    %c5 = arith.constant 5 : index
    %c0_299 = arith.constant 0 : index
    %c0_300 = arith.constant 0 : index
    %446 = vector.load %arg0[%c5, %c0_299, %c0_300] : memref<7x8x16xf32, #tpu.memory_space<vmem>>, vector<1x8x16xf32>
    %447 = vector.shape_cast %446 : vector<1x8x16xf32> to vector<8x16xf32>
    %c0_301 = arith.constant 0 : index
    %c0_302 = arith.constant 0 : index
    %c0_303 = arith.constant 0 : index
    %448 = vector.load %arg2[%c0_301, %c0_302, %c0_303] : memref<3x16x32xf32, #tpu.memory_space<vmem>>, vector<1x16x32xf32>
    %449 = vector.shape_cast %448 : vector<1x16x32xf32> to vector<16x32xf32>
    %cst_304 = arith.constant dense<0.000000e+00> : vector<8x32xf32>
    %450 = tpu.matmul %447, %449, %cst_304 {dimension_numbers = #tpu.dot_dimension_numbers<[1], [0], [0], [1], [0, 0, 1, 1], [], []>} : vector<8x16xf32>, vector<16x32xf32>, vector<8x32xf32> -> vector<8x32xf32>
    %c0_305 = arith.constant 0 : index
    %c0_306 = arith.constant 0 : index
    %c0_307 = arith.constant 0 : index
    %451 = vector.load %arg3[%c0_305, %c0_306, %c0_307] : memref<3x32x32xf32, #tpu.memory_space<vmem>>, vector<1x32x32xf32>
    %452 = vector.shape_cast %451 : vector<1x32x32xf32> to vector<32x32xf32>
    %cst_308 = arith.constant dense<0.000000e+00> : vector<8x32xf32>
    %453 = tpu.matmul %405, %452, %cst_308 {dimension_numbers = #tpu.dot_dimension_numbers<[1], [0], [0], [1], [0, 0, 1, 1], [], []>} : vector<8x32xf32>, vector<32x32xf32>, vector<8x32xf32> -> vector<8x32xf32>
    %454 = arith.addf %450, %453 : vector<8x32xf32>
    %455 = arith.addf %454, %3 : vector<8x32xf32>
    %456 = arith.negf %455 : vector<8x32xf32>
    %457 = math.exp %456 : vector<8x32xf32>
    %cst_309 = arith.constant 1.000000e+00 : f32
    %458 = vector.broadcast %cst_309 : f32 to vector<8x32xf32>
    %459 = arith.addf %458, %457 : vector<8x32xf32>
    %460 = arith.divf %458, %459 : vector<8x32xf32>
    %c1_310 = arith.constant 1 : index
    %c0_311 = arith.constant 0 : index
    %c0_312 = arith.constant 0 : index
    %461 = vector.load %arg2[%c1_310, %c0_311, %c0_312] : memref<3x16x32xf32, #tpu.memory_space<vmem>>, vector<1x16x32xf32>
    %462 = vector.shape_cast %461 : vector<1x16x32xf32> to vector<16x32xf32>
    %cst_313 = arith.constant dense<0.000000e+00> : vector<8x32xf32>
    %463 = tpu.matmul %447, %462, %cst_313 {dimension_numbers = #tpu.dot_dimension_numbers<[1], [0], [0], [1], [0, 0, 1, 1], [], []>} : vector<8x16xf32>, vector<16x32xf32>, vector<8x32xf32> -> vector<8x32xf32>
    %c1_314 = arith.constant 1 : index
    %c0_315 = arith.constant 0 : index
    %c0_316 = arith.constant 0 : index
    %464 = vector.load %arg3[%c1_314, %c0_315, %c0_316] : memref<3x32x32xf32, #tpu.memory_space<vmem>>, vector<1x32x32xf32>
    %465 = vector.shape_cast %464 : vector<1x32x32xf32> to vector<32x32xf32>
    %cst_317 = arith.constant dense<0.000000e+00> : vector<8x32xf32>
    %466 = tpu.matmul %405, %465, %cst_317 {dimension_numbers = #tpu.dot_dimension_numbers<[1], [0], [0], [1], [0, 0, 1, 1], [], []>} : vector<8x32xf32>, vector<32x32xf32>, vector<8x32xf32> -> vector<8x32xf32>
    %467 = arith.addf %463, %466 : vector<8x32xf32>
    %468 = arith.addf %467, %7 : vector<8x32xf32>
    %469 = arith.negf %468 : vector<8x32xf32>
    %470 = math.exp %469 : vector<8x32xf32>
    %cst_318 = arith.constant 1.000000e+00 : f32
    %471 = vector.broadcast %cst_318 : f32 to vector<8x32xf32>
    %472 = arith.addf %471, %470 : vector<8x32xf32>
    %473 = arith.divf %471, %472 : vector<8x32xf32>
    %c2_319 = arith.constant 2 : index
    %c0_320 = arith.constant 0 : index
    %c0_321 = arith.constant 0 : index
    %474 = vector.load %arg2[%c2_319, %c0_320, %c0_321] : memref<3x16x32xf32, #tpu.memory_space<vmem>>, vector<1x16x32xf32>
    %475 = vector.shape_cast %474 : vector<1x16x32xf32> to vector<16x32xf32>
    %cst_322 = arith.constant dense<0.000000e+00> : vector<8x32xf32>
    %476 = tpu.matmul %447, %475, %cst_322 {dimension_numbers = #tpu.dot_dimension_numbers<[1], [0], [0], [1], [0, 0, 1, 1], [], []>} : vector<8x16xf32>, vector<16x32xf32>, vector<8x32xf32> -> vector<8x32xf32>
    %477 = arith.addf %476, %11 : vector<8x32xf32>
    %c2_323 = arith.constant 2 : index
    %c0_324 = arith.constant 0 : index
    %c0_325 = arith.constant 0 : index
    %478 = vector.load %arg3[%c2_323, %c0_324, %c0_325] : memref<3x32x32xf32, #tpu.memory_space<vmem>>, vector<1x32x32xf32>
    %479 = vector.shape_cast %478 : vector<1x32x32xf32> to vector<32x32xf32>
    %cst_326 = arith.constant dense<0.000000e+00> : vector<8x32xf32>
    %480 = tpu.matmul %405, %479, %cst_326 {dimension_numbers = #tpu.dot_dimension_numbers<[1], [0], [0], [1], [0, 0, 1, 1], [], []>} : vector<8x32xf32>, vector<32x32xf32>, vector<8x32xf32> -> vector<8x32xf32>
    %481 = arith.addf %480, %15 : vector<8x32xf32>
    %482 = arith.mulf %460, %481 : vector<8x32xf32>
    %483 = arith.addf %477, %482 : vector<8x32xf32>
    %484 = math.tanh %483 : vector<8x32xf32>
    %485 = arith.subf %405, %484 : vector<8x32xf32>
    %486 = arith.mulf %473, %485 : vector<8x32xf32>
    %487 = arith.addf %484, %486 : vector<8x32xf32>
    %c0_327 = arith.constant 0 : index
    %c0_328 = arith.constant 0 : index
    %c0_329 = arith.constant 0 : index
    %488 = vector.load %arg5[%c0_327, %c0_328, %c0_329] : memref<3x32x32xf32, #tpu.memory_space<vmem>>, vector<1x32x32xf32>
    %489 = vector.shape_cast %488 : vector<1x32x32xf32> to vector<32x32xf32>
    %cst_330 = arith.constant dense<0.000000e+00> : vector<8x32xf32>
    %490 = tpu.matmul %487, %489, %cst_330 {dimension_numbers = #tpu.dot_dimension_numbers<[1], [0], [0], [1], [0, 0, 1, 1], [], []>} : vector<8x32xf32>, vector<32x32xf32>, vector<8x32xf32> -> vector<8x32xf32>
    %c0_331 = arith.constant 0 : index
    %c0_332 = arith.constant 0 : index
    %c0_333 = arith.constant 0 : index
    %491 = vector.load %arg6[%c0_331, %c0_332, %c0_333] : memref<3x32x32xf32, #tpu.memory_space<vmem>>, vector<1x32x32xf32>
    %492 = vector.shape_cast %491 : vector<1x32x32xf32> to vector<32x32xf32>
    %cst_334 = arith.constant dense<0.000000e+00> : vector<8x32xf32>
    %493 = tpu.matmul %445, %492, %cst_334 {dimension_numbers = #tpu.dot_dimension_numbers<[1], [0], [0], [1], [0, 0, 1, 1], [], []>} : vector<8x32xf32>, vector<32x32xf32>, vector<8x32xf32> -> vector<8x32xf32>
    %494 = arith.addf %490, %493 : vector<8x32xf32>
    %495 = arith.addf %494, %19 : vector<8x32xf32>
    %496 = arith.negf %495 : vector<8x32xf32>
    %497 = math.exp %496 : vector<8x32xf32>
    %cst_335 = arith.constant 1.000000e+00 : f32
    %498 = vector.broadcast %cst_335 : f32 to vector<8x32xf32>
    %499 = arith.addf %498, %497 : vector<8x32xf32>
    %500 = arith.divf %498, %499 : vector<8x32xf32>
    %c1_336 = arith.constant 1 : index
    %c0_337 = arith.constant 0 : index
    %c0_338 = arith.constant 0 : index
    %501 = vector.load %arg5[%c1_336, %c0_337, %c0_338] : memref<3x32x32xf32, #tpu.memory_space<vmem>>, vector<1x32x32xf32>
    %502 = vector.shape_cast %501 : vector<1x32x32xf32> to vector<32x32xf32>
    %cst_339 = arith.constant dense<0.000000e+00> : vector<8x32xf32>
    %503 = tpu.matmul %487, %502, %cst_339 {dimension_numbers = #tpu.dot_dimension_numbers<[1], [0], [0], [1], [0, 0, 1, 1], [], []>} : vector<8x32xf32>, vector<32x32xf32>, vector<8x32xf32> -> vector<8x32xf32>
    %c1_340 = arith.constant 1 : index
    %c0_341 = arith.constant 0 : index
    %c0_342 = arith.constant 0 : index
    %504 = vector.load %arg6[%c1_340, %c0_341, %c0_342] : memref<3x32x32xf32, #tpu.memory_space<vmem>>, vector<1x32x32xf32>
    %505 = vector.shape_cast %504 : vector<1x32x32xf32> to vector<32x32xf32>
    %cst_343 = arith.constant dense<0.000000e+00> : vector<8x32xf32>
    %506 = tpu.matmul %445, %505, %cst_343 {dimension_numbers = #tpu.dot_dimension_numbers<[1], [0], [0], [1], [0, 0, 1, 1], [], []>} : vector<8x32xf32>, vector<32x32xf32>, vector<8x32xf32> -> vector<8x32xf32>
    %507 = arith.addf %503, %506 : vector<8x32xf32>
    %508 = arith.addf %507, %23 : vector<8x32xf32>
    %509 = arith.negf %508 : vector<8x32xf32>
    %510 = math.exp %509 : vector<8x32xf32>
    %cst_344 = arith.constant 1.000000e+00 : f32
    %511 = vector.broadcast %cst_344 : f32 to vector<8x32xf32>
    %512 = arith.addf %511, %510 : vector<8x32xf32>
    %513 = arith.divf %511, %512 : vector<8x32xf32>
    %c2_345 = arith.constant 2 : index
    %c0_346 = arith.constant 0 : index
    %c0_347 = arith.constant 0 : index
    %514 = vector.load %arg5[%c2_345, %c0_346, %c0_347] : memref<3x32x32xf32, #tpu.memory_space<vmem>>, vector<1x32x32xf32>
    %515 = vector.shape_cast %514 : vector<1x32x32xf32> to vector<32x32xf32>
    %cst_348 = arith.constant dense<0.000000e+00> : vector<8x32xf32>
    %516 = tpu.matmul %487, %515, %cst_348 {dimension_numbers = #tpu.dot_dimension_numbers<[1], [0], [0], [1], [0, 0, 1, 1], [], []>} : vector<8x32xf32>, vector<32x32xf32>, vector<8x32xf32> -> vector<8x32xf32>
    %517 = arith.addf %516, %27 : vector<8x32xf32>
    %c2_349 = arith.constant 2 : index
    %c0_350 = arith.constant 0 : index
    %c0_351 = arith.constant 0 : index
    %518 = vector.load %arg6[%c2_349, %c0_350, %c0_351] : memref<3x32x32xf32, #tpu.memory_space<vmem>>, vector<1x32x32xf32>
    %519 = vector.shape_cast %518 : vector<1x32x32xf32> to vector<32x32xf32>
    %cst_352 = arith.constant dense<0.000000e+00> : vector<8x32xf32>
    %520 = tpu.matmul %445, %519, %cst_352 {dimension_numbers = #tpu.dot_dimension_numbers<[1], [0], [0], [1], [0, 0, 1, 1], [], []>} : vector<8x32xf32>, vector<32x32xf32>, vector<8x32xf32> -> vector<8x32xf32>
    %521 = arith.addf %520, %31 : vector<8x32xf32>
    %522 = arith.mulf %500, %521 : vector<8x32xf32>
    %523 = arith.addf %517, %522 : vector<8x32xf32>
    %524 = math.tanh %523 : vector<8x32xf32>
    %525 = arith.subf %445, %524 : vector<8x32xf32>
    %526 = arith.mulf %513, %525 : vector<8x32xf32>
    %527 = arith.addf %524, %526 : vector<8x32xf32>
    %c6 = arith.constant 6 : index
    %c0_353 = arith.constant 0 : index
    %c0_354 = arith.constant 0 : index
    %528 = vector.load %arg0[%c6, %c0_353, %c0_354] : memref<7x8x16xf32, #tpu.memory_space<vmem>>, vector<1x8x16xf32>
    %529 = vector.shape_cast %528 : vector<1x8x16xf32> to vector<8x16xf32>
    %c0_355 = arith.constant 0 : index
    %c0_356 = arith.constant 0 : index
    %c0_357 = arith.constant 0 : index
    %530 = vector.load %arg2[%c0_355, %c0_356, %c0_357] : memref<3x16x32xf32, #tpu.memory_space<vmem>>, vector<1x16x32xf32>
    %531 = vector.shape_cast %530 : vector<1x16x32xf32> to vector<16x32xf32>
    %cst_358 = arith.constant dense<0.000000e+00> : vector<8x32xf32>
    %532 = tpu.matmul %529, %531, %cst_358 {dimension_numbers = #tpu.dot_dimension_numbers<[1], [0], [0], [1], [0, 0, 1, 1], [], []>} : vector<8x16xf32>, vector<16x32xf32>, vector<8x32xf32> -> vector<8x32xf32>
    %c0_359 = arith.constant 0 : index
    %c0_360 = arith.constant 0 : index
    %c0_361 = arith.constant 0 : index
    %533 = vector.load %arg3[%c0_359, %c0_360, %c0_361] : memref<3x32x32xf32, #tpu.memory_space<vmem>>, vector<1x32x32xf32>
    %534 = vector.shape_cast %533 : vector<1x32x32xf32> to vector<32x32xf32>
    %cst_362 = arith.constant dense<0.000000e+00> : vector<8x32xf32>
    %535 = tpu.matmul %487, %534, %cst_362 {dimension_numbers = #tpu.dot_dimension_numbers<[1], [0], [0], [1], [0, 0, 1, 1], [], []>} : vector<8x32xf32>, vector<32x32xf32>, vector<8x32xf32> -> vector<8x32xf32>
    %536 = arith.addf %532, %535 : vector<8x32xf32>
    %537 = arith.addf %536, %3 : vector<8x32xf32>
    %538 = arith.negf %537 : vector<8x32xf32>
    %539 = math.exp %538 : vector<8x32xf32>
    %cst_363 = arith.constant 1.000000e+00 : f32
    %540 = vector.broadcast %cst_363 : f32 to vector<8x32xf32>
    %541 = arith.addf %540, %539 : vector<8x32xf32>
    %542 = arith.divf %540, %541 : vector<8x32xf32>
    %c1_364 = arith.constant 1 : index
    %c0_365 = arith.constant 0 : index
    %c0_366 = arith.constant 0 : index
    %543 = vector.load %arg2[%c1_364, %c0_365, %c0_366] : memref<3x16x32xf32, #tpu.memory_space<vmem>>, vector<1x16x32xf32>
    %544 = vector.shape_cast %543 : vector<1x16x32xf32> to vector<16x32xf32>
    %cst_367 = arith.constant dense<0.000000e+00> : vector<8x32xf32>
    %545 = tpu.matmul %529, %544, %cst_367 {dimension_numbers = #tpu.dot_dimension_numbers<[1], [0], [0], [1], [0, 0, 1, 1], [], []>} : vector<8x16xf32>, vector<16x32xf32>, vector<8x32xf32> -> vector<8x32xf32>
    %c1_368 = arith.constant 1 : index
    %c0_369 = arith.constant 0 : index
    %c0_370 = arith.constant 0 : index
    %546 = vector.load %arg3[%c1_368, %c0_369, %c0_370] : memref<3x32x32xf32, #tpu.memory_space<vmem>>, vector<1x32x32xf32>
    %547 = vector.shape_cast %546 : vector<1x32x32xf32> to vector<32x32xf32>
    %cst_371 = arith.constant dense<0.000000e+00> : vector<8x32xf32>
    %548 = tpu.matmul %487, %547, %cst_371 {dimension_numbers = #tpu.dot_dimension_numbers<[1], [0], [0], [1], [0, 0, 1, 1], [], []>} : vector<8x32xf32>, vector<32x32xf32>, vector<8x32xf32> -> vector<8x32xf32>
    %549 = arith.addf %545, %548 : vector<8x32xf32>
    %550 = arith.addf %549, %7 : vector<8x32xf32>
    %551 = arith.negf %550 : vector<8x32xf32>
    %552 = math.exp %551 : vector<8x32xf32>
    %cst_372 = arith.constant 1.000000e+00 : f32
    %553 = vector.broadcast %cst_372 : f32 to vector<8x32xf32>
    %554 = arith.addf %553, %552 : vector<8x32xf32>
    %555 = arith.divf %553, %554 : vector<8x32xf32>
    %c2_373 = arith.constant 2 : index
    %c0_374 = arith.constant 0 : index
    %c0_375 = arith.constant 0 : index
    %556 = vector.load %arg2[%c2_373, %c0_374, %c0_375] : memref<3x16x32xf32, #tpu.memory_space<vmem>>, vector<1x16x32xf32>
    %557 = vector.shape_cast %556 : vector<1x16x32xf32> to vector<16x32xf32>
    %cst_376 = arith.constant dense<0.000000e+00> : vector<8x32xf32>
    %558 = tpu.matmul %529, %557, %cst_376 {dimension_numbers = #tpu.dot_dimension_numbers<[1], [0], [0], [1], [0, 0, 1, 1], [], []>} : vector<8x16xf32>, vector<16x32xf32>, vector<8x32xf32> -> vector<8x32xf32>
    %559 = arith.addf %558, %11 : vector<8x32xf32>
    %c2_377 = arith.constant 2 : index
    %c0_378 = arith.constant 0 : index
    %c0_379 = arith.constant 0 : index
    %560 = vector.load %arg3[%c2_377, %c0_378, %c0_379] : memref<3x32x32xf32, #tpu.memory_space<vmem>>, vector<1x32x32xf32>
    %561 = vector.shape_cast %560 : vector<1x32x32xf32> to vector<32x32xf32>
    %cst_380 = arith.constant dense<0.000000e+00> : vector<8x32xf32>
    %562 = tpu.matmul %487, %561, %cst_380 {dimension_numbers = #tpu.dot_dimension_numbers<[1], [0], [0], [1], [0, 0, 1, 1], [], []>} : vector<8x32xf32>, vector<32x32xf32>, vector<8x32xf32> -> vector<8x32xf32>
    %563 = arith.addf %562, %15 : vector<8x32xf32>
    %564 = arith.mulf %542, %563 : vector<8x32xf32>
    %565 = arith.addf %559, %564 : vector<8x32xf32>
    %566 = math.tanh %565 : vector<8x32xf32>
    %567 = arith.subf %487, %566 : vector<8x32xf32>
    %568 = arith.mulf %555, %567 : vector<8x32xf32>
    %569 = arith.addf %566, %568 : vector<8x32xf32>
    %c0_381 = arith.constant 0 : index
    %c0_382 = arith.constant 0 : index
    %c0_383 = arith.constant 0 : index
    %570 = vector.load %arg5[%c0_381, %c0_382, %c0_383] : memref<3x32x32xf32, #tpu.memory_space<vmem>>, vector<1x32x32xf32>
    %571 = vector.shape_cast %570 : vector<1x32x32xf32> to vector<32x32xf32>
    %cst_384 = arith.constant dense<0.000000e+00> : vector<8x32xf32>
    %572 = tpu.matmul %569, %571, %cst_384 {dimension_numbers = #tpu.dot_dimension_numbers<[1], [0], [0], [1], [0, 0, 1, 1], [], []>} : vector<8x32xf32>, vector<32x32xf32>, vector<8x32xf32> -> vector<8x32xf32>
    %c0_385 = arith.constant 0 : index
    %c0_386 = arith.constant 0 : index
    %c0_387 = arith.constant 0 : index
    %573 = vector.load %arg6[%c0_385, %c0_386, %c0_387] : memref<3x32x32xf32, #tpu.memory_space<vmem>>, vector<1x32x32xf32>
    %574 = vector.shape_cast %573 : vector<1x32x32xf32> to vector<32x32xf32>
    %cst_388 = arith.constant dense<0.000000e+00> : vector<8x32xf32>
    %575 = tpu.matmul %527, %574, %cst_388 {dimension_numbers = #tpu.dot_dimension_numbers<[1], [0], [0], [1], [0, 0, 1, 1], [], []>} : vector<8x32xf32>, vector<32x32xf32>, vector<8x32xf32> -> vector<8x32xf32>
    %576 = arith.addf %572, %575 : vector<8x32xf32>
    %577 = arith.addf %576, %19 : vector<8x32xf32>
    %578 = arith.negf %577 : vector<8x32xf32>
    %579 = math.exp %578 : vector<8x32xf32>
    %cst_389 = arith.constant 1.000000e+00 : f32
    %580 = vector.broadcast %cst_389 : f32 to vector<8x32xf32>
    %581 = arith.addf %580, %579 : vector<8x32xf32>
    %582 = arith.divf %580, %581 : vector<8x32xf32>
    %c1_390 = arith.constant 1 : index
    %c0_391 = arith.constant 0 : index
    %c0_392 = arith.constant 0 : index
    %583 = vector.load %arg5[%c1_390, %c0_391, %c0_392] : memref<3x32x32xf32, #tpu.memory_space<vmem>>, vector<1x32x32xf32>
    %584 = vector.shape_cast %583 : vector<1x32x32xf32> to vector<32x32xf32>
    %cst_393 = arith.constant dense<0.000000e+00> : vector<8x32xf32>
    %585 = tpu.matmul %569, %584, %cst_393 {dimension_numbers = #tpu.dot_dimension_numbers<[1], [0], [0], [1], [0, 0, 1, 1], [], []>} : vector<8x32xf32>, vector<32x32xf32>, vector<8x32xf32> -> vector<8x32xf32>
    %c1_394 = arith.constant 1 : index
    %c0_395 = arith.constant 0 : index
    %c0_396 = arith.constant 0 : index
    %586 = vector.load %arg6[%c1_394, %c0_395, %c0_396] : memref<3x32x32xf32, #tpu.memory_space<vmem>>, vector<1x32x32xf32>
    %587 = vector.shape_cast %586 : vector<1x32x32xf32> to vector<32x32xf32>
    %cst_397 = arith.constant dense<0.000000e+00> : vector<8x32xf32>
    %588 = tpu.matmul %527, %587, %cst_397 {dimension_numbers = #tpu.dot_dimension_numbers<[1], [0], [0], [1], [0, 0, 1, 1], [], []>} : vector<8x32xf32>, vector<32x32xf32>, vector<8x32xf32> -> vector<8x32xf32>
    %589 = arith.addf %585, %588 : vector<8x32xf32>
    %590 = arith.addf %589, %23 : vector<8x32xf32>
    %591 = arith.negf %590 : vector<8x32xf32>
    %592 = math.exp %591 : vector<8x32xf32>
    %cst_398 = arith.constant 1.000000e+00 : f32
    %593 = vector.broadcast %cst_398 : f32 to vector<8x32xf32>
    %594 = arith.addf %593, %592 : vector<8x32xf32>
    %595 = arith.divf %593, %594 : vector<8x32xf32>
    %c2_399 = arith.constant 2 : index
    %c0_400 = arith.constant 0 : index
    %c0_401 = arith.constant 0 : index
    %596 = vector.load %arg5[%c2_399, %c0_400, %c0_401] : memref<3x32x32xf32, #tpu.memory_space<vmem>>, vector<1x32x32xf32>
    %597 = vector.shape_cast %596 : vector<1x32x32xf32> to vector<32x32xf32>
    %cst_402 = arith.constant dense<0.000000e+00> : vector<8x32xf32>
    %598 = tpu.matmul %569, %597, %cst_402 {dimension_numbers = #tpu.dot_dimension_numbers<[1], [0], [0], [1], [0, 0, 1, 1], [], []>} : vector<8x32xf32>, vector<32x32xf32>, vector<8x32xf32> -> vector<8x32xf32>
    %599 = arith.addf %598, %27 : vector<8x32xf32>
    %c2_403 = arith.constant 2 : index
    %c0_404 = arith.constant 0 : index
    %c0_405 = arith.constant 0 : index
    %600 = vector.load %arg6[%c2_403, %c0_404, %c0_405] : memref<3x32x32xf32, #tpu.memory_space<vmem>>, vector<1x32x32xf32>
    %601 = vector.shape_cast %600 : vector<1x32x32xf32> to vector<32x32xf32>
    %cst_406 = arith.constant dense<0.000000e+00> : vector<8x32xf32>
    %602 = tpu.matmul %527, %601, %cst_406 {dimension_numbers = #tpu.dot_dimension_numbers<[1], [0], [0], [1], [0, 0, 1, 1], [], []>} : vector<8x32xf32>, vector<32x32xf32>, vector<8x32xf32> -> vector<8x32xf32>
    %603 = arith.addf %602, %31 : vector<8x32xf32>
    %604 = arith.mulf %582, %603 : vector<8x32xf32>
    %605 = arith.addf %599, %604 : vector<8x32xf32>
    %606 = math.tanh %605 : vector<8x32xf32>
    %607 = arith.subf %527, %606 : vector<8x32xf32>
    %608 = arith.mulf %595, %607 : vector<8x32xf32>
    %609 = arith.addf %606, %608 : vector<8x32xf32>
    %610 = vector.shape_cast %117 : vector<8x32xf32> to vector<1x8x32xf32>
    %611 = vector.shape_cast %199 : vector<8x32xf32> to vector<1x8x32xf32>
    %612 = vector.shape_cast %281 : vector<8x32xf32> to vector<1x8x32xf32>
    %613 = vector.shape_cast %363 : vector<8x32xf32> to vector<1x8x32xf32>
    %614 = vector.shape_cast %445 : vector<8x32xf32> to vector<1x8x32xf32>
    %615 = vector.shape_cast %527 : vector<8x32xf32> to vector<1x8x32xf32>
    %616 = vector.shape_cast %609 : vector<8x32xf32> to vector<1x8x32xf32>
    %617 = tpu.concatenate %610, %611, %612, %613, %614, %615, %616 in 0 : vector<1x8x32xf32>, vector<1x8x32xf32>, vector<1x8x32xf32>, vector<1x8x32xf32>, vector<1x8x32xf32>, vector<1x8x32xf32>, vector<1x8x32xf32> -> vector<7x8x32xf32>
    %618 = vector.shape_cast %617 : vector<7x8x32xf32> to vector<56x32xf32>
    %c0_407 = arith.constant 0 : index
    %c0_408 = arith.constant 0 : index
    %619 = vector.load %arg8[%c0_407, %c0_408] : memref<32x128xf32, #tpu.memory_space<vmem>>, vector<32x128xf32>
    %cst_409 = arith.constant dense<0.000000e+00> : vector<56x128xf32>
    %620 = tpu.matmul %618, %619, %cst_409 {dimension_numbers = #tpu.dot_dimension_numbers<[1], [0], [0], [1], [0, 0, 1, 1], [], []>} : vector<56x32xf32>, vector<32x128xf32>, vector<56x128xf32> -> vector<56x128xf32>
    %c0_410 = arith.constant 0 : index
    %c0_411 = arith.constant 0 : index
    %621 = vector.load %arg9[%c0_410, %c0_411] : memref<1x128xf32, #tpu.memory_space<vmem>>, vector<1x128xf32>
    %622 = vector.broadcast %621 : vector<1x128xf32> to vector<56x128xf32>
    %623 = arith.addf %620, %622 : vector<56x128xf32>
    %624 = vector.shape_cast %623 : vector<56x128xf32> to vector<7x8x128xf32>
    %c0_412 = arith.constant 0 : index
    %c0_413 = arith.constant 0 : index
    %c0_414 = arith.constant 0 : index
    %625 = vector.load %arg10[%c0_412, %c0_413, %c0_414] : memref<7x8x128xf32, #tpu.memory_space<vmem>>, vector<7x8x128xf32>
    tpu.vector_store %arg10[%c0_412, %c0_413, %c0_414], %624 {strides = array<i32>} : memref<7x8x128xf32, #tpu.memory_space<vmem>>, vector<7x8x128xf32>,
    return
  }
}

</mosaic_0001>

<llo_original>
// kernel: tpu_custom_call.1
$region0: #{tpu_custom_call.1}
  #allocation0 [shape = 'u32[]', space=smem, size = 0x4, offset = 0x4, fixed_abs, tag = 'smem constant byte address 0x4 - core index']
  #allocation1 [shape = 'u32[144,128]{1,0:T(1,128)}', space=vmem, size = 0x12000, scoped, tag = 'internal scratch']
  %s0 = inlined_call_operand.hbm [shape: f32[7,8,16], index: 0, kind: input, shape index: {}]
  %s1 = inlined_call_operand.hbm [shape: f32[2,8,32], index: 1, kind: input, shape index: {}]
  %s2 = inlined_call_operand.hbm [shape: f32[3,16,32], index: 2, kind: input, shape index: {}]
  %s3 = inlined_call_operand.hbm [shape: f32[3,32,32], index: 3, kind: input, shape index: {}]
  %s4 = inlined_call_operand.vmem [shape: f32[4,1,32], index: 4, kind: input, shape index: {}]
  %s5 = inlined_call_operand.hbm [shape: f32[3,32,32], index: 5, kind: input, shape index: {}]
  %s6 = inlined_call_operand.hbm [shape: f32[3,32,32], index: 6, kind: input, shape index: {}]
  %s7 = inlined_call_operand.vmem [shape: f32[4,1,32], index: 7, kind: input, shape index: {}]
  %s8 = inlined_call_operand.hbm [shape: f32[32,128], index: 8, kind: input, shape index: {}]
  %s9 = inlined_call_operand.vmem [shape: f32[1,128], index: 9, kind: input, shape index: {}]
  %s10 = inlined_call_operand.hbm [shape: f32[7,8,128], index: 10, kind: output, shape index: {}]
  %s11 = sld [smem:[#allocation0]]
  $region78: #{tpu_custom_call.1} parent=0
    _
  %s13 = ssub.s32 1, %s11
  %s14 = scalar_select 0, %s13, %s11
  $region1: #{tpu_custom_call.1} parent=0
    #allocation2 [shape = 'u8[28672]{0}', space=vmem, size = 0x7000, scoped, tag = 'input window, operand 0, single buffered']
    #allocation3 [shape = 's32[1]{0}', space=sflag, size = 0x4, scoped, tag = 'scoped memory for tpu_custom_call.1']
    #allocation4 [shape = 's32[1]{0}', space=sflag, size = 0x4, scoped, tag = 'scoped memory for tpu_custom_call.1']
    #allocation5 [shape = 'u8[8192]{0}', space=vmem, size = 0x2000, scoped, tag = 'input window, operand 1, single buffered']
    #allocation6 [shape = 's32[1]{0}', space=sflag, size = 0x4, scoped, tag = 'scoped memory for tpu_custom_call.1']
    #allocation7 [shape = 'u8[24576]{0}', space=vmem, size = 0x6000, scoped, tag = 'input window, operand 2, single buffered']
    #allocation8 [shape = 'u8[49152]{0}', space=vmem, size = 0xc000, scoped, tag = 'input window, operand 3, single buffered']
    #allocation9 [shape = 's32[1]{0}', space=sflag, size = 0x4, scoped, tag = 'scoped memory for tpu_custom_call.1']
    #allocation10 [shape = 'u8[49152]{0}', space=vmem, size = 0xc000, scoped, tag = 'input window, operand 5, single buffered']
    #allocation11 [shape = 'u8[49152]{0}', space=vmem, size = 0xc000, scoped, tag = 'input window, operand 6, single buffered']
    #allocation12 [shape = 's32[1]{0}', space=sflag, size = 0x4, scoped, tag = 'scoped memory for tpu_custom_call.1']
    #allocation13 [shape = 'u8[16384]{0}', space=vmem, size = 0x4000, scoped, tag = 'input window, operand 8, single buffered']
    #allocation14 [shape = 'u8[28672]{0}', space=vmem, size = 0x7000, scoped, tag = 'output window, operand 0, single buffered']
    %15 = vsyncpa [#allocation3], 0
    %16 = vsyncpa [#allocation6], 0
    %17 = vsyncpa [#allocation9], 0
    %18 = vsyncpa [#allocation12], 0
    %19 = vsyncpa [#allocation4], 0
    // Predicated region
    $region2: #{tpu_custom_call.1} parent=1 // pred_check
      _
    $region3: #{tpu_custom_call.1} parent=1 // pred_check_branch
      %21 = sbr.rel (0) target = $region5
    $region4: #{tpu_custom_call.1} parent=1 // pred_region
      %s23 = ssub.s32 896, 896
      %24 = vsyncadd [#allocation3], %s23
      %s25 = sshll.u32 [#allocation2], 4
      %s26 = int_to_ptr.vmem [resolvable:$true] %s25
      %31 = dma.hbm_to_vmem [thread:$0]  %s0, 896, %s26, [#allocation3], 128, 128, 8
    $region5: #{tpu_custom_call.1} parent=1 // pred_fallthru
      _
    // Predicated region
    $region6: #{tpu_custom_call.1} parent=1 // pred_check
      _
    $region7: #{tpu_custom_call.1} parent=1 // pred_check_branch
      %33 = sbr.rel (0) target = $region9
    $region8: #{tpu_custom_call.1} parent=1 // pred_region
      %s35 = ssub.s32 256, 256
      %36 = vsyncadd [#allocation6], %s35
      %s37 = sshll.u32 [#allocation5], 4
      %s38 = int_to_ptr.vmem [resolvable:$true] %s37
      %43 = dma.hbm_to_vmem [thread:$0]  %s1, 256, %s38, [#allocation6], 128, 128, 8
    $region9: #{tpu_custom_call.1} parent=1 // pred_fallthru
      _
    // Predicated region
    $region10: #{tpu_custom_call.1} parent=1 // pred_check
      _
    $region11: #{tpu_custom_call.1} parent=1 // pred_check_branch
      %45 = sbr.rel (0) target = $region13
    $region12: #{tpu_custom_call.1} parent=1 // pred_region
      %s47 = ssub.s32 768, 768
      %48 = vsyncadd [#allocation6], %s47
      %s49 = sshll.u32 [#allocation7], 4
      %s50 = int_to_ptr.vmem [resolvable:$true] %s49
      %55 = dma.hbm_to_vmem [thread:$0]  %s2, 768, %s50, [#allocation6], 128, 128, 8
    $region13: #{tpu_custom_call.1} parent=1 // pred_fallthru
      _
    // Predicated region
    $region14: #{tpu_custom_call.1} parent=1 // pred_check
      _
    $region15: #{tpu_custom_call.1} parent=1 // pred_check_branch
      %57 = sbr.rel (0) target = $region17
    $region16: #{tpu_custom_call.1} parent=1 // pred_region
      %s59 = ssub.s32 1536, 1536
      %60 = vsyncadd [#allocation9], %s59
      %s61 = sshll.u32 [#allocation8], 4
      %s62 = int_to_ptr.vmem [resolvable:$true] %s61
      %67 = dma.hbm_to_vmem [thread:$0]  %s3, 1536, %s62, [#allocation9], 128, 128, 8
    $region17: #{tpu_custom_call.1} parent=1 // pred_fallthru
      _
    // Predicated region
    $region18: #{tpu_custom_call.1} parent=1 // pred_check
      _
    $region19: #{tpu_custom_call.1} parent=1 // pred_check_branch
      %69 = sbr.rel (0) target = $region21
    $region20: #{tpu_custom_call.1} parent=1 // pred_region
      _
    $region21: #{tpu_custom_call.1} parent=1 // pred_fallthru
      _
    // Predicated region
    $region22: #{tpu_custom_call.1} parent=1 // pred_check
      _
    $region23: #{tpu_custom_call.1} parent=1 // pred_check_branch
      %71 = sbr.rel (0) target = $region25
    $region24: #{tpu_custom_call.1} parent=1 // pred_region
      %s73 = ssub.s32 1536, 1536
      %74 = vsyncadd [#allocation9], %s73
      %s75 = sshll.u32 [#allocation10], 4
      %s76 = int_to_ptr.vmem [resolvable:$true] %s75
      %81 = dma.hbm_to_vmem [thread:$0]  %s5, 1536, %s76, [#allocation9], 128, 128, 8
    $region25: #{tpu_custom_call.1} parent=1 // pred_fallthru
      _
    // Predicated region
    $region26: #{tpu_custom_call.1} parent=1 // pred_check
      _
    $region27: #{tpu_custom_call.1} parent=1 // pred_check_branch
      %83 = sbr.rel (0) target = $region29
    $region28: #{tpu_custom_call.1} parent=1 // pred_region
      %s85 = ssub.s32 1536, 1536
      %86 = vsyncadd [#allocation12], %s85
      %s87 = sshll.u32 [#allocation11], 4
      %s88 = int_to_ptr.vmem [resolvable:$true] %s87
      %93 = dma.hbm_to_vmem [thread:$0]  %s6, 1536, %s88, [#allocation12], 128, 128, 8
    $region29: #{tpu_custom_call.1} parent=1 // pred_fallthru
      _
    // Predicated region
    $region30: #{tpu_custom_call.1} parent=1 // pred_check
      _
    $region31: #{tpu_custom_call.1} parent=1 // pred_check_branch
      %95 = sbr.rel (0) target = $region33
    $region32: #{tpu_custom_call.1} parent=1 // pred_region
      _
    $region33: #{tpu_custom_call.1} parent=1 // pred_fallthru
      _
    // Predicated region
    $region34: #{tpu_custom_call.1} parent=1 // pred_check
      _
    $region35: #{tpu_custom_call.1} parent=1 // pred_check_branch
      %97 = sbr.rel (0) target = $region37
    $region36: #{tpu_custom_call.1} parent=1 // pred_region
      %s99 = ssub.s32 512, 512
      %100 = vsyncadd [#allocation12], %s99
      %s101 = sshll.u32 [#allocation13], 4
      %s102 = int_to_ptr.vmem [resolvable:$true] %s101
      %107 = dma.hbm_to_vmem [thread:$0]  %s8, 512, %s102, [#allocation12], 128, 128, 8
    $region37: #{tpu_custom_call.1} parent=1 // pred_fallthru
      _
    // Predicated region
    $region38: #{tpu_custom_call.1} parent=1 // pred_check
      _
    $region39: #{tpu_custom_call.1} parent=1 // pred_check_branch
      %109 = sbr.rel (0) target = $region41
    $region40: #{tpu_custom_call.1} parent=1 // pred_region
      _
    $region41: #{tpu_custom_call.1} parent=1 // pred_fallthru
      _
    // Predicated region
    $region42: #{tpu_custom_call.1} parent=1 // pred_check
      _
    $region43: #{tpu_custom_call.1} parent=1 // pred_check_branch
      %111 = sbr.rel (0) target = $region45
    $region44: #{tpu_custom_call.1} parent=1 // pred_region
      %112 = dma.done [#allocation3], 896
    $region45: #{tpu_custom_call.1} parent=1 // pred_fallthru
      _
    // Predicated region
    $region46: #{tpu_custom_call.1} parent=1 // pred_check
      _
    $region47: #{tpu_custom_call.1} parent=1 // pred_check_branch
      %114 = sbr.rel (0) target = $region49
    $region48: #{tpu_custom_call.1} parent=1 // pred_region
      %115 = dma.done [#allocation6], 256
    $region49: #{tpu_custom_call.1} parent=1 // pred_fallthru
      _
    // Predicated region
    $region50: #{tpu_custom_call.1} parent=1 // pred_check
      _
    $region51: #{tpu_custom_call.1} parent=1 // pred_check_branch
      %117 = sbr.rel (0) target = $region53
    $region52: #{tpu_custom_call.1} parent=1 // pred_region
      %118 = dma.done [#allocation6], 768
    $region53: #{tpu_custom_call.1} parent=1 // pred_fallthru
      _
    // Predicated region
    $region54: #{tpu_custom_call.1} parent=1 // pred_check
      _
    $region55: #{tpu_custom_call.1} parent=1 // pred_check_branch
      %120 = sbr.rel (0) target = $region57
    $region56: #{tpu_custom_call.1} parent=1 // pred_region
      %121 = dma.done [#allocation9], 1536
    $region57: #{tpu_custom_call.1} parent=1 // pred_fallthru
      _
    // Predicated region
    $region58: #{tpu_custom_call.1} parent=1 // pred_check
      _
    $region59: #{tpu_custom_call.1} parent=1 // pred_check_branch
      %123 = sbr.rel (0) target = $region61
    $region60: #{tpu_custom_call.1} parent=1 // pred_region
      %124 = dma.done [#allocation9], 1536
    $region61: #{tpu_custom_call.1} parent=1 // pred_fallthru
      _
    // Predicated region
    $region62: #{tpu_custom_call.1} parent=1 // pred_check
      _
    $region63: #{tpu_custom_call.1} parent=1 // pred_check_branch
      %126 = sbr.rel (0) target = $region65
    $region64: #{tpu_custom_call.1} parent=1 // pred_region
      %127 = dma.done [#allocation12], 1536
    $region65: #{tpu_custom_call.1} parent=1 // pred_fallthru
      _
    // Predicated region
    $region66: #{tpu_custom_call.1} parent=1 // pred_check
      _
    $region67: #{tpu_custom_call.1} parent=1 // pred_check_branch
      %129 = sbr.rel (0) target = $region69
    $region68: #{tpu_custom_call.1} parent=1 // pred_region
      %130 = dma.done [#allocation12], 512
    $region69: #{tpu_custom_call.1} parent=1 // pred_fallthru
      _
    %v131 = vld [vmem:[%s4] sm:$0x1]
    %v133 = vlaneseq
    %v134 = vshrl.u32 %v133, 7
    %v135 = vsub.s32 0, %v134
    %v136 = vrot.slane %v131, %v135
    %s138 = scalar_lea.vmem %s4, 1
    %v139 = vld [vmem:[%s138] sm:$0x1]
    %v141 = vlaneseq
    %v142 = vshrl.u32 %v141, 7
    %v143 = vsub.s32 0, %v142
    %v144 = vrot.slane %v139, %v143
    %s146 = scalar_lea.vmem %s4, 2
    %v147 = vld [vmem:[%s146] sm:$0x1]
    %v149 = vlaneseq
    %v150 = vshrl.u32 %v149, 7
    %v151 = vsub.s32 0, %v150
    %v152 = vrot.slane %v147, %v151
    %s154 = scalar_lea.vmem %s4, 3
    %v155 = vld [vmem:[%s154] sm:$0x1]
    %v157 = vlaneseq
    %v158 = vshrl.u32 %v157, 7
    %v159 = vsub.s32 0, %v158
    %v160 = vrot.slane %v155, %v159
    %v162 = vld [vmem:[%s7] sm:$0x1]
    %v164 = vlaneseq
    %v165 = vshrl.u32 %v164, 7
    %v166 = vsub.s32 0, %v165
    %v167 = vrot.slane %v162, %v166
    %s169 = scalar_lea.vmem %s7, 1
    %v170 = vld [vmem:[%s169] sm:$0x1]
    %v172 = vlaneseq
    %v173 = vshrl.u32 %v172, 7
    %v174 = vsub.s32 0, %v173
    %v175 = vrot.slane %v170, %v174
    %s177 = scalar_lea.vmem %s7, 2
    %v178 = vld [vmem:[%s177] sm:$0x1]
    %v180 = vlaneseq
    %v181 = vshrl.u32 %v180, 7
    %v182 = vsub.s32 0, %v181
    %v183 = vrot.slane %v178, %v182
    %s185 = scalar_lea.vmem %s7, 3
    %v186 = vld [vmem:[%s185] sm:$0x1]
    %v188 = vlaneseq
    %v189 = vshrl.u32 %v188, 7
    %v190 = vsub.s32 0, %v189
    %v191 = vrot.slane %v186, %v190
    %v193 = vld [vmem:[#allocation5] sm:$0xff]
    %s194 = scalar_lea.vmem [#allocation5], 8
    %v195 = vld [vmem:[%s194] sm:$0xff]
    %v196 = vld [vmem:[#allocation2] sm:$0xff]
    %v197 = vld [vmem:[#allocation7] sm:$0xff]
    %v198 = vld [vmem:[#allocation7 + $0x8] sm:$0xff]
    %v199 = vld [vmem:[#allocation8] sm:$0xff]
    %v200 = vld [vmem:[#allocation8 + $0x8] sm:$0xff]
    %v201 = vld [vmem:[#allocation8 + $0x10] sm:$0xff]
    %v202 = vld [vmem:[#allocation8 + $0x18] sm:$0xff]
    %vm203 = vcmask 261120
    %v205 = vsel %vm203, %v193, 0
    %207 = vmatprep.subr.mxu0 0.0
    %208 = vmatpush1.msra.mxu0 %v199
    %209 = vmatprep.subr.mxu0 0.0
    %210 = vmatpush1.msra.mxu0 %v200
    %211 = vmatprep.subr.mxu0 0.0
    %212 = vmatpush1.msra.mxu0 %v201
    %213 = vmatprep.subr.mxu0 0.0
    %214 = vmatpush1.msra.mxu0 %v202
    %215 = vmatprep.subr.mxu0 0.0
    %216 = vmatpush1.msra.mxu0 0.0
    %217 = vmatprep.subr.mxu0 0.0
    %218 = vmatpush1.msra.mxu0 0.0
    %219 = vmatprep.subr.mxu0 0.0
    %220 = vmatpush1.msra.mxu0 0.0
    %221 = vmatprep.subr.mxu0 0.0
    %222 = vmatpush1.msra.mxu0 0.0
    %223 = vmatprep.subr.mxu0 0.0
    %224 = vmatpush1.msra.mxu0 0.0
    %225 = vmatprep.subr.mxu0 0.0
    %226 = vmatpush1.msra.mxu0 0.0
    %227 = vmatprep.subr.mxu0 0.0
    %228 = vmatpush1.msra.mxu0 0.0
    %229 = vmatprep.subr.mxu0 0.0
    %230 = vmatpush1.msra.mxu0 0.0
    %231 = vmatprep.subr.mxu0 0.0
    %232 = vmatpush1.msra.mxu0 0.0
    %233 = vmatprep.subr.mxu0 0.0
    %234 = vmatpush1.msra.mxu0 0.0
    %235 = vmatprep.subr.mxu0 0.0
    %236 = vmatpush1.msra.mxu0 0.0
    %237 = vmatprep.subr.mxu0 0.0
    %238 = vmatpush1.msra.mxu0 0.0
    %239 = vmatprep.subr.mxu0 0.0
    %240 = vmatpush1.msra.mxu0 0.0
    %241 = vmatprep.subr.mxu0 0.0
    %242 = vmatpush1.msra.mxu0 0.0
    %243 = vmatprep.subr.mxu0 0.0
    %244 = vmatpush1.msra.mxu0 0.0
    %245 = vmatprep.subr.mxu0 0.0
    %246 = vmatpush1.msra.mxu0 0.0
    %247 = vmatprep.subr.mxu0 0.0
    %248 = vmatpush1.msra.mxu0 0.0
    %249 = vmatprep.subr.mxu0 0.0
    %250 = vmatpush1.msra.mxu0 0.0
    %251 = vmatprep.subr.mxu0 0.0
    %252 = vmatpush1.msra.mxu0 0.0
    %253 = vmatprep.subr.mxu0 0.0
    %254 = vmatpush1.msra.mxu0 0.0
    %255 = vmatprep.subr.mxu0 0.0
    %256 = vmatpush1.msra.mxu0 0.0
    %257 = vmatprep.subr.mxu0 0.0
    %258 = vmatpush1.msra.mxu0 0.0
    %259 = vmatprep.subr.mxu0 0.0
    %260 = vmatpush1.msra.mxu0 0.0
    %261 = vmatprep.subr.mxu0 0.0
    %262 = vmatpush1.msra.mxu0 0.0
    %263 = vmatprep.subr.mxu0 0.0
    %264 = vmatpush1.msra.mxu0 0.0
    %265 = vmatprep.subr.mxu0 0.0
    %266 = vmatpush1.msra.mxu0 0.0
    %267 = vmatprep.subr.mxu0 0.0
    %268 = vmatpush1.msra.mxu0 0.0
    %269 = vmatprep.subr.mxu0 0.0
    %270 = vmatpush1.msra.mxu0 0.0
    %271 = vmatprep.mubr.f32.mxu0 0.0
    %272 = vmatmul.mubr.f32.gmra.mrb[0].mxu0 %v205
    %v273 = vpop.f32.mrb[0].mxu0
    %v274 = vadd.f32 0.0, %v273
    %v275 = vpop.f32.mrb[0].mxu0
    %276 = vdwg.mxu0
    %vm277 = vcmask 130048
    %v279 = vsel %vm277, %v196, 0
    %281 = vmatprep.subr.mxu0 0.0
    %282 = vmatpush1.msra.mxu0 %v197
    %283 = vmatprep.subr.mxu0 0.0
    %284 = vmatpush1.msra.mxu0 %v198
    %285 = vmatprep.subr.mxu0 0.0
    %286 = vmatpush1.msra.mxu0 0.0
    %287 = vmatprep.subr.mxu0 0.0
    %288 = vmatpush1.msra.mxu0 0.0
    %289 = vmatprep.subr.mxu0 0.0
    %290 = vmatpush1.msra.mxu0 0.0
    %291 = vmatprep.subr.mxu0 0.0
    %292 = vmatpush1.msra.mxu0 0.0
    %293 = vmatprep.subr.mxu0 0.0
    %294 = vmatpush1.msra.mxu0 0.0
    %295 = vmatprep.subr.mxu0 0.0
    %296 = vmatpush1.msra.mxu0 0.0
    %297 = vmatprep.subr.mxu0 0.0
    %298 = vmatpush1.msra.mxu0 0.0
    %299 = vmatprep.subr.mxu0 0.0
    %300 = vmatpush1.msra.mxu0 0.0
    %301 = vmatprep.subr.mxu0 0.0
    %302 = vmatpush1.msra.mxu0 0.0
    %303 = vmatprep.subr.mxu0 0.0
    %304 = vmatpush1.msra.mxu0 0.0
    %305 = vmatprep.subr.mxu0 0.0
    %306 = vmatpush1.msra.mxu0 0.0
    %307 = vmatprep.subr.mxu0 0.0
    %308 = vmatpush1.msra.mxu0 0.0
    %309 = vmatprep.subr.mxu0 0.0
    %310 = vmatpush1.msra.mxu0 0.0
    %311 = vmatprep.subr.mxu0 0.0
    %312 = vmatpush1.msra.mxu0 0.0
    %313 = vmatprep.subr.mxu0 0.0
    %314 = vmatpush1.msra.mxu0 0.0
    %315 = vmatprep.subr.mxu0 0.0
    %316 = vmatpush1.msra.mxu0 0.0
    %317 = vmatprep.subr.mxu0 0.0
    %318 = vmatpush1.msra.mxu0 0.0
    %319 = vmatprep.subr.mxu0 0.0
    %320 = vmatpush1.msra.mxu0 0.0
    %321 = vmatprep.subr.mxu0 0.0
    %322 = vmatpush1.msra.mxu0 0.0
    %323 = vmatprep.subr.mxu0 0.0
    %324 = vmatpush1.msra.mxu0 0.0
    %325 = vmatprep.subr.mxu0 0.0
    %326 = vmatpush1.msra.mxu0 0.0
    %327 = vmatprep.subr.mxu0 0.0
    %328 = vmatpush1.msra.mxu0 0.0
    %329 = vmatprep.subr.mxu0 0.0
    %330 = vmatpush1.msra.mxu0 0.0
    %331 = vmatprep.subr.mxu0 0.0
    %332 = vmatpush1.msra.mxu0 0.0
    %333 = vmatprep.subr.mxu0 0.0
    %334 = vmatpush1.msra.mxu0 0.0
    %335 = vmatprep.subr.mxu0 0.0
    %336 = vmatpush1.msra.mxu0 0.0
    %337 = vmatprep.subr.mxu0 0.0
    %338 = vmatpush1.msra.mxu0 0.0
    %339 = vmatprep.subr.mxu0 0.0
    %340 = vmatpush1.msra.mxu0 0.0
    %341 = vmatprep.subr.mxu0 0.0
    %342 = vmatpush1.msra.mxu0 0.0
    %343 = vmatprep.subr.mxu0 0.0
    %344 = vmatpush1.msra.mxu0 0.0
    %345 = vmatprep.mubr.f32.mxu0 0.0
    %346 = vmatmul.mubr.f32.gmra.mrb[0].mxu0 %v279
    %v347 = vpop.f32.mrb[0].mxu0
    %v348 = vadd.f32 %v274, %v347
    %v349 = vpop.f32.mrb[0].mxu0
    %350 = vdwg.mxu0
    %v351 = vadd.f32 %v348, %v136
    %v352 = vxor.u32 %v351, 2147483648
    %v353 = vmul.f32 %v352, 1.442695
    %v354 = vpow.pop %v353
    %v355 = vadd.f32 %v354, 1.0
    %v356 = vrcp.pop %v355
    %v357 = vmul.f32 1.0, %v356
    %s358 = scalar_lea.vmem [#allocation7], 16
    %v359 = vld [vmem:[%s358] sm:$0xff]
    %v360 = vld [vmem:[%s358 + $0x8] sm:$0xff]
    %s361 = scalar_lea.vmem [#allocation8], 32
    %v362 = vld [vmem:[%s361] sm:$0xff]
    %v363 = vld [vmem:[%s361 + $0x8] sm:$0xff]
    %v364 = vld [vmem:[%s361 + $0x10] sm:$0xff]
    %v365 = vld [vmem:[%s361 + $0x18] sm:$0xff]
    %366 = vmatprep.subr.mxu0 0.0
    %367 = vmatpush1.msra.mxu0 %v362
    %368 = vmatprep.subr.mxu0 0.0
    %369 = vmatpush1.msra.mxu0 %v363
    %370 = vmatprep.subr.mxu0 0.0
    %371 = vmatpush1.msra.mxu0 %v364
    %372 = vmatprep.subr.mxu0 0.0
    %373 = vmatpush1.msra.mxu0 %v365
    %374 = vmatprep.subr.mxu0 0.0
    %375 = vmatpush1.msra.mxu0 0.0
    %376 = vmatprep.subr.mxu0 0.0
    %377 = vmatpush1.msra.mxu0 0.0
    %378 = vmatprep.subr.mxu0 0.0
    %379 = vmatpush1.msra.mxu0 0.0
    %380 = vmatprep.subr.mxu0 0.0
    %381 = vmatpush1.msra.mxu0 0.0
    %382 = vmatprep.subr.mxu0 0.0
    %383 = vmatpush1.msra.mxu0 0.0
    %384 = vmatprep.subr.mxu0 0.0
    %385 = vmatpush1.msra.mxu0 0.0
    %386 = vmatprep.subr.mxu0 0.0
    %387 = vmatpush1.msra.mxu0 0.0
    %388 = vmatprep.subr.mxu0 0.0
    %389 = vmatpush1.msra.mxu0 0.0
    %390 = vmatprep.subr.mxu0 0.0
    %391 = vmatpush1.msra.mxu0 0.0
    %392 = vmatprep.subr.mxu0 0.0
    %393 = vmatpush1.msra.mxu0 0.0
    %394 = vmatprep.subr.mxu0 0.0
    %395 = vmatpush1.msra.mxu0 0.0
    %396 = vmatprep.subr.mxu0 0.0
    %397 = vmatpush1.msra.mxu0 0.0
    %398 = vmatprep.subr.mxu0 0.0
    %399 = vmatpush1.msra.mxu0 0.0
    %400 = vmatprep.subr.mxu0 0.0
    %401 = vmatpush1.msra.mxu0 0.0
    %402 = vmatprep.subr.mxu0 0.0
    %403 = vmatpush1.msra.mxu0 0.0
    %404 = vmatprep.subr.mxu0 0.0
    %405 = vmatpush1.msra.mxu0 0.0
    %406 = vmatprep.subr.mxu0 0.0
    %407 = vmatpush1.msra.mxu0 0.0
    %408 = vmatprep.subr.mxu0 0.0
    %409 = vmatpush1.msra.mxu0 0.0
    %410 = vmatprep.subr.mxu0 0.0
    %411 = vmatpush1.msra.mxu0 0.0
    %412 = vmatprep.subr.mxu0 0.0
    %413 = vmatpush1.msra.mxu0 0.0
    %414 = vmatprep.subr.mxu0 0.0
    %415 = vmatpush1.msra.mxu0 0.0
    %416 = vmatprep.subr.mxu0 0.0
    %417 = vmatpush1.msra.mxu0 0.0
    %418 = vmatprep.subr.mxu0 0.0
    %419 = vmatpush1.msra.mxu0 0.0
    %420 = vmatprep.subr.mxu0 0.0
    %421 = vmatpush1.msra.mxu0 0.0
    %422 = vmatprep.subr.mxu0 0.0
    %423 = vmatpush1.msra.mxu0 0.0
    %424 = vmatprep.subr.mxu0 0.0
    %425 = vmatpush1.msra.mxu0 0.0
    %426 = vmatprep.subr.mxu0 0.0
    %427 = vmatpush1.msra.mxu0 0.0
    %428 = vmatprep.subr.mxu0 0.0
    %429 = vmatpush1.msra.mxu0 0.0
    %430 = vmatprep.mubr.f32.mxu0 0.0
    %431 = vmatmul.mubr.f32.gmra.mrb[0].mxu0 %v205
    %v432 = vpop.f32.mrb[0].mxu0
    %v433 = vadd.f32 0.0, %v432
    %v434 = vpop.f32.mrb[0].mxu0
    %435 = vdwg.mxu0
    %436 = vmatprep.subr.mxu0 0.0
    %437 = vmatpush1.msra.mxu0 %v359
    %438 = vmatprep.subr.mxu0 0.0
    %439 = vmatpush1.msra.mxu0 %v360
    %440 = vmatprep.subr.mxu0 0.0
    %441 = vmatpush1.msra.mxu0 0.0
    %442 = vmatprep.subr.mxu0 0.0
    %443 = vmatpush1.msra.mxu0 0.0
    %444 = vmatprep.subr.mxu0 0.0
    %445 = vmatpush1.msra.mxu0 0.0
    %446 = vmatprep.subr.mxu0 0.0
    %447 = vmatpush1.msra.mxu0 0.0
    %448 = vmatprep.subr.mxu0 0.0
    %449 = vmatpush1.msra.mxu0 0.0
    %450 = vmatprep.subr.mxu0 0.0
    %451 = vmatpush1.msra.mxu0 0.0
    %452 = vmatprep.subr.mxu0 0.0
    %453 = vmatpush1.msra.mxu0 0.0
    %454 = vmatprep.subr.mxu0 0.0
    %455 = vmatpush1.msra.mxu0 0.0
    %456 = vmatprep.subr.mxu0 0.0
    %457 = vmatpush1.msra.mxu0 0.0
    %458 = vmatprep.subr.mxu0 0.0
    %459 = vmatpush1.msra.mxu0 0.0
    %460 = vmatprep.subr.mxu0 0.0
    %461 = vmatpush1.msra.mxu0 0.0
    %462 = vmatprep.subr.mxu0 0.0
    %463 = vmatpush1.msra.mxu0 0.0
    %464 = vmatprep.subr.mxu0 0.0
    %465 = vmatpush1.msra.mxu0 0.0
    %466 = vmatprep.subr.mxu0 0.0
    %467 = vmatpush1.msra.mxu0 0.0
    %468 = vmatprep.subr.mxu0 0.0
    %469 = vmatpush1.msra.mxu0 0.0
    %470 = vmatprep.subr.mxu0 0.0
    %471 = vmatpush1.msra.mxu0 0.0
    %472 = vmatprep.subr.mxu0 0.0
    %473 = vmatpush1.msra.mxu0 0.0
    %474 = vmatprep.subr.mxu0 0.0
    %475 = vmatpush1.msra.mxu0 0.0
    %476 = vmatprep.subr.mxu0 0.0
    %477 = vmatpush1.msra.mxu0 0.0
    %478 = vmatprep.subr.mxu0 0.0
    %479 = vmatpush1.msra.mxu0 0.0
    %480 = vmatprep.subr.mxu0 0.0
    %481 = vmatpush1.msra.mxu0 0.0
    %482 = vmatprep.subr.mxu0 0.0
    %483 = vmatpush1.msra.mxu0 0.0
    %484 = vmatprep.subr.mxu0 0.0
    %485 = vmatpush1.msra.mxu0 0.0
    %486 = vmatprep.subr.mxu0 0.0
    %487 = vmatpush1.msra.mxu0 0.0
    %488 = vmatprep.subr.mxu0 0.0
    %489 = vmatpush1.msra.mxu0 0.0
    %490 = vmatprep.subr.mxu0 0.0
    %491 = vmatpush1.msra.mxu0 0.0
    %492 = vmatprep.subr.mxu0 0.0
    %493 = vmatpush1.msra.mxu0 0.0
    %494 = vmatprep.subr.mxu0 0.0
    %495 = vmatpush1.msra.mxu0 0.0
    %496 = vmatprep.subr.mxu0 0.0
    %497 = vmatpush1.msra.mxu0 0.0
    %498 = vmatprep.subr.mxu0 0.0
    %499 = vmatpush1.msra.mxu0 0.0
    %500 = vmatprep.mubr.f32.mxu0 0.0
    %501 = vmatmul.mubr.f32.gmra.mrb[0].mxu0 %v279
    %v502 = vpop.f32.mrb[0].mxu0
    %v503 = vadd.f32 %v433, %v502
    %v504 = vpop.f32.mrb[0].mxu0
    %505 = vdwg.mxu0
    %v506 = vadd.f32 %v503, %v144
    %v507 = vxor.u32 %v506, 2147483648
    %v508 = vmul.f32 %v507, 1.442695
    %v509 = vpow.pop %v508
    %v510 = vadd.f32 %v509, 1.0
    %v511 = vrcp.pop %v510
    %v512 = vmul.f32 1.0, %v511
    %s513 = scalar_lea.vmem [#allocation7], 32
    %v514 = vld [vmem:[%s513] sm:$0xff]
    %v515 = vld [vmem:[%s513 + $0x8] sm:$0xff]
    %516 = vmatprep.subr.mxu0 0.0
    %517 = vmatpush1.msra.mxu0 %v514
    %518 = vmatprep.subr.mxu0 0.0
    %519 = vmatpush1.msra.mxu0 %v515
    %520 = vmatprep.subr.mxu0 0.0
    %521 = vmatpush1.msra.mxu0 0.0
    %522 = vmatprep.subr.mxu0 0.0
    %523 = vmatpush1.msra.mxu0 0.0
    %524 = vmatprep.subr.mxu0 0.0
    %525 = vmatpush1.msra.mxu0 0.0
    %526 = vmatprep.subr.mxu0 0.0
    %527 = vmatpush1.msra.mxu0 0.0
    %528 = vmatprep.subr.mxu0 0.0
    %529 = vmatpush1.msra.mxu0 0.0
    %530 = vmatprep.subr.mxu0 0.0
    %531 = vmatpush1.msra.mxu0 0.0
    %532 = vmatprep.subr.mxu0 0.0
    %533 = vmatpush1.msra.mxu0 0.0
    %534 = vmatprep.subr.mxu0 0.0
    %535 = vmatpush1.msra.mxu0 0.0
    %536 = vmatprep.subr.mxu0 0.0
    %537 = vmatpush1.msra.mxu0 0.0
    %538 = vmatprep.subr.mxu0 0.0
    %539 = vmatpush1.msra.mxu0 0.0
    %540 = vmatprep.subr.mxu0 0.0
    %541 = vmatpush1.msra.mxu0 0.0
    %542 = vmatprep.subr.mxu0 0.0
    %543 = vmatpush1.msra.mxu0 0.0
    %544 = vmatprep.subr.mxu0 0.0
    %545 = vmatpush1.msra.mxu0 0.0
    %546 = vmatprep.subr.mxu0 0.0
    %547 = vmatpush1.msra.mxu0 0.0
    %548 = vmatprep.subr.mxu0 0.0
    %549 = vmatpush1.msra.mxu0 0.0
    %550 = vmatprep.subr.mxu0 0.0
    %551 = vmatpush1.msra.mxu0 0.0
    %552 = vmatprep.subr.mxu0 0.0
    %553 = vmatpush1.msra.mxu0 0.0
    %554 = vmatprep.subr.mxu0 0.0
    %555 = vmatpush1.msra.mxu0 0.0
    %556 = vmatprep.subr.mxu0 0.0
    %557 = vmatpush1.msra.mxu0 0.0
    %558 = vmatprep.subr.mxu0 0.0
    %559 = vmatpush1.msra.mxu0 0.0
    %560 = vmatprep.subr.mxu0 0.0
    %561 = vmatpush1.msra.mxu0 0.0
    %562 = vmatprep.subr.mxu0 0.0
    %563 = vmatpush1.msra.mxu0 0.0
    %564 = vmatprep.subr.mxu0 0.0
    %565 = vmatpush1.msra.mxu0 0.0
    %566 = vmatprep.subr.mxu0 0.0
    %567 = vmatpush1.msra.mxu0 0.0
    %568 = vmatprep.subr.mxu0 0.0
    %569 = vmatpush1.msra.mxu0 0.0
    %570 = vmatprep.subr.mxu0 0.0
    %571 = vmatpush1.msra.mxu0 0.0
    %572 = vmatprep.subr.mxu0 0.0
    %573 = vmatpush1.msra.mxu0 0.0
    %574 = vmatprep.subr.mxu0 0.0
    %575 = vmatpush1.msra.mxu0 0.0
    %576 = vmatprep.subr.mxu0 0.0
    %577 = vmatpush1.msra.mxu0 0.0
    %578 = vmatprep.subr.mxu0 0.0
    %579 = vmatpush1.msra.mxu0 0.0
    %580 = vmatprep.mubr.f32.mxu0 0.0
    %581 = vmatmul.mubr.f32.gmra.mrb[0].mxu0 %v279
    %v582 = vpop.f32.mrb[0].mxu0
    %v583 = vadd.f32 %v152, %v582
    %v584 = vpop.f32.mrb[0].mxu0
    %585 = vdwg.mxu0
    %s586 = scalar_lea.vmem [#allocation8], 64
    %v587 = vld [vmem:[%s586] sm:$0xff]
    %v588 = vld [vmem:[%s586 + $0x8] sm:$0xff]
    %v589 = vld [vmem:[%s586 + $0x10] sm:$0xff]
    %v590 = vld [vmem:[%s586 + $0x18] sm:$0xff]
    %591 = vmatprep.subr.mxu0 0.0
    %592 = vmatpush1.msra.mxu0 %v587
    %593 = vmatprep.subr.mxu0 0.0
    %594 = vmatpush1.msra.mxu0 %v588
    %595 = vmatprep.subr.mxu0 0.0
    %596 = vmatpush1.msra.mxu0 %v589
    %597 = vmatprep.subr.mxu0 0.0
    %598 = vmatpush1.msra.mxu0 %v590
    %599 = vmatprep.subr.mxu0 0.0
    %600 = vmatpush1.msra.mxu0 0.0
    %601 = vmatprep.subr.mxu0 0.0
    %602 = vmatpush1.msra.mxu0 0.0
    %603 = vmatprep.subr.mxu0 0.0
    %604 = vmatpush1.msra.mxu0 0.0
    %605 = vmatprep.subr.mxu0 0.0
    %606 = vmatpush1.msra.mxu0 0.0
    %607 = vmatprep.subr.mxu0 0.0
    %608 = vmatpush1.msra.mxu0 0.0
    %609 = vmatprep.subr.mxu0 0.0
    %610 = vmatpush1.msra.mxu0 0.0
    %611 = vmatprep.subr.mxu0 0.0
    %612 = vmatpush1.msra.mxu0 0.0
    %613 = vmatprep.subr.mxu0 0.0
    %614 = vmatpush1.msra.mxu0 0.0
    %615 = vmatprep.subr.mxu0 0.0
    %616 = vmatpush1.msra.mxu0 0.0
    %617 = vmatprep.subr.mxu0 0.0
    %618 = vmatpush1.msra.mxu0 0.0
    %619 = vmatprep.subr.mxu0 0.0
    %620 = vmatpush1.msra.mxu0 0.0
    %621 = vmatprep.subr.mxu0 0.0
    %622 = vmatpush1.msra.mxu0 0.0
    %623 = vmatprep.subr.mxu0 0.0
    %624 = vmatpush1.msra.mxu0 0.0
    %625 = vmatprep.subr.mxu0 0.0
    %626 = vmatpush1.msra.mxu0 0.0
    %627 = vmatprep.subr.mxu0 0.0
    %628 = vmatpush1.msra.mxu0 0.0
    %629 = vmatprep.subr.mxu0 0.0
    %630 = vmatpush1.msra.mxu0 0.0
    %631 = vmatprep.subr.mxu0 0.0
    %632 = vmatpush1.msra.mxu0 0.0
    %633 = vmatprep.subr.mxu0 0.0
    %634 = vmatpush1.msra.mxu0 0.0
    %635 = vmatprep.subr.mxu0 0.0
    %636 = vmatpush1.msra.mxu0 0.0
    %637 = vmatprep.subr.mxu0 0.0
    %638 = vmatpush1.msra.mxu0 0.0
    %639 = vmatprep.subr.mxu0 0.0
    %640 = vmatpush1.msra.mxu0 0.0
    %641 = vmatprep.subr.mxu0 0.0
    %642 = vmatpush1.msra.mxu0 0.0
    %643 = vmatprep.subr.mxu0 0.0
    %644 = vmatpush1.msra.mxu0 0.0
    %645 = vmatprep.subr.mxu0 0.0
    %646 = vmatpush1.msra.mxu0 0.0
    %647 = vmatprep.subr.mxu0 0.0
    %648 = vmatpush1.msra.mxu0 0.0
    %649 = vmatprep.subr.mxu0 0.0
    %650 = vmatpush1.msra.mxu0 0.0
    %651 = vmatprep.subr.mxu0 0.0
    %652 = vmatpush1.msra.mxu0 0.0
    %653 = vmatprep.subr.mxu0 0.0
    %654 = vmatpush1.msra.mxu0 0.0
    %655 = vmatprep.mubr.f32.mxu0 0.0
    %656 = vmatmul.mubr.f32.gmra.mrb[0].mxu0 %v205
    %v657 = vpop.f32.mrb[0].mxu0
    %v658 = vadd.f32 %v160, %v657
    %v659 = vpop.f32.mrb[0].mxu0
    %660 = vdwg.mxu0
    %v661 = vmul.f32 %v357, %v658
    %v662 = vadd.f32 %v583, %v661
    %v663 = vtanh.pop %v662
    %v664 = vsub.f32 %v193, %v663
    %v665 = vmul.f32 %v512, %v664
    %v666 = vadd.f32 %v663, %v665
    %v667 = vld [vmem:[#allocation10] sm:$0xff]
    %v668 = vld [vmem:[#allocation10 + $0x8] sm:$0xff]
    %v669 = vld [vmem:[#allocation10 + $0x10] sm:$0xff]
    %v670 = vld [vmem:[#allocation10 + $0x18] sm:$0xff]
    %v671 = vld [vmem:[#allocation11] sm:$0xff]
    %v672 = vld [vmem:[#allocation11 + $0x8] sm:$0xff]
    %v673 = vld [vmem:[#allocation11 + $0x10] sm:$0xff]
    %v674 = vld [vmem:[#allocation11 + $0x18] sm:$0xff]
    %v676 = vsel %vm203, %v195, 0
    %678 = vmatprep.subr.mxu0 0.0
    %679 = vmatpush1.msra.mxu0 %v671
    %680 = vmatprep.subr.mxu0 0.0
    %681 = vmatpush1.msra.mxu0 %v672
    %682 = vmatprep.subr.mxu0 0.0
    %683 = vmatpush1.msra.mxu0 %v673
    %684 = vmatprep.subr.mxu0 0.0
    %685 = vmatpush1.msra.mxu0 %v674
    %686 = vmatprep.subr.mxu0 0.0
    %687 = vmatpush1.msra.mxu0 0.0
    %688 = vmatprep.subr.mxu0 0.0
    %689 = vmatpush1.msra.mxu0 0.0
    %690 = vmatprep.subr.mxu0 0.0
    %691 = vmatpush1.msra.mxu0 0.0
    %692 = vmatprep.subr.mxu0 0.0
    %693 = vmatpush1.msra.mxu0 0.0
    %694 = vmatprep.subr.mxu0 0.0
    %695 = vmatpush1.msra.mxu0 0.0
    %696 = vmatprep.subr.mxu0 0.0
    %697 = vmatpush1.msra.mxu0 0.0
    %698 = vmatprep.subr.mxu0 0.0
    %699 = vmatpush1.msra.mxu0 0.0
    %700 = vmatprep.subr.mxu0 0.0
    %701 = vmatpush1.msra.mxu0 0.0
    %702 = vmatprep.subr.mxu0 0.0
    %703 = vmatpush1.msra.mxu0 0.0
    %704 = vmatprep.subr.mxu0 0.0
    %705 = vmatpush1.msra.mxu0 0.0
    %706 = vmatprep.subr.mxu0 0.0
    %707 = vmatpush1.msra.mxu0 0.0
    %708 = vmatprep.subr.mxu0 0.0
    %709 = vmatpush1.msra.mxu0 0.0
    %710 = vmatprep.subr.mxu0 0.0
    %711 = vmatpush1.msra.mxu0 0.0
    %712 = vmatprep.subr.mxu0 0.0
    %713 = vmatpush1.msra.mxu0 0.0
    %714 = vmatprep.subr.mxu0 0.0
    %715 = vmatpush1.msra.mxu0 0.0
    %716 = vmatprep.subr.mxu0 0.0
    %717 = vmatpush1.msra.mxu0 0.0
    %718 = vmatprep.subr.mxu0 0.0
    %719 = vmatpush1.msra.mxu0 0.0
    %720 = vmatprep.subr.mxu0 0.0
    %721 = vmatpush1.msra.mxu0 0.0
    %722 = vmatprep.subr.mxu0 0.0
    %723 = vmatpush1.msra.mxu0 0.0
    %724 = vmatprep.subr.mxu0 0.0
    %725 = vmatpush1.msra.mxu0 0.0
    %726 = vmatprep.subr.mxu0 0.0
    %727 = vmatpush1.msra.mxu0 0.0
    %728 = vmatprep.subr.mxu0 0.0
    %729 = vmatpush1.msra.mxu0 0.0
    %730 = vmatprep.subr.mxu0 0.0
    %731 = vmatpush1.msra.mxu0 0.0
    %732 = vmatprep.subr.mxu0 0.0
    %733 = vmatpush1.msra.mxu0 0.0
    %734 = vmatprep.subr.mxu0 0.0
    %735 = vmatpush1.msra.mxu0 0.0
    %736 = vmatprep.subr.mxu0 0.0
    %737 = vmatpush1.msra.mxu0 0.0
    %738 = vmatprep.subr.mxu0 0.0
    %739 = vmatpush1.msra.mxu0 0.0
    %740 = vmatprep.subr.mxu0 0.0
    %741 = vmatpush1.msra.mxu0 0.0
    %742 = vmatprep.mubr.f32.mxu0 0.0
    %743 = vmatmul.mubr.f32.gmra.mrb[0].mxu0 %v676
    %v744 = vpop.f32.mrb[0].mxu0
    %v745 = vadd.f32 0.0, %v744
    %v746 = vpop.f32.mrb[0].mxu0
    %747 = vdwg.mxu0
    %v749 = vsel %vm203, %v666, 0
    %751 = vmatprep.subr.mxu0 0.0
    %752 = vmatpush1.msra.mxu0 %v667
    %753 = vmatprep.subr.mxu0 0.0
    %754 = vmatpush1.msra.mxu0 %v668
    %755 = vmatprep.subr.mxu0 0.0
    %756 = vmatpush1.msra.mxu0 %v669
    %757 = vmatprep.subr.mxu0 0.0
    %758 = vmatpush1.msra.mxu0 %v670
    %759 = vmatprep.subr.mxu0 0.0
    %760 = vmatpush1.msra.mxu0 0.0
    %761 = vmatprep.subr.mxu0 0.0
    %762 = vmatpush1.msra.mxu0 0.0
    %763 = vmatprep.subr.mxu0 0.0
    %764 = vmatpush1.msra.mxu0 0.0
    %765 = vmatprep.subr.mxu0 0.0
    %766 = vmatpush1.msra.mxu0 0.0
    %767 = vmatprep.subr.mxu0 0.0
    %768 = vmatpush1.msra.mxu0 0.0
    %769 = vmatprep.subr.mxu0 0.0
    %770 = vmatpush1.msra.mxu0 0.0
    %771 = vmatprep.subr.mxu0 0.0
    %772 = vmatpush1.msra.mxu0 0.0
    %773 = vmatprep.subr.mxu0 0.0
    %774 = vmatpush1.msra.mxu0 0.0
    %775 = vmatprep.subr.mxu0 0.0
    %776 = vmatpush1.msra.mxu0 0.0
    %777 = vmatprep.subr.mxu0 0.0
    %778 = vmatpush1.msra.mxu0 0.0
    %779 = vmatprep.subr.mxu0 0.0
    %780 = vmatpush1.msra.mxu0 0.0
    %781 = vmatprep.subr.mxu0 0.0
    %782 = vmatpush1.msra.mxu0 0.0
    %783 = vmatprep.subr.mxu0 0.0
    %784 = vmatpush1.msra.mxu0 0.0
    %785 = vmatprep.subr.mxu0 0.0
    %786 = vmatpush1.msra.mxu0 0.0
    %787 = vmatprep.subr.mxu0 0.0
    %788 = vmatpush1.msra.mxu0 0.0
    %789 = vmatprep.subr.mxu0 0.0
    %790 = vmatpush1.msra.mxu0 0.0
    %791 = vmatprep.subr.mxu0 0.0
    %792 = vmatpush1.msra.mxu0 0.0
    %793 = vmatprep.subr.mxu0 0.0
    %794 = vmatpush1.msra.mxu0 0.0
    %795 = vmatprep.subr.mxu0 0.0
    %796 = vmatpush1.msra.mxu0 0.0
    %797 = vmatprep.subr.mxu0 0.0
    %798 = vmatpush1.msra.mxu0 0.0
    %799 = vmatprep.subr.mxu0 0.0
    %800 = vmatpush1.msra.mxu0 0.0
    %801 = vmatprep.subr.mxu0 0.0
    %802 = vmatpush1.msra.mxu0 0.0
    %803 = vmatprep.subr.mxu0 0.0
    %804 = vmatpush1.msra.mxu0 0.0
    %805 = vmatprep.subr.mxu0 0.0
    %806 = vmatpush1.msra.mxu0 0.0
    %807 = vmatprep.subr.mxu0 0.0
    %808 = vmatpush1.msra.mxu0 0.0
    %809 = vmatprep.subr.mxu0 0.0
    %810 = vmatpush1.msra.mxu0 0.0
    %811 = vmatprep.subr.mxu0 0.0
    %812 = vmatpush1.msra.mxu0 0.0
    %813 = vmatprep.subr.mxu0 0.0
    %814 = vmatpush1.msra.mxu0 0.0
    %815 = vmatprep.mubr.f32.mxu0 0.0
    %816 = vmatmul.mubr.f32.gmra.mrb[0].mxu0 %v749
    %v817 = vpop.f32.mrb[0].mxu0
    %v818 = vadd.f32 %v745, %v817
    %v819 = vpop.f32.mrb[0].mxu0
    %820 = vdwg.mxu0
    %v821 = vadd.f32 %v818, %v167
    %v822 = vxor.u32 %v821, 2147483648
    %v823 = vmul.f32 %v822, 1.442695
    %v824 = vpow.pop %v823
    %v825 = vadd.f32 %v824, 1.0
    %v826 = vrcp.pop %v825
    %v827 = vmul.f32 1.0, %v826
    %s828 = scalar_lea.vmem [#allocation10], 32
    %v829 = vld [vmem:[%s828] sm:$0xff]
    %v830 = vld [vmem:[%s828 + $0x8] sm:$0xff]
    %v831 = vld [vmem:[%s828 + $0x10] sm:$0xff]
    %v832 = vld [vmem:[%s828 + $0x18] sm:$0xff]
    %s833 = scalar_lea.vmem [#allocation11], 32
    %v834 = vld [vmem:[%s833] sm:$0xff]
    %v835 = vld [vmem:[%s833 + $0x8] sm:$0xff]
    %v836 = vld [vmem:[%s833 + $0x10] sm:$0xff]
    %v837 = vld [vmem:[%s833 + $0x18] sm:$0xff]
    %838 = vmatprep.subr.mxu0 0.0
    %839 = vmatpush1.msra.mxu0 %v834
    %840 = vmatprep.subr.mxu0 0.0
    %841 = vmatpush1.msra.mxu0 %v835
    %842 = vmatprep.subr.mxu0 0.0
    %843 = vmatpush1.msra.mxu0 %v836
    %844 = vmatprep.subr.mxu0 0.0
    %845 = vmatpush1.msra.mxu0 %v837
    %846 = vmatprep.subr.mxu0 0.0
    %847 = vmatpush1.msra.mxu0 0.0
    %848 = vmatprep.subr.mxu0 0.0
    %849 = vmatpush1.msra.mxu0 0.0
    %850 = vmatprep.subr.mxu0 0.0
    %851 = vmatpush1.msra.mxu0 0.0
    %852 = vmatprep.subr.mxu0 0.0
    %853 = vmatpush1.msra.mxu0 0.0
    %854 = vmatprep.subr.mxu0 0.0
    %855 = vmatpush1.msra.mxu0 0.0
    %856 = vmatprep.subr.mxu0 0.0
    %857 = vmatpush1.msra.mxu0 0.0
    %858 = vmatprep.subr.mxu0 0.0
    %859 = vmatpush1.msra.mxu0 0.0
    %860 = vmatprep.subr.mxu0 0.0
    %861 = vmatpush1.msra.mxu0 0.0
    %862 = vmatprep.subr.mxu0 0.0
    %863 = vmatpush1.msra.mxu0 0.0
    %864 = vmatprep.subr.mxu0 0.0
    %865 = vmatpush1.msra.mxu0 0.0
    %866 = vmatprep.subr.mxu0 0.0
    %867 = vmatpush1.msra.mxu0 0.0
    %868 = vmatprep.subr.mxu0 0.0
    %869 = vmatpush1.msra.mxu0 0.0
    %870 = vmatprep.subr.mxu0 0.0
    %871 = vmatpush1.msra.mxu0 0.0
    %872 = vmatprep.subr.mxu0 0.0
    %873 = vmatpush1.msra.mxu0 0.0
    %874 = vmatprep.subr.mxu0 0.0
    %875 = vmatpush1.msra.mxu0 0.0
    %876 = vmatprep.subr.mxu0 0.0
    %877 = vmatpush1.msra.mxu0 0.0
    %878 = vmatprep.subr.mxu0 0.0
    %879 = vmatpush1.msra.mxu0 0.0
    %880 = vmatprep.subr.mxu0 0.0
    %881 = vmatpush1.msra.mxu0 0.0
    %882 = vmatprep.subr.mxu0 0.0
    %883 = vmatpush1.msra.mxu0 0.0
    %884 = vmatprep.subr.mxu0 0.0
    %885 = vmatpush1.msra.mxu0 0.0
    %886 = vmatprep.subr.mxu0 0.0
    %887 = vmatpush1.msra.mxu0 0.0
    %888 = vmatprep.subr.mxu0 0.0
    %889 = vmatpush1.msra.mxu0 0.0
    %890 = vmatprep.subr.mxu0 0.0
    %891 = vmatpush1.msra.mxu0 0.0
    %892 = vmatprep.subr.mxu0 0.0
    %893 = vmatpush1.msra.mxu0 0.0
    %894 = vmatprep.subr.mxu0 0.0
    %895 = vmatpush1.msra.mxu0 0.0
    %896 = vmatprep.subr.mxu0 0.0
    %897 = vmatpush1.msra.mxu0 0.0
    %898 = vmatprep.subr.mxu0 0.0
    %899 = vmatpush1.msra.mxu0 0.0
    %900 = vmatprep.subr.mxu0 0.0
    %901 = vmatpush1.msra.mxu0 0.0
    %902 = vmatprep.mubr.f32.mxu0 0.0
    %903 = vmatmul.mubr.f32.gmra.mrb[0].mxu0 %v676
    %v904 = vpop.f32.mrb[0].mxu0
    %v905 = vadd.f32 0.0, %v904
    %v906 = vpop.f32.mrb[0].mxu0
    %907 = vdwg.mxu0
    %908 = vmatprep.subr.mxu0 0.0
    %909 = vmatpush1.msra.mxu0 %v829
    %910 = vmatprep.subr.mxu0 0.0
    %911 = vmatpush1.msra.mxu0 %v830
    %912 = vmatprep.subr.mxu0 0.0
    %913 = vmatpush1.msra.mxu0 %v831
    %914 = vmatprep.subr.mxu0 0.0
    %915 = vmatpush1.msra.mxu0 %v832
    %916 = vmatprep.subr.mxu0 0.0
    %917 = vmatpush1.msra.mxu0 0.0
    %918 = vmatprep.subr.mxu0 0.0
    %919 = vmatpush1.msra.mxu0 0.0
    %920 = vmatprep.subr.mxu0 0.0
    %921 = vmatpush1.msra.mxu0 0.0
    %922 = vmatprep.subr.mxu0 0.0
    %923 = vmatpush1.msra.mxu0 0.0
    %924 = vmatprep.subr.mxu0 0.0
    %925 = vmatpush1.msra.mxu0 0.0
    %926 = vmatprep.subr.mxu0 0.0
    %927 = vmatpush1.msra.mxu0 0.0
    %928 = vmatprep.subr.mxu0 0.0
    %929 = vmatpush1.msra.mxu0 0.0
    %930 = vmatprep.subr.mxu0 0.0
    %931 = vmatpush1.msra.mxu0 0.0
    %932 = vmatprep.subr.mxu0 0.0
    %933 = vmatpush1.msra.mxu0 0.0
    %934 = vmatprep.subr.mxu0 0.0
    %935 = vmatpush1.msra.mxu0 0.0
    %936 = vmatprep.subr.mxu0 0.0
    %937 = vmatpush1.msra.mxu0 0.0
    %938 = vmatprep.subr.mxu0 0.0
    %939 = vmatpush1.msra.mxu0 0.0
    %940 = vmatprep.subr.mxu0 0.0
    %941 = vmatpush1.msra.mxu0 0.0
    %942 = vmatprep.subr.mxu0 0.0
    %943 = vmatpush1.msra.mxu0 0.0
    %944 = vmatprep.subr.mxu0 0.0
    %945 = vmatpush1.msra.mxu0 0.0
    %946 = vmatprep.subr.mxu0 0.0
    %947 = vmatpush1.msra.mxu0 0.0
    %948 = vmatprep.subr.mxu0 0.0
    %949 = vmatpush1.msra.mxu0 0.0
    %950 = vmatprep.subr.mxu0 0.0
    %951 = vmatpush1.msra.mxu0 0.0
    %952 = vmatprep.subr.mxu0 0.0
    %953 = vmatpush1.msra.mxu0 0.0
    %954 = vmatprep.subr.mxu0 0.0
    %955 = vmatpush1.msra.mxu0 0.0
    %956 = vmatprep.subr.mxu0 0.0
    %957 = vmatpush1.msra.mxu0 0.0
    %958 = vmatprep.subr.mxu0 0.0
    %959 = vmatpush1.msra.mxu0 0.0
    %960 = vmatprep.subr.mxu0 0.0
    %961 = vmatpush1.msra.mxu0 0.0
    %962 = vmatprep.subr.mxu0 0.0
    %963 = vmatpush1.msra.mxu0 0.0
    %964 = vmatprep.subr.mxu0 0.0
    %965 = vmatpush1.msra.mxu0 0.0
    %966 = vmatprep.subr.mxu0 0.0
    %967 = vmatpush1.msra.mxu0 0.0
    %968 = vmatprep.subr.mxu0 0.0
    %969 = vmatpush1.msra.mxu0 0.0
    %970 = vmatprep.subr.mxu0 0.0
    %971 = vmatpush1.msra.mxu0 0.0
    %972 = vmatprep.mubr.f32.mxu0 0.0
    %973 = vmatmul.mubr.f32.gmra.mrb[0].mxu0 %v749
    %v974 = vpop.f32.mrb[0].mxu0
    %v975 = vadd.f32 %v905, %v974
    %v976 = vpop.f32.mrb[0].mxu0
    %977 = vdwg.mxu0
    %v978 = vadd.f32 %v975, %v175
    %v979 = vxor.u32 %v978, 2147483648
    %v980 = vmul.f32 %v979, 1.442695
    %v981 = vpow.pop %v980
    %v982 = vadd.f32 %v981, 1.0
    %v983 = vrcp.pop %v982
    %v984 = vmul.f32 1.0, %v983
    %s985 = scalar_lea.vmem [#allocation10], 64
    %v986 = vld [vmem:[%s985] sm:$0xff]
    %v987 = vld [vmem:[%s985 + $0x8] sm:$0xff]
    %v988 = vld [vmem:[%s985 + $0x10] sm:$0xff]
    %v989 = vld [vmem:[%s985 + $0x18] sm:$0xff]
    %990 = vmatprep.subr.mxu0 0.0
    %991 = vmatpush1.msra.mxu0 %v986
    %992 = vmatprep.subr.mxu0 0.0
    %993 = vmatpush1.msra.mxu0 %v987
    %994 = vmatprep.subr.mxu0 0.0
    %995 = vmatpush1.msra.mxu0 %v988
    %996 = vmatprep.subr.mxu0 0.0
    %997 = vmatpush1.msra.mxu0 %v989
    %998 = vmatprep.subr.mxu0 0.0
    %999 = vmatpush1.msra.mxu0 0.0
    %1000 = vmatprep.subr.mxu0 0.0
    %1001 = vmatpush1.msra.mxu0 0.0
    %1002 = vmatprep.subr.mxu0 0.0
    %1003 = vmatpush1.msra.mxu0 0.0
    %1004 = vmatprep.subr.mxu0 0.0
    %1005 = vmatpush1.msra.mxu0 0.0
    %1006 = vmatprep.subr.mxu0 0.0
    %1007 = vmatpush1.msra.mxu0 0.0
    %1008 = vmatprep.subr.mxu0 0.0
    %1009 = vmatpush1.msra.mxu0 0.0
    %1010 = vmatprep.subr.mxu0 0.0
    %1011 = vmatpush1.msra.mxu0 0.0
    %1012 = vmatprep.subr.mxu0 0.0
    %1013 = vmatpush1.msra.mxu0 0.0
    %1014 = vmatprep.subr.mxu0 0.0
    %1015 = vmatpush1.msra.mxu0 0.0
    %1016 = vmatprep.subr.mxu0 0.0
    %1017 = vmatpush1.msra.mxu0 0.0
    %1018 = vmatprep.subr.mxu0 0.0
    %1019 = vmatpush1.msra.mxu0 0.0
    %1020 = vmatprep.subr.mxu0 0.0
    %1021 = vmatpush1.msra.mxu0 0.0
    %1022 = vmatprep.subr.mxu0 0.0
    %1023 = vmatpush1.msra.mxu0 0.0
    %1024 = vmatprep.subr.mxu0 0.0
    %1025 = vmatpush1.msra.mxu0 0.0
    %1026 = vmatprep.subr.mxu0 0.0
    %1027 = vmatpush1.msra.mxu0 0.0
    %1028 = vmatprep.subr.mxu0 0.0
    %1029 = vmatpush1.msra.mxu0 0.0
    %1030 = vmatprep.subr.mxu0 0.0
    %1031 = vmatpush1.msra.mxu0 0.0
    %1032 = vmatprep.subr.mxu0 0.0
    %1033 = vmatpush1.msra.mxu0 0.0
    %1034 = vmatprep.subr.mxu0 0.0
    %1035 = vmatpush1.msra.mxu0 0.0
    %1036 = vmatprep.subr.mxu0 0.0
    %1037 = vmatpush1.msra.mxu0 0.0
    %1038 = vmatprep.subr.mxu0 0.0
    %1039 = vmatpush1.msra.mxu0 0.0
    %1040 = vmatprep.subr.mxu0 0.0
    %1041 = vmatpush1.msra.mxu0 0.0
    %1042 = vmatprep.subr.mxu0 0.0
    %1043 = vmatpush1.msra.mxu0 0.0
    %1044 = vmatprep.subr.mxu0 0.0
    %1045 = vmatpush1.msra.mxu0 0.0
    %1046 = vmatprep.subr.mxu0 0.0
    %1047 = vmatpush1.msra.mxu0 0.0
    %1048 = vmatprep.subr.mxu0 0.0
    %1049 = vmatpush1.msra.mxu0 0.0
    %1050 = vmatprep.subr.mxu0 0.0
    %1051 = vmatpush1.msra.mxu0 0.0
    %1052 = vmatprep.subr.mxu0 0.0
    %1053 = vmatpush1.msra.mxu0 0.0
    %1054 = vmatprep.mubr.f32.mxu0 0.0
    %1055 = vmatmul.mubr.f32.gmra.mrb[0].mxu0 %v749
    %v1056 = vpop.f32.mrb[0].mxu0
    %v1057 = vadd.f32 %v183, %v1056
    %v1058 = vpop.f32.mrb[0].mxu0
    %1059 = vdwg.mxu0
    %s1060 = scalar_lea.vmem [#allocation11], 64
    %v1061 = vld [vmem:[%s1060] sm:$0xff]
    %v1062 = vld [vmem:[%s1060 + $0x8] sm:$0xff]
    %v1063 = vld [vmem:[%s1060 + $0x10] sm:$0xff]
    %v1064 = vld [vmem:[%s1060 + $0x18] sm:$0xff]
    %1065 = vmatprep.subr.mxu0 0.0
    %1066 = vmatpush1.msra.mxu0 %v1061
    %1067 = vmatprep.subr.mxu0 0.0
    %1068 = vmatpush1.msra.mxu0 %v1062
    %1069 = vmatprep.subr.mxu0 0.0
    %1070 = vmatpush1.msra.mxu0 %v1063
    %1071 = vmatprep.subr.mxu0 0.0
    %1072 = vmatpush1.msra.mxu0 %v1064
    %1073 = vmatprep.subr.mxu0 0.0
    %1074 = vmatpush1.msra.mxu0 0.0
    %1075 = vmatprep.subr.mxu0 0.0
    %1076 = vmatpush1.msra.mxu0 0.0
    %1077 = vmatprep.subr.mxu0 0.0
    %1078 = vmatpush1.msra.mxu0 0.0
    %1079 = vmatprep.subr.mxu0 0.0
    %1080 = vmatpush1.msra.mxu0 0.0
    %1081 = vmatprep.subr.mxu0 0.0
    %1082 = vmatpush1.msra.mxu0 0.0
    %1083 = vmatprep.subr.mxu0 0.0
    %1084 = vmatpush1.msra.mxu0 0.0
    %1085 = vmatprep.subr.mxu0 0.0
    %1086 = vmatpush1.msra.mxu0 0.0
    %1087 = vmatprep.subr.mxu0 0.0
    %1088 = vmatpush1.msra.mxu0 0.0
    %1089 = vmatprep.subr.mxu0 0.0
    %1090 = vmatpush1.msra.mxu0 0.0
    %1091 = vmatprep.subr.mxu0 0.0
    %1092 = vmatpush1.msra.mxu0 0.0
    %1093 = vmatprep.subr.mxu0 0.0
    %1094 = vmatpush1.msra.mxu0 0.0
    %1095 = vmatprep.subr.mxu0 0.0
    %1096 = vmatpush1.msra.mxu0 0.0
    %1097 = vmatprep.subr.mxu0 0.0
    %1098 = vmatpush1.msra.mxu0 0.0
    %1099 = vmatprep.subr.mxu0 0.0
    %1100 = vmatpush1.msra.mxu0 0.0
    %1101 = vmatprep.subr.mxu0 0.0
    %1102 = vmatpush1.msra.mxu0 0.0
    %1103 = vmatprep.subr.mxu0 0.0
    %1104 = vmatpush1.msra.mxu0 0.0
    %1105 = vmatprep.subr.mxu0 0.0
    %1106 = vmatpush1.msra.mxu0 0.0
    %1107 = vmatprep.subr.mxu0 0.0
    %1108 = vmatpush1.msra.mxu0 0.0
    %1109 = vmatprep.subr.mxu0 0.0
    %1110 = vmatpush1.msra.mxu0 0.0
    %1111 = vmatprep.subr.mxu0 0.0
    %1112 = vmatpush1.msra.mxu0 0.0
    %1113 = vmatprep.subr.mxu0 0.0
    %1114 = vmatpush1.msra.mxu0 0.0
    %1115 = vmatprep.subr.mxu0 0.0
    %1116 = vmatpush1.msra.mxu0 0.0
    %1117 = vmatprep.subr.mxu0 0.0
    %1118 = vmatpush1.msra.mxu0 0.0
    %1119 = vmatprep.subr.mxu0 0.0
    %1120 = vmatpush1.msra.mxu0 0.0
    %1121 = vmatprep.subr.mxu0 0.0
    %1122 = vmatpush1.msra.mxu0 0.0
    %1123 = vmatprep.subr.mxu0 0.0
    %1124 = vmatpush1.msra.mxu0 0.0
    %1125 = vmatprep.subr.mxu0 0.0
    %1126 = vmatpush1.msra.mxu0 0.0
    %1127 = vmatprep.subr.mxu0 0.0
    %1128 = vmatpush1.msra.mxu0 0.0
    %1129 = vmatprep.mubr.f32.mxu0 0.0
    %1130 = vmatmul.mubr.f32.gmra.mrb[0].mxu0 %v676
    %v1131 = vpop.f32.mrb[0].mxu0
    %v1132 = vadd.f32 %v191, %v1131
    %v1133 = vpop.f32.mrb[0].mxu0
    %1134 = vdwg.mxu0
    %v1135 = vmul.f32 %v827, %v1132
    %v1136 = vadd.f32 %v1057, %v1135
    %v1137 = vtanh.pop %v1136
    %v1138 = vsub.f32 %v195, %v1137
    %v1139 = vmul.f32 %v984, %v1138
    %v1140 = vadd.f32 %v1137, %v1139
    %s1141 = scalar_lea.vmem [#allocation2], 8
    %v1142 = vld [vmem:[%s1141] sm:$0xff]
    %1143 = vmatprep.subr.mxu0 0.0
    %1144 = vmatpush1.msra.mxu0 %v199
    %1145 = vmatprep.subr.mxu0 0.0
    %1146 = vmatpush1.msra.mxu0 %v200
    %1147 = vmatprep.subr.mxu0 0.0
    %1148 = vmatpush1.msra.mxu0 %v201
    %1149 = vmatprep.subr.mxu0 0.0
    %1150 = vmatpush1.msra.mxu0 %v202
    %1151 = vmatprep.subr.mxu0 0.0
    %1152 = vmatpush1.msra.mxu0 0.0
    %1153 = vmatprep.subr.mxu0 0.0
    %1154 = vmatpush1.msra.mxu0 0.0
    %1155 = vmatprep.subr.mxu0 0.0
    %1156 = vmatpush1.msra.mxu0 0.0
    %1157 = vmatprep.subr.mxu0 0.0
    %1158 = vmatpush1.msra.mxu0 0.0
    %1159 = vmatprep.subr.mxu0 0.0
    %1160 = vmatpush1.msra.mxu0 0.0
    %1161 = vmatprep.subr.mxu0 0.0
    %1162 = vmatpush1.msra.mxu0 0.0
    %1163 = vmatprep.subr.mxu0 0.0
    %1164 = vmatpush1.msra.mxu0 0.0
    %1165 = vmatprep.subr.mxu0 0.0
    %1166 = vmatpush1.msra.mxu0 0.0
    %1167 = vmatprep.subr.mxu0 0.0
    %1168 = vmatpush1.msra.mxu0 0.0
    %1169 = vmatprep.subr.mxu0 0.0
    %1170 = vmatpush1.msra.mxu0 0.0
    %1171 = vmatprep.subr.mxu0 0.0
    %1172 = vmatpush1.msra.mxu0 0.0
    %1173 = vmatprep.subr.mxu0 0.0
    %1174 = vmatpush1.msra.mxu0 0.0
    %1175 = vmatprep.subr.mxu0 0.0
    %1176 = vmatpush1.msra.mxu0 0.0
    %1177 = vmatprep.subr.mxu0 0.0
    %1178 = vmatpush1.msra.mxu0 0.0
    %1179 = vmatprep.subr.mxu0 0.0
    %1180 = vmatpush1.msra.mxu0 0.0
    %1181 = vmatprep.subr.mxu0 0.0
    %1182 = vmatpush1.msra.mxu0 0.0
    %1183 = vmatprep.subr.mxu0 0.0
    %1184 = vmatpush1.msra.mxu0 0.0
    %1185 = vmatprep.subr.mxu0 0.0
    %1186 = vmatpush1.msra.mxu0 0.0
    %1187 = vmatprep.subr.mxu0 0.0
    %1188 = vmatpush1.msra.mxu0 0.0
    %1189 = vmatprep.subr.mxu0 0.0
    %1190 = vmatpush1.msra.mxu0 0.0
    %1191 = vmatprep.subr.mxu0 0.0
    %1192 = vmatpush1.msra.mxu0 0.0
    %1193 = vmatprep.subr.mxu0 0.0
    %1194 = vmatpush1.msra.mxu0 0.0
    %1195 = vmatprep.subr.mxu0 0.0
    %1196 = vmatpush1.msra.mxu0 0.0
    %1197 = vmatprep.subr.mxu0 0.0
    %1198 = vmatpush1.msra.mxu0 0.0
    %1199 = vmatprep.subr.mxu0 0.0
    %1200 = vmatpush1.msra.mxu0 0.0
    %1201 = vmatprep.subr.mxu0 0.0
    %1202 = vmatpush1.msra.mxu0 0.0
    %1203 = vmatprep.subr.mxu0 0.0
    %1204 = vmatpush1.msra.mxu0 0.0
    %1205 = vmatprep.subr.mxu0 0.0
    %1206 = vmatpush1.msra.mxu0 0.0
    %1207 = vmatprep.mubr.f32.mxu0 0.0
    %1208 = vmatmul.mubr.f32.gmra.mrb[0].mxu0 %v749
    %v1209 = vpop.f32.mrb[0].mxu0
    %v1210 = vadd.f32 0.0, %v1209
    %v1211 = vpop.f32.mrb[0].mxu0
    %1212 = vdwg.mxu0
    %v1214 = vsel %vm277, %v1142, 0
    %1216 = vmatprep.subr.mxu0 0.0
    %1217 = vmatpush1.msra.mxu0 %v197
    %1218 = vmatprep.subr.mxu0 0.0
    %1219 = vmatpush1.msra.mxu0 %v198
    %1220 = vmatprep.subr.mxu0 0.0
    %1221 = vmatpush1.msra.mxu0 0.0
    %1222 = vmatprep.subr.mxu0 0.0
    %1223 = vmatpush1.msra.mxu0 0.0
    %1224 = vmatprep.subr.mxu0 0.0
    %1225 = vmatpush1.msra.mxu0 0.0
    %1226 = vmatprep.subr.mxu0 0.0
    %1227 = vmatpush1.msra.mxu0 0.0
    %1228 = vmatprep.subr.mxu0 0.0
    %1229 = vmatpush1.msra.mxu0 0.0
    %1230 = vmatprep.subr.mxu0 0.0
    %1231 = vmatpush1.msra.mxu0 0.0
    %1232 = vmatprep.subr.mxu0 0.0
    %1233 = vmatpush1.msra.mxu0 0.0
    %1234 = vmatprep.subr.mxu0 0.0
    %1235 = vmatpush1.msra.mxu0 0.0
    %1236 = vmatprep.subr.mxu0 0.0
    %1237 = vmatpush1.msra.mxu0 0.0
    %1238 = vmatprep.subr.mxu0 0.0
    %1239 = vmatpush1.msra.mxu0 0.0
    %1240 = vmatprep.subr.mxu0 0.0
    %1241 = vmatpush1.msra.mxu0 0.0
    %1242 = vmatprep.subr.mxu0 0.0
    %1243 = vmatpush1.msra.mxu0 0.0
    %1244 = vmatprep.subr.mxu0 0.0
    %1245 = vmatpush1.msra.mxu0 0.0
    %1246 = vmatprep.subr.mxu0 0.0
    %1247 = vmatpush1.msra.mxu0 0.0
    %1248 = vmatprep.subr.mxu0 0.0
    %1249 = vmatpush1.msra.mxu0 0.0
    %1250 = vmatprep.subr.mxu0 0.0
    %1251 = vmatpush1.msra.mxu0 0.0
    %1252 = vmatprep.subr.mxu0 0.0
    %1253 = vmatpush1.msra.mxu0 0.0
    %1254 = vmatprep.subr.mxu0 0.0
    %1255 = vmatpush1.msra.mxu0 0.0
    %1256 = vmatprep.subr.mxu0 0.0
    %1257 = vmatpush1.msra.mxu0 0.0
    %1258 = vmatprep.subr.mxu0 0.0
    %1259 = vmatpush1.msra.mxu0 0.0
    %1260 = vmatprep.subr.mxu0 0.0
    %1261 = vmatpush1.msra.mxu0 0.0
    %1262 = vmatprep.subr.mxu0 0.0
    %1263 = vmatpush1.msra.mxu0 0.0
    %1264 = vmatprep.subr.mxu0 0.0
    %1265 = vmatpush1.msra.mxu0 0.0
    %1266 = vmatprep.subr.mxu0 0.0
    %1267 = vmatpush1.msra.mxu0 0.0
    %1268 = vmatprep.subr.mxu0 0.0
    %1269 = vmatpush1.msra.mxu0 0.0
    %1270 = vmatprep.subr.mxu0 0.0
    %1271 = vmatpush1.msra.mxu0 0.0
    %1272 = vmatprep.subr.mxu0 0.0
    %1273 = vmatpush1.msra.mxu0 0.0
    %1274 = vmatprep.subr.mxu0 0.0
    %1275 = vmatpush1.msra.mxu0 0.0
    %1276 = vmatprep.subr.mxu0 0.0
    %1277 = vmatpush1.msra.mxu0 0.0
    %1278 = vmatprep.subr.mxu0 0.0
    %1279 = vmatpush1.msra.mxu0 0.0
    %1280 = vmatprep.mubr.f32.mxu0 0.0
    %1281 = vmatmul.mubr.f32.gmra.mrb[0].mxu0 %v1214
    %v1282 = vpop.f32.mrb[0].mxu0
    %v1283 = vadd.f32 %v1210, %v1282
    %v1284 = vpop.f32.mrb[0].mxu0
    %1285 = vdwg.mxu0
    %v1286 = vadd.f32 %v1283, %v136
    %v1287 = vxor.u32 %v1286, 2147483648
    %v1288 = vmul.f32 %v1287, 1.442695
    %v1289 = vpow.pop %v1288
    %v1290 = vadd.f32 %v1289, 1.0
    %v1291 = vrcp.pop %v1290
    %v1292 = vmul.f32 1.0, %v1291
    %1293 = vmatprep.subr.mxu0 0.0
    %1294 = vmatpush1.msra.mxu0 %v362
    %1295 = vmatprep.subr.mxu0 0.0
    %1296 = vmatpush1.msra.mxu0 %v363
    %1297 = vmatprep.subr.mxu0 0.0
    %1298 = vmatpush1.msra.mxu0 %v364
    %1299 = vmatprep.subr.mxu0 0.0
    %1300 = vmatpush1.msra.mxu0 %v365
    %1301 = vmatprep.subr.mxu0 0.0
    %1302 = vmatpush1.msra.mxu0 0.0
    %1303 = vmatprep.subr.mxu0 0.0
    %1304 = vmatpush1.msra.mxu0 0.0
    %1305 = vmatprep.subr.mxu0 0.0
    %1306 = vmatpush1.msra.mxu0 0.0
    %1307 = vmatprep.subr.mxu0 0.0
    %1308 = vmatpush1.msra.mxu0 0.0
    %1309 = vmatprep.subr.mxu0 0.0
    %1310 = vmatpush1.msra.mxu0 0.0
    %1311 = vmatprep.subr.mxu0 0.0
    %1312 = vmatpush1.msra.mxu0 0.0
    %1313 = vmatprep.subr.mxu0 0.0
    %1314 = vmatpush1.msra.mxu0 0.0
    %1315 = vmatprep.subr.mxu0 0.0
    %1316 = vmatpush1.msra.mxu0 0.0
    %1317 = vmatprep.subr.mxu0 0.0
    %1318 = vmatpush1.msra.mxu0 0.0
    %1319 = vmatprep.subr.mxu0 0.0
    %1320 = vmatpush1.msra.mxu0 0.0
    %1321 = vmatprep.subr.mxu0 0.0
    %1322 = vmatpush1.msra.mxu0 0.0
    %1323 = vmatprep.subr.mxu0 0.0
    %1324 = vmatpush1.msra.mxu0 0.0
    %1325 = vmatprep.subr.mxu0 0.0
    %1326 = vmatpush1.msra.mxu0 0.0
    %1327 = vmatprep.subr.mxu0 0.0
    %1328 = vmatpush1.msra.mxu0 0.0
    %1329 = vmatprep.subr.mxu0 0.0
    %1330 = vmatpush1.msra.mxu0 0.0
    %1331 = vmatprep.subr.mxu0 0.0
    %1332 = vmatpush1.msra.mxu0 0.0
    %1333 = vmatprep.subr.mxu0 0.0
    %1334 = vmatpush1.msra.mxu0 0.0
    %1335 = vmatprep.subr.mxu0 0.0
    %1336 = vmatpush1.msra.mxu0 0.0
    %1337 = vmatprep.subr.mxu0 0.0
    %1338 = vmatpush1.msra.mxu0 0.0
    %1339 = vmatprep.subr.mxu0 0.0
    %1340 = vmatpush1.msra.mxu0 0.0
    %1341 = vmatprep.subr.mxu0 0.0
    %1342 = vmatpush1.msra.mxu0 0.0
    %1343 = vmatprep.subr.mxu0 0.0
    %1344 = vmatpush1.msra.mxu0 0.0
    %1345 = vmatprep.subr.mxu0 0.0
    %1346 = vmatpush1.msra.mxu0 0.0
    %1347 = vmatprep.subr.mxu0 0.0
    %1348 = vmatpush1.msra.mxu0 0.0
    %1349 = vmatprep.subr.mxu0 0.0
    %1350 = vmatpush1.msra.mxu0 0.0
    %1351 = vmatprep.subr.mxu0 0.0
    %1352 = vmatpush1.msra.mxu0 0.0
    %1353 = vmatprep.subr.mxu0 0.0
    %1354 = vmatpush1.msra.mxu0 0.0
    %1355 = vmatprep.subr.mxu0 0.0
    %1356 = vmatpush1.msra.mxu0 0.0
    %1357 = vmatprep.mubr.f32.mxu0 0.0
    %1358 = vmatmul.mubr.f32.gmra.mrb[0].mxu0 %v749
    %v1359 = vpop.f32.mrb[0].mxu0
    %v1360 = vadd.f32 0.0, %v1359
    %v1361 = vpop.f32.mrb[0].mxu0
    %1362 = vdwg.mxu0
    %1363 = vmatprep.subr.mxu0 0.0
    %1364 = vmatpush1.msra.mxu0 %v359
    %1365 = vmatprep.subr.mxu0 0.0
    %1366 = vmatpush1.msra.mxu0 %v360
    %1367 = vmatprep.subr.mxu0 0.0
    %1368 = vmatpush1.msra.mxu0 0.0
    %1369 = vmatprep.subr.mxu0 0.0
    %1370 = vmatpush1.msra.mxu0 0.0
    %1371 = vmatprep.subr.mxu0 0.0
    %1372 = vmatpush1.msra.mxu0 0.0
    %1373 = vmatprep.subr.mxu0 0.0
    %1374 = vmatpush1.msra.mxu0 0.0
    %1375 = vmatprep.subr.mxu0 0.0
    %1376 = vmatpush1.msra.mxu0 0.0
    %1377 = vmatprep.subr.mxu0 0.0
    %1378 = vmatpush1.msra.mxu0 0.0
    %1379 = vmatprep.subr.mxu0 0.0
    %1380 = vmatpush1.msra.mxu0 0.0
    %1381 = vmatprep.subr.mxu0 0.0
    %1382 = vmatpush1.msra.mxu0 0.0
    %1383 = vmatprep.subr.mxu0 0.0
    %1384 = vmatpush1.msra.mxu0 0.0
    %1385 = vmatprep.subr.mxu0 0.0
    %1386 = vmatpush1.msra.mxu0 0.0
    %1387 = vmatprep.subr.mxu0 0.0
    %1388 = vmatpush1.msra.mxu0 0.0
    %1389 = vmatprep.subr.mxu0 0.0
    %1390 = vmatpush1.msra.mxu0 0.0
    %1391 = vmatprep.subr.mxu0 0.0
    %1392 = vmatpush1.msra.mxu0 0.0
    %1393 = vmatprep.subr.mxu0 0.0
    %1394 = vmatpush1.msra.mxu0 0.0
    %1395 = vmatprep.subr.mxu0 0.0
    %1396 = vmatpush1.msra.mxu0 0.0
    %1397 = vmatprep.subr.mxu0 0.0
    %1398 = vmatpush1.msra.mxu0 0.0
    %1399 = vmatprep.subr.mxu0 0.0
    %1400 = vmatpush1.msra.mxu0 0.0
    %1401 = vmatprep.subr.mxu0 0.0
    %1402 = vmatpush1.msra.mxu0 0.0
    %1403 = vmatprep.subr.mxu0 0.0
    %1404 = vmatpush1.msra.mxu0 0.0
    %1405 = vmatprep.subr.mxu0 0.0
    %1406 = vmatpush1.msra.mxu0 0.0
    %1407 = vmatprep.subr.mxu0 0.0
    %1408 = vmatpush1.msra.mxu0 0.0
    %1409 = vmatprep.subr.mxu0 0.0
    %1410 = vmatpush1.msra.mxu0 0.0
    %1411 = vmatprep.subr.mxu0 0.0
    %1412 = vmatpush1.msra.mxu0 0.0
    %1413 = vmatprep.subr.mxu0 0.0
    %1414 = vmatpush1.msra.mxu0 0.0
    %1415 = vmatprep.subr.mxu0 0.0
    %1416 = vmatpush1.msra.mxu0 0.0
    %1417 = vmatprep.subr.mxu0 0.0
    %1418 = vmatpush1.msra.mxu0 0.0
    %1419 = vmatprep.subr.mxu0 0.0
    %1420 = vmatpush1.msra.mxu0 0.0
    %1421 = vmatprep.subr.mxu0 0.0
    %1422 = vmatpush1.msra.mxu0 0.0
    %1423 = vmatprep.subr.mxu0 0.0
    %1424 = vmatpush1.msra.mxu0 0.0
    %1425 = vmatprep.subr.mxu0 0.0
    %1426 = vmatpush1.msra.mxu0 0.0
    %1427 = vmatprep.mubr.f32.mxu0 0.0
    %1428 = vmatmul.mubr.f32.gmra.mrb[0].mxu0 %v1214
    %v1429 = vpop.f32.mrb[0].mxu0
    %v1430 = vadd.f32 %v1360, %v1429
    %v1431 = vpop.f32.mrb[0].mxu0
    %1432 = vdwg.mxu0
    %v1433 = vadd.f32 %v1430, %v144
    %v1434 = vxor.u32 %v1433, 2147483648
    %v1435 = vmul.f32 %v1434, 1.442695
    %v1436 = vpow.pop %v1435
    %v1437 = vadd.f32 %v1436, 1.0
    %v1438 = vrcp.pop %v1437
    %v1439 = vmul.f32 1.0, %v1438
    %1440 = vmatprep.subr.mxu0 0.0
    %1441 = vmatpush1.msra.mxu0 %v514
    %1442 = vmatprep.subr.mxu0 0.0
    %1443 = vmatpush1.msra.mxu0 %v515
    %1444 = vmatprep.subr.mxu0 0.0
    %1445 = vmatpush1.msra.mxu0 0.0
    %1446 = vmatprep.subr.mxu0 0.0
    %1447 = vmatpush1.msra.mxu0 0.0
    %1448 = vmatprep.subr.mxu0 0.0
    %1449 = vmatpush1.msra.mxu0 0.0
    %1450 = vmatprep.subr.mxu0 0.0
    %1451 = vmatpush1.msra.mxu0 0.0
    %1452 = vmatprep.subr.mxu0 0.0
    %1453 = vmatpush1.msra.mxu0 0.0
    %1454 = vmatprep.subr.mxu0 0.0
    %1455 = vmatpush1.msra.mxu0 0.0
    %1456 = vmatprep.subr.mxu0 0.0
    %1457 = vmatpush1.msra.mxu0 0.0
    %1458 = vmatprep.subr.mxu0 0.0
    %1459 = vmatpush1.msra.mxu0 0.0
    %1460 = vmatprep.subr.mxu0 0.0
    %1461 = vmatpush1.msra.mxu0 0.0
    %1462 = vmatprep.subr.mxu0 0.0
    %1463 = vmatpush1.msra.mxu0 0.0
    %1464 = vmatprep.subr.mxu0 0.0
    %1465 = vmatpush1.msra.mxu0 0.0
    %1466 = vmatprep.subr.mxu0 0.0
    %1467 = vmatpush1.msra.mxu0 0.0
    %1468 = vmatprep.subr.mxu0 0.0
    %1469 = vmatpush1.msra.mxu0 0.0
    %1470 = vmatprep.subr.mxu0 0.0
    %1471 = vmatpush1.msra.mxu0 0.0
    %1472 = vmatprep.subr.mxu0 0.0
    %1473 = vmatpush1.msra.mxu0 0.0
    %1474 = vmatprep.subr.mxu0 0.0
    %1475 = vmatpush1.msra.mxu0 0.0
    %1476 = vmatprep.subr.mxu0 0.0
    %1477 = vmatpush1.msra.mxu0 0.0
    %1478 = vmatprep.subr.mxu0 0.0
    %1479 = vmatpush1.msra.mxu0 0.0
    %1480 = vmatprep.subr.mxu0 0.0
    %1481 = vmatpush1.msra.mxu0 0.0
    %1482 = vmatprep.subr.mxu0 0.0
    %1483 = vmatpush1.msra.mxu0 0.0
    %1484 = vmatprep.subr.mxu0 0.0
    %1485 = vmatpush1.msra.mxu0 0.0
    %1486 = vmatprep.subr.mxu0 0.0
    %1487 = vmatpush1.msra.mxu0 0.0
    %1488 = vmatprep.subr.mxu0 0.0
    %1489 = vmatpush1.msra.mxu0 0.0
    %1490 = vmatprep.subr.mxu0 0.0
    %1491 = vmatpush1.msra.mxu0 0.0
    %1492 = vmatprep.subr.mxu0 0.0
    %1493 = vmatpush1.msra.mxu0 0.0
    %1494 = vmatprep.subr.mxu0 0.0
    %1495 = vmatpush1.msra.mxu0 0.0
    %1496 = vmatprep.subr.mxu0 0.0
    %1497 = vmatpush1.msra.mxu0 0.0
    %1498 = vmatprep.subr.mxu0 0.0
    %1499 = vmatpush1.msra.mxu0 0.0
    %1500 = vmatprep.subr.mxu0 0.0
    %1501 = vmatpush1.msra.mxu0 0.0
    %1502 = vmatprep.subr.mxu0 0.0
    %1503 = vmatpush1.msra.mxu0 0.0
    %1504 = vmatprep.mubr.f32.mxu0 0.0
    %1505 = vmatmul.mubr.f32.gmra.mrb[0].mxu0 %v1214
    %v1506 = vpop.f32.mrb[0].mxu0
    %v1507 = vadd.f32 %v152, %v1506
    %v1508 = vpop.f32.mrb[0].mxu0
    %1509 = vdwg.mxu0
    %1510 = vmatprep.subr.mxu0 0.0
    %1511 = vmatpush1.msra.mxu0 %v587
    %1512 = vmatprep.subr.mxu0 0.0
    %1513 = vmatpush1.msra.mxu0 %v588
    %1514 = vmatprep.subr.mxu0 0.0
    %1515 = vmatpush1.msra.mxu0 %v589
    %1516 = vmatprep.subr.mxu0 0.0
    %1517 = vmatpush1.msra.mxu0 %v590
    %1518 = vmatprep.subr.mxu0 0.0
    %1519 = vmatpush1.msra.mxu0 0.0
    %1520 = vmatprep.subr.mxu0 0.0
    %1521 = vmatpush1.msra.mxu0 0.0
    %1522 = vmatprep.subr.mxu0 0.0
    %1523 = vmatpush1.msra.mxu0 0.0
    %1524 = vmatprep.subr.mxu0 0.0
    %1525 = vmatpush1.msra.mxu0 0.0
    %1526 = vmatprep.subr.mxu0 0.0
    %1527 = vmatpush1.msra.mxu0 0.0
    %1528 = vmatprep.subr.mxu0 0.0
    %1529 = vmatpush1.msra.mxu0 0.0
    %1530 = vmatprep.subr.mxu0 0.0
    %1531 = vmatpush1.msra.mxu0 0.0
    %1532 = vmatprep.subr.mxu0 0.0
    %1533 = vmatpush1.msra.mxu0 0.0
    %1534 = vmatprep.subr.mxu0 0.0
    %1535 = vmatpush1.msra.mxu0 0.0
    %1536 = vmatprep.subr.mxu0 0.0
    %1537 = vmatpush1.msra.mxu0 0.0
    %1538 = vmatprep.subr.mxu0 0.0
    %1539 = vmatpush1.msra.mxu0 0.0
    %1540 = vmatprep.subr.mxu0 0.0
    %1541 = vmatpush1.msra.mxu0 0.0
    %1542 = vmatprep.subr.mxu0 0.0
    %1543 = vmatpush1.msra.mxu0 0.0
    %1544 = vmatprep.subr.mxu0 0.0
    %1545 = vmatpush1.msra.mxu0 0.0
    %1546 = vmatprep.subr.mxu0 0.0
    %1547 = vmatpush1.msra.mxu0 0.0
    %1548 = vmatprep.subr.mxu0 0.0
    %1549 = vmatpush1.msra.mxu0 0.0
    %1550 = vmatprep.subr.mxu0 0.0
    %1551 = vmatpush1.msra.mxu0 0.0
    %1552 = vmatprep.subr.mxu0 0.0
    %1553 = vmatpush1.msra.mxu0 0.0
    %1554 = vmatprep.subr.mxu0 0.0
    %1555 = vmatpush1.msra.mxu0 0.0
    %1556 = vmatprep.subr.mxu0 0.0
    %1557 = vmatpush1.msra.mxu0 0.0
    %1558 = vmatprep.subr.mxu0 0.0
    %1559 = vmatpush1.msra.mxu0 0.0
    %1560 = vmatprep.subr.mxu0 0.0
    %1561 = vmatpush1.msra.mxu0 0.0
    %1562 = vmatprep.subr.mxu0 0.0
    %1563 = vmatpush1.msra.mxu0 0.0
    %1564 = vmatprep.subr.mxu0 0.0
    %1565 = vmatpush1.msra.mxu0 0.0
    %1566 = vmatprep.subr.mxu0 0.0
    %1567 = vmatpush1.msra.mxu0 0.0
    %1568 = vmatprep.subr.mxu0 0.0
    %1569 = vmatpush1.msra.mxu0 0.0
    %1570 = vmatprep.subr.mxu0 0.0
    %1571 = vmatpush1.msra.mxu0 0.0
    %1572 = vmatprep.subr.mxu0 0.0
    %1573 = vmatpush1.msra.mxu0 0.0
    %1574 = vmatprep.mubr.f32.mxu0 0.0
    %1575 = vmatmul.mubr.f32.gmra.mrb[0].mxu0 %v749
    %v1576 = vpop.f32.mrb[0].mxu0
    %v1577 = vadd.f32 %v160, %v1576
    %v1578 = vpop.f32.mrb[0].mxu0
    %1579 = vdwg.mxu0
    %v1580 = vmul.f32 %v1292, %v1577
    %v1581 = vadd.f32 %v1507, %v1580
    %v1582 = vtanh.pop %v1581
    %v1583 = vsub.f32 %v666, %v1582
    %v1584 = vmul.f32 %v1439, %v1583
    %v1585 = vadd.f32 %v1582, %v1584
    %v1587 = vsel %vm203, %v1140, 0
    %1589 = vmatprep.subr.mxu0 0.0
    %1590 = vmatpush1.msra.mxu0 %v671
    %1591 = vmatprep.subr.mxu0 0.0
    %1592 = vmatpush1.msra.mxu0 %v672
    %1593 = vmatprep.subr.mxu0 0.0
    %1594 = vmatpush1.msra.mxu0 %v673
    %1595 = vmatprep.subr.mxu0 0.0
    %1596 = vmatpush1.msra.mxu0 %v674
    %1597 = vmatprep.subr.mxu0 0.0
    %1598 = vmatpush1.msra.mxu0 0.0
    %1599 = vmatprep.subr.mxu0 0.0
    %1600 = vmatpush1.msra.mxu0 0.0
    %1601 = vmatprep.subr.mxu0 0.0
    %1602 = vmatpush1.msra.mxu0 0.0
    %1603 = vmatprep.subr.mxu0 0.0
    %1604 = vmatpush1.msra.mxu0 0.0
    %1605 = vmatprep.subr.mxu0 0.0
    %1606 = vmatpush1.msra.mxu0 0.0
    %1607 = vmatprep.subr.mxu0 0.0
    %1608 = vmatpush1.msra.mxu0 0.0
    %1609 = vmatprep.subr.mxu0 0.0
    %1610 = vmatpush1.msra.mxu0 0.0
    %1611 = vmatprep.subr.mxu0 0.0
    %1612 = vmatpush1.msra.mxu0 0.0
    %1613 = vmatprep.subr.mxu0 0.0
    %1614 = vmatpush1.msra.mxu0 0.0
    %1615 = vmatprep.subr.mxu0 0.0
    %1616 = vmatpush1.msra.mxu0 0.0
    %1617 = vmatprep.subr.mxu0 0.0
    %1618 = vmatpush1.msra.mxu0 0.0
    %1619 = vmatprep.subr.mxu0 0.0
    %1620 = vmatpush1.msra.mxu0 0.0
    %1621 = vmatprep.subr.mxu0 0.0
    %1622 = vmatpush1.msra.mxu0 0.0
    %1623 = vmatprep.subr.mxu0 0.0
    %1624 = vmatpush1.msra.mxu0 0.0
    %1625 = vmatprep.subr.mxu0 0.0
    %1626 = vmatpush1.msra.mxu0 0.0
    %1627 = vmatprep.subr.mxu0 0.0
    %1628 = vmatpush1.msra.mxu0 0.0
    %1629 = vmatprep.subr.mxu0 0.0
    %1630 = vmatpush1.msra.mxu0 0.0
    %1631 = vmatprep.subr.mxu0 0.0
    %1632 = vmatpush1.msra.mxu0 0.0
    %1633 = vmatprep.subr.mxu0 0.0
    %1634 = vmatpush1.msra.mxu0 0.0
    %1635 = vmatprep.subr.mxu0 0.0
    %1636 = vmatpush1.msra.mxu0 0.0
    %1637 = vmatprep.subr.mxu0 0.0
    %1638 = vmatpush1.msra.mxu0 0.0
    %1639 = vmatprep.subr.mxu0 0.0
    %1640 = vmatpush1.msra.mxu0 0.0
    %1641 = vmatprep.subr.mxu0 0.0
    %1642 = vmatpush1.msra.mxu0 0.0
    %1643 = vmatprep.subr.mxu0 0.0
    %1644 = vmatpush1.msra.mxu0 0.0
    %1645 = vmatprep.subr.mxu0 0.0
    %1646 = vmatpush1.msra.mxu0 0.0
    %1647 = vmatprep.subr.mxu0 0.0
    %1648 = vmatpush1.msra.mxu0 0.0
    %1649 = vmatprep.subr.mxu0 0.0
    %1650 = vmatpush1.msra.mxu0 0.0
    %1651 = vmatprep.subr.mxu0 0.0
    %1652 = vmatpush1.msra.mxu0 0.0
    %1653 = vmatprep.mubr.f32.mxu0 0.0
    %1654 = vmatmul.mubr.f32.gmra.mrb[0].mxu0 %v1587
    %v1655 = vpop.f32.mrb[0].mxu0
    %v1656 = vadd.f32 0.0, %v1655
    %v1657 = vpop.f32.mrb[0].mxu0
    %1658 = vdwg.mxu0
    %v1660 = vsel %vm203, %v1585, 0
    %1662 = vmatprep.subr.mxu0 0.0
    %1663 = vmatpush1.msra.mxu0 %v667
    %1664 = vmatprep.subr.mxu0 0.0
    %1665 = vmatpush1.msra.mxu0 %v668
    %1666 = vmatprep.subr.mxu0 0.0
    %1667 = vmatpush1.msra.mxu0 %v669
    %1668 = vmatprep.subr.mxu0 0.0
    %1669 = vmatpush1.msra.mxu0 %v670
    %1670 = vmatprep.subr.mxu0 0.0
    %1671 = vmatpush1.msra.mxu0 0.0
    %1672 = vmatprep.subr.mxu0 0.0
    %1673 = vmatpush1.msra.mxu0 0.0
    %1674 = vmatprep.subr.mxu0 0.0
    %1675 = vmatpush1.msra.mxu0 0.0
    %1676 = vmatprep.subr.mxu0 0.0
    %1677 = vmatpush1.msra.mxu0 0.0
    %1678 = vmatprep.subr.mxu0 0.0
    %1679 = vmatpush1.msra.mxu0 0.0
    %1680 = vmatprep.subr.mxu0 0.0
    %1681 = vmatpush1.msra.mxu0 0.0
    %1682 = vmatprep.subr.mxu0 0.0
    %1683 = vmatpush1.msra.mxu0 0.0
    %1684 = vmatprep.subr.mxu0 0.0
    %1685 = vmatpush1.msra.mxu0 0.0
    %1686 = vmatprep.subr.mxu0 0.0
    %1687 = vmatpush1.msra.mxu0 0.0
    %1688 = vmatprep.subr.mxu0 0.0
    %1689 = vmatpush1.msra.mxu0 0.0
    %1690 = vmatprep.subr.mxu0 0.0
    %1691 = vmatpush1.msra.mxu0 0.0
    %1692 = vmatprep.subr.mxu0 0.0
    %1693 = vmatpush1.msra.mxu0 0.0
    %1694 = vmatprep.subr.mxu0 0.0
    %1695 = vmatpush1.msra.mxu0 0.0
    %1696 = vmatprep.subr.mxu0 0.0
    %1697 = vmatpush1.msra.mxu0 0.0
    %1698 = vmatprep.subr.mxu0 0.0
    %1699 = vmatpush1.msra.mxu0 0.0
    %1700 = vmatprep.subr.mxu0 0.0
    %1701 = vmatpush1.msra.mxu0 0.0
    %1702 = vmatprep.subr.mxu0 0.0
    %1703 = vmatpush1.msra.mxu0 0.0
    %1704 = vmatprep.subr.mxu0 0.0
    %1705 = vmatpush1.msra.mxu0 0.0
    %1706 = vmatprep.subr.mxu0 0.0
    %1707 = vmatpush1.msra.mxu0 0.0
    %1708 = vmatprep.subr.mxu0 0.0
    %1709 = vmatpush1.msra.mxu0 0.0
    %1710 = vmatprep.subr.mxu0 0.0
    %1711 = vmatpush1.msra.mxu0 0.0
    %1712 = vmatprep.subr.mxu0 0.0
    %1713 = vmatpush1.msra.mxu0 0.0
    %1714 = vmatprep.subr.mxu0 0.0
    %1715 = vmatpush1.msra.mxu0 0.0
    %1716 = vmatprep.subr.mxu0 0.0
    %1717 = vmatpush1.msra.mxu0 0.0
    %1718 = vmatprep.subr.mxu0 0.0
    %1719 = vmatpush1.msra.mxu0 0.0
    %1720 = vmatprep.subr.mxu0 0.0
    %1721 = vmatpush1.msra.mxu0 0.0
    %1722 = vmatprep.subr.mxu0 0.0
    %1723 = vmatpush1.msra.mxu0 0.0
    %1724 = vmatprep.subr.mxu0 0.0
    %1725 = vmatpush1.msra.mxu0 0.0
    %1726 = vmatprep.mubr.f32.mxu0 0.0
    %1727 = vmatmul.mubr.f32.gmra.mrb[0].mxu0 %v1660
    %v1728 = vpop.f32.mrb[0].mxu0
    %v1729 = vadd.f32 %v1656, %v1728
    %v1730 = vpop.f32.mrb[0].mxu0
    %1731 = vdwg.mxu0
    %v1732 = vadd.f32 %v1729, %v167
    %v1733 = vxor.u32 %v1732, 2147483648
    %v1734 = vmul.f32 %v1733, 1.442695
    %v1735 = vpow.pop %v1734
    %v1736 = vadd.f32 %v1735, 1.0
    %v1737 = vrcp.pop %v1736
    %v1738 = vmul.f32 1.0, %v1737
    %1739 = vmatprep.subr.mxu0 0.0
    %1740 = vmatpush1.msra.mxu0 %v834
    %1741 = vmatprep.subr.mxu0 0.0
    %1742 = vmatpush1.msra.mxu0 %v835
    %1743 = vmatprep.subr.mxu0 0.0
    %1744 = vmatpush1.msra.mxu0 %v836
    %1745 = vmatprep.subr.mxu0 0.0
    %1746 = vmatpush1.msra.mxu0 %v837
    %1747 = vmatprep.subr.mxu0 0.0
    %1748 = vmatpush1.msra.mxu0 0.0
    %1749 = vmatprep.subr.mxu0 0.0
    %1750 = vmatpush1.msra.mxu0 0.0
    %1751 = vmatprep.subr.mxu0 0.0
    %1752 = vmatpush1.msra.mxu0 0.0
    %1753 = vmatprep.subr.mxu0 0.0
    %1754 = vmatpush1.msra.mxu0 0.0
    %1755 = vmatprep.subr.mxu0 0.0
    %1756 = vmatpush1.msra.mxu0 0.0
    %1757 = vmatprep.subr.mxu0 0.0
    %1758 = vmatpush1.msra.mxu0 0.0
    %1759 = vmatprep.subr.mxu0 0.0
    %1760 = vmatpush1.msra.mxu0 0.0
    %1761 = vmatprep.subr.mxu0 0.0
    %1762 = vmatpush1.msra.mxu0 0.0
    %1763 = vmatprep.subr.mxu0 0.0
    %1764 = vmatpush1.msra.mxu0 0.0
    %1765 = vmatprep.subr.mxu0 0.0
    %1766 = vmatpush1.msra.mxu0 0.0
    %1767 = vmatprep.subr.mxu0 0.0
    %1768 = vmatpush1.msra.mxu0 0.0
    %1769 = vmatprep.subr.mxu0 0.0
    %1770 = vmatpush1.msra.mxu0 0.0
    %1771 = vmatprep.subr.mxu0 0.0
    %1772 = vmatpush1.msra.mxu0 0.0
    %1773 = vmatprep.subr.mxu0 0.0
    %1774 = vmatpush1.msra.mxu0 0.0
    %1775 = vmatprep.subr.mxu0 0.0
    %1776 = vmatpush1.msra.mxu0 0.0
    %1777 = vmatprep.subr.mxu0 0.0
    %1778 = vmatpush1.msra.mxu0 0.0
    %1779 = vmatprep.subr.mxu0 0.0
    %1780 = vmatpush1.msra.mxu0 0.0
    %1781 = vmatprep.subr.mxu0 0.0
    %1782 = vmatpush1.msra.mxu0 0.0
    %1783 = vmatprep.subr.mxu0 0.0
    %1784 = vmatpush1.msra.mxu0 0.0
    %1785 = vmatprep.subr.mxu0 0.0
    %1786 = vmatpush1.msra.mxu0 0.0
    %1787 = vmatprep.subr.mxu0 0.0
    %1788 = vmatpush1.msra.mxu0 0.0
    %1789 = vmatprep.subr.mxu0 0.0
    %1790 = vmatpush1.msra.mxu0 0.0
    %1791 = vmatprep.subr.mxu0 0.0
    %1792 = vmatpush1.msra.mxu0 0.0
    %1793 = vmatprep.subr.mxu0 0.0
    %1794 = vmatpush1.msra.mxu0 0.0
    %1795 = vmatprep.subr.mxu0 0.0
    %1796 = vmatpush1.msra.mxu0 0.0
    %1797 = vmatprep.subr.mxu0 0.0
    %1798 = vmatpush1.msra.mxu0 0.0
    %1799 = vmatprep.subr.mxu0 0.0
    %1800 = vmatpush1.msra.mxu0 0.0
    %1801 = vmatprep.subr.mxu0 0.0
    %1802 = vmatpush1.msra.mxu0 0.0
    %1803 = vmatprep.mubr.f32.mxu0 0.0
    %1804 = vmatmul.mubr.f32.gmra.mrb[0].mxu0 %v1587
    %v1805 = vpop.f32.mrb[0].mxu0
    %v1806 = vadd.f32 0.0, %v1805
    %v1807 = vpop.f32.mrb[0].mxu0
    %1808 = vdwg.mxu0
    %1809 = vmatprep.subr.mxu0 0.0
    %1810 = vmatpush1.msra.mxu0 %v829
    %1811 = vmatprep.subr.mxu0 0.0
    %1812 = vmatpush1.msra.mxu0 %v830
    %1813 = vmatprep.subr.mxu0 0.0
    %1814 = vmatpush1.msra.mxu0 %v831
    %1815 = vmatprep.subr.mxu0 0.0
    %1816 = vmatpush1.msra.mxu0 %v832
    %1817 = vmatprep.subr.mxu0 0.0
    %1818 = vmatpush1.msra.mxu0 0.0
    %1819 = vmatprep.subr.mxu0 0.0
    %1820 = vmatpush1.msra.mxu0 0.0
    %1821 = vmatprep.subr.mxu0 0.0
    %1822 = vmatpush1.msra.mxu0 0.0
    %1823 = vmatprep.subr.mxu0 0.0
    %1824 = vmatpush1.msra.mxu0 0.0
    %1825 = vmatprep.subr.mxu0 0.0
    %1826 = vmatpush1.msra.mxu0 0.0
    %1827 = vmatprep.subr.mxu0 0.0
    %1828 = vmatpush1.msra.mxu0 0.0
    %1829 = vmatprep.subr.mxu0 0.0
    %1830 = vmatpush1.msra.mxu0 0.0
    %1831 = vmatprep.subr.mxu0 0.0
    %1832 = vmatpush1.msra.mxu0 0.0
    %1833 = vmatprep.subr.mxu0 0.0
    %1834 = vmatpush1.msra.mxu0 0.0
    %1835 = vmatprep.subr.mxu0 0.0
    %1836 = vmatpush1.msra.mxu0 0.0
    %1837 = vmatprep.subr.mxu0 0.0
    %1838 = vmatpush1.msra.mxu0 0.0
    %1839 = vmatprep.subr.mxu0 0.0
    %1840 = vmatpush1.msra.mxu0 0.0
    %1841 = vmatprep.subr.mxu0 0.0
    %1842 = vmatpush1.msra.mxu0 0.0
    %1843 = vmatprep.subr.mxu0 0.0
    %1844 = vmatpush1.msra.mxu0 0.0
    %1845 = vmatprep.subr.mxu0 0.0
    %1846 = vmatpush1.msra.mxu0 0.0
    %1847 = vmatprep.subr.mxu0 0.0
    %1848 = vmatpush1.msra.mxu0 0.0
    %1849 = vmatprep.subr.mxu0 0.0
    %1850 = vmatpush1.msra.mxu0 0.0
    %1851 = vmatprep.subr.mxu0 0.0
    %1852 = vmatpush1.msra.mxu0 0.0
    %1853 = vmatprep.subr.mxu0 0.0
    %1854 = vmatpush1.msra.mxu0 0.0
    %1855 = vmatprep.subr.mxu0 0.0
    %1856 = vmatpush1.msra.mxu0 0.0
    %1857 = vmatprep.subr.mxu0 0.0
    %1858 = vmatpush1.msra.mxu0 0.0
    %1859 = vmatprep.subr.mxu0 0.0
    %1860 = vmatpush1.msra.mxu0 0.0
    %1861 = vmatprep.subr.mxu0 0.0
    %1862 = vmatpush1.msra.mxu0 0.0
    %1863 = vmatprep.subr.mxu0 0.0
    %1864 = vmatpush1.msra.mxu0 0.0
    %1865 = vmatprep.subr.mxu0 0.0
    %1866 = vmatpush1.msra.mxu0 0.0
    %1867 = vmatprep.subr.mxu0 0.0
    %1868 = vmatpush1.msra.mxu0 0.0
    %1869 = vmatprep.subr.mxu0 0.0
    %1870 = vmatpush1.msra.mxu0 0.0
    %1871 = vmatprep.subr.mxu0 0.0
    %1872 = vmatpush1.msra.mxu0 0.0
    %1873 = vmatprep.mubr.f32.mxu0 0.0
    %1874 = vmatmul.mubr.f32.gmra.mrb[0].mxu0 %v1660
    %v1875 = vpop.f32.mrb[0].mxu0
    %v1876 = vadd.f32 %v1806, %v1875
    %v1877 = vpop.f32.mrb[0].mxu0
    %1878 = vdwg.mxu0
    %v1879 = vadd.f32 %v1876, %v175
    %v1880 = vxor.u32 %v1879, 2147483648
    %v1881 = vmul.f32 %v1880, 1.442695
    %v1882 = vpow.pop %v1881
    %v1883 = vadd.f32 %v1882, 1.0
    %v1884 = vrcp.pop %v1883
    %v1885 = vmul.f32 1.0, %v1884
    %1886 = vmatprep.subr.mxu0 0.0
    %1887 = vmatpush1.msra.mxu0 %v986
    %1888 = vmatprep.subr.mxu0 0.0
    %1889 = vmatpush1.msra.mxu0 %v987
    %1890 = vmatprep.subr.mxu0 0.0
    %1891 = vmatpush1.msra.mxu0 %v988
    %1892 = vmatprep.subr.mxu0 0.0
    %1893 = vmatpush1.msra.mxu0 %v989
    %1894 = vmatprep.subr.mxu0 0.0
    %1895 = vmatpush1.msra.mxu0 0.0
    %1896 = vmatprep.subr.mxu0 0.0
    %1897 = vmatpush1.msra.mxu0 0.0
    %1898 = vmatprep.subr.mxu0 0.0
    %1899 = vmatpush1.msra.mxu0 0.0
    %1900 = vmatprep.subr.mxu0 0.0
    %1901 = vmatpush1.msra.mxu0 0.0
    %1902 = vmatprep.subr.mxu0 0.0
    %1903 = vmatpush1.msra.mxu0 0.0
    %1904 = vmatprep.subr.mxu0 0.0
    %1905 = vmatpush1.msra.mxu0 0.0
    %1906 = vmatprep.subr.mxu0 0.0
    %1907 = vmatpush1.msra.mxu0 0.0
    %1908 = vmatprep.subr.mxu0 0.0
    %1909 = vmatpush1.msra.mxu0 0.0
    %1910 = vmatprep.subr.mxu0 0.0
    %1911 = vmatpush1.msra.mxu0 0.0
    %1912 = vmatprep.subr.mxu0 0.0
    %1913 = vmatpush1.msra.mxu0 0.0
    %1914 = vmatprep.subr.mxu0 0.0
    %1915 = vmatpush1.msra.mxu0 0.0
    %1916 = vmatprep.subr.mxu0 0.0
    %1917 = vmatpush1.msra.mxu0 0.0
    %1918 = vmatprep.subr.mxu0 0.0
    %1919 = vmatpush1.msra.mxu0 0.0
    %1920 = vmatprep.subr.mxu0 0.0
    %1921 = vmatpush1.msra.mxu0 0.0
    %1922 = vmatprep.subr.mxu0 0.0
    %1923 = vmatpush1.msra.mxu0 0.0
    %1924 = vmatprep.subr.mxu0 0.0
    %1925 = vmatpush1.msra.mxu0 0.0
    %1926 = vmatprep.subr.mxu0 0.0
    %1927 = vmatpush1.msra.mxu0 0.0
    %1928 = vmatprep.subr.mxu0 0.0
    %1929 = vmatpush1.msra.mxu0 0.0
    %1930 = vmatprep.subr.mxu0 0.0
    %1931 = vmatpush1.msra.mxu0 0.0
    %1932 = vmatprep.subr.mxu0 0.0
    %1933 = vmatpush1.msra.mxu0 0.0
    %1934 = vmatprep.subr.mxu0 0.0
    %1935 = vmatpush1.msra.mxu0 0.0
    %1936 = vmatprep.subr.mxu0 0.0
    %1937 = vmatpush1.msra.mxu0 0.0
    %1938 = vmatprep.subr.mxu0 0.0
    %1939 = vmatpush1.msra.mxu0 0.0
    %1940 = vmatprep.subr.mxu0 0.0
    %1941 = vmatpush1.msra.mxu0 0.0
    %1942 = vmatprep.subr.mxu0 0.0
    %1943 = vmatpush1.msra.mxu0 0.0
    %1944 = vmatprep.subr.mxu0 0.0
    %1945 = vmatpush1.msra.mxu0 0.0
    %1946 = vmatprep.subr.mxu0 0.0
    %1947 = vmatpush1.msra.mxu0 0.0
    %1948 = vmatprep.subr.mxu0 0.0
    %1949 = vmatpush1.msra.mxu0 0.0
    %1950 = vmatprep.mubr.f32.mxu0 0.0
    %1951 = vmatmul.mubr.f32.gmra.mrb[0].mxu0 %v1660
    %v1952 = vpop.f32.mrb[0].mxu0
    %v1953 = vadd.f32 %v183, %v1952
    %v1954 = vpop.f32.mrb[0].mxu0
    %1955 = vdwg.mxu0
    %1956 = vmatprep.subr.mxu0 0.0
    %1957 = vmatpush1.msra.mxu0 %v1061
    %1958 = vmatprep.subr.mxu0 0.0
    %1959 = vmatpush1.msra.mxu0 %v1062
    %1960 = vmatprep.subr.mxu0 0.0
    %1961 = vmatpush1.msra.mxu0 %v1063
    %1962 = vmatprep.subr.mxu0 0.0
    %1963 = vmatpush1.msra.mxu0 %v1064
    %1964 = vmatprep.subr.mxu0 0.0
    %1965 = vmatpush1.msra.mxu0 0.0
    %1966 = vmatprep.subr.mxu0 0.0
    %1967 = vmatpush1.msra.mxu0 0.0
    %1968 = vmatprep.subr.mxu0 0.0
    %1969 = vmatpush1.msra.mxu0 0.0
    %1970 = vmatprep.subr.mxu0 0.0
    %1971 = vmatpush1.msra.mxu0 0.0
    %1972 = vmatprep.subr.mxu0 0.0
    %1973 = vmatpush1.msra.mxu0 0.0
    %1974 = vmatprep.subr.mxu0 0.0
    %1975 = vmatpush1.msra.mxu0 0.0
    %1976 = vmatprep.subr.mxu0 0.0
    %1977 = vmatpush1.msra.mxu0 0.0
    %1978 = vmatprep.subr.mxu0 0.0
    %1979 = vmatpush1.msra.mxu0 0.0
    %1980 = vmatprep.subr.mxu0 0.0
    %1981 = vmatpush1.msra.mxu0 0.0
    %1982 = vmatprep.subr.mxu0 0.0
    %1983 = vmatpush1.msra.mxu0 0.0
    %1984 = vmatprep.subr.mxu0 0.0
    %1985 = vmatpush1.msra.mxu0 0.0
    %1986 = vmatprep.subr.mxu0 0.0
    %1987 = vmatpush1.msra.mxu0 0.0
    %1988 = vmatprep.subr.mxu0 0.0
    %1989 = vmatpush1.msra.mxu0 0.0
    %1990 = vmatprep.subr.mxu0 0.0
    %1991 = vmatpush1.msra.mxu0 0.0
    %1992 = vmatprep.subr.mxu0 0.0
    %1993 = vmatpush1.msra.mxu0 0.0
    %1994 = vmatprep.subr.mxu0 0.0
    %1995 = vmatpush1.msra.mxu0 0.0
    %1996 = vmatprep.subr.mxu0 0.0
    %1997 = vmatpush1.msra.mxu0 0.0
    %1998 = vmatprep.subr.mxu0 0.0
    %1999 = vmatpush1.msra.mxu0 0.0
    %2000 = vmatprep.subr.mxu0 0.0
    %2001 = vmatpush1.msra.mxu0 0.0
    %2002 = vmatprep.subr.mxu0 0.0
    %2003 = vmatpush1.msra.mxu0 0.0
    %2004 = vmatprep.subr.mxu0 0.0
    %2005 = vmatpush1.msra.mxu0 0.0
    %2006 = vmatprep.subr.mxu0 0.0
    %2007 = vmatpush1.msra.mxu0 0.0
    %2008 = vmatprep.subr.mxu0 0.0
    %2009 = vmatpush1.msra.mxu0 0.0
    %2010 = vmatprep.subr.mxu0 0.0
    %2011 = vmatpush1.msra.mxu0 0.0
    %2012 = vmatprep.subr.mxu0 0.0
    %2013 = vmatpush1.msra.mxu0 0.0
    %2014 = vmatprep.subr.mxu0 0.0
    %2015 = vmatpush1.msra.mxu0 0.0
    %2016 = vmatprep.subr.mxu0 0.0
    %2017 = vmatpush1.msra.mxu0 0.0
    %2018 = vmatprep.subr.mxu0 0.0
    %2019 = vmatpush1.msra.mxu0 0.0
    %2020 = vmatprep.mubr.f32.mxu0 0.0
    %2021 = vmatmul.mubr.f32.gmra.mrb[0].mxu0 %v1587
    %v2022 = vpop.f32.mrb[0].mxu0
    %v2023 = vadd.f32 %v191, %v2022
    %v2024 = vpop.f32.mrb[0].mxu0
    %2025 = vdwg.mxu0
    %v2026 = vmul.f32 %v1738, %v2023
    %v2027 = vadd.f32 %v1953, %v2026
    %v2028 = vtanh.pop %v2027
    %v2029 = vsub.f32 %v1140, %v2028
    %v2030 = vmul.f32 %v1885, %v2029
    %v2031 = vadd.f32 %v2028, %v2030
    %s2032 = scalar_lea.vmem [#allocation2], 16
    %v2033 = vld [vmem:[%s2032] sm:$0xff]
    %2034 = vmatprep.subr.mxu0 0.0
    %2035 = vmatpush1.msra.mxu0 %v199
    %2036 = vmatprep.subr.mxu0 0.0
    %2037 = vmatpush1.msra.mxu0 %v200
    %2038 = vmatprep.subr.mxu0 0.0
    %2039 = vmatpush1.msra.mxu0 %v201
    %2040 = vmatprep.subr.mxu0 0.0
    %2041 = vmatpush1.msra.mxu0 %v202
    %2042 = vmatprep.subr.mxu0 0.0
    %2043 = vmatpush1.msra.mxu0 0.0
    %2044 = vmatprep.subr.mxu0 0.0
    %2045 = vmatpush1.msra.mxu0 0.0
    %2046 = vmatprep.subr.mxu0 0.0
    %2047 = vmatpush1.msra.mxu0 0.0
    %2048 = vmatprep.subr.mxu0 0.0
    %2049 = vmatpush1.msra.mxu0 0.0
    %2050 = vmatprep.subr.mxu0 0.0
    %2051 = vmatpush1.msra.mxu0 0.0
    %2052 = vmatprep.subr.mxu0 0.0
    %2053 = vmatpush1.msra.mxu0 0.0
    %2054 = vmatprep.subr.mxu0 0.0
    %2055 = vmatpush1.msra.mxu0 0.0
    %2056 = vmatprep.subr.mxu0 0.0
    %2057 = vmatpush1.msra.mxu0 0.0
    %2058 = vmatprep.subr.mxu0 0.0
    %2059 = vmatpush1.msra.mxu0 0.0
    %2060 = vmatprep.subr.mxu0 0.0
    %2061 = vmatpush1.msra.mxu0 0.0
    %2062 = vmatprep.subr.mxu0 0.0
    %2063 = vmatpush1.msra.mxu0 0.0
    %2064 = vmatprep.subr.mxu0 0.0
    %2065 = vmatpush1.msra.mxu0 0.0
    %2066 = vmatprep.subr.mxu0 0.0
    %2067 = vmatpush1.msra.mxu0 0.0
    %2068 = vmatprep.subr.mxu0 0.0
    %2069 = vmatpush1.msra.mxu0 0.0
    %2070 = vmatprep.subr.mxu0 0.0
    %2071 = vmatpush1.msra.mxu0 0.0
    %2072 = vmatprep.subr.mxu0 0.0
    %2073 = vmatpush1.msra.mxu0 0.0
    %2074 = vmatprep.subr.mxu0 0.0
    %2075 = vmatpush1.msra.mxu0 0.0
    %2076 = vmatprep.subr.mxu0 0.0
    %2077 = vmatpush1.msra.mxu0 0.0
    %2078 = vmatprep.subr.mxu0 0.0
    %2079 = vmatpush1.msra.mxu0 0.0
    %2080 = vmatprep.subr.mxu0 0.0
    %2081 = vmatpush1.msra.mxu0 0.0
    %2082 = vmatprep.subr.mxu0 0.0
    %2083 = vmatpush1.msra.mxu0 0.0
    %2084 = vmatprep.subr.mxu0 0.0
    %2085 = vmatpush1.msra.mxu0 0.0
    %2086 = vmatprep.subr.mxu0 0.0
    %2087 = vmatpush1.msra.mxu0 0.0
    %2088 = vmatprep.subr.mxu0 0.0
    %2089 = vmatpush1.msra.mxu0 0.0
    %2090 = vmatprep.subr.mxu0 0.0
    %2091 = vmatpush1.msra.mxu0 0.0
    %2092 = vmatprep.subr.mxu0 0.0
    %2093 = vmatpush1.msra.mxu0 0.0
    %2094 = vmatprep.subr.mxu0 0.0
    %2095 = vmatpush1.msra.mxu0 0.0
    %2096 = vmatprep.subr.mxu0 0.0
    %2097 = vmatpush1.msra.mxu0 0.0
    %2098 = vmatprep.mubr.f32.mxu0 0.0
    %2099 = vmatmul.mubr.f32.gmra.mrb[0].mxu0 %v1660
    %v2100 = vpop.f32.mrb[0].mxu0
    %v2101 = vadd.f32 0.0, %v2100
    %v2102 = vpop.f32.mrb[0].mxu0
    %2103 = vdwg.mxu0
    %v2105 = vsel %vm277, %v2033, 0
    %2107 = vmatprep.subr.mxu0 0.0
    %2108 = vmatpush1.msra.mxu0 %v197
    %2109 = vmatprep.subr.mxu0 0.0
    %2110 = vmatpush1.msra.mxu0 %v198
    %2111 = vmatprep.subr.mxu0 0.0
    %2112 = vmatpush1.msra.mxu0 0.0
    %2113 = vmatprep.subr.mxu0 0.0
    %2114 = vmatpush1.msra.mxu0 0.0
    %2115 = vmatprep.subr.mxu0 0.0
    %2116 = vmatpush1.msra.mxu0 0.0
    %2117 = vmatprep.subr.mxu0 0.0
    %2118 = vmatpush1.msra.mxu0 0.0
    %2119 = vmatprep.subr.mxu0 0.0
    %2120 = vmatpush1.msra.mxu0 0.0
    %2121 = vmatprep.subr.mxu0 0.0
    %2122 = vmatpush1.msra.mxu0 0.0
    %2123 = vmatprep.subr.mxu0 0.0
    %2124 = vmatpush1.msra.mxu0 0.0
    %2125 = vmatprep.subr.mxu0 0.0
    %2126 = vmatpush1.msra.mxu0 0.0
    %2127 = vmatprep.subr.mxu0 0.0
    %2128 = vmatpush1.msra.mxu0 0.0
    %2129 = vmatprep.subr.mxu0 0.0
    %2130 = vmatpush1.msra.mxu0 0.0
    %2131 = vmatprep.subr.mxu0 0.0
    %2132 = vmatpush1.msra.mxu0 0.0
    %2133 = vmatprep.subr.mxu0 0.0
    %2134 = vmatpush1.msra.mxu0 0.0
    %2135 = vmatprep.subr.mxu0 0.0
    %2136 = vmatpush1.msra.mxu0 0.0
    %2137 = vmatprep.subr.mxu0 0.0
    %2138 = vmatpush1.msra.mxu0 0.0
    %2139 = vmatprep.subr.mxu0 0.0
    %2140 = vmatpush1.msra.mxu0 0.0
    %2141 = vmatprep.subr.mxu0 0.0
    %2142 = vmatpush1.msra.mxu0 0.0
    %2143 = vmatprep.subr.mxu0 0.0
    %2144 = vmatpush1.msra.mxu0 0.0
    %2145 = vmatprep.subr.mxu0 0.0
    %2146 = vmatpush1.msra.mxu0 0.0
    %2147 = vmatprep.subr.mxu0 0.0
    %2148 = vmatpush1.msra.mxu0 0.0
    %2149 = vmatprep.subr.mxu0 0.0
    %2150 = vmatpush1.msra.mxu0 0.0
    %2151 = vmatprep.subr.mxu0 0.0
    %2152 = vmatpush1.msra.mxu0 0.0
    %2153 = vmatprep.subr.mxu0 0.0
    %2154 = vmatpush1.msra.mxu0 0.0
    %2155 = vmatprep.subr.mxu0 0.0
    %2156 = vmatpush1.msra.mxu0 0.0
    %2157 = vmatprep.subr.mxu0 0.0
    %2158 = vmatpush1.msra.mxu0 0.0
    %2159 = vmatprep.subr.mxu0 0.0
    %2160 = vmatpush1.msra.mxu0 0.0
    %2161 = vmatprep.subr.mxu0 0.0
    %2162 = vmatpush1.msra.mxu0 0.0
    %2163 = vmatprep.subr.mxu0 0.0
    %2164 = vmatpush1.msra.mxu0 0.0
    %2165 = vmatprep.subr.mxu0 0.0
    %2166 = vmatpush1.msra.mxu0 0.0
    %2167 = vmatprep.subr.mxu0 0.0
    %2168 = vmatpush1.msra.mxu0 0.0
    %2169 = vmatprep.subr.mxu0 0.0
    %2170 = vmatpush1.msra.mxu0 0.0
    %2171 = vmatprep.mubr.f32.mxu0 0.0
    %2172 = vmatmul.mubr.f32.gmra.mrb[0].mxu0 %v2105
    %v2173 = vpop.f32.mrb[0].mxu0
    %v2174 = vadd.f32 %v2101, %v2173
    %v2175 = vpop.f32.mrb[0].mxu0
    %2176 = vdwg.mxu0
    %v2177 = vadd.f32 %v2174, %v136
    %v2178 = vxor.u32 %v2177, 2147483648
    %v2179 = vmul.f32 %v2178, 1.442695
    %v2180 = vpow.pop %v2179
    %v2181 = vadd.f32 %v2180, 1.0
    %v2182 = vrcp.pop %v2181
    %v2183 = vmul.f32 1.0, %v2182
    %2184 = vmatprep.subr.mxu0 0.0
    %2185 = vmatpush1.msra.mxu0 %v362
    %2186 = vmatprep.subr.mxu0 0.0
    %2187 = vmatpush1.msra.mxu0 %v363
    %2188 = vmatprep.subr.mxu0 0.0
    %2189 = vmatpush1.msra.mxu0 %v364
    %2190 = vmatprep.subr.mxu0 0.0
    %2191 = vmatpush1.msra.mxu0 %v365
    %2192 = vmatprep.subr.mxu0 0.0
    %2193 = vmatpush1.msra.mxu0 0.0
    %2194 = vmatprep.subr.mxu0 0.0
    %2195 = vmatpush1.msra.mxu0 0.0
    %2196 = vmatprep.subr.mxu0 0.0
    %2197 = vmatpush1.msra.mxu0 0.0
    %2198 = vmatprep.subr.mxu0 0.0
    %2199 = vmatpush1.msra.mxu0 0.0
    %2200 = vmatprep.subr.mxu0 0.0
    %2201 = vmatpush1.msra.mxu0 0.0
    %2202 = vmatprep.subr.mxu0 0.0
    %2203 = vmatpush1.msra.mxu0 0.0
    %2204 = vmatprep.subr.mxu0 0.0
    %2205 = vmatpush1.msra.mxu0 0.0
    %2206 = vmatprep.subr.mxu0 0.0
    %2207 = vmatpush1.msra.mxu0 0.0
    %2208 = vmatprep.subr.mxu0 0.0
    %2209 = vmatpush1.msra.mxu0 0.0
    %2210 = vmatprep.subr.mxu0 0.0
    %2211 = vmatpush1.msra.mxu0 0.0
    %2212 = vmatprep.subr.mxu0 0.0
    %2213 = vmatpush1.msra.mxu0 0.0
    %2214 = vmatprep.subr.mxu0 0.0
    %2215 = vmatpush1.msra.mxu0 0.0
    %2216 = vmatprep.subr.mxu0 0.0
    %2217 = vmatpush1.msra.mxu0 0.0
    %2218 = vmatprep.subr.mxu0 0.0
    %2219 = vmatpush1.msra.mxu0 0.0
    %2220 = vmatprep.subr.mxu0 0.0
    %2221 = vmatpush1.msra.mxu0 0.0
    %2222 = vmatprep.subr.mxu0 0.0
    %2223 = vmatpush1.msra.mxu0 0.0
    %2224 = vmatprep.subr.mxu0 0.0
    %2225 = vmatpush1.msra.mxu0 0.0
    %2226 = vmatprep.subr.mxu0 0.0
    %2227 = vmatpush1.msra.mxu0 0.0
    %2228 = vmatprep.subr.mxu0 0.0
    %2229 = vmatpush1.msra.mxu0 0.0
    %2230 = vmatprep.subr.mxu0 0.0
    %2231 = vmatpush1.msra.mxu0 0.0
    %2232 = vmatprep.subr.mxu0 0.0
    %2233 = vmatpush1.msra.mxu0 0.0
    %2234 = vmatprep.subr.mxu0 0.0
    %2235 = vmatpush1.msra.mxu0 0.0
    %2236 = vmatprep.subr.mxu0 0.0
    %2237 = vmatpush1.msra.mxu0 0.0
    %2238 = vmatprep.subr.mxu0 0.0
    %2239 = vmatpush1.msra.mxu0 0.0
    %2240 = vmatprep.subr.mxu0 0.0
    %2241 = vmatpush1.msra.mxu0 0.0
    %2242 = vmatprep.subr.mxu0 0.0
    %2243 = vmatpush1.msra.mxu0 0.0
    %2244 = vmatprep.subr.mxu0 0.0
    %2245 = vmatpush1.msra.mxu0 0.0
    %2246 = vmatprep.subr.mxu0 0.0
    %2247 = vmatpush1.msra.mxu0 0.0
    %2248 = vmatprep.mubr.f32.mxu0 0.0
    %2249 = vmatmul.mubr.f32.gmra.mrb[0].mxu0 %v1660
    %v2250 = vpop.f32.mrb[0].mxu0
    %v2251 = vadd.f32 0.0, %v2250
    %v2252 = vpop.f32.mrb[0].mxu0
    %2253 = vdwg.mxu0
    %2254 = vmatprep.subr.mxu0 0.0
    %2255 = vmatpush1.msra.mxu0 %v359
    %2256 = vmatprep.subr.mxu0 0.0
    %2257 = vmatpush1.msra.mxu0 %v360
    %2258 = vmatprep.subr.mxu0 0.0
    %2259 = vmatpush1.msra.mxu0 0.0
    %2260 = vmatprep.subr.mxu0 0.0
    %2261 = vmatpush1.msra.mxu0 0.0
    %2262 = vmatprep.subr.mxu0 0.0
    %2263 = vmatpush1.msra.mxu0 0.0
    %2264 = vmatprep.subr.mxu0 0.0
    %2265 = vmatpush1.msra.mxu0 0.0
    %2266 = vmatprep.subr.mxu0 0.0
    %2267 = vmatpush1.msra.mxu0 0.0
    %2268 = vmatprep.subr.mxu0 0.0
    %2269 = vmatpush1.msra.mxu0 0.0
    %2270 = vmatprep.subr.mxu0 0.0
    %2271 = vmatpush1.msra.mxu0 0.0
    %2272 = vmatprep.subr.mxu0 0.0
    %2273 = vmatpush1.msra.mxu0 0.0
    %2274 = vmatprep.subr.mxu0 0.0
    %2275 = vmatpush1.msra.mxu0 0.0
    %2276 = vmatprep.subr.mxu0 0.0
    %2277 = vmatpush1.msra.mxu0 0.0
    %2278 = vmatprep.subr.mxu0 0.0
    %2279 = vmatpush1.msra.mxu0 0.0
    %2280 = vmatprep.subr.mxu0 0.0
    %2281 = vmatpush1.msra.mxu0 0.0
    %2282 = vmatprep.subr.mxu0 0.0
    %2283 = vmatpush1.msra.mxu0 0.0
    %2284 = vmatprep.subr.mxu0 0.0
    %2285 = vmatpush1.msra.mxu0 0.0
    %2286 = vmatprep.subr.mxu0 0.0
    %2287 = vmatpush1.msra.mxu0 0.0
    %2288 = vmatprep.subr.mxu0 0.0
    %2289 = vmatpush1.msra.mxu0 0.0
    %2290 = vmatprep.subr.mxu0 0.0
    %2291 = vmatpush1.msra.mxu0 0.0
    %2292 = vmatprep.subr.mxu0 0.0
    %2293 = vmatpush1.msra.mxu0 0.0
    %2294 = vmatprep.subr.mxu0 0.0
    %2295 = vmatpush1.msra.mxu0 0.0
    %2296 = vmatprep.subr.mxu0 0.0
    %2297 = vmatpush1.msra.mxu0 0.0
    %2298 = vmatprep.subr.mxu0 0.0
    %2299 = vmatpush1.msra.mxu0 0.0
    %2300 = vmatprep.subr.mxu0 0.0
    %2301 = vmatpush1.msra.mxu0 0.0
    %2302 = vmatprep.subr.mxu0 0.0
    %2303 = vmatpush1.msra.mxu0 0.0
    %2304 = vmatprep.subr.mxu0 0.0
    %2305 = vmatpush1.msra.mxu0 0.0
    %2306 = vmatprep.subr.mxu0 0.0
    %2307 = vmatpush1.msra.mxu0 0.0
    %2308 = vmatprep.subr.mxu0 0.0
    %2309 = vmatpush1.msra.mxu0 0.0
    %2310 = vmatprep.subr.mxu0 0.0
    %2311 = vmatpush1.msra.mxu0 0.0
    %2312 = vmatprep.subr.mxu0 0.0
    %2313 = vmatpush1.msra.mxu0 0.0
    %2314 = vmatprep.subr.mxu0 0.0
    %2315 = vmatpush1.msra.mxu0 0.0
    %2316 = vmatprep.subr.mxu0 0.0
    %2317 = vmatpush1.msra.mxu0 0.0
    %2318 = vmatprep.mubr.f32.mxu0 0.0
    %2319 = vmatmul.mubr.f32.gmra.mrb[0].mxu0 %v2105
    %v2320 = vpop.f32.mrb[0].mxu0
    %v2321 = vadd.f32 %v2251, %v2320
    %v2322 = vpop.f32.mrb[0].mxu0
    %2323 = vdwg.mxu0
    %v2324 = vadd.f32 %v2321, %v144
    %v2325 = vxor.u32 %v2324, 2147483648
    %v2326 = vmul.f32 %v2325, 1.442695
    %v2327 = vpow.pop %v2326
    %v2328 = vadd.f32 %v2327, 1.0
    %v2329 = vrcp.pop %v2328
    %v2330 = vmul.f32 1.0, %v2329
    %2331 = vmatprep.subr.mxu0 0.0
    %2332 = vmatpush1.msra.mxu0 %v514
    %2333 = vmatprep.subr.mxu0 0.0
    %2334 = vmatpush1.msra.mxu0 %v515
    %2335 = vmatprep.subr.mxu0 0.0
    %2336 = vmatpush1.msra.mxu0 0.0
    %2337 = vmatprep.subr.mxu0 0.0
    %2338 = vmatpush1.msra.mxu0 0.0
    %2339 = vmatprep.subr.mxu0 0.0
    %2340 = vmatpush1.msra.mxu0 0.0
    %2341 = vmatprep.subr.mxu0 0.0
    %2342 = vmatpush1.msra.mxu0 0.0
    %2343 = vmatprep.subr.mxu0 0.0
    %2344 = vmatpush1.msra.mxu0 0.0
    %2345 = vmatprep.subr.mxu0 0.0
    %2346 = vmatpush1.msra.mxu0 0.0
    %2347 = vmatprep.subr.mxu0 0.0
    %2348 = vmatpush1.msra.mxu0 0.0
    %2349 = vmatprep.subr.mxu0 0.0
    %2350 = vmatpush1.msra.mxu0 0.0
    %2351 = vmatprep.subr.mxu0 0.0
    %2352 = vmatpush1.msra.mxu0 0.0
    %2353 = vmatprep.subr.mxu0 0.0
    %2354 = vmatpush1.msra.mxu0 0.0
    %2355 = vmatprep.subr.mxu0 0.0
    %2356 = vmatpush1.msra.mxu0 0.0
    %2357 = vmatprep.subr.mxu0 0.0
    %2358 = vmatpush1.msra.mxu0 0.0
    %2359 = vmatprep.subr.mxu0 0.0
    %2360 = vmatpush1.msra.mxu0 0.0
    %2361 = vmatprep.subr.mxu0 0.0
    %2362 = vmatpush1.msra.mxu0 0.0
    %2363 = vmatprep.subr.mxu0 0.0
    %2364 = vmatpush1.msra.mxu0 0.0
    %2365 = vmatprep.subr.mxu0 0.0
    %2366 = vmatpush1.msra.mxu0 0.0
    %2367 = vmatprep.subr.mxu0 0.0
    %2368 = vmatpush1.msra.mxu0 0.0
    %2369 = vmatprep.subr.mxu0 0.0
    %2370 = vmatpush1.msra.mxu0 0.0
    %2371 = vmatprep.subr.mxu0 0.0
    %2372 = vmatpush1.msra.mxu0 0.0
    %2373 = vmatprep.subr.mxu0 0.0
    %2374 = vmatpush1.msra.mxu0 0.0
    %2375 = vmatprep.subr.mxu0 0.0
    %2376 = vmatpush1.msra.mxu0 0.0
    %2377 = vmatprep.subr.mxu0 0.0
    %2378 = vmatpush1.msra.mxu0 0.0
    %2379 = vmatprep.subr.mxu0 0.0
    %2380 = vmatpush1.msra.mxu0 0.0
    %2381 = vmatprep.subr.mxu0 0.0
    %2382 = vmatpush1.msra.mxu0 0.0
    %2383 = vmatprep.subr.mxu0 0.0
    %2384 = vmatpush1.msra.mxu0 0.0
    %2385 = vmatprep.subr.mxu0 0.0
    %2386 = vmatpush1.msra.mxu0 0.0
    %2387 = vmatprep.subr.mxu0 0.0
    %2388 = vmatpush1.msra.mxu0 0.0
    %2389 = vmatprep.subr.mxu0 0.0
    %2390 = vmatpush1.msra.mxu0 0.0
    %2391 = vmatprep.subr.mxu0 0.0
    %2392 = vmatpush1.msra.mxu0 0.0
    %2393 = vmatprep.subr.mxu0 0.0
    %2394 = vmatpush1.msra.mxu0 0.0
    %2395 = vmatprep.mubr.f32.mxu0 0.0
    %2396 = vmatmul.mubr.f32.gmra.mrb[0].mxu0 %v2105
    %v2397 = vpop.f32.mrb[0].mxu0
    %v2398 = vadd.f32 %v152, %v2397
    %v2399 = vpop.f32.mrb[0].mxu0
    %2400 = vdwg.mxu0
    %2401 = vmatprep.subr.mxu0 0.0
    %2402 = vmatpush1.msra.mxu0 %v587
    %2403 = vmatprep.subr.mxu0 0.0
    %2404 = vmatpush1.msra.mxu0 %v588
    %2405 = vmatprep.subr.mxu0 0.0
    %2406 = vmatpush1.msra.mxu0 %v589
    %2407 = vmatprep.subr.mxu0 0.0
    %2408 = vmatpush1.msra.mxu0 %v590
    %2409 = vmatprep.subr.mxu0 0.0
    %2410 = vmatpush1.msra.mxu0 0.0
    %2411 = vmatprep.subr.mxu0 0.0
    %2412 = vmatpush1.msra.mxu0 0.0
    %2413 = vmatprep.subr.mxu0 0.0
    %2414 = vmatpush1.msra.mxu0 0.0
    %2415 = vmatprep.subr.mxu0 0.0
    %2416 = vmatpush1.msra.mxu0 0.0
    %2417 = vmatprep.subr.mxu0 0.0
    %2418 = vmatpush1.msra.mxu0 0.0
    %2419 = vmatprep.subr.mxu0 0.0
    %2420 = vmatpush1.msra.mxu0 0.0
    %2421 = vmatprep.subr.mxu0 0.0
    %2422 = vmatpush1.msra.mxu0 0.0
    %2423 = vmatprep.subr.mxu0 0.0
    %2424 = vmatpush1.msra.mxu0 0.0
    %2425 = vmatprep.subr.mxu0 0.0
    %2426 = vmatpush1.msra.mxu0 0.0
    %2427 = vmatprep.subr.mxu0 0.0
    %2428 = vmatpush1.msra.mxu0 0.0
    %2429 = vmatprep.subr.mxu0 0.0
    %2430 = vmatpush1.msra.mxu0 0.0
    %2431 = vmatprep.subr.mxu0 0.0
    %2432 = vmatpush1.msra.mxu0 0.0
    %2433 = vmatprep.subr.mxu0 0.0
    %2434 = vmatpush1.msra.mxu0 0.0
    %2435 = vmatprep.subr.mxu0 0.0
    %2436 = vmatpush1.msra.mxu0 0.0
    %2437 = vmatprep.subr.mxu0 0.0
    %2438 = vmatpush1.msra.mxu0 0.0
    %2439 = vmatprep.subr.mxu0 0.0
    %2440 = vmatpush1.msra.mxu0 0.0
    %2441 = vmatprep.subr.mxu0 0.0
    %2442 = vmatpush1.msra.mxu0 0.0
    %2443 = vmatprep.subr.mxu0 0.0
    %2444 = vmatpush1.msra.mxu0 0.0
    %2445 = vmatprep.subr.mxu0 0.0
    %2446 = vmatpush1.msra.mxu0 0.0
    %2447 = vmatprep.subr.mxu0 0.0
    %2448 = vmatpush1.msra.mxu0 0.0
    %2449 = vmatprep.subr.mxu0 0.0
    %2450 = vmatpush1.msra.mxu0 0.0
    %2451 = vmatprep.subr.mxu0 0.0
    %2452 = vmatpush1.msra.mxu0 0.0
    %2453 = vmatprep.subr.mxu0 0.0
    %2454 = vmatpush1.msra.mxu0 0.0
    %2455 = vmatprep.subr.mxu0 0.0
    %2456 = vmatpush1.msra.mxu0 0.0
    %2457 = vmatprep.subr.mxu0 0.0
    %2458 = vmatpush1.msra.mxu0 0.0
    %2459 = vmatprep.subr.mxu0 0.0
    %2460 = vmatpush1.msra.mxu0 0.0
    %2461 = vmatprep.subr.mxu0 0.0
    %2462 = vmatpush1.msra.mxu0 0.0
    %2463 = vmatprep.subr.mxu0 0.0
    %2464 = vmatpush1.msra.mxu0 0.0
    %2465 = vmatprep.mubr.f32.mxu0 0.0
    %2466 = vmatmul.mubr.f32.gmra.mrb[0].mxu0 %v1660
    %v2467 = vpop.f32.mrb[0].mxu0
    %v2468 = vadd.f32 %v160, %v2467
    %v2469 = vpop.f32.mrb[0].mxu0
    %2470 = vdwg.mxu0
    %v2471 = vmul.f32 %v2183, %v2468
    %v2472 = vadd.f32 %v2398, %v2471
    %v2473 = vtanh.pop %v2472
    %v2474 = vsub.f32 %v1585, %v2473
    %v2475 = vmul.f32 %v2330, %v2474
    %v2476 = vadd.f32 %v2473, %v2475
    %v2478 = vsel %vm203, %v2031, 0
    %2480 = vmatprep.subr.mxu0 0.0
    %2481 = vmatpush1.msra.mxu0 %v671
    %2482 = vmatprep.subr.mxu0 0.0
    %2483 = vmatpush1.msra.mxu0 %v672
    %2484 = vmatprep.subr.mxu0 0.0
    %2485 = vmatpush1.msra.mxu0 %v673
    %2486 = vmatprep.subr.mxu0 0.0
    %2487 = vmatpush1.msra.mxu0 %v674
    %2488 = vmatprep.subr.mxu0 0.0
    %2489 = vmatpush1.msra.mxu0 0.0
    %2490 = vmatprep.subr.mxu0 0.0
    %2491 = vmatpush1.msra.mxu0 0.0
    %2492 = vmatprep.subr.mxu0 0.0
    %2493 = vmatpush1.msra.mxu0 0.0
    %2494 = vmatprep.subr.mxu0 0.0
    %2495 = vmatpush1.msra.mxu0 0.0
    %2496 = vmatprep.subr.mxu0 0.0
    %2497 = vmatpush1.msra.mxu0 0.0
    %2498 = vmatprep.subr.mxu0 0.0
    %2499 = vmatpush1.msra.mxu0 0.0
    %2500 = vmatprep.subr.mxu0 0.0
    %2501 = vmatpush1.msra.mxu0 0.0
    %2502 = vmatprep.subr.mxu0 0.0
    %2503 = vmatpush1.msra.mxu0 0.0
    %2504 = vmatprep.subr.mxu0 0.0
    %2505 = vmatpush1.msra.mxu0 0.0
    %2506 = vmatprep.subr.mxu0 0.0
    %2507 = vmatpush1.msra.mxu0 0.0
    %2508 = vmatprep.subr.mxu0 0.0
    %2509 = vmatpush1.msra.mxu0 0.0
    %2510 = vmatprep.subr.mxu0 0.0
    %2511 = vmatpush1.msra.mxu0 0.0
    %2512 = vmatprep.subr.mxu0 0.0
    %2513 = vmatpush1.msra.mxu0 0.0
    %2514 = vmatprep.subr.mxu0 0.0
    %2515 = vmatpush1.msra.mxu0 0.0
    %2516 = vmatprep.subr.mxu0 0.0
    %2517 = vmatpush1.msra.mxu0 0.0
    %2518 = vmatprep.subr.mxu0 0.0
    %2519 = vmatpush1.msra.mxu0 0.0
    %2520 = vmatprep.subr.mxu0 0.0
    %2521 = vmatpush1.msra.mxu0 0.0
    %2522 = vmatprep.subr.mxu0 0.0
    %2523 = vmatpush1.msra.mxu0 0.0
    %2524 = vmatprep.subr.mxu0 0.0
    %2525 = vmatpush1.msra.mxu0 0.0
    %2526 = vmatprep.subr.mxu0 0.0
    %2527 = vmatpush1.msra.mxu0 0.0
    %2528 = vmatprep.subr.mxu0 0.0
    %2529 = vmatpush1.msra.mxu0 0.0
    %2530 = vmatprep.subr.mxu0 0.0
    %2531 = vmatpush1.msra.mxu0 0.0
    %2532 = vmatprep.subr.mxu0 0.0
    %2533 = vmatpush1.msra.mxu0 0.0
    %2534 = vmatprep.subr.mxu0 0.0
    %2535 = vmatpush1.msra.mxu0 0.0
    %2536 = vmatprep.subr.mxu0 0.0
    %2537 = vmatpush1.msra.mxu0 0.0
    %2538 = vmatprep.subr.mxu0 0.0
    %2539 = vmatpush1.msra.mxu0 0.0
    %2540 = vmatprep.subr.mxu0 0.0
    %2541 = vmatpush1.msra.mxu0 0.0
    %2542 = vmatprep.subr.mxu0 0.0
    %2543 = vmatpush1.msra.mxu0 0.0
    %2544 = vmatprep.mubr.f32.mxu0 0.0
    %2545 = vmatmul.mubr.f32.gmra.mrb[0].mxu0 %v2478
    %v2546 = vpop.f32.mrb[0].mxu0
    %v2547 = vadd.f32 0.0, %v2546
    %v2548 = vpop.f32.mrb[0].mxu0
    %2549 = vdwg.mxu0
    %v2551 = vsel %vm203, %v2476, 0
    %2553 = vmatprep.subr.mxu0 0.0
    %2554 = vmatpush1.msra.mxu0 %v667
    %2555 = vmatprep.subr.mxu0 0.0
    %2556 = vmatpush1.msra.mxu0 %v668
    %2557 = vmatprep.subr.mxu0 0.0
    %2558 = vmatpush1.msra.mxu0 %v669
    %2559 = vmatprep.subr.mxu0 0.0
    %2560 = vmatpush1.msra.mxu0 %v670
    %2561 = vmatprep.subr.mxu0 0.0
    %2562 = vmatpush1.msra.mxu0 0.0
    %2563 = vmatprep.subr.mxu0 0.0
    %2564 = vmatpush1.msra.mxu0 0.0
    %2565 = vmatprep.subr.mxu0 0.0
    %2566 = vmatpush1.msra.mxu0 0.0
    %2567 = vmatprep.subr.mxu0 0.0
    %2568 = vmatpush1.msra.mxu0 0.0
    %2569 = vmatprep.subr.mxu0 0.0
    %2570 = vmatpush1.msra.mxu0 0.0
    %2571 = vmatprep.subr.mxu0 0.0
    %2572 = vmatpush1.msra.mxu0 0.0
    %2573 = vmatprep.subr.mxu0 0.0
    %2574 = vmatpush1.msra.mxu0 0.0
    %2575 = vmatprep.subr.mxu0 0.0
    %2576 = vmatpush1.msra.mxu0 0.0
    %2577 = vmatprep.subr.mxu0 0.0
    %2578 = vmatpush1.msra.mxu0 0.0
    %2579 = vmatprep.subr.mxu0 0.0
    %2580 = vmatpush1.msra.mxu0 0.0
    %2581 = vmatprep.subr.mxu0 0.0
    %2582 = vmatpush1.msra.mxu0 0.0
    %2583 = vmatprep.subr.mxu0 0.0
    %2584 = vmatpush1.msra.mxu0 0.0
    %2585 = vmatprep.subr.mxu0 0.0
    %2586 = vmatpush1.msra.mxu0 0.0
    %2587 = vmatprep.subr.mxu0 0.0
    %2588 = vmatpush1.msra.mxu0 0.0
    %2589 = vmatprep.subr.mxu0 0.0
    %2590 = vmatpush1.msra.mxu0 0.0
    %2591 = vmatprep.subr.mxu0 0.0
    %2592 = vmatpush1.msra.mxu0 0.0
    %2593 = vmatprep.subr.mxu0 0.0
    %2594 = vmatpush1.msra.mxu0 0.0
    %2595 = vmatprep.subr.mxu0 0.0
    %2596 = vmatpush1.msra.mxu0 0.0
    %2597 = vmatprep.subr.mxu0 0.0
    %2598 = vmatpush1.msra.mxu0 0.0
    %2599 = vmatprep.subr.mxu0 0.0
    %2600 = vmatpush1.msra.mxu0 0.0
    %2601 = vmatprep.subr.mxu0 0.0
    %2602 = vmatpush1.msra.mxu0 0.0
    %2603 = vmatprep.subr.mxu0 0.0
    %2604 = vmatpush1.msra.mxu0 0.0
    %2605 = vmatprep.subr.mxu0 0.0
    %2606 = vmatpush1.msra.mxu0 0.0
    %2607 = vmatprep.subr.mxu0 0.0
    %2608 = vmatpush1.msra.mxu0 0.0
    %2609 = vmatprep.subr.mxu0 0.0
    %2610 = vmatpush1.msra.mxu0 0.0
    %2611 = vmatprep.subr.mxu0 0.0
    %2612 = vmatpush1.msra.mxu0 0.0
    %2613 = vmatprep.subr.mxu0 0.0
    %2614 = vmatpush1.msra.mxu0 0.0
    %2615 = vmatprep.subr.mxu0 0.0
    %2616 = vmatpush1.msra.mxu0 0.0
    %2617 = vmatprep.mubr.f32.mxu0 0.0
    %2618 = vmatmul.mubr.f32.gmra.mrb[0].mxu0 %v2551
    %v2619 = vpop.f32.mrb[0].mxu0
    %v2620 = vadd.f32 %v2547, %v2619
    %v2621 = vpop.f32.mrb[0].mxu0
    %2622 = vdwg.mxu0
    %v2623 = vadd.f32 %v2620, %v167
    %v2624 = vxor.u32 %v2623, 2147483648
    %v2625 = vmul.f32 %v2624, 1.442695
    %v2626 = vpow.pop %v2625
    %v2627 = vadd.f32 %v2626, 1.0
    %v2628 = vrcp.pop %v2627
    %v2629 = vmul.f32 1.0, %v2628
    %2630 = vmatprep.subr.mxu0 0.0
    %2631 = vmatpush1.msra.mxu0 %v834
    %2632 = vmatprep.subr.mxu0 0.0
    %2633 = vmatpush1.msra.mxu0 %v835
    %2634 = vmatprep.subr.mxu0 0.0
    %2635 = vmatpush1.msra.mxu0 %v836
    %2636 = vmatprep.subr.mxu0 0.0
    %2637 = vmatpush1.msra.mxu0 %v837
    %2638 = vmatprep.subr.mxu0 0.0
    %2639 = vmatpush1.msra.mxu0 0.0
    %2640 = vmatprep.subr.mxu0 0.0
    %2641 = vmatpush1.msra.mxu0 0.0
    %2642 = vmatprep.subr.mxu0 0.0
    %2643 = vmatpush1.msra.mxu0 0.0
    %2644 = vmatprep.subr.mxu0 0.0
    %2645 = vmatpush1.msra.mxu0 0.0
    %2646 = vmatprep.subr.mxu0 0.0
    %2647 = vmatpush1.msra.mxu0 0.0
    %2648 = vmatprep.subr.mxu0 0.0
    %2649 = vmatpush1.msra.mxu0 0.0
    %2650 = vmatprep.subr.mxu0 0.0
    %2651 = vmatpush1.msra.mxu0 0.0
    %2652 = vmatprep.subr.mxu0 0.0
    %2653 = vmatpush1.msra.mxu0 0.0
    %2654 = vmatprep.subr.mxu0 0.0
    %2655 = vmatpush1.msra.mxu0 0.0
    %2656 = vmatprep.subr.mxu0 0.0
    %2657 = vmatpush1.msra.mxu0 0.0
    %2658 = vmatprep.subr.mxu0 0.0
    %2659 = vmatpush1.msra.mxu0 0.0
    %2660 = vmatprep.subr.mxu0 0.0
    %2661 = vmatpush1.msra.mxu0 0.0
    %2662 = vmatprep.subr.mxu0 0.0
    %2663 = vmatpush1.msra.mxu0 0.0
    %2664 = vmatprep.subr.mxu0 0.0
    %2665 = vmatpush1.msra.mxu0 0.0
    %2666 = vmatprep.subr.mxu0 0.0
    %2667 = vmatpush1.msra.mxu0 0.0
    %2668 = vmatprep.subr.mxu0 0.0
    %2669 = vmatpush1.msra.mxu0 0.0
    %2670 = vmatprep.subr.mxu0 0.0
    %2671 = vmatpush1.msra.mxu0 0.0
    %2672 = vmatprep.subr.mxu0 0.0
    %2673 = vmatpush1.msra.mxu0 0.0
    %2674 = vmatprep.subr.mxu0 0.0
    %2675 = vmatpush1.msra.mxu0 0.0
    %2676 = vmatprep.subr.mxu0 0.0
    %2677 = vmatpush1.msra.mxu0 0.0
    %2678 = vmatprep.subr.mxu0 0.0
    %2679 = vmatpush1.msra.mxu0 0.0
    %2680 = vmatprep.subr.mxu0 0.0
    %2681 = vmatpush1.msra.mxu0 0.0
    %2682 = vmatprep.subr.mxu0 0.0
    %2683 = vmatpush1.msra.mxu0 0.0
    %2684 = vmatprep.subr.mxu0 0.0
    %2685 = vmatpush1.msra.mxu0 0.0
    %2686 = vmatprep.subr.mxu0 0.0
    %2687 = vmatpush1.msra.mxu0 0.0
    %2688 = vmatprep.subr.mxu0 0.0
    %2689 = vmatpush1.msra.mxu0 0.0
    %2690 = vmatprep.subr.mxu0 0.0
    %2691 = vmatpush1.msra.mxu0 0.0
    %2692 = vmatprep.subr.mxu0 0.0
    %2693 = vmatpush1.msra.mxu0 0.0
    %2694 = vmatprep.mubr.f32.mxu0 0.0
    %2695 = vmatmul.mubr.f32.gmra.mrb[0].mxu0 %v2478
    %v2696 = vpop.f32.mrb[0].mxu0
    %v2697 = vadd.f32 0.0, %v2696
    %v2698 = vpop.f32.mrb[0].mxu0
    %2699 = vdwg.mxu0
    %2700 = vmatprep.subr.mxu0 0.0
    %2701 = vmatpush1.msra.mxu0 %v829
    %2702 = vmatprep.subr.mxu0 0.0
    %2703 = vmatpush1.msra.mxu0 %v830
    %2704 = vmatprep.subr.mxu0 0.0
    %2705 = vmatpush1.msra.mxu0 %v831
    %2706 = vmatprep.subr.mxu0 0.0
    %2707 = vmatpush1.msra.mxu0 %v832
    %2708 = vmatprep.subr.mxu0 0.0
    %2709 = vmatpush1.msra.mxu0 0.0
    %2710 = vmatprep.subr.mxu0 0.0
    %2711 = vmatpush1.msra.mxu0 0.0
    %2712 = vmatprep.subr.mxu0 0.0
    %2713 = vmatpush1.msra.mxu0 0.0
    %2714 = vmatprep.subr.mxu0 0.0
    %2715 = vmatpush1.msra.mxu0 0.0
    %2716 = vmatprep.subr.mxu0 0.0
    %2717 = vmatpush1.msra.mxu0 0.0
    %2718 = vmatprep.subr.mxu0 0.0
    %2719 = vmatpush1.msra.mxu0 0.0
    %2720 = vmatprep.subr.mxu0 0.0
    %2721 = vmatpush1.msra.mxu0 0.0
    %2722 = vmatprep.subr.mxu0 0.0
    %2723 = vmatpush1.msra.mxu0 0.0
    %2724 = vmatprep.subr.mxu0 0.0
    %2725 = vmatpush1.msra.mxu0 0.0
    %2726 = vmatprep.subr.mxu0 0.0
    %2727 = vmatpush1.msra.mxu0 0.0
    %2728 = vmatprep.subr.mxu0 0.0
    %2729 = vmatpush1.msra.mxu0 0.0
    %2730 = vmatprep.subr.mxu0 0.0
    %2731 = vmatpush1.msra.mxu0 0.0
    %2732 = vmatprep.subr.mxu0 0.0
    %2733 = vmatpush1.msra.mxu0 0.0
    %2734 = vmatprep.subr.mxu0 0.0
    %2735 = vmatpush1.msra.mxu0 0.0
    %2736 = vmatprep.subr.mxu0 0.0
    %2737 = vmatpush1.msra.mxu0 0.0
    %2738 = vmatprep.subr.mxu0 0.0
    %2739 = vmatpush1.msra.mxu0 0.0
    %2740 = vmatprep.subr.mxu0 0.0
    %2741 = vmatpush1.msra.mxu0 0.0
    %2742 = vmatprep.subr.mxu0 0.0
    %2743 = vmatpush1.msra.mxu0 0.0
    %2744 = vmatprep.subr.mxu0 0.0
    %2745 = vmatpush1.msra.mxu0 0.0
    %2746 = vmatprep.subr.mxu0 0.0
    %2747 = vmatpush1.msra.mxu0 0.0
    %2748 = vmatprep.subr.mxu0 0.0
    %2749 = vmatpush1.msra.mxu0 0.0
    %2750 = vmatprep.subr.mxu0 0.0
    %2751 = vmatpush1.msra.mxu0 0.0
    %2752 = vmatprep.subr.mxu0 0.0
    %2753 = vmatpush1.msra.mxu0 0.0
    %2754 = vmatprep.subr.mxu0 0.0
    %2755 = vmatpush1.msra.mxu0 0.0
    %2756 = vmatprep.subr.mxu0 0.0
    %2757 = vmatpush1.msra.mxu0 0.0
    %2758 = vmatprep.subr.mxu0 0.0
    %2759 = vmatpush1.msra.mxu0 0.0
    %2760 = vmatprep.subr.mxu0 0.0
    %2761 = vmatpush1.msra.mxu0 0.0
    %2762 = vmatprep.subr.mxu0 0.0
    %2763 = vmatpush1.msra.mxu0 0.0
    %2764 = vmatprep.mubr.f32.mxu0 0.0
    %2765 = vmatmul.mubr.f32.gmra.mrb[0].mxu0 %v2551
    %v2766 = vpop.f32.mrb[0].mxu0
    %v2767 = vadd.f32 %v2697, %v2766
    %v2768 = vpop.f32.mrb[0].mxu0
    %2769 = vdwg.mxu0
    %v2770 = vadd.f32 %v2767, %v175
    %v2771 = vxor.u32 %v2770, 2147483648
    %v2772 = vmul.f32 %v2771, 1.442695
    %v2773 = vpow.pop %v2772
    %v2774 = vadd.f32 %v2773, 1.0
    %v2775 = vrcp.pop %v2774
    %v2776 = vmul.f32 1.0, %v2775
    %2777 = vmatprep.subr.mxu0 0.0
    %2778 = vmatpush1.msra.mxu0 %v986
    %2779 = vmatprep.subr.mxu0 0.0
    %2780 = vmatpush1.msra.mxu0 %v987
    %2781 = vmatprep.subr.mxu0 0.0
    %2782 = vmatpush1.msra.mxu0 %v988
    %2783 = vmatprep.subr.mxu0 0.0
    %2784 = vmatpush1.msra.mxu0 %v989
    %2785 = vmatprep.subr.mxu0 0.0
    %2786 = vmatpush1.msra.mxu0 0.0
    %2787 = vmatprep.subr.mxu0 0.0
    %2788 = vmatpush1.msra.mxu0 0.0
    %2789 = vmatprep.subr.mxu0 0.0
    %2790 = vmatpush1.msra.mxu0 0.0
    %2791 = vmatprep.subr.mxu0 0.0
    %2792 = vmatpush1.msra.mxu0 0.0
    %2793 = vmatprep.subr.mxu0 0.0
    %2794 = vmatpush1.msra.mxu0 0.0
    %2795 = vmatprep.subr.mxu0 0.0
    %2796 = vmatpush1.msra.mxu0 0.0
    %2797 = vmatprep.subr.mxu0 0.0
    %2798 = vmatpush1.msra.mxu0 0.0
    %2799 = vmatprep.subr.mxu0 0.0
    %2800 = vmatpush1.msra.mxu0 0.0
    %2801 = vmatprep.subr.mxu0 0.0
    %2802 = vmatpush1.msra.mxu0 0.0
    %2803 = vmatprep.subr.mxu0 0.0
    %2804 = vmatpush1.msra.mxu0 0.0
    %2805 = vmatprep.subr.mxu0 0.0
    %2806 = vmatpush1.msra.mxu0 0.0
    %2807 = vmatprep.subr.mxu0 0.0
    %2808 = vmatpush1.msra.mxu0 0.0
    %2809 = vmatprep.subr.mxu0 0.0
    %2810 = vmatpush1.msra.mxu0 0.0
    %2811 = vmatprep.subr.mxu0 0.0
    %2812 = vmatpush1.msra.mxu0 0.0
    %2813 = vmatprep.subr.mxu0 0.0
    %2814 = vmatpush1.msra.mxu0 0.0
    %2815 = vmatprep.subr.mxu0 0.0
    %2816 = vmatpush1.msra.mxu0 0.0
    %2817 = vmatprep.subr.mxu0 0.0
    %2818 = vmatpush1.msra.mxu0 0.0
    %2819 = vmatprep.subr.mxu0 0.0
    %2820 = vmatpush1.msra.mxu0 0.0
    %2821 = vmatprep.subr.mxu0 0.0
    %2822 = vmatpush1.msra.mxu0 0.0
    %2823 = vmatprep.subr.mxu0 0.0
    %2824 = vmatpush1.msra.mxu0 0.0
    %2825 = vmatprep.subr.mxu0 0.0
    %2826 = vmatpush1.msra.mxu0 0.0
    %2827 = vmatprep.subr.mxu0 0.0
    %2828 = vmatpush1.msra.mxu0 0.0
    %2829 = vmatprep.subr.mxu0 0.0
    %2830 = vmatpush1.msra.mxu0 0.0
    %2831 = vmatprep.subr.mxu0 0.0
    %2832 = vmatpush1.msra.mxu0 0.0
    %2833 = vmatprep.subr.mxu0 0.0
    %2834 = vmatpush1.msra.mxu0 0.0
    %2835 = vmatprep.subr.mxu0 0.0
    %2836 = vmatpush1.msra.mxu0 0.0
    %2837 = vmatprep.subr.mxu0 0.0
    %2838 = vmatpush1.msra.mxu0 0.0
    %2839 = vmatprep.subr.mxu0 0.0
    %2840 = vmatpush1.msra.mxu0 0.0
    %2841 = vmatprep.mubr.f32.mxu0 0.0
    %2842 = vmatmul.mubr.f32.gmra.mrb[0].mxu0 %v2551
    %v2843 = vpop.f32.mrb[0].mxu0
    %v2844 = vadd.f32 %v183, %v2843
    %v2845 = vpop.f32.mrb[0].mxu0
    %2846 = vdwg.mxu0
    %2847 = vmatprep.subr.mxu0 0.0
    %2848 = vmatpush1.msra.mxu0 %v1061
    %2849 = vmatprep.subr.mxu0 0.0
    %2850 = vmatpush1.msra.mxu0 %v1062
    %2851 = vmatprep.subr.mxu0 0.0
    %2852 = vmatpush1.msra.mxu0 %v1063
    %2853 = vmatprep.subr.mxu0 0.0
    %2854 = vmatpush1.msra.mxu0 %v1064
    %2855 = vmatprep.subr.mxu0 0.0
    %2856 = vmatpush1.msra.mxu0 0.0
    %2857 = vmatprep.subr.mxu0 0.0
    %2858 = vmatpush1.msra.mxu0 0.0
    %2859 = vmatprep.subr.mxu0 0.0
    %2860 = vmatpush1.msra.mxu0 0.0
    %2861 = vmatprep.subr.mxu0 0.0
    %2862 = vmatpush1.msra.mxu0 0.0
    %2863 = vmatprep.subr.mxu0 0.0
    %2864 = vmatpush1.msra.mxu0 0.0
    %2865 = vmatprep.subr.mxu0 0.0
    %2866 = vmatpush1.msra.mxu0 0.0
    %2867 = vmatprep.subr.mxu0 0.0
    %2868 = vmatpush1.msra.mxu0 0.0
    %2869 = vmatprep.subr.mxu0 0.0
    %2870 = vmatpush1.msra.mxu0 0.0
    %2871 = vmatprep.subr.mxu0 0.0
    %2872 = vmatpush1.msra.mxu0 0.0
    %2873 = vmatprep.subr.mxu0 0.0
    %2874 = vmatpush1.msra.mxu0 0.0
    %2875 = vmatprep.subr.mxu0 0.0
    %2876 = vmatpush1.msra.mxu0 0.0
    %2877 = vmatprep.subr.mxu0 0.0
    %2878 = vmatpush1.msra.mxu0 0.0
    %2879 = vmatprep.subr.mxu0 0.0
    %2880 = vmatpush1.msra.mxu0 0.0
    %2881 = vmatprep.subr.mxu0 0.0
    %2882 = vmatpush1.msra.mxu0 0.0
    %2883 = vmatprep.subr.mxu0 0.0
    %2884 = vmatpush1.msra.mxu0 0.0
    %2885 = vmatprep.subr.mxu0 0.0
    %2886 = vmatpush1.msra.mxu0 0.0
    %2887 = vmatprep.subr.mxu0 0.0
    %2888 = vmatpush1.msra.mxu0 0.0
    %2889 = vmatprep.subr.mxu0 0.0
    %2890 = vmatpush1.msra.mxu0 0.0
    %2891 = vmatprep.subr.mxu0 0.0
    %2892 = vmatpush1.msra.mxu0 0.0
    %2893 = vmatprep.subr.mxu0 0.0
    %2894 = vmatpush1.msra.mxu0 0.0
    %2895 = vmatprep.subr.mxu0 0.0
    %2896 = vmatpush1.msra.mxu0 0.0
    %2897 = vmatprep.subr.mxu0 0.0
    %2898 = vmatpush1.msra.mxu0 0.0
    %2899 = vmatprep.subr.mxu0 0.0
    %2900 = vmatpush1.msra.mxu0 0.0
    %2901 = vmatprep.subr.mxu0 0.0
    %2902 = vmatpush1.msra.mxu0 0.0
    %2903 = vmatprep.subr.mxu0 0.0
    %2904 = vmatpush1.msra.mxu0 0.0
    %2905 = vmatprep.subr.mxu0 0.0
    %2906 = vmatpush1.msra.mxu0 0.0
    %2907 = vmatprep.subr.mxu0 0.0
    %2908 = vmatpush1.msra.mxu0 0.0
    %2909 = vmatprep.subr.mxu0 0.0
    %2910 = vmatpush1.msra.mxu0 0.0
    %2911 = vmatprep.mubr.f32.mxu0 0.0
    %2912 = vmatmul.mubr.f32.gmra.mrb[0].mxu0 %v2478
    %v2913 = vpop.f32.mrb[0].mxu0
    %v2914 = vadd.f32 %v191, %v2913
    %v2915 = vpop.f32.mrb[0].mxu0
    %2916 = vdwg.mxu0
    %v2917 = vmul.f32 %v2629, %v2914
    %v2918 = vadd.f32 %v2844, %v2917
    %v2919 = vtanh.pop %v2918
    %v2920 = vsub.f32 %v2031, %v2919
    %v2921 = vmul.f32 %v2776, %v2920
    %v2922 = vadd.f32 %v2919, %v2921
    %s2923 = scalar_lea.vmem [#allocation2], 24
    %v2924 = vld [vmem:[%s2923] sm:$0xff]
    %2925 = vmatprep.subr.mxu0 0.0
    %2926 = vmatpush1.msra.mxu0 %v199
    %2927 = vmatprep.subr.mxu0 0.0
    %2928 = vmatpush1.msra.mxu0 %v200
    %2929 = vmatprep.subr.mxu0 0.0
    %2930 = vmatpush1.msra.mxu0 %v201
    %2931 = vmatprep.subr.mxu0 0.0
    %2932 = vmatpush1.msra.mxu0 %v202
    %2933 = vmatprep.subr.mxu0 0.0
    %2934 = vmatpush1.msra.mxu0 0.0
    %2935 = vmatprep.subr.mxu0 0.0
    %2936 = vmatpush1.msra.mxu0 0.0
    %2937 = vmatprep.subr.mxu0 0.0
    %2938 = vmatpush1.msra.mxu0 0.0
    %2939 = vmatprep.subr.mxu0 0.0
    %2940 = vmatpush1.msra.mxu0 0.0
    %2941 = vmatprep.subr.mxu0 0.0
    %2942 = vmatpush1.msra.mxu0 0.0
    %2943 = vmatprep.subr.mxu0 0.0
    %2944 = vmatpush1.msra.mxu0 0.0
    %2945 = vmatprep.subr.mxu0 0.0
    %2946 = vmatpush1.msra.mxu0 0.0
    %2947 = vmatprep.subr.mxu0 0.0
    %2948 = vmatpush1.msra.mxu0 0.0
    %2949 = vmatprep.subr.mxu0 0.0
    %2950 = vmatpush1.msra.mxu0 0.0
    %2951 = vmatprep.subr.mxu0 0.0
    %2952 = vmatpush1.msra.mxu0 0.0
    %2953 = vmatprep.subr.mxu0 0.0
    %2954 = vmatpush1.msra.mxu0 0.0
    %2955 = vmatprep.subr.mxu0 0.0
    %2956 = vmatpush1.msra.mxu0 0.0
    %2957 = vmatprep.subr.mxu0 0.0
    %2958 = vmatpush1.msra.mxu0 0.0
    %2959 = vmatprep.subr.mxu0 0.0
    %2960 = vmatpush1.msra.mxu0 0.0
    %2961 = vmatprep.subr.mxu0 0.0
    %2962 = vmatpush1.msra.mxu0 0.0
    %2963 = vmatprep.subr.mxu0 0.0
    %2964 = vmatpush1.msra.mxu0 0.0
    %2965 = vmatprep.subr.mxu0 0.0
    %2966 = vmatpush1.msra.mxu0 0.0
    %2967 = vmatprep.subr.mxu0 0.0
    %2968 = vmatpush1.msra.mxu0 0.0
    %2969 = vmatprep.subr.mxu0 0.0
    %2970 = vmatpush1.msra.mxu0 0.0
    %2971 = vmatprep.subr.mxu0 0.0
    %2972 = vmatpush1.msra.mxu0 0.0
    %2973 = vmatprep.subr.mxu0 0.0
    %2974 = vmatpush1.msra.mxu0 0.0
    %2975 = vmatprep.subr.mxu0 0.0
    %2976 = vmatpush1.msra.mxu0 0.0
    %2977 = vmatprep.subr.mxu0 0.0
    %2978 = vmatpush1.msra.mxu0 0.0
    %2979 = vmatprep.subr.mxu0 0.0
    %2980 = vmatpush1.msra.mxu0 0.0
    %2981 = vmatprep.subr.mxu0 0.0
    %2982 = vmatpush1.msra.mxu0 0.0
    %2983 = vmatprep.subr.mxu0 0.0
    %2984 = vmatpush1.msra.mxu0 0.0
    %2985 = vmatprep.subr.mxu0 0.0
    %2986 = vmatpush1.msra.mxu0 0.0
    %2987 = vmatprep.subr.mxu0 0.0
    %2988 = vmatpush1.msra.mxu0 0.0
    %2989 = vmatprep.mubr.f32.mxu0 0.0
    %2990 = vmatmul.mubr.f32.gmra.mrb[0].mxu0 %v2551
    %v2991 = vpop.f32.mrb[0].mxu0
    %v2992 = vadd.f32 0.0, %v2991
    %v2993 = vpop.f32.mrb[0].mxu0
    %2994 = vdwg.mxu0
    %v2996 = vsel %vm277, %v2924, 0
    %2998 = vmatprep.subr.mxu0 0.0
    %2999 = vmatpush1.msra.mxu0 %v197
    %3000 = vmatprep.subr.mxu0 0.0
    %3001 = vmatpush1.msra.mxu0 %v198
    %3002 = vmatprep.subr.mxu0 0.0
    %3003 = vmatpush1.msra.mxu0 0.0
    %3004 = vmatprep.subr.mxu0 0.0
    %3005 = vmatpush1.msra.mxu0 0.0
    %3006 = vmatprep.subr.mxu0 0.0
    %3007 = vmatpush1.msra.mxu0 0.0
    %3008 = vmatprep.subr.mxu0 0.0
    %3009 = vmatpush1.msra.mxu0 0.0
    %3010 = vmatprep.subr.mxu0 0.0
    %3011 = vmatpush1.msra.mxu0 0.0
    %3012 = vmatprep.subr.mxu0 0.0
    %3013 = vmatpush1.msra.mxu0 0.0
    %3014 = vmatprep.subr.mxu0 0.0
    %3015 = vmatpush1.msra.mxu0 0.0
    %3016 = vmatprep.subr.mxu0 0.0
    %3017 = vmatpush1.msra.mxu0 0.0
    %3018 = vmatprep.subr.mxu0 0.0
    %3019 = vmatpush1.msra.mxu0 0.0
    %3020 = vmatprep.subr.mxu0 0.0
    %3021 = vmatpush1.msra.mxu0 0.0
    %3022 = vmatprep.subr.mxu0 0.0
    %3023 = vmatpush1.msra.mxu0 0.0
    %3024 = vmatprep.subr.mxu0 0.0
    %3025 = vmatpush1.msra.mxu0 0.0
    %3026 = vmatprep.subr.mxu0 0.0
    %3027 = vmatpush1.msra.mxu0 0.0
    %3028 = vmatprep.subr.mxu0 0.0
    %3029 = vmatpush1.msra.mxu0 0.0
    %3030 = vmatprep.subr.mxu0 0.0
    %3031 = vmatpush1.msra.mxu0 0.0
    %3032 = vmatprep.subr.mxu0 0.0
    %3033 = vmatpush1.msra.mxu0 0.0
    %3034 = vmatprep.subr.mxu0 0.0
    %3035 = vmatpush1.msra.mxu0 0.0
    %3036 = vmatprep.subr.mxu0 0.0
    %3037 = vmatpush1.msra.mxu0 0.0
    %3038 = vmatprep.subr.mxu0 0.0
    %3039 = vmatpush1.msra.mxu0 0.0
    %3040 = vmatprep.subr.mxu0 0.0
    %3041 = vmatpush1.msra.mxu0 0.0
    %3042 = vmatprep.subr.mxu0 0.0
    %3043 = vmatpush1.msra.mxu0 0.0
    %3044 = vmatprep.subr.mxu0 0.0
    %3045 = vmatpush1.msra.mxu0 0.0
    %3046 = vmatprep.subr.mxu0 0.0
    %3047 = vmatpush1.msra.mxu0 0.0
    %3048 = vmatprep.subr.mxu0 0.0
    %3049 = vmatpush1.msra.mxu0 0.0
    %3050 = vmatprep.subr.mxu0 0.0
    %3051 = vmatpush1.msra.mxu0 0.0
    %3052 = vmatprep.subr.mxu0 0.0
    %3053 = vmatpush1.msra.mxu0 0.0
    %3054 = vmatprep.subr.mxu0 0.0
    %3055 = vmatpush1.msra.mxu0 0.0
    %3056 = vmatprep.subr.mxu0 0.0
    %3057 = vmatpush1.msra.mxu0 0.0
    %3058 = vmatprep.subr.mxu0 0.0
    %3059 = vmatpush1.msra.mxu0 0.0
    %3060 = vmatprep.subr.mxu0 0.0
    %3061 = vmatpush1.msra.mxu0 0.0
    %3062 = vmatprep.mubr.f32.mxu0 0.0
    %3063 = vmatmul.mubr.f32.gmra.mrb[0].mxu0 %v2996
    %v3064 = vpop.f32.mrb[0].mxu0
    %v3065 = vadd.f32 %v2992, %v3064
    %v3066 = vpop.f32.mrb[0].mxu0
    %3067 = vdwg.mxu0
    %v3068 = vadd.f32 %v3065, %v136
    %v3069 = vxor.u32 %v3068, 2147483648
    %v3070 = vmul.f32 %v3069, 1.442695
    %v3071 = vpow.pop %v3070
    %v3072 = vadd.f32 %v3071, 1.0
    %v3073 = vrcp.pop %v3072
    %v3074 = vmul.f32 1.0, %v3073
    %3075 = vmatprep.subr.mxu0 0.0
    %3076 = vmatpush1.msra.mxu0 %v362
    %3077 = vmatprep.subr.mxu0 0.0
    %3078 = vmatpush1.msra.mxu0 %v363
    %3079 = vmatprep.subr.mxu0 0.0
    %3080 = vmatpush1.msra.mxu0 %v364
    %3081 = vmatprep.subr.mxu0 0.0
    %3082 = vmatpush1.msra.mxu0 %v365
    %3083 = vmatprep.subr.mxu0 0.0
    %3084 = vmatpush1.msra.mxu0 0.0
    %3085 = vmatprep.subr.mxu0 0.0
    %3086 = vmatpush1.msra.mxu0 0.0
    %3087 = vmatprep.subr.mxu0 0.0
    %3088 = vmatpush1.msra.mxu0 0.0
    %3089 = vmatprep.subr.mxu0 0.0
    %3090 = vmatpush1.msra.mxu0 0.0
    %3091 = vmatprep.subr.mxu0 0.0
    %3092 = vmatpush1.msra.mxu0 0.0
    %3093 = vmatprep.subr.mxu0 0.0
    %3094 = vmatpush1.msra.mxu0 0.0
    %3095 = vmatprep.subr.mxu0 0.0
    %3096 = vmatpush1.msra.mxu0 0.0
    %3097 = vmatprep.subr.mxu0 0.0
    %3098 = vmatpush1.msra.mxu0 0.0
    %3099 = vmatprep.subr.mxu0 0.0
    %3100 = vmatpush1.msra.mxu0 0.0
    %3101 = vmatprep.subr.mxu0 0.0
    %3102 = vmatpush1.msra.mxu0 0.0
    %3103 = vmatprep.subr.mxu0 0.0
    %3104 = vmatpush1.msra.mxu0 0.0
    %3105 = vmatprep.subr.mxu0 0.0
    %3106 = vmatpush1.msra.mxu0 0.0
    %3107 = vmatprep.subr.mxu0 0.0
    %3108 = vmatpush1.msra.mxu0 0.0
    %3109 = vmatprep.subr.mxu0 0.0
    %3110 = vmatpush1.msra.mxu0 0.0
    %3111 = vmatprep.subr.mxu0 0.0
    %3112 = vmatpush1.msra.mxu0 0.0
    %3113 = vmatprep.subr.mxu0 0.0
    %3114 = vmatpush1.msra.mxu0 0.0
    %3115 = vmatprep.subr.mxu0 0.0
    %3116 = vmatpush1.msra.mxu0 0.0
    %3117 = vmatprep.subr.mxu0 0.0
    %3118 = vmatpush1.msra.mxu0 0.0
    %3119 = vmatprep.subr.mxu0 0.0
    %3120 = vmatpush1.msra.mxu0 0.0
    %3121 = vmatprep.subr.mxu0 0.0
    %3122 = vmatpush1.msra.mxu0 0.0
    %3123 = vmatprep.subr.mxu0 0.0
    %3124 = vmatpush1.msra.mxu0 0.0
    %3125 = vmatprep.subr.mxu0 0.0
    %3126 = vmatpush1.msra.mxu0 0.0
    %3127 = vmatprep.subr.mxu0 0.0
    %3128 = vmatpush1.msra.mxu0 0.0
    %3129 = vmatprep.subr.mxu0 0.0
    %3130 = vmatpush1.msra.mxu0 0.0
    %3131 = vmatprep.subr.mxu0 0.0
    %3132 = vmatpush1.msra.mxu0 0.0
    %3133 = vmatprep.subr.mxu0 0.0
    %3134 = vmatpush1.msra.mxu0 0.0
    %3135 = vmatprep.subr.mxu0 0.0
    %3136 = vmatpush1.msra.mxu0 0.0
    %3137 = vmatprep.subr.mxu0 0.0
    %3138 = vmatpush1.msra.mxu0 0.0
    %3139 = vmatprep.mubr.f32.mxu0 0.0
    %3140 = vmatmul.mubr.f32.gmra.mrb[0].mxu0 %v2551
    %v3141 = vpop.f32.mrb[0].mxu0
    %v3142 = vadd.f32 0.0, %v3141
    %v3143 = vpop.f32.mrb[0].mxu0
    %3144 = vdwg.mxu0
    %3145 = vmatprep.subr.mxu0 0.0
    %3146 = vmatpush1.msra.mxu0 %v359
    %3147 = vmatprep.subr.mxu0 0.0
    %3148 = vmatpush1.msra.mxu0 %v360
    %3149 = vmatprep.subr.mxu0 0.0
    %3150 = vmatpush1.msra.mxu0 0.0
    %3151 = vmatprep.subr.mxu0 0.0
    %3152 = vmatpush1.msra.mxu0 0.0
    %3153 = vmatprep.subr.mxu0 0.0
    %3154 = vmatpush1.msra.mxu0 0.0
    %3155 = vmatprep.subr.mxu0 0.0
    %3156 = vmatpush1.msra.mxu0 0.0
    %3157 = vmatprep.subr.mxu0 0.0
    %3158 = vmatpush1.msra.mxu0 0.0
    %3159 = vmatprep.subr.mxu0 0.0
    %3160 = vmatpush1.msra.mxu0 0.0
    %3161 = vmatprep.subr.mxu0 0.0
    %3162 = vmatpush1.msra.mxu0 0.0
    %3163 = vmatprep.subr.mxu0 0.0
    %3164 = vmatpush1.msra.mxu0 0.0
    %3165 = vmatprep.subr.mxu0 0.0
    %3166 = vmatpush1.msra.mxu0 0.0
    %3167 = vmatprep.subr.mxu0 0.0
    %3168 = vmatpush1.msra.mxu0 0.0
    %3169 = vmatprep.subr.mxu0 0.0
    %3170 = vmatpush1.msra.mxu0 0.0
    %3171 = vmatprep.subr.mxu0 0.0
    %3172 = vmatpush1.msra.mxu0 0.0
    %3173 = vmatprep.subr.mxu0 0.0
    %3174 = vmatpush1.msra.mxu0 0.0
    %3175 = vmatprep.subr.mxu0 0.0
    %3176 = vmatpush1.msra.mxu0 0.0
    %3177 = vmatprep.subr.mxu0 0.0
    %3178 = vmatpush1.msra.mxu0 0.0
    %3179 = vmatprep.subr.mxu0 0.0
    %3180 = vmatpush1.msra.mxu0 0.0
    %3181 = vmatprep.subr.mxu0 0.0
    %3182 = vmatpush1.msra.mxu0 0.0
    %3183 = vmatprep.subr.mxu0 0.0
    %3184 = vmatpush1.msra.mxu0 0.0
    %3185 = vmatprep.subr.mxu0 0.0
    %3186 = vmatpush1.msra.mxu0 0.0
    %3187 = vmatprep.subr.mxu0 0.0
    %3188 = vmatpush1.msra.mxu0 0.0
    %3189 = vmatprep.subr.mxu0 0.0
    %3190 = vmatpush1.msra.mxu0 0.0
    %3191 = vmatprep.subr.mxu0 0.0
    %3192 = vmatpush1.msra.mxu0 0.0
    %3193 = vmatprep.subr.mxu0 0.0
    %3194 = vmatpush1.msra.mxu0 0.0
    %3195 = vmatprep.subr.mxu0 0.0
    %3196 = vmatpush1.msra.mxu0 0.0
    %3197 = vmatprep.subr.mxu0 0.0
    %3198 = vmatpush1.msra.mxu0 0.0
    %3199 = vmatprep.subr.mxu0 0.0
    %3200 = vmatpush1.msra.mxu0 0.0
    %3201 = vmatprep.subr.mxu0 0.0
    %3202 = vmatpush1.msra.mxu0 0.0
    %3203 = vmatprep.subr.mxu0 0.0
    %3204 = vmatpush1.msra.mxu0 0.0
    %3205 = vmatprep.subr.mxu0 0.0
    %3206 = vmatpush1.msra.mxu0 0.0
    %3207 = vmatprep.subr.mxu0 0.0
    %3208 = vmatpush1.msra.mxu0 0.0
    %3209 = vmatprep.mubr.f32.mxu0 0.0
    %3210 = vmatmul.mubr.f32.gmra.mrb[0].mxu0 %v2996
    %v3211 = vpop.f32.mrb[0].mxu0
    %v3212 = vadd.f32 %v3142, %v3211
    %v3213 = vpop.f32.mrb[0].mxu0
    %3214 = vdwg.mxu0
    %v3215 = vadd.f32 %v3212, %v144
    %v3216 = vxor.u32 %v3215, 2147483648
    %v3217 = vmul.f32 %v3216, 1.442695
    %v3218 = vpow.pop %v3217
    %v3219 = vadd.f32 %v3218, 1.0
    %v3220 = vrcp.pop %v3219
    %v3221 = vmul.f32 1.0, %v3220
    %3222 = vmatprep.subr.mxu0 0.0
    %3223 = vmatpush1.msra.mxu0 %v514
    %3224 = vmatprep.subr.mxu0 0.0
    %3225 = vmatpush1.msra.mxu0 %v515
    %3226 = vmatprep.subr.mxu0 0.0
    %3227 = vmatpush1.msra.mxu0 0.0
    %3228 = vmatprep.subr.mxu0 0.0
    %3229 = vmatpush1.msra.mxu0 0.0
    %3230 = vmatprep.subr.mxu0 0.0
    %3231 = vmatpush1.msra.mxu0 0.0
    %3232 = vmatprep.subr.mxu0 0.0
    %3233 = vmatpush1.msra.mxu0 0.0
    %3234 = vmatprep.subr.mxu0 0.0
    %3235 = vmatpush1.msra.mxu0 0.0
    %3236 = vmatprep.subr.mxu0 0.0
    %3237 = vmatpush1.msra.mxu0 0.0
    %3238 = vmatprep.subr.mxu0 0.0
    %3239 = vmatpush1.msra.mxu0 0.0
    %3240 = vmatprep.subr.mxu0 0.0
    %3241 = vmatpush1.msra.mxu0 0.0
    %3242 = vmatprep.subr.mxu0 0.0
    %3243 = vmatpush1.msra.mxu0 0.0
    %3244 = vmatprep.subr.mxu0 0.0
    %3245 = vmatpush1.msra.mxu0 0.0
    %3246 = vmatprep.subr.mxu0 0.0
    %3247 = vmatpush1.msra.mxu0 0.0
    %3248 = vmatprep.subr.mxu0 0.0
    %3249 = vmatpush1.msra.mxu0 0.0
    %3250 = vmatprep.subr.mxu0 0.0
    %3251 = vmatpush1.msra.mxu0 0.0
    %3252 = vmatprep.subr.mxu0 0.0
    %3253 = vmatpush1.msra.mxu0 0.0
    %3254 = vmatprep.subr.mxu0 0.0
    %3255 = vmatpush1.msra.mxu0 0.0
    %3256 = vmatprep.subr.mxu0 0.0
    %3257 = vmatpush1.msra.mxu0 0.0
    %3258 = vmatprep.subr.mxu0 0.0
    %3259 = vmatpush1.msra.mxu0 0.0
    %3260 = vmatprep.subr.mxu0 0.0
    %3261 = vmatpush1.msra.mxu0 0.0
    %3262 = vmatprep.subr.mxu0 0.0
    %3263 = vmatpush1.msra.mxu0 0.0
    %3264 = vmatprep.subr.mxu0 0.0
    %3265 = vmatpush1.msra.mxu0 0.0
    %3266 = vmatprep.subr.mxu0 0.0
    %3267 = vmatpush1.msra.mxu0 0.0
    %3268 = vmatprep.subr.mxu0 0.0
    %3269 = vmatpush1.msra.mxu0 0.0
    %3270 = vmatprep.subr.mxu0 0.0
    %3271 = vmatpush1.msra.mxu0 0.0
    %3272 = vmatprep.subr.mxu0 0.0
    %3273 = vmatpush1.msra.mxu0 0.0
    %3274 = vmatprep.subr.mxu0 0.0
    %3275 = vmatpush1.msra.mxu0 0.0
    %3276 = vmatprep.subr.mxu0 0.0
    %3277 = vmatpush1.msra.mxu0 0.0
    %3278 = vmatprep.subr.mxu0 0.0
    %3279 = vmatpush1.msra.mxu0 0.0
    %3280 = vmatprep.subr.mxu0 0.0
    %3281 = vmatpush1.msra.mxu0 0.0
    %3282 = vmatprep.subr.mxu0 0.0
    %3283 = vmatpush1.msra.mxu0 0.0
    %3284 = vmatprep.subr.mxu0 0.0
    %3285 = vmatpush1.msra.mxu0 0.0
    %3286 = vmatprep.mubr.f32.mxu0 0.0
    %3287 = vmatmul.mubr.f32.gmra.mrb[0].mxu0 %v2996
    %v3288 = vpop.f32.mrb[0].mxu0
    %v3289 = vadd.f32 %v152, %v3288
    %v3290 = vpop.f32.mrb[0].mxu0
    %3291 = vdwg.mxu0
    %3292 = vmatprep.subr.mxu0 0.0
    %3293 = vmatpush1.msra.mxu0 %v587
    %3294 = vmatprep.subr.mxu0 0.0
    %3295 = vmatpush1.msra.mxu0 %v588
    %3296 = vmatprep.subr.mxu0 0.0
    %3297 = vmatpush1.msra.mxu0 %v589
    %3298 = vmatprep.subr.mxu0 0.0
    %3299 = vmatpush1.msra.mxu0 %v590
    %3300 = vmatprep.subr.mxu0 0.0
    %3301 = vmatpush1.msra.mxu0 0.0
    %3302 = vmatprep.subr.mxu0 0.0
    %3303 = vmatpush1.msra.mxu0 0.0
    %3304 = vmatprep.subr.mxu0 0.0
    %3305 = vmatpush1.msra.mxu0 0.0
    %3306 = vmatprep.subr.mxu0 0.0
    %3307 = vmatpush1.msra.mxu0 0.0
    %3308 = vmatprep.subr.mxu0 0.0
    %3309 = vmatpush1.msra.mxu0 0.0
    %3310 = vmatprep.subr.mxu0 0.0
    %3311 = vmatpush1.msra.mxu0 0.0
    %3312 = vmatprep.subr.mxu0 0.0
    %3313 = vmatpush1.msra.mxu0 0.0
    %3314 = vmatprep.subr.mxu0 0.0
    %3315 = vmatpush1.msra.mxu0 0.0
    %3316 = vmatprep.subr.mxu0 0.0
    %3317 = vmatpush1.msra.mxu0 0.0
    %3318 = vmatprep.subr.mxu0 0.0
    %3319 = vmatpush1.msra.mxu0 0.0
    %3320 = vmatprep.subr.mxu0 0.0
    %3321 = vmatpush1.msra.mxu0 0.0
    %3322 = vmatprep.subr.mxu0 0.0
    %3323 = vmatpush1.msra.mxu0 0.0
    %3324 = vmatprep.subr.mxu0 0.0
    %3325 = vmatpush1.msra.mxu0 0.0
    %3326 = vmatprep.subr.mxu0 0.0
    %3327 = vmatpush1.msra.mxu0 0.0
    %3328 = vmatprep.subr.mxu0 0.0
    %3329 = vmatpush1.msra.mxu0 0.0
    %3330 = vmatprep.subr.mxu0 0.0
    %3331 = vmatpush1.msra.mxu0 0.0
    %3332 = vmatprep.subr.mxu0 0.0
    %3333 = vmatpush1.msra.mxu0 0.0
    %3334 = vmatprep.subr.mxu0 0.0
    %3335 = vmatpush1.msra.mxu0 0.0
    %3336 = vmatprep.subr.mxu0 0.0
    %3337 = vmatpush1.msra.mxu0 0.0
    %3338 = vmatprep.subr.mxu0 0.0
    %3339 = vmatpush1.msra.mxu0 0.0
    %3340 = vmatprep.subr.mxu0 0.0
    %3341 = vmatpush1.msra.mxu0 0.0
    %3342 = vmatprep.subr.mxu0 0.0
    %3343 = vmatpush1.msra.mxu0 0.0
    %3344 = vmatprep.subr.mxu0 0.0
    %3345 = vmatpush1.msra.mxu0 0.0
    %3346 = vmatprep.subr.mxu0 0.0
    %3347 = vmatpush1.msra.mxu0 0.0
    %3348 = vmatprep.subr.mxu0 0.0
    %3349 = vmatpush1.msra.mxu0 0.0
    %3350 = vmatprep.subr.mxu0 0.0
    %3351 = vmatpush1.msra.mxu0 0.0
    %3352 = vmatprep.subr.mxu0 0.0
    %3353 = vmatpush1.msra.mxu0 0.0
    %3354 = vmatprep.subr.mxu0 0.0
    %3355 = vmatpush1.msra.mxu0 0.0
    %3356 = vmatprep.mubr.f32.mxu0 0.0
    %3357 = vmatmul.mubr.f32.gmra.mrb[0].mxu0 %v2551
    %v3358 = vpop.f32.mrb[0].mxu0
    %v3359 = vadd.f32 %v160, %v3358
    %v3360 = vpop.f32.mrb[0].mxu0
    %3361 = vdwg.mxu0
    %v3362 = vmul.f32 %v3074, %v3359
    %v3363 = vadd.f32 %v3289, %v3362
    %v3364 = vtanh.pop %v3363
    %v3365 = vsub.f32 %v2476, %v3364
    %v3366 = vmul.f32 %v3221, %v3365
    %v3367 = vadd.f32 %v3364, %v3366
    %v3369 = vsel %vm203, %v2922, 0
    %3371 = vmatprep.subr.mxu0 0.0
    %3372 = vmatpush1.msra.mxu0 %v671
    %3373 = vmatprep.subr.mxu0 0.0
    %3374 = vmatpush1.msra.mxu0 %v672
    %3375 = vmatprep.subr.mxu0 0.0
    %3376 = vmatpush1.msra.mxu0 %v673
    %3377 = vmatprep.subr.mxu0 0.0
    %3378 = vmatpush1.msra.mxu0 %v674
    %3379 = vmatprep.subr.mxu0 0.0
    %3380 = vmatpush1.msra.mxu0 0.0
    %3381 = vmatprep.subr.mxu0 0.0
    %3382 = vmatpush1.msra.mxu0 0.0
    %3383 = vmatprep.subr.mxu0 0.0
    %3384 = vmatpush1.msra.mxu0 0.0
    %3385 = vmatprep.subr.mxu0 0.0
    %3386 = vmatpush1.msra.mxu0 0.0
    %3387 = vmatprep.subr.mxu0 0.0
    %3388 = vmatpush1.msra.mxu0 0.0
    %3389 = vmatprep.subr.mxu0 0.0
    %3390 = vmatpush1.msra.mxu0 0.0
    %3391 = vmatprep.subr.mxu0 0.0
    %3392 = vmatpush1.msra.mxu0 0.0
    %3393 = vmatprep.subr.mxu0 0.0
    %3394 = vmatpush1.msra.mxu0 0.0
    %3395 = vmatprep.subr.mxu0 0.0
    %3396 = vmatpush1.msra.mxu0 0.0
    %3397 = vmatprep.subr.mxu0 0.0
    %3398 = vmatpush1.msra.mxu0 0.0
    %3399 = vmatprep.subr.mxu0 0.0
    %3400 = vmatpush1.msra.mxu0 0.0
    %3401 = vmatprep.subr.mxu0 0.0
    %3402 = vmatpush1.msra.mxu0 0.0
    %3403 = vmatprep.subr.mxu0 0.0
    %3404 = vmatpush1.msra.mxu0 0.0
    %3405 = vmatprep.subr.mxu0 0.0
    %3406 = vmatpush1.msra.mxu0 0.0
    %3407 = vmatprep.subr.mxu0 0.0
    %3408 = vmatpush1.msra.mxu0 0.0
    %3409 = vmatprep.subr.mxu0 0.0
    %3410 = vmatpush1.msra.mxu0 0.0
    %3411 = vmatprep.subr.mxu0 0.0
    %3412 = vmatpush1.msra.mxu0 0.0
    %3413 = vmatprep.subr.mxu0 0.0
    %3414 = vmatpush1.msra.mxu0 0.0
    %3415 = vmatprep.subr.mxu0 0.0
    %3416 = vmatpush1.msra.mxu0 0.0
    %3417 = vmatprep.subr.mxu0 0.0
    %3418 = vmatpush1.msra.mxu0 0.0
    %3419 = vmatprep.subr.mxu0 0.0
    %3420 = vmatpush1.msra.mxu0 0.0
    %3421 = vmatprep.subr.mxu0 0.0
    %3422 = vmatpush1.msra.mxu0 0.0
    %3423 = vmatprep.subr.mxu0 0.0
    %3424 = vmatpush1.msra.mxu0 0.0
    %3425 = vmatprep.subr.mxu0 0.0
    %3426 = vmatpush1.msra.mxu0 0.0
    %3427 = vmatprep.subr.mxu0 0.0
    %3428 = vmatpush1.msra.mxu0 0.0
    %3429 = vmatprep.subr.mxu0 0.0
    %3430 = vmatpush1.msra.mxu0 0.0
    %3431 = vmatprep.subr.mxu0 0.0
    %3432 = vmatpush1.msra.mxu0 0.0
    %3433 = vmatprep.subr.mxu0 0.0
    %3434 = vmatpush1.msra.mxu0 0.0
    %3435 = vmatprep.mubr.f32.mxu0 0.0
    %3436 = vmatmul.mubr.f32.gmra.mrb[0].mxu0 %v3369
    %v3437 = vpop.f32.mrb[0].mxu0
    %v3438 = vadd.f32 0.0, %v3437
    %v3439 = vpop.f32.mrb[0].mxu0
    %3440 = vdwg.mxu0
    %v3442 = vsel %vm203, %v3367, 0
    %3444 = vmatprep.subr.mxu0 0.0
    %3445 = vmatpush1.msra.mxu0 %v667
    %3446 = vmatprep.subr.mxu0 0.0
    %3447 = vmatpush1.msra.mxu0 %v668
    %3448 = vmatprep.subr.mxu0 0.0
    %3449 = vmatpush1.msra.mxu0 %v669
    %3450 = vmatprep.subr.mxu0 0.0
    %3451 = vmatpush1.msra.mxu0 %v670
    %3452 = vmatprep.subr.mxu0 0.0
    %3453 = vmatpush1.msra.mxu0 0.0
    %3454 = vmatprep.subr.mxu0 0.0
    %3455 = vmatpush1.msra.mxu0 0.0
    %3456 = vmatprep.subr.mxu0 0.0
    %3457 = vmatpush1.msra.mxu0 0.0
    %3458 = vmatprep.subr.mxu0 0.0
    %3459 = vmatpush1.msra.mxu0 0.0
    %3460 = vmatprep.subr.mxu0 0.0
    %3461 = vmatpush1.msra.mxu0 0.0
    %3462 = vmatprep.subr.mxu0 0.0
    %3463 = vmatpush1.msra.mxu0 0.0
    %3464 = vmatprep.subr.mxu0 0.0
    %3465 = vmatpush1.msra.mxu0 0.0
    %3466 = vmatprep.subr.mxu0 0.0
    %3467 = vmatpush1.msra.mxu0 0.0
    %3468 = vmatprep.subr.mxu0 0.0
    %3469 = vmatpush1.msra.mxu0 0.0
    %3470 = vmatprep.subr.mxu0 0.0
    %3471 = vmatpush1.msra.mxu0 0.0
    %3472 = vmatprep.subr.mxu0 0.0
    %3473 = vmatpush1.msra.mxu0 0.0
    %3474 = vmatprep.subr.mxu0 0.0
    %3475 = vmatpush1.msra.mxu0 0.0
    %3476 = vmatprep.subr.mxu0 0.0
    %3477 = vmatpush1.msra.mxu0 0.0
    %3478 = vmatprep.subr.mxu0 0.0
    %3479 = vmatpush1.msra.mxu0 0.0
    %3480 = vmatprep.subr.mxu0 0.0
    %3481 = vmatpush1.msra.mxu0 0.0
    %3482 = vmatprep.subr.mxu0 0.0
    %3483 = vmatpush1.msra.mxu0 0.0
    %3484 = vmatprep.subr.mxu0 0.0
    %3485 = vmatpush1.msra.mxu0 0.0
    %3486 = vmatprep.subr.mxu0 0.0
    %3487 = vmatpush1.msra.mxu0 0.0
    %3488 = vmatprep.subr.mxu0 0.0
    %3489 = vmatpush1.msra.mxu0 0.0
    %3490 = vmatprep.subr.mxu0 0.0
    %3491 = vmatpush1.msra.mxu0 0.0
    %3492 = vmatprep.subr.mxu0 0.0
    %3493 = vmatpush1.msra.mxu0 0.0
    %3494 = vmatprep.subr.mxu0 0.0
    %3495 = vmatpush1.msra.mxu0 0.0
    %3496 = vmatprep.subr.mxu0 0.0
    %3497 = vmatpush1.msra.mxu0 0.0
    %3498 = vmatprep.subr.mxu0 0.0
    %3499 = vmatpush1.msra.mxu0 0.0
    %3500 = vmatprep.subr.mxu0 0.0
    %3501 = vmatpush1.msra.mxu0 0.0
    %3502 = vmatprep.subr.mxu0 0.0
    %3503 = vmatpush1.msra.mxu0 0.0
    %3504 = vmatprep.subr.mxu0 0.0
    %3505 = vmatpush1.msra.mxu0 0.0
    %3506 = vmatprep.subr.mxu0 0.0
    %3507 = vmatpush1.msra.mxu0 0.0
    %3508 = vmatprep.mubr.f32.mxu0 0.0
    %3509 = vmatmul.mubr.f32.gmra.mrb[0].mxu0 %v3442
    %v3510 = vpop.f32.mrb[0].mxu0
    %v3511 = vadd.f32 %v3438, %v3510
    %v3512 = vpop.f32.mrb[0].mxu0
    %3513 = vdwg.mxu0
    %v3514 = vadd.f32 %v3511, %v167
    %v3515 = vxor.u32 %v3514, 2147483648
    %v3516 = vmul.f32 %v3515, 1.442695
    %v3517 = vpow.pop %v3516
    %v3518 = vadd.f32 %v3517, 1.0
    %v3519 = vrcp.pop %v3518
    %v3520 = vmul.f32 1.0, %v3519
    %3521 = vmatprep.subr.mxu0 0.0
    %3522 = vmatpush1.msra.mxu0 %v834
    %3523 = vmatprep.subr.mxu0 0.0
    %3524 = vmatpush1.msra.mxu0 %v835
    %3525 = vmatprep.subr.mxu0 0.0
    %3526 = vmatpush1.msra.mxu0 %v836
    %3527 = vmatprep.subr.mxu0 0.0
    %3528 = vmatpush1.msra.mxu0 %v837
    %3529 = vmatprep.subr.mxu0 0.0
    %3530 = vmatpush1.msra.mxu0 0.0
    %3531 = vmatprep.subr.mxu0 0.0
    %3532 = vmatpush1.msra.mxu0 0.0
    %3533 = vmatprep.subr.mxu0 0.0
    %3534 = vmatpush1.msra.mxu0 0.0
    %3535 = vmatprep.subr.mxu0 0.0
    %3536 = vmatpush1.msra.mxu0 0.0
    %3537 = vmatprep.subr.mxu0 0.0
    %3538 = vmatpush1.msra.mxu0 0.0
    %3539 = vmatprep.subr.mxu0 0.0
    %3540 = vmatpush1.msra.mxu0 0.0
    %3541 = vmatprep.subr.mxu0 0.0
    %3542 = vmatpush1.msra.mxu0 0.0
    %3543 = vmatprep.subr.mxu0 0.0
    %3544 = vmatpush1.msra.mxu0 0.0
    %3545 = vmatprep.subr.mxu0 0.0
    %3546 = vmatpush1.msra.mxu0 0.0
    %3547 = vmatprep.subr.mxu0 0.0
    %3548 = vmatpush1.msra.mxu0 0.0
    %3549 = vmatprep.subr.mxu0 0.0
    %3550 = vmatpush1.msra.mxu0 0.0
    %3551 = vmatprep.subr.mxu0 0.0
    %3552 = vmatpush1.msra.mxu0 0.0
    %3553 = vmatprep.subr.mxu0 0.0
    %3554 = vmatpush1.msra.mxu0 0.0
    %3555 = vmatprep.subr.mxu0 0.0
    %3556 = vmatpush1.msra.mxu0 0.0
    %3557 = vmatprep.subr.mxu0 0.0
    %3558 = vmatpush1.msra.mxu0 0.0
    %3559 = vmatprep.subr.mxu0 0.0
    %3560 = vmatpush1.msra.mxu0 0.0
    %3561 = vmatprep.subr.mxu0 0.0
    %3562 = vmatpush1.msra.mxu0 0.0
    %3563 = vmatprep.subr.mxu0 0.0
    %3564 = vmatpush1.msra.mxu0 0.0
    %3565 = vmatprep.subr.mxu0 0.0
    %3566 = vmatpush1.msra.mxu0 0.0
    %3567 = vmatprep.subr.mxu0 0.0
    %3568 = vmatpush1.msra.mxu0 0.0
    %3569 = vmatprep.subr.mxu0 0.0
    %3570 = vmatpush1.msra.mxu0 0.0
    %3571 = vmatprep.subr.mxu0 0.0
    %3572 = vmatpush1.msra.mxu0 0.0
    %3573 = vmatprep.subr.mxu0 0.0
    %3574 = vmatpush1.msra.mxu0 0.0
    %3575 = vmatprep.subr.mxu0 0.0
    %3576 = vmatpush1.msra.mxu0 0.0
    %3577 = vmatprep.subr.mxu0 0.0
    %3578 = vmatpush1.msra.mxu0 0.0
    %3579 = vmatprep.subr.mxu0 0.0
    %3580 = vmatpush1.msra.mxu0 0.0
    %3581 = vmatprep.subr.mxu0 0.0
    %3582 = vmatpush1.msra.mxu0 0.0
    %3583 = vmatprep.subr.mxu0 0.0
    %3584 = vmatpush1.msra.mxu0 0.0
    %3585 = vmatprep.mubr.f32.mxu0 0.0
    %3586 = vmatmul.mubr.f32.gmra.mrb[0].mxu0 %v3369
    %v3587 = vpop.f32.mrb[0].mxu0
    %v3588 = vadd.f32 0.0, %v3587
    %v3589 = vpop.f32.mrb[0].mxu0
    %3590 = vdwg.mxu0
    %3591 = vmatprep.subr.mxu0 0.0
    %3592 = vmatpush1.msra.mxu0 %v829
    %3593 = vmatprep.subr.mxu0 0.0
    %3594 = vmatpush1.msra.mxu0 %v830
    %3595 = vmatprep.subr.mxu0 0.0
    %3596 = vmatpush1.msra.mxu0 %v831
    %3597 = vmatprep.subr.mxu0 0.0
    %3598 = vmatpush1.msra.mxu0 %v832
    %3599 = vmatprep.subr.mxu0 0.0
    %3600 = vmatpush1.msra.mxu0 0.0
    %3601 = vmatprep.subr.mxu0 0.0
    %3602 = vmatpush1.msra.mxu0 0.0
    %3603 = vmatprep.subr.mxu0 0.0
    %3604 = vmatpush1.msra.mxu0 0.0
    %3605 = vmatprep.subr.mxu0 0.0
    %3606 = vmatpush1.msra.mxu0 0.0
    %3607 = vmatprep.subr.mxu0 0.0
    %3608 = vmatpush1.msra.mxu0 0.0
    %3609 = vmatprep.subr.mxu0 0.0
    %3610 = vmatpush1.msra.mxu0 0.0
    %3611 = vmatprep.subr.mxu0 0.0
    %3612 = vmatpush1.msra.mxu0 0.0
    %3613 = vmatprep.subr.mxu0 0.0
    %3614 = vmatpush1.msra.mxu0 0.0
    %3615 = vmatprep.subr.mxu0 0.0
    %3616 = vmatpush1.msra.mxu0 0.0
    %3617 = vmatprep.subr.mxu0 0.0
    %3618 = vmatpush1.msra.mxu0 0.0
    %3619 = vmatprep.subr.mxu0 0.0
    %3620 = vmatpush1.msra.mxu0 0.0
    %3621 = vmatprep.subr.mxu0 0.0
    %3622 = vmatpush1.msra.mxu0 0.0
    %3623 = vmatprep.subr.mxu0 0.0
    %3624 = vmatpush1.msra.mxu0 0.0
    %3625 = vmatprep.subr.mxu0 0.0
    %3626 = vmatpush1.msra.mxu0 0.0
    %3627 = vmatprep.subr.mxu0 0.0
    %3628 = vmatpush1.msra.mxu0 0.0
    %3629 = vmatprep.subr.mxu0 0.0
    %3630 = vmatpush1.msra.mxu0 0.0
    %3631 = vmatprep.subr.mxu0 0.0
    %3632 = vmatpush1.msra.mxu0 0.0
    %3633 = vmatprep.subr.mxu0 0.0
    %3634 = vmatpush1.msra.mxu0 0.0
    %3635 = vmatprep.subr.mxu0 0.0
    %3636 = vmatpush1.msra.mxu0 0.0
    %3637 = vmatprep.subr.mxu0 0.0
    %3638 = vmatpush1.msra.mxu0 0.0
    %3639 = vmatprep.subr.mxu0 0.0
    %3640 = vmatpush1.msra.mxu0 0.0
    %3641 = vmatprep.subr.mxu0 0.0
    %3642 = vmatpush1.msra.mxu0 0.0
    %3643 = vmatprep.subr.mxu0 0.0
    %3644 = vmatpush1.msra.mxu0 0.0
    %3645 = vmatprep.subr.mxu0 0.0
    %3646 = vmatpush1.msra.mxu0 0.0
    %3647 = vmatprep.subr.mxu0 0.0
    %3648 = vmatpush1.msra.mxu0 0.0
    %3649 = vmatprep.subr.mxu0 0.0
    %3650 = vmatpush1.msra.mxu0 0.0
    %3651 = vmatprep.subr.mxu0 0.0
    %3652 = vmatpush1.msra.mxu0 0.0
    %3653 = vmatprep.subr.mxu0 0.0
    %3654 = vmatpush1.msra.mxu0 0.0
    %3655 = vmatprep.mubr.f32.mxu0 0.0
    %3656 = vmatmul.mubr.f32.gmra.mrb[0].mxu0 %v3442
    %v3657 = vpop.f32.mrb[0].mxu0
    %v3658 = vadd.f32 %v3588, %v3657
    %v3659 = vpop.f32.mrb[0].mxu0
    %3660 = vdwg.mxu0
    %v3661 = vadd.f32 %v3658, %v175
    %v3662 = vxor.u32 %v3661, 2147483648
    %v3663 = vmul.f32 %v3662, 1.442695
    %v3664 = vpow.pop %v3663
    %v3665 = vadd.f32 %v3664, 1.0
    %v3666 = vrcp.pop %v3665
    %v3667 = vmul.f32 1.0, %v3666
    %3668 = vmatprep.subr.mxu0 0.0
    %3669 = vmatpush1.msra.mxu0 %v986
    %3670 = vmatprep.subr.mxu0 0.0
    %3671 = vmatpush1.msra.mxu0 %v987
    %3672 = vmatprep.subr.mxu0 0.0
    %3673 = vmatpush1.msra.mxu0 %v988
    %3674 = vmatprep.subr.mxu0 0.0
    %3675 = vmatpush1.msra.mxu0 %v989
    %3676 = vmatprep.subr.mxu0 0.0
    %3677 = vmatpush1.msra.mxu0 0.0
    %3678 = vmatprep.subr.mxu0 0.0
    %3679 = vmatpush1.msra.mxu0 0.0
    %3680 = vmatprep.subr.mxu0 0.0
    %3681 = vmatpush1.msra.mxu0 0.0
    %3682 = vmatprep.subr.mxu0 0.0
    %3683 = vmatpush1.msra.mxu0 0.0
    %3684 = vmatprep.subr.mxu0 0.0
    %3685 = vmatpush1.msra.mxu0 0.0
    %3686 = vmatprep.subr.mxu0 0.0
    %3687 = vmatpush1.msra.mxu0 0.0
    %3688 = vmatprep.subr.mxu0 0.0
    %3689 = vmatpush1.msra.mxu0 0.0
    %3690 = vmatprep.subr.mxu0 0.0
    %3691 = vmatpush1.msra.mxu0 0.0
    %3692 = vmatprep.subr.mxu0 0.0
    %3693 = vmatpush1.msra.mxu0 0.0
    %3694 = vmatprep.subr.mxu0 0.0
    %3695 = vmatpush1.msra.mxu0 0.0
    %3696 = vmatprep.subr.mxu0 0.0
    %3697 = vmatpush1.msra.mxu0 0.0
    %3698 = vmatprep.subr.mxu0 0.0
    %3699 = vmatpush1.msra.mxu0 0.0
    %3700 = vmatprep.subr.mxu0 0.0
    %3701 = vmatpush1.msra.mxu0 0.0
    %3702 = vmatprep.subr.mxu0 0.0
    %3703 = vmatpush1.msra.mxu0 0.0
    %3704 = vmatprep.subr.mxu0 0.0
    %3705 = vmatpush1.msra.mxu0 0.0
    %3706 = vmatprep.subr.mxu0 0.0
    %3707 = vmatpush1.msra.mxu0 0.0
    %3708 = vmatprep.subr.mxu0 0.0
    %3709 = vmatpush1.msra.mxu0 0.0
    %3710 = vmatprep.subr.mxu0 0.0
    %3711 = vmatpush1.msra.mxu0 0.0
    %3712 = vmatprep.subr.mxu0 0.0
    %3713 = vmatpush1.msra.mxu0 0.0
    %3714 = vmatprep.subr.mxu0 0.0
    %3715 = vmatpush1.msra.mxu0 0.0
    %3716 = vmatprep.subr.mxu0 0.0
    %3717 = vmatpush1.msra.mxu0 0.0
    %3718 = vmatprep.subr.mxu0 0.0
    %3719 = vmatpush1.msra.mxu0 0.0
    %3720 = vmatprep.subr.mxu0 0.0
    %3721 = vmatpush1.msra.mxu0 0.0
    %3722 = vmatprep.subr.mxu0 0.0
    %3723 = vmatpush1.msra.mxu0 0.0
    %3724 = vmatprep.subr.mxu0 0.0
    %3725 = vmatpush1.msra.mxu0 0.0
    %3726 = vmatprep.subr.mxu0 0.0
    %3727 = vmatpush1.msra.mxu0 0.0
    %3728 = vmatprep.subr.mxu0 0.0
    %3729 = vmatpush1.msra.mxu0 0.0
    %3730 = vmatprep.subr.mxu0 0.0
    %3731 = vmatpush1.msra.mxu0 0.0
    %3732 = vmatprep.mubr.f32.mxu0 0.0
    %3733 = vmatmul.mubr.f32.gmra.mrb[0].mxu0 %v3442
    %v3734 = vpop.f32.mrb[0].mxu0
    %v3735 = vadd.f32 %v183, %v3734
    %v3736 = vpop.f32.mrb[0].mxu0
    %3737 = vdwg.mxu0
    %3738 = vmatprep.subr.mxu0 0.0
    %3739 = vmatpush1.msra.mxu0 %v1061
    %3740 = vmatprep.subr.mxu0 0.0
    %3741 = vmatpush1.msra.mxu0 %v1062
    %3742 = vmatprep.subr.mxu0 0.0
    %3743 = vmatpush1.msra.mxu0 %v1063
    %3744 = vmatprep.subr.mxu0 0.0
    %3745 = vmatpush1.msra.mxu0 %v1064
    %3746 = vmatprep.subr.mxu0 0.0
    %3747 = vmatpush1.msra.mxu0 0.0
    %3748 = vmatprep.subr.mxu0 0.0
    %3749 = vmatpush1.msra.mxu0 0.0
    %3750 = vmatprep.subr.mxu0 0.0
    %3751 = vmatpush1.msra.mxu0 0.0
    %3752 = vmatprep.subr.mxu0 0.0
    %3753 = vmatpush1.msra.mxu0 0.0
    %3754 = vmatprep.subr.mxu0 0.0
    %3755 = vmatpush1.msra.mxu0 0.0
    %3756 = vmatprep.subr.mxu0 0.0
    %3757 = vmatpush1.msra.mxu0 0.0
    %3758 = vmatprep.subr.mxu0 0.0
    %3759 = vmatpush1.msra.mxu0 0.0
    %3760 = vmatprep.subr.mxu0 0.0
    %3761 = vmatpush1.msra.mxu0 0.0
    %3762 = vmatprep.subr.mxu0 0.0
    %3763 = vmatpush1.msra.mxu0 0.0
    %3764 = vmatprep.subr.mxu0 0.0
    %3765 = vmatpush1.msra.mxu0 0.0
    %3766 = vmatprep.subr.mxu0 0.0
    %3767 = vmatpush1.msra.mxu0 0.0
    %3768 = vmatprep.subr.mxu0 0.0
    %3769 = vmatpush1.msra.mxu0 0.0
    %3770 = vmatprep.subr.mxu0 0.0
    %3771 = vmatpush1.msra.mxu0 0.0
    %3772 = vmatprep.subr.mxu0 0.0
    %3773 = vmatpush1.msra.mxu0 0.0
    %3774 = vmatprep.subr.mxu0 0.0
    %3775 = vmatpush1.msra.mxu0 0.0
    %3776 = vmatprep.subr.mxu0 0.0
    %3777 = vmatpush1.msra.mxu0 0.0
    %3778 = vmatprep.subr.mxu0 0.0
    %3779 = vmatpush1.msra.mxu0 0.0
    %3780 = vmatprep.subr.mxu0 0.0
    %3781 = vmatpush1.msra.mxu0 0.0
    %3782 = vmatprep.subr.mxu0 0.0
    %3783 = vmatpush1.msra.mxu0 0.0
    %3784 = vmatprep.subr.mxu0 0.0
    %3785 = vmatpush1.msra.mxu0 0.0
    %3786 = vmatprep.subr.mxu0 0.0
    %3787 = vmatpush1.msra.mxu0 0.0
    %3788 = vmatprep.subr.mxu0 0.0
    %3789 = vmatpush1.msra.mxu0 0.0
    %3790 = vmatprep.subr.mxu0 0.0
    %3791 = vmatpush1.msra.mxu0 0.0
    %3792 = vmatprep.subr.mxu0 0.0
    %3793 = vmatpush1.msra.mxu0 0.0
    %3794 = vmatprep.subr.mxu0 0.0
    %3795 = vmatpush1.msra.mxu0 0.0
    %3796 = vmatprep.subr.mxu0 0.0
    %3797 = vmatpush1.msra.mxu0 0.0
    %3798 = vmatprep.subr.mxu0 0.0
    %3799 = vmatpush1.msra.mxu0 0.0
    %3800 = vmatprep.subr.mxu0 0.0
    %3801 = vmatpush1.msra.mxu0 0.0
    %3802 = vmatprep.mubr.f32.mxu0 0.0
    %3803 = vmatmul.mubr.f32.gmra.mrb[0].mxu0 %v3369
    %v3804 = vpop.f32.mrb[0].mxu0
    %v3805 = vadd.f32 %v191, %v3804
    %v3806 = vpop.f32.mrb[0].mxu0
    %3807 = vdwg.mxu0
    %v3808 = vmul.f32 %v3520, %v3805
    %v3809 = vadd.f32 %v3735, %v3808
    %v3810 = vtanh.pop %v3809
    %v3811 = vsub.f32 %v2922, %v3810
    %v3812 = vmul.f32 %v3667, %v3811
    %v3813 = vadd.f32 %v3810, %v3812
    %s3814 = scalar_lea.vmem [#allocation2], 32
    %v3815 = vld [vmem:[%s3814] sm:$0xff]
    %3816 = vmatprep.subr.mxu0 0.0
    %3817 = vmatpush1.msra.mxu0 %v199
    %3818 = vmatprep.subr.mxu0 0.0
    %3819 = vmatpush1.msra.mxu0 %v200
    %3820 = vmatprep.subr.mxu0 0.0
    %3821 = vmatpush1.msra.mxu0 %v201
    %3822 = vmatprep.subr.mxu0 0.0
    %3823 = vmatpush1.msra.mxu0 %v202
    %3824 = vmatprep.subr.mxu0 0.0
    %3825 = vmatpush1.msra.mxu0 0.0
    %3826 = vmatprep.subr.mxu0 0.0
    %3827 = vmatpush1.msra.mxu0 0.0
    %3828 = vmatprep.subr.mxu0 0.0
    %3829 = vmatpush1.msra.mxu0 0.0
    %3830 = vmatprep.subr.mxu0 0.0
    %3831 = vmatpush1.msra.mxu0 0.0
    %3832 = vmatprep.subr.mxu0 0.0
    %3833 = vmatpush1.msra.mxu0 0.0
    %3834 = vmatprep.subr.mxu0 0.0
    %3835 = vmatpush1.msra.mxu0 0.0
    %3836 = vmatprep.subr.mxu0 0.0
    %3837 = vmatpush1.msra.mxu0 0.0
    %3838 = vmatprep.subr.mxu0 0.0
    %3839 = vmatpush1.msra.mxu0 0.0
    %3840 = vmatprep.subr.mxu0 0.0
    %3841 = vmatpush1.msra.mxu0 0.0
    %3842 = vmatprep.subr.mxu0 0.0
    %3843 = vmatpush1.msra.mxu0 0.0
    %3844 = vmatprep.subr.mxu0 0.0
    %3845 = vmatpush1.msra.mxu0 0.0
    %3846 = vmatprep.subr.mxu0 0.0
    %3847 = vmatpush1.msra.mxu0 0.0
    %3848 = vmatprep.subr.mxu0 0.0
    %3849 = vmatpush1.msra.mxu0 0.0
    %3850 = vmatprep.subr.mxu0 0.0
    %3851 = vmatpush1.msra.mxu0 0.0
    %3852 = vmatprep.subr.mxu0 0.0
    %3853 = vmatpush1.msra.mxu0 0.0
    %3854 = vmatprep.subr.mxu0 0.0
    %3855 = vmatpush1.msra.mxu0 0.0
    %3856 = vmatprep.subr.mxu0 0.0
    %3857 = vmatpush1.msra.mxu0 0.0
    %3858 = vmatprep.subr.mxu0 0.0
    %3859 = vmatpush1.msra.mxu0 0.0
    %3860 = vmatprep.subr.mxu0 0.0
    %3861 = vmatpush1.msra.mxu0 0.0
    %3862 = vmatprep.subr.mxu0 0.0
    %3863 = vmatpush1.msra.mxu0 0.0
    %3864 = vmatprep.subr.mxu0 0.0
    %3865 = vmatpush1.msra.mxu0 0.0
    %3866 = vmatprep.subr.mxu0 0.0
    %3867 = vmatpush1.msra.mxu0 0.0
    %3868 = vmatprep.subr.mxu0 0.0
    %3869 = vmatpush1.msra.mxu0 0.0
    %3870 = vmatprep.subr.mxu0 0.0
    %3871 = vmatpush1.msra.mxu0 0.0
    %3872 = vmatprep.subr.mxu0 0.0
    %3873 = vmatpush1.msra.mxu0 0.0
    %3874 = vmatprep.subr.mxu0 0.0
    %3875 = vmatpush1.msra.mxu0 0.0
    %3876 = vmatprep.subr.mxu0 0.0
    %3877 = vmatpush1.msra.mxu0 0.0
    %3878 = vmatprep.subr.mxu0 0.0
    %3879 = vmatpush1.msra.mxu0 0.0
    %3880 = vmatprep.mubr.f32.mxu0 0.0
    %3881 = vmatmul.mubr.f32.gmra.mrb[0].mxu0 %v3442
    %v3882 = vpop.f32.mrb[0].mxu0
    %v3883 = vadd.f32 0.0, %v3882
    %v3884 = vpop.f32.mrb[0].mxu0
    %3885 = vdwg.mxu0
    %v3887 = vsel %vm277, %v3815, 0
    %3889 = vmatprep.subr.mxu0 0.0
    %3890 = vmatpush1.msra.mxu0 %v197
    %3891 = vmatprep.subr.mxu0 0.0
    %3892 = vmatpush1.msra.mxu0 %v198
    %3893 = vmatprep.subr.mxu0 0.0
    %3894 = vmatpush1.msra.mxu0 0.0
    %3895 = vmatprep.subr.mxu0 0.0
    %3896 = vmatpush1.msra.mxu0 0.0
    %3897 = vmatprep.subr.mxu0 0.0
    %3898 = vmatpush1.msra.mxu0 0.0
    %3899 = vmatprep.subr.mxu0 0.0
    %3900 = vmatpush1.msra.mxu0 0.0
    %3901 = vmatprep.subr.mxu0 0.0
    %3902 = vmatpush1.msra.mxu0 0.0
    %3903 = vmatprep.subr.mxu0 0.0
    %3904 = vmatpush1.msra.mxu0 0.0
    %3905 = vmatprep.subr.mxu0 0.0
    %3906 = vmatpush1.msra.mxu0 0.0
    %3907 = vmatprep.subr.mxu0 0.0
    %3908 = vmatpush1.msra.mxu0 0.0
    %3909 = vmatprep.subr.mxu0 0.0
    %3910 = vmatpush1.msra.mxu0 0.0
    %3911 = vmatprep.subr.mxu0 0.0
    %3912 = vmatpush1.msra.mxu0 0.0
    %3913 = vmatprep.subr.mxu0 0.0
    %3914 = vmatpush1.msra.mxu0 0.0
    %3915 = vmatprep.subr.mxu0 0.0
    %3916 = vmatpush1.msra.mxu0 0.0
    %3917 = vmatprep.subr.mxu0 0.0
    %3918 = vmatpush1.msra.mxu0 0.0
    %3919 = vmatprep.subr.mxu0 0.0
    %3920 = vmatpush1.msra.mxu0 0.0
    %3921 = vmatprep.subr.mxu0 0.0
    %3922 = vmatpush1.msra.mxu0 0.0
    %3923 = vmatprep.subr.mxu0 0.0
    %3924 = vmatpush1.msra.mxu0 0.0
    %3925 = vmatprep.subr.mxu0 0.0
    %3926 = vmatpush1.msra.mxu0 0.0
    %3927 = vmatprep.subr.mxu0 0.0
    %3928 = vmatpush1.msra.mxu0 0.0
    %3929 = vmatprep.subr.mxu0 0.0
    %3930 = vmatpush1.msra.mxu0 0.0
    %3931 = vmatprep.subr.mxu0 0.0
    %3932 = vmatpush1.msra.mxu0 0.0
    %3933 = vmatprep.subr.mxu0 0.0
    %3934 = vmatpush1.msra.mxu0 0.0
    %3935 = vmatprep.subr.mxu0 0.0
    %3936 = vmatpush1.msra.mxu0 0.0
    %3937 = vmatprep.subr.mxu0 0.0
    %3938 = vmatpush1.msra.mxu0 0.0
    %3939 = vmatprep.subr.mxu0 0.0
    %3940 = vmatpush1.msra.mxu0 0.0
    %3941 = vmatprep.subr.mxu0 0.0
    %3942 = vmatpush1.msra.mxu0 0.0
    %3943 = vmatprep.subr.mxu0 0.0
    %3944 = vmatpush1.msra.mxu0 0.0
    %3945 = vmatprep.subr.mxu0 0.0
    %3946 = vmatpush1.msra.mxu0 0.0
    %3947 = vmatprep.subr.mxu0 0.0
    %3948 = vmatpush1.msra.mxu0 0.0
    %3949 = vmatprep.subr.mxu0 0.0
    %3950 = vmatpush1.msra.mxu0 0.0
    %3951 = vmatprep.subr.mxu0 0.0
    %3952 = vmatpush1.msra.mxu0 0.0
    %3953 = vmatprep.mubr.f32.mxu0 0.0
    %3954 = vmatmul.mubr.f32.gmra.mrb[0].mxu0 %v3887
    %v3955 = vpop.f32.mrb[0].mxu0
    %v3956 = vadd.f32 %v3883, %v3955
    %v3957 = vpop.f32.mrb[0].mxu0
    %3958 = vdwg.mxu0
    %v3959 = vadd.f32 %v3956, %v136
    %v3960 = vxor.u32 %v3959, 2147483648
    %v3961 = vmul.f32 %v3960, 1.442695
    %v3962 = vpow.pop %v3961
    %v3963 = vadd.f32 %v3962, 1.0
    %v3964 = vrcp.pop %v3963
    %v3965 = vmul.f32 1.0, %v3964
    %3966 = vmatprep.subr.mxu0 0.0
    %3967 = vmatpush1.msra.mxu0 %v362
    %3968 = vmatprep.subr.mxu0 0.0
    %3969 = vmatpush1.msra.mxu0 %v363
    %3970 = vmatprep.subr.mxu0 0.0
    %3971 = vmatpush1.msra.mxu0 %v364
    %3972 = vmatprep.subr.mxu0 0.0
    %3973 = vmatpush1.msra.mxu0 %v365
    %3974 = vmatprep.subr.mxu0 0.0
    %3975 = vmatpush1.msra.mxu0 0.0
    %3976 = vmatprep.subr.mxu0 0.0
    %3977 = vmatpush1.msra.mxu0 0.0
    %3978 = vmatprep.subr.mxu0 0.0
    %3979 = vmatpush1.msra.mxu0 0.0
    %3980 = vmatprep.subr.mxu0 0.0
    %3981 = vmatpush1.msra.mxu0 0.0
    %3982 = vmatprep.subr.mxu0 0.0
    %3983 = vmatpush1.msra.mxu0 0.0
    %3984 = vmatprep.subr.mxu0 0.0
    %3985 = vmatpush1.msra.mxu0 0.0
    %3986 = vmatprep.subr.mxu0 0.0
    %3987 = vmatpush1.msra.mxu0 0.0
    %3988 = vmatprep.subr.mxu0 0.0
    %3989 = vmatpush1.msra.mxu0 0.0
    %3990 = vmatprep.subr.mxu0 0.0
    %3991 = vmatpush1.msra.mxu0 0.0
    %3992 = vmatprep.subr.mxu0 0.0
    %3993 = vmatpush1.msra.mxu0 0.0
    %3994 = vmatprep.subr.mxu0 0.0
    %3995 = vmatpush1.msra.mxu0 0.0
    %3996 = vmatprep.subr.mxu0 0.0
    %3997 = vmatpush1.msra.mxu0 0.0
    %3998 = vmatprep.subr.mxu0 0.0
    %3999 = vmatpush1.msra.mxu0 0.0
    %4000 = vmatprep.subr.mxu0 0.0
    %4001 = vmatpush1.msra.mxu0 0.0
    %4002 = vmatprep.subr.mxu0 0.0
    %4003 = vmatpush1.msra.mxu0 0.0
    %4004 = vmatprep.subr.mxu0 0.0
    %4005 = vmatpush1.msra.mxu0 0.0
    %4006 = vmatprep.subr.mxu0 0.0
    %4007 = vmatpush1.msra.mxu0 0.0
    %4008 = vmatprep.subr.mxu0 0.0
    %4009 = vmatpush1.msra.mxu0 0.0
    %4010 = vmatprep.subr.mxu0 0.0
    %4011 = vmatpush1.msra.mxu0 0.0
    %4012 = vmatprep.subr.mxu0 0.0
    %4013 = vmatpush1.msra.mxu0 0.0
    %4014 = vmatprep.subr.mxu0 0.0
    %4015 = vmatpush1.msra.mxu0 0.0
    %4016 = vmatprep.subr.mxu0 0.0
    %4017 = vmatpush1.msra.mxu0 0.0
    %4018 = vmatprep.subr.mxu0 0.0
    %4019 = vmatpush1.msra.mxu0 0.0
    %4020 = vmatprep.subr.mxu0 0.0
    %4021 = vmatpush1.msra.mxu0 0.0
    %4022 = vmatprep.subr.mxu0 0.0
    %4023 = vmatpush1.msra.mxu0 0.0
    %4024 = vmatprep.subr.mxu0 0.0
    %4025 = vmatpush1.msra.mxu0 0.0
    %4026 = vmatprep.subr.mxu0 0.0
    %4027 = vmatpush1.msra.mxu0 0.0
    %4028 = vmatprep.subr.mxu0 0.0
    %4029 = vmatpush1.msra.mxu0 0.0
    %4030 = vmatprep.mubr.f32.mxu0 0.0
    %4031 = vmatmul.mubr.f32.gmra.mrb[0].mxu0 %v3442
    %v4032 = vpop.f32.mrb[0].mxu0
    %v4033 = vadd.f32 0.0, %v4032
    %v4034 = vpop.f32.mrb[0].mxu0
    %4035 = vdwg.mxu0
    %4036 = vmatprep.subr.mxu0 0.0
    %4037 = vmatpush1.msra.mxu0 %v359
    %4038 = vmatprep.subr.mxu0 0.0
    %4039 = vmatpush1.msra.mxu0 %v360
    %4040 = vmatprep.subr.mxu0 0.0
    %4041 = vmatpush1.msra.mxu0 0.0
    %4042 = vmatprep.subr.mxu0 0.0
    %4043 = vmatpush1.msra.mxu0 0.0
    %4044 = vmatprep.subr.mxu0 0.0
    %4045 = vmatpush1.msra.mxu0 0.0
    %4046 = vmatprep.subr.mxu0 0.0
    %4047 = vmatpush1.msra.mxu0 0.0
    %4048 = vmatprep.subr.mxu0 0.0
    %4049 = vmatpush1.msra.mxu0 0.0
    %4050 = vmatprep.subr.mxu0 0.0
    %4051 = vmatpush1.msra.mxu0 0.0
    %4052 = vmatprep.subr.mxu0 0.0
    %4053 = vmatpush1.msra.mxu0 0.0
    %4054 = vmatprep.subr.mxu0 0.0
    %4055 = vmatpush1.msra.mxu0 0.0
    %4056 = vmatprep.subr.mxu0 0.0
    %4057 = vmatpush1.msra.mxu0 0.0
    %4058 = vmatprep.subr.mxu0 0.0
    %4059 = vmatpush1.msra.mxu0 0.0
    %4060 = vmatprep.subr.mxu0 0.0
    %4061 = vmatpush1.msra.mxu0 0.0
    %4062 = vmatprep.subr.mxu0 0.0
    %4063 = vmatpush1.msra.mxu0 0.0
    %4064 = vmatprep.subr.mxu0 0.0
    %4065 = vmatpush1.msra.mxu0 0.0
    %4066 = vmatprep.subr.mxu0 0.0
    %4067 = vmatpush1.msra.mxu0 0.0
    %4068 = vmatprep.subr.mxu0 0.0
    %4069 = vmatpush1.msra.mxu0 0.0
    %4070 = vmatprep.subr.mxu0 0.0
    %4071 = vmatpush1.msra.mxu0 0.0
    %4072 = vmatprep.subr.mxu0 0.0
    %4073 = vmatpush1.msra.mxu0 0.0
    %4074 = vmatprep.subr.mxu0 0.0
    %4075 = vmatpush1.msra.mxu0 0.0
    %4076 = vmatprep.subr.mxu0 0.0
    %4077 = vmatpush1.msra.mxu0 0.0
    %4078 = vmatprep.subr.mxu0 0.0
    %4079 = vmatpush1.msra.mxu0 0.0
    %4080 = vmatprep.subr.mxu0 0.0
    %4081 = vmatpush1.msra.mxu0 0.0
    %4082 = vmatprep.subr.mxu0 0.0
    %4083 = vmatpush1.msra.mxu0 0.0
    %4084 = vmatprep.subr.mxu0 0.0
    %4085 = vmatpush1.msra.mxu0 0.0
    %4086 = vmatprep.subr.mxu0 0.0
    %4087 = vmatpush1.msra.mxu0 0.0
    %4088 = vmatprep.subr.mxu0 0.0
    %4089 = vmatpush1.msra.mxu0 0.0
    %4090 = vmatprep.subr.mxu0 0.0
    %4091 = vmatpush1.msra.mxu0 0.0
    %4092 = vmatprep.subr.mxu0 0.0
    %4093 = vmatpush1.msra.mxu0 0.0
    %4094 = vmatprep.subr.mxu0 0.0
    %4095 = vmatpush1.msra.mxu0 0.0
    %4096 = vmatprep.subr.mxu0 0.0
    %4097 = vmatpush1.msra.mxu0 0.0
    %4098 = vmatprep.subr.mxu0 0.0
    %4099 = vmatpush1.msra.mxu0 0.0
    %4100 = vmatprep.mubr.f32.mxu0 0.0
    %4101 = vmatmul.mubr.f32.gmra.mrb[0].mxu0 %v3887
    %v4102 = vpop.f32.mrb[0].mxu0
    %v4103 = vadd.f32 %v4033, %v4102
    %v4104 = vpop.f32.mrb[0].mxu0
    %4105 = vdwg.mxu0
    %v4106 = vadd.f32 %v4103, %v144
    %v4107 = vxor.u32 %v4106, 2147483648
    %v4108 = vmul.f32 %v4107, 1.442695
    %v4109 = vpow.pop %v4108
    %v4110 = vadd.f32 %v4109, 1.0
    %v4111 = vrcp.pop %v4110
    %v4112 = vmul.f32 1.0, %v4111
    %4113 = vmatprep.subr.mxu0 0.0
    %4114 = vmatpush1.msra.mxu0 %v514
    %4115 = vmatprep.subr.mxu0 0.0
    %4116 = vmatpush1.msra.mxu0 %v515
    %4117 = vmatprep.subr.mxu0 0.0
    %4118 = vmatpush1.msra.mxu0 0.0
    %4119 = vmatprep.subr.mxu0 0.0
    %4120 = vmatpush1.msra.mxu0 0.0
    %4121 = vmatprep.subr.mxu0 0.0
    %4122 = vmatpush1.msra.mxu0 0.0
    %4123 = vmatprep.subr.mxu0 0.0
    %4124 = vmatpush1.msra.mxu0 0.0
    %4125 = vmatprep.subr.mxu0 0.0
    %4126 = vmatpush1.msra.mxu0 0.0
    %4127 = vmatprep.subr.mxu0 0.0
    %4128 = vmatpush1.msra.mxu0 0.0
    %4129 = vmatprep.subr.mxu0 0.0
    %4130 = vmatpush1.msra.mxu0 0.0
    %4131 = vmatprep.subr.mxu0 0.0
    %4132 = vmatpush1.msra.mxu0 0.0
    %4133 = vmatprep.subr.mxu0 0.0
    %4134 = vmatpush1.msra.mxu0 0.0
    %4135 = vmatprep.subr.mxu0 0.0
    %4136 = vmatpush1.msra.mxu0 0.0
    %4137 = vmatprep.subr.mxu0 0.0
    %4138 = vmatpush1.msra.mxu0 0.0
    %4139 = vmatprep.subr.mxu0 0.0
    %4140 = vmatpush1.msra.mxu0 0.0
    %4141 = vmatprep.subr.mxu0 0.0
    %4142 = vmatpush1.msra.mxu0 0.0
    %4143 = vmatprep.subr.mxu0 0.0
    %4144 = vmatpush1.msra.mxu0 0.0
    %4145 = vmatprep.subr.mxu0 0.0
    %4146 = vmatpush1.msra.mxu0 0.0
    %4147 = vmatprep.subr.mxu0 0.0
    %4148 = vmatpush1.msra.mxu0 0.0
    %4149 = vmatprep.subr.mxu0 0.0
    %4150 = vmatpush1.msra.mxu0 0.0
    %4151 = vmatprep.subr.mxu0 0.0
    %4152 = vmatpush1.msra.mxu0 0.0
    %4153 = vmatprep.subr.mxu0 0.0
    %4154 = vmatpush1.msra.mxu0 0.0
    %4155 = vmatprep.subr.mxu0 0.0
    %4156 = vmatpush1.msra.mxu0 0.0
    %4157 = vmatprep.subr.mxu0 0.0
    %4158 = vmatpush1.msra.mxu0 0.0
    %4159 = vmatprep.subr.mxu0 0.0
    %4160 = vmatpush1.msra.mxu0 0.0
    %4161 = vmatprep.subr.mxu0 0.0
    %4162 = vmatpush1.msra.mxu0 0.0
    %4163 = vmatprep.subr.mxu0 0.0
    %4164 = vmatpush1.msra.mxu0 0.0
    %4165 = vmatprep.subr.mxu0 0.0
    %4166 = vmatpush1.msra.mxu0 0.0
    %4167 = vmatprep.subr.mxu0 0.0
    %4168 = vmatpush1.msra.mxu0 0.0
    %4169 = vmatprep.subr.mxu0 0.0
    %4170 = vmatpush1.msra.mxu0 0.0
    %4171 = vmatprep.subr.mxu0 0.0
    %4172 = vmatpush1.msra.mxu0 0.0
    %4173 = vmatprep.subr.mxu0 0.0
    %4174 = vmatpush1.msra.mxu0 0.0
    %4175 = vmatprep.subr.mxu0 0.0
    %4176 = vmatpush1.msra.mxu0 0.0
    %4177 = vmatprep.mubr.f32.mxu0 0.0
    %4178 = vmatmul.mubr.f32.gmra.mrb[0].mxu0 %v3887
    %v4179 = vpop.f32.mrb[0].mxu0
    %v4180 = vadd.f32 %v152, %v4179
    %v4181 = vpop.f32.mrb[0].mxu0
    %4182 = vdwg.mxu0
    %4183 = vmatprep.subr.mxu0 0.0
    %4184 = vmatpush1.msra.mxu0 %v587
    %4185 = vmatprep.subr.mxu0 0.0
    %4186 = vmatpush1.msra.mxu0 %v588
    %4187 = vmatprep.subr.mxu0 0.0
    %4188 = vmatpush1.msra.mxu0 %v589
    %4189 = vmatprep.subr.mxu0 0.0
    %4190 = vmatpush1.msra.mxu0 %v590
    %4191 = vmatprep.subr.mxu0 0.0
    %4192 = vmatpush1.msra.mxu0 0.0
    %4193 = vmatprep.subr.mxu0 0.0
    %4194 = vmatpush1.msra.mxu0 0.0
    %4195 = vmatprep.subr.mxu0 0.0
    %4196 = vmatpush1.msra.mxu0 0.0
    %4197 = vmatprep.subr.mxu0 0.0
    %4198 = vmatpush1.msra.mxu0 0.0
    %4199 = vmatprep.subr.mxu0 0.0
    %4200 = vmatpush1.msra.mxu0 0.0
    %4201 = vmatprep.subr.mxu0 0.0
    %4202 = vmatpush1.msra.mxu0 0.0
    %4203 = vmatprep.subr.mxu0 0.0
    %4204 = vmatpush1.msra.mxu0 0.0
    %4205 = vmatprep.subr.mxu0 0.0
    %4206 = vmatpush1.msra.mxu0 0.0
    %4207 = vmatprep.subr.mxu0 0.0
    %4208 = vmatpush1.msra.mxu0 0.0
    %4209 = vmatprep.subr.mxu0 0.0
    %4210 = vmatpush1.msra.mxu0 0.0
    %4211 = vmatprep.subr.mxu0 0.0
    %4212 = vmatpush1.msra.mxu0 0.0
    %4213 = vmatprep.subr.mxu0 0.0
    %4214 = vmatpush1.msra.mxu0 0.0
    %4215 = vmatprep.subr.mxu0 0.0
    %4216 = vmatpush1.msra.mxu0 0.0
    %4217 = vmatprep.subr.mxu0 0.0
    %4218 = vmatpush1.msra.mxu0 0.0
    %4219 = vmatprep.subr.mxu0 0.0
    %4220 = vmatpush1.msra.mxu0 0.0
    %4221 = vmatprep.subr.mxu0 0.0
    %4222 = vmatpush1.msra.mxu0 0.0
    %4223 = vmatprep.subr.mxu0 0.0
    %4224 = vmatpush1.msra.mxu0 0.0
    %4225 = vmatprep.subr.mxu0 0.0
    %4226 = vmatpush1.msra.mxu0 0.0
    %4227 = vmatprep.subr.mxu0 0.0
    %4228 = vmatpush1.msra.mxu0 0.0
    %4229 = vmatprep.subr.mxu0 0.0
    %4230 = vmatpush1.msra.mxu0 0.0
    %4231 = vmatprep.subr.mxu0 0.0
    %4232 = vmatpush1.msra.mxu0 0.0
    %4233 = vmatprep.subr.mxu0 0.0
    %4234 = vmatpush1.msra.mxu0 0.0
    %4235 = vmatprep.subr.mxu0 0.0
    %4236 = vmatpush1.msra.mxu0 0.0
    %4237 = vmatprep.subr.mxu0 0.0
    %4238 = vmatpush1.msra.mxu0 0.0
    %4239 = vmatprep.subr.mxu0 0.0
    %4240 = vmatpush1.msra.mxu0 0.0
    %4241 = vmatprep.subr.mxu0 0.0
    %4242 = vmatpush1.msra.mxu0 0.0
    %4243 = vmatprep.subr.mxu0 0.0
    %4244 = vmatpush1.msra.mxu0 0.0
    %4245 = vmatprep.subr.mxu0 0.0
    %4246 = vmatpush1.msra.mxu0 0.0
    %4247 = vmatprep.mubr.f32.mxu0 0.0
    %4248 = vmatmul.mubr.f32.gmra.mrb[0].mxu0 %v3442
    %v4249 = vpop.f32.mrb[0].mxu0
    %v4250 = vadd.f32 %v160, %v4249
    %v4251 = vpop.f32.mrb[0].mxu0
    %4252 = vdwg.mxu0
    %v4253 = vmul.f32 %v3965, %v4250
    %v4254 = vadd.f32 %v4180, %v4253
    %v4255 = vtanh.pop %v4254
    %v4256 = vsub.f32 %v3367, %v4255
    %v4257 = vmul.f32 %v4112, %v4256
    %v4258 = vadd.f32 %v4255, %v4257
    %v4260 = vsel %vm203, %v3813, 0
    %4262 = vmatprep.subr.mxu0 0.0
    %4263 = vmatpush1.msra.mxu0 %v671
    %4264 = vmatprep.subr.mxu0 0.0
    %4265 = vmatpush1.msra.mxu0 %v672
    %4266 = vmatprep.subr.mxu0 0.0
    %4267 = vmatpush1.msra.mxu0 %v673
    %4268 = vmatprep.subr.mxu0 0.0
    %4269 = vmatpush1.msra.mxu0 %v674
    %4270 = vmatprep.subr.mxu0 0.0
    %4271 = vmatpush1.msra.mxu0 0.0
    %4272 = vmatprep.subr.mxu0 0.0
    %4273 = vmatpush1.msra.mxu0 0.0
    %4274 = vmatprep.subr.mxu0 0.0
    %4275 = vmatpush1.msra.mxu0 0.0
    %4276 = vmatprep.subr.mxu0 0.0
    %4277 = vmatpush1.msra.mxu0 0.0
    %4278 = vmatprep.subr.mxu0 0.0
    %4279 = vmatpush1.msra.mxu0 0.0
    %4280 = vmatprep.subr.mxu0 0.0
    %4281 = vmatpush1.msra.mxu0 0.0
    %4282 = vmatprep.subr.mxu0 0.0
    %4283 = vmatpush1.msra.mxu0 0.0
    %4284 = vmatprep.subr.mxu0 0.0
    %4285 = vmatpush1.msra.mxu0 0.0
    %4286 = vmatprep.subr.mxu0 0.0
    %4287 = vmatpush1.msra.mxu0 0.0
    %4288 = vmatprep.subr.mxu0 0.0
    %4289 = vmatpush1.msra.mxu0 0.0
    %4290 = vmatprep.subr.mxu0 0.0
    %4291 = vmatpush1.msra.mxu0 0.0
    %4292 = vmatprep.subr.mxu0 0.0
    %4293 = vmatpush1.msra.mxu0 0.0
    %4294 = vmatprep.subr.mxu0 0.0
    %4295 = vmatpush1.msra.mxu0 0.0
    %4296 = vmatprep.subr.mxu0 0.0
    %4297 = vmatpush1.msra.mxu0 0.0
    %4298 = vmatprep.subr.mxu0 0.0
    %4299 = vmatpush1.msra.mxu0 0.0
    %4300 = vmatprep.subr.mxu0 0.0
    %4301 = vmatpush1.msra.mxu0 0.0
    %4302 = vmatprep.subr.mxu0 0.0
    %4303 = vmatpush1.msra.mxu0 0.0
    %4304 = vmatprep.subr.mxu0 0.0
    %4305 = vmatpush1.msra.mxu0 0.0
    %4306 = vmatprep.subr.mxu0 0.0
    %4307 = vmatpush1.msra.mxu0 0.0
    %4308 = vmatprep.subr.mxu0 0.0
    %4309 = vmatpush1.msra.mxu0 0.0
    %4310 = vmatprep.subr.mxu0 0.0
    %4311 = vmatpush1.msra.mxu0 0.0
    %4312 = vmatprep.subr.mxu0 0.0
    %4313 = vmatpush1.msra.mxu0 0.0
    %4314 = vmatprep.subr.mxu0 0.0
    %4315 = vmatpush1.msra.mxu0 0.0
    %4316 = vmatprep.subr.mxu0 0.0
    %4317 = vmatpush1.msra.mxu0 0.0
    %4318 = vmatprep.subr.mxu0 0.0
    %4319 = vmatpush1.msra.mxu0 0.0
    %4320 = vmatprep.subr.mxu0 0.0
    %4321 = vmatpush1.msra.mxu0 0.0
    %4322 = vmatprep.subr.mxu0 0.0
    %4323 = vmatpush1.msra.mxu0 0.0
    %4324 = vmatprep.subr.mxu0 0.0
    %4325 = vmatpush1.msra.mxu0 0.0
    %4326 = vmatprep.mubr.f32.mxu0 0.0
    %4327 = vmatmul.mubr.f32.gmra.mrb[0].mxu0 %v4260
    %v4328 = vpop.f32.mrb[0].mxu0
    %v4329 = vadd.f32 0.0, %v4328
    %v4330 = vpop.f32.mrb[0].mxu0
    %4331 = vdwg.mxu0
    %v4333 = vsel %vm203, %v4258, 0
    %4335 = vmatprep.subr.mxu0 0.0
    %4336 = vmatpush1.msra.mxu0 %v667
    %4337 = vmatprep.subr.mxu0 0.0
    %4338 = vmatpush1.msra.mxu0 %v668
    %4339 = vmatprep.subr.mxu0 0.0
    %4340 = vmatpush1.msra.mxu0 %v669
    %4341 = vmatprep.subr.mxu0 0.0
    %4342 = vmatpush1.msra.mxu0 %v670
    %4343 = vmatprep.subr.mxu0 0.0
    %4344 = vmatpush1.msra.mxu0 0.0
    %4345 = vmatprep.subr.mxu0 0.0
    %4346 = vmatpush1.msra.mxu0 0.0
    %4347 = vmatprep.subr.mxu0 0.0
    %4348 = vmatpush1.msra.mxu0 0.0
    %4349 = vmatprep.subr.mxu0 0.0
    %4350 = vmatpush1.msra.mxu0 0.0
    %4351 = vmatprep.subr.mxu0 0.0
    %4352 = vmatpush1.msra.mxu0 0.0
    %4353 = vmatprep.subr.mxu0 0.0
    %4354 = vmatpush1.msra.mxu0 0.0
    %4355 = vmatprep.subr.mxu0 0.0
    %4356 = vmatpush1.msra.mxu0 0.0
    %4357 = vmatprep.subr.mxu0 0.0
    %4358 = vmatpush1.msra.mxu0 0.0
    %4359 = vmatprep.subr.mxu0 0.0
    %4360 = vmatpush1.msra.mxu0 0.0
    %4361 = vmatprep.subr.mxu0 0.0
    %4362 = vmatpush1.msra.mxu0 0.0
    %4363 = vmatprep.subr.mxu0 0.0
    %4364 = vmatpush1.msra.mxu0 0.0
    %4365 = vmatprep.subr.mxu0 0.0
    %4366 = vmatpush1.msra.mxu0 0.0
    %4367 = vmatprep.subr.mxu0 0.0
    %4368 = vmatpush1.msra.mxu0 0.0
    %4369 = vmatprep.subr.mxu0 0.0
    %4370 = vmatpush1.msra.mxu0 0.0
    %4371 = vmatprep.subr.mxu0 0.0
    %4372 = vmatpush1.msra.mxu0 0.0
    %4373 = vmatprep.subr.mxu0 0.0
    %4374 = vmatpush1.msra.mxu0 0.0
    %4375 = vmatprep.subr.mxu0 0.0
    %4376 = vmatpush1.msra.mxu0 0.0
    %4377 = vmatprep.subr.mxu0 0.0
    %4378 = vmatpush1.msra.mxu0 0.0
    %4379 = vmatprep.subr.mxu0 0.0
    %4380 = vmatpush1.msra.mxu0 0.0
    %4381 = vmatprep.subr.mxu0 0.0
    %4382 = vmatpush1.msra.mxu0 0.0
    %4383 = vmatprep.subr.mxu0 0.0
    %4384 = vmatpush1.msra.mxu0 0.0
    %4385 = vmatprep.subr.mxu0 0.0
    %4386 = vmatpush1.msra.mxu0 0.0
    %4387 = vmatprep.subr.mxu0 0.0
    %4388 = vmatpush1.msra.mxu0 0.0
    %4389 = vmatprep.subr.mxu0 0.0
    %4390 = vmatpush1.msra.mxu0 0.0
    %4391 = vmatprep.subr.mxu0 0.0
    %4392 = vmatpush1.msra.mxu0 0.0
    %4393 = vmatprep.subr.mxu0 0.0
    %4394 = vmatpush1.msra.mxu0 0.0
    %4395 = vmatprep.subr.mxu0 0.0
    %4396 = vmatpush1.msra.mxu0 0.0
    %4397 = vmatprep.subr.mxu0 0.0
    %4398 = vmatpush1.msra.mxu0 0.0
    %4399 = vmatprep.mubr.f32.mxu0 0.0
    %4400 = vmatmul.mubr.f32.gmra.mrb[0].mxu0 %v4333
    %v4401 = vpop.f32.mrb[0].mxu0
    %v4402 = vadd.f32 %v4329, %v4401
    %v4403 = vpop.f32.mrb[0].mxu0
    %4404 = vdwg.mxu0
    %v4405 = vadd.f32 %v4402, %v167
    %v4406 = vxor.u32 %v4405, 2147483648
    %v4407 = vmul.f32 %v4406, 1.442695
    %v4408 = vpow.pop %v4407
    %v4409 = vadd.f32 %v4408, 1.0
    %v4410 = vrcp.pop %v4409
    %v4411 = vmul.f32 1.0, %v4410
    %4412 = vmatprep.subr.mxu0 0.0
    %4413 = vmatpush1.msra.mxu0 %v834
    %4414 = vmatprep.subr.mxu0 0.0
    %4415 = vmatpush1.msra.mxu0 %v835
    %4416 = vmatprep.subr.mxu0 0.0
    %4417 = vmatpush1.msra.mxu0 %v836
    %4418 = vmatprep.subr.mxu0 0.0
    %4419 = vmatpush1.msra.mxu0 %v837
    %4420 = vmatprep.subr.mxu0 0.0
    %4421 = vmatpush1.msra.mxu0 0.0
    %4422 = vmatprep.subr.mxu0 0.0
    %4423 = vmatpush1.msra.mxu0 0.0
    %4424 = vmatprep.subr.mxu0 0.0
    %4425 = vmatpush1.msra.mxu0 0.0
    %4426 = vmatprep.subr.mxu0 0.0
    %4427 = vmatpush1.msra.mxu0 0.0
    %4428 = vmatprep.subr.mxu0 0.0
    %4429 = vmatpush1.msra.mxu0 0.0
    %4430 = vmatprep.subr.mxu0 0.0
    %4431 = vmatpush1.msra.mxu0 0.0
    %4432 = vmatprep.subr.mxu0 0.0
    %4433 = vmatpush1.msra.mxu0 0.0
    %4434 = vmatprep.subr.mxu0 0.0
    %4435 = vmatpush1.msra.mxu0 0.0
    %4436 = vmatprep.subr.mxu0 0.0
    %4437 = vmatpush1.msra.mxu0 0.0
    %4438 = vmatprep.subr.mxu0 0.0
    %4439 = vmatpush1.msra.mxu0 0.0
    %4440 = vmatprep.subr.mxu0 0.0
    %4441 = vmatpush1.msra.mxu0 0.0
    %4442 = vmatprep.subr.mxu0 0.0
    %4443 = vmatpush1.msra.mxu0 0.0
    %4444 = vmatprep.subr.mxu0 0.0
    %4445 = vmatpush1.msra.mxu0 0.0
    %4446 = vmatprep.subr.mxu0 0.0
    %4447 = vmatpush1.msra.mxu0 0.0
    %4448 = vmatprep.subr.mxu0 0.0
    %4449 = vmatpush1.msra.mxu0 0.0
    %4450 = vmatprep.subr.mxu0 0.0
    %4451 = vmatpush1.msra.mxu0 0.0
    %4452 = vmatprep.subr.mxu0 0.0
    %4453 = vmatpush1.msra.mxu0 0.0
    %4454 = vmatprep.subr.mxu0 0.0
    %4455 = vmatpush1.msra.mxu0 0.0
    %4456 = vmatprep.subr.mxu0 0.0
    %4457 = vmatpush1.msra.mxu0 0.0
    %4458 = vmatprep.subr.mxu0 0.0
    %4459 = vmatpush1.msra.mxu0 0.0
    %4460 = vmatprep.subr.mxu0 0.0
    %4461 = vmatpush1.msra.mxu0 0.0
    %4462 = vmatprep.subr.mxu0 0.0
    %4463 = vmatpush1.msra.mxu0 0.0
    %4464 = vmatprep.subr.mxu0 0.0
    %4465 = vmatpush1.msra.mxu0 0.0
    %4466 = vmatprep.subr.mxu0 0.0
    %4467 = vmatpush1.msra.mxu0 0.0
    %4468 = vmatprep.subr.mxu0 0.0
    %4469 = vmatpush1.msra.mxu0 0.0
    %4470 = vmatprep.subr.mxu0 0.0
    %4471 = vmatpush1.msra.mxu0 0.0
    %4472 = vmatprep.subr.mxu0 0.0
    %4473 = vmatpush1.msra.mxu0 0.0
    %4474 = vmatprep.subr.mxu0 0.0
    %4475 = vmatpush1.msra.mxu0 0.0
    %4476 = vmatprep.mubr.f32.mxu0 0.0
    %4477 = vmatmul.mubr.f32.gmra.mrb[0].mxu0 %v4260
    %v4478 = vpop.f32.mrb[0].mxu0
    %v4479 = vadd.f32 0.0, %v4478
    %v4480 = vpop.f32.mrb[0].mxu0
    %4481 = vdwg.mxu0
    %4482 = vmatprep.subr.mxu0 0.0
    %4483 = vmatpush1.msra.mxu0 %v829
    %4484 = vmatprep.subr.mxu0 0.0
    %4485 = vmatpush1.msra.mxu0 %v830
    %4486 = vmatprep.subr.mxu0 0.0
    %4487 = vmatpush1.msra.mxu0 %v831
    %4488 = vmatprep.subr.mxu0 0.0
    %4489 = vmatpush1.msra.mxu0 %v832
    %4490 = vmatprep.subr.mxu0 0.0
    %4491 = vmatpush1.msra.mxu0 0.0
    %4492 = vmatprep.subr.mxu0 0.0
    %4493 = vmatpush1.msra.mxu0 0.0
    %4494 = vmatprep.subr.mxu0 0.0
    %4495 = vmatpush1.msra.mxu0 0.0
    %4496 = vmatprep.subr.mxu0 0.0
    %4497 = vmatpush1.msra.mxu0 0.0
    %4498 = vmatprep.subr.mxu0 0.0
    %4499 = vmatpush1.msra.mxu0 0.0
    %4500 = vmatprep.subr.mxu0 0.0
    %4501 = vmatpush1.msra.mxu0 0.0
    %4502 = vmatprep.subr.mxu0 0.0
    %4503 = vmatpush1.msra.mxu0 0.0
    %4504 = vmatprep.subr.mxu0 0.0
    %4505 = vmatpush1.msra.mxu0 0.0
    %4506 = vmatprep.subr.mxu0 0.0
    %4507 = vmatpush1.msra.mxu0 0.0
    %4508 = vmatprep.subr.mxu0 0.0
    %4509 = vmatpush1.msra.mxu0 0.0
    %4510 = vmatprep.subr.mxu0 0.0
    %4511 = vmatpush1.msra.mxu0 0.0
    %4512 = vmatprep.subr.mxu0 0.0
    %4513 = vmatpush1.msra.mxu0 0.0
    %4514 = vmatprep.subr.mxu0 0.0
    %4515 = vmatpush1.msra.mxu0 0.0
    %4516 = vmatprep.subr.mxu0 0.0
    %4517 = vmatpush1.msra.mxu0 0.0
    %4518 = vmatprep.subr.mxu0 0.0
    %4519 = vmatpush1.msra.mxu0 0.0
    %4520 = vmatprep.subr.mxu0 0.0
    %4521 = vmatpush1.msra.mxu0 0.0
    %4522 = vmatprep.subr.mxu0 0.0
    %4523 = vmatpush1.msra.mxu0 0.0
    %4524 = vmatprep.subr.mxu0 0.0
    %4525 = vmatpush1.msra.mxu0 0.0
    %4526 = vmatprep.subr.mxu0 0.0
    %4527 = vmatpush1.msra.mxu0 0.0
    %4528 = vmatprep.subr.mxu0 0.0
    %4529 = vmatpush1.msra.mxu0 0.0
    %4530 = vmatprep.subr.mxu0 0.0
    %4531 = vmatpush1.msra.mxu0 0.0
    %4532 = vmatprep.subr.mxu0 0.0
    %4533 = vmatpush1.msra.mxu0 0.0
    %4534 = vmatprep.subr.mxu0 0.0
    %4535 = vmatpush1.msra.mxu0 0.0
    %4536 = vmatprep.subr.mxu0 0.0
    %4537 = vmatpush1.msra.mxu0 0.0
    %4538 = vmatprep.subr.mxu0 0.0
    %4539 = vmatpush1.msra.mxu0 0.0
    %4540 = vmatprep.subr.mxu0 0.0
    %4541 = vmatpush1.msra.mxu0 0.0
    %4542 = vmatprep.subr.mxu0 0.0
    %4543 = vmatpush1.msra.mxu0 0.0
    %4544 = vmatprep.subr.mxu0 0.0
    %4545 = vmatpush1.msra.mxu0 0.0
    %4546 = vmatprep.mubr.f32.mxu0 0.0
    %4547 = vmatmul.mubr.f32.gmra.mrb[0].mxu0 %v4333
    %v4548 = vpop.f32.mrb[0].mxu0
    %v4549 = vadd.f32 %v4479, %v4548
    %v4550 = vpop.f32.mrb[0].mxu0
    %4551 = vdwg.mxu0
    %v4552 = vadd.f32 %v4549, %v175
    %v4553 = vxor.u32 %v4552, 2147483648
    %v4554 = vmul.f32 %v4553, 1.442695
    %v4555 = vpow.pop %v4554
    %v4556 = vadd.f32 %v4555, 1.0
    %v4557 = vrcp.pop %v4556
    %v4558 = vmul.f32 1.0, %v4557
    %4559 = vmatprep.subr.mxu0 0.0
    %4560 = vmatpush1.msra.mxu0 %v986
    %4561 = vmatprep.subr.mxu0 0.0
    %4562 = vmatpush1.msra.mxu0 %v987
    %4563 = vmatprep.subr.mxu0 0.0
    %4564 = vmatpush1.msra.mxu0 %v988
    %4565 = vmatprep.subr.mxu0 0.0
    %4566 = vmatpush1.msra.mxu0 %v989
    %4567 = vmatprep.subr.mxu0 0.0
    %4568 = vmatpush1.msra.mxu0 0.0
    %4569 = vmatprep.subr.mxu0 0.0
    %4570 = vmatpush1.msra.mxu0 0.0
    %4571 = vmatprep.subr.mxu0 0.0
    %4572 = vmatpush1.msra.mxu0 0.0
    %4573 = vmatprep.subr.mxu0 0.0
    %4574 = vmatpush1.msra.mxu0 0.0
    %4575 = vmatprep.subr.mxu0 0.0
    %4576 = vmatpush1.msra.mxu0 0.0
    %4577 = vmatprep.subr.mxu0 0.0
    %4578 = vmatpush1.msra.mxu0 0.0
    %4579 = vmatprep.subr.mxu0 0.0
    %4580 = vmatpush1.msra.mxu0 0.0
    %4581 = vmatprep.subr.mxu0 0.0
    %4582 = vmatpush1.msra.mxu0 0.0
    %4583 = vmatprep.subr.mxu0 0.0
    %4584 = vmatpush1.msra.mxu0 0.0
    %4585 = vmatprep.subr.mxu0 0.0
    %4586 = vmatpush1.msra.mxu0 0.0
    %4587 = vmatprep.subr.mxu0 0.0
    %4588 = vmatpush1.msra.mxu0 0.0
    %4589 = vmatprep.subr.mxu0 0.0
    %4590 = vmatpush1.msra.mxu0 0.0
    %4591 = vmatprep.subr.mxu0 0.0
    %4592 = vmatpush1.msra.mxu0 0.0
    %4593 = vmatprep.subr.mxu0 0.0
    %4594 = vmatpush1.msra.mxu0 0.0
    %4595 = vmatprep.subr.mxu0 0.0
    %4596 = vmatpush1.msra.mxu0 0.0
    %4597 = vmatprep.subr.mxu0 0.0
    %4598 = vmatpush1.msra.mxu0 0.0
    %4599 = vmatprep.subr.mxu0 0.0
    %4600 = vmatpush1.msra.mxu0 0.0
    %4601 = vmatprep.subr.mxu0 0.0
    %4602 = vmatpush1.msra.mxu0 0.0
    %4603 = vmatprep.subr.mxu0 0.0
    %4604 = vmatpush1.msra.mxu0 0.0
    %4605 = vmatprep.subr.mxu0 0.0
    %4606 = vmatpush1.msra.mxu0 0.0
    %4607 = vmatprep.subr.mxu0 0.0
    %4608 = vmatpush1.msra.mxu0 0.0
    %4609 = vmatprep.subr.mxu0 0.0
    %4610 = vmatpush1.msra.mxu0 0.0
    %4611 = vmatprep.subr.mxu0 0.0
    %4612 = vmatpush1.msra.mxu0 0.0
    %4613 = vmatprep.subr.mxu0 0.0
    %4614 = vmatpush1.msra.mxu0 0.0
    %4615 = vmatprep.subr.mxu0 0.0
    %4616 = vmatpush1.msra.mxu0 0.0
    %4617 = vmatprep.subr.mxu0 0.0
    %4618 = vmatpush1.msra.mxu0 0.0
    %4619 = vmatprep.subr.mxu0 0.0
    %4620 = vmatpush1.msra.mxu0 0.0
    %4621 = vmatprep.subr.mxu0 0.0
    %4622 = vmatpush1.msra.mxu0 0.0
    %4623 = vmatprep.mubr.f32.mxu0 0.0
    %4624 = vmatmul.mubr.f32.gmra.mrb[0].mxu0 %v4333
    %v4625 = vpop.f32.mrb[0].mxu0
    %v4626 = vadd.f32 %v183, %v4625
    %v4627 = vpop.f32.mrb[0].mxu0
    %4628 = vdwg.mxu0
    %4629 = vmatprep.subr.mxu0 0.0
    %4630 = vmatpush1.msra.mxu0 %v1061
    %4631 = vmatprep.subr.mxu0 0.0
    %4632 = vmatpush1.msra.mxu0 %v1062
    %4633 = vmatprep.subr.mxu0 0.0
    %4634 = vmatpush1.msra.mxu0 %v1063
    %4635 = vmatprep.subr.mxu0 0.0
    %4636 = vmatpush1.msra.mxu0 %v1064
    %4637 = vmatprep.subr.mxu0 0.0
    %4638 = vmatpush1.msra.mxu0 0.0
    %4639 = vmatprep.subr.mxu0 0.0
    %4640 = vmatpush1.msra.mxu0 0.0
    %4641 = vmatprep.subr.mxu0 0.0
    %4642 = vmatpush1.msra.mxu0 0.0
    %4643 = vmatprep.subr.mxu0 0.0
    %4644 = vmatpush1.msra.mxu0 0.0
    %4645 = vmatprep.subr.mxu0 0.0
    %4646 = vmatpush1.msra.mxu0 0.0
    %4647 = vmatprep.subr.mxu0 0.0
    %4648 = vmatpush1.msra.mxu0 0.0
    %4649 = vmatprep.subr.mxu0 0.0
    %4650 = vmatpush1.msra.mxu0 0.0
    %4651 = vmatprep.subr.mxu0 0.0
    %4652 = vmatpush1.msra.mxu0 0.0
    %4653 = vmatprep.subr.mxu0 0.0
    %4654 = vmatpush1.msra.mxu0 0.0
    %4655 = vmatprep.subr.mxu0 0.0
    %4656 = vmatpush1.msra.mxu0 0.0
    %4657 = vmatprep.subr.mxu0 0.0
    %4658 = vmatpush1.msra.mxu0 0.0
    %4659 = vmatprep.subr.mxu0 0.0
    %4660 = vmatpush1.msra.mxu0 0.0
    %4661 = vmatprep.subr.mxu0 0.0
    %4662 = vmatpush1.msra.mxu0 0.0
    %4663 = vmatprep.subr.mxu0 0.0
    %4664 = vmatpush1.msra.mxu0 0.0
    %4665 = vmatprep.subr.mxu0 0.0
    %4666 = vmatpush1.msra.mxu0 0.0
    %4667 = vmatprep.subr.mxu0 0.0
    %4668 = vmatpush1.msra.mxu0 0.0
    %4669 = vmatprep.subr.mxu0 0.0
    %4670 = vmatpush1.msra.mxu0 0.0
    %4671 = vmatprep.subr.mxu0 0.0
    %4672 = vmatpush1.msra.mxu0 0.0
    %4673 = vmatprep.subr.mxu0 0.0
    %4674 = vmatpush1.msra.mxu0 0.0
    %4675 = vmatprep.subr.mxu0 0.0
    %4676 = vmatpush1.msra.mxu0 0.0
    %4677 = vmatprep.subr.mxu0 0.0
    %4678 = vmatpush1.msra.mxu0 0.0
    %4679 = vmatprep.subr.mxu0 0.0
    %4680 = vmatpush1.msra.mxu0 0.0
    %4681 = vmatprep.subr.mxu0 0.0
    %4682 = vmatpush1.msra.mxu0 0.0
    %4683 = vmatprep.subr.mxu0 0.0
    %4684 = vmatpush1.msra.mxu0 0.0
    %4685 = vmatprep.subr.mxu0 0.0
    %4686 = vmatpush1.msra.mxu0 0.0
    %4687 = vmatprep.subr.mxu0 0.0
    %4688 = vmatpush1.msra.mxu0 0.0
    %4689 = vmatprep.subr.mxu0 0.0
    %4690 = vmatpush1.msra.mxu0 0.0
    %4691 = vmatprep.subr.mxu0 0.0
    %4692 = vmatpush1.msra.mxu0 0.0
    %4693 = vmatprep.mubr.f32.mxu0 0.0
    %4694 = vmatmul.mubr.f32.gmra.mrb[0].mxu0 %v4260
    %v4695 = vpop.f32.mrb[0].mxu0
    %v4696 = vadd.f32 %v191, %v4695
    %v4697 = vpop.f32.mrb[0].mxu0
    %4698 = vdwg.mxu0
    %v4699 = vmul.f32 %v4411, %v4696
    %v4700 = vadd.f32 %v4626, %v4699
    %v4701 = vtanh.pop %v4700
    %v4702 = vsub.f32 %v3813, %v4701
    %v4703 = vmul.f32 %v4558, %v4702
    %v4704 = vadd.f32 %v4701, %v4703
    %s4705 = scalar_lea.vmem [#allocation2], 40
    %v4706 = vld [vmem:[%s4705] sm:$0xff]
    %4707 = vmatprep.subr.mxu0 0.0
    %4708 = vmatpush1.msra.mxu0 %v199
    %4709 = vmatprep.subr.mxu0 0.0
    %4710 = vmatpush1.msra.mxu0 %v200
    %4711 = vmatprep.subr.mxu0 0.0
    %4712 = vmatpush1.msra.mxu0 %v201
    %4713 = vmatprep.subr.mxu0 0.0
    %4714 = vmatpush1.msra.mxu0 %v202
    %4715 = vmatprep.subr.mxu0 0.0
    %4716 = vmatpush1.msra.mxu0 0.0
    %4717 = vmatprep.subr.mxu0 0.0
    %4718 = vmatpush1.msra.mxu0 0.0
    %4719 = vmatprep.subr.mxu0 0.0
    %4720 = vmatpush1.msra.mxu0 0.0
    %4721 = vmatprep.subr.mxu0 0.0
    %4722 = vmatpush1.msra.mxu0 0.0
    %4723 = vmatprep.subr.mxu0 0.0
    %4724 = vmatpush1.msra.mxu0 0.0
    %4725 = vmatprep.subr.mxu0 0.0
    %4726 = vmatpush1.msra.mxu0 0.0
    %4727 = vmatprep.subr.mxu0 0.0
    %4728 = vmatpush1.msra.mxu0 0.0
    %4729 = vmatprep.subr.mxu0 0.0
    %4730 = vmatpush1.msra.mxu0 0.0
    %4731 = vmatprep.subr.mxu0 0.0
    %4732 = vmatpush1.msra.mxu0 0.0
    %4733 = vmatprep.subr.mxu0 0.0
    %4734 = vmatpush1.msra.mxu0 0.0
    %4735 = vmatprep.subr.mxu0 0.0
    %4736 = vmatpush1.msra.mxu0 0.0
    %4737 = vmatprep.subr.mxu0 0.0
    %4738 = vmatpush1.msra.mxu0 0.0
    %4739 = vmatprep.subr.mxu0 0.0
    %4740 = vmatpush1.msra.mxu0 0.0
    %4741 = vmatprep.subr.mxu0 0.0
    %4742 = vmatpush1.msra.mxu0 0.0
    %4743 = vmatprep.subr.mxu0 0.0
    %4744 = vmatpush1.msra.mxu0 0.0
    %4745 = vmatprep.subr.mxu0 0.0
    %4746 = vmatpush1.msra.mxu0 0.0
    %4747 = vmatprep.subr.mxu0 0.0
    %4748 = vmatpush1.msra.mxu0 0.0
    %4749 = vmatprep.subr.mxu0 0.0
    %4750 = vmatpush1.msra.mxu0 0.0
    %4751 = vmatprep.subr.mxu0 0.0
    %4752 = vmatpush1.msra.mxu0 0.0
    %4753 = vmatprep.subr.mxu0 0.0
    %4754 = vmatpush1.msra.mxu0 0.0
    %4755 = vmatprep.subr.mxu0 0.0
    %4756 = vmatpush1.msra.mxu0 0.0
    %4757 = vmatprep.subr.mxu0 0.0
    %4758 = vmatpush1.msra.mxu0 0.0
    %4759 = vmatprep.subr.mxu0 0.0
    %4760 = vmatpush1.msra.mxu0 0.0
    %4761 = vmatprep.subr.mxu0 0.0
    %4762 = vmatpush1.msra.mxu0 0.0
    %4763 = vmatprep.subr.mxu0 0.0
    %4764 = vmatpush1.msra.mxu0 0.0
    %4765 = vmatprep.subr.mxu0 0.0
    %4766 = vmatpush1.msra.mxu0 0.0
    %4767 = vmatprep.subr.mxu0 0.0
    %4768 = vmatpush1.msra.mxu0 0.0
    %4769 = vmatprep.subr.mxu0 0.0
    %4770 = vmatpush1.msra.mxu0 0.0
    %4771 = vmatprep.mubr.f32.mxu0 0.0
    %4772 = vmatmul.mubr.f32.gmra.mrb[0].mxu0 %v4333
    %v4773 = vpop.f32.mrb[0].mxu0
    %v4774 = vadd.f32 0.0, %v4773
    %v4775 = vpop.f32.mrb[0].mxu0
    %4776 = vdwg.mxu0
    %v4778 = vsel %vm277, %v4706, 0
    %4780 = vmatprep.subr.mxu0 0.0
    %4781 = vmatpush1.msra.mxu0 %v197
    %4782 = vmatprep.subr.mxu0 0.0
    %4783 = vmatpush1.msra.mxu0 %v198
    %4784 = vmatprep.subr.mxu0 0.0
    %4785 = vmatpush1.msra.mxu0 0.0
    %4786 = vmatprep.subr.mxu0 0.0
    %4787 = vmatpush1.msra.mxu0 0.0
    %4788 = vmatprep.subr.mxu0 0.0
    %4789 = vmatpush1.msra.mxu0 0.0
    %4790 = vmatprep.subr.mxu0 0.0
    %4791 = vmatpush1.msra.mxu0 0.0
    %4792 = vmatprep.subr.mxu0 0.0
    %4793 = vmatpush1.msra.mxu0 0.0
    %4794 = vmatprep.subr.mxu0 0.0
    %4795 = vmatpush1.msra.mxu0 0.0
    %4796 = vmatprep.subr.mxu0 0.0
    %4797 = vmatpush1.msra.mxu0 0.0
    %4798 = vmatprep.subr.mxu0 0.0
    %4799 = vmatpush1.msra.mxu0 0.0
    %4800 = vmatprep.subr.mxu0 0.0
    %4801 = vmatpush1.msra.mxu0 0.0
    %4802 = vmatprep.subr.mxu0 0.0
    %4803 = vmatpush1.msra.mxu0 0.0
    %4804 = vmatprep.subr.mxu0 0.0
    %4805 = vmatpush1.msra.mxu0 0.0
    %4806 = vmatprep.subr.mxu0 0.0
    %4807 = vmatpush1.msra.mxu0 0.0
    %4808 = vmatprep.subr.mxu0 0.0
    %4809 = vmatpush1.msra.mxu0 0.0
    %4810 = vmatprep.subr.mxu0 0.0
    %4811 = vmatpush1.msra.mxu0 0.0
    %4812 = vmatprep.subr.mxu0 0.0
    %4813 = vmatpush1.msra.mxu0 0.0
    %4814 = vmatprep.subr.mxu0 0.0
    %4815 = vmatpush1.msra.mxu0 0.0
    %4816 = vmatprep.subr.mxu0 0.0
    %4817 = vmatpush1.msra.mxu0 0.0
    %4818 = vmatprep.subr.mxu0 0.0
    %4819 = vmatpush1.msra.mxu0 0.0
    %4820 = vmatprep.subr.mxu0 0.0
    %4821 = vmatpush1.msra.mxu0 0.0
    %4822 = vmatprep.subr.mxu0 0.0
    %4823 = vmatpush1.msra.mxu0 0.0
    %4824 = vmatprep.subr.mxu0 0.0
    %4825 = vmatpush1.msra.mxu0 0.0
    %4826 = vmatprep.subr.mxu0 0.0
    %4827 = vmatpush1.msra.mxu0 0.0
    %4828 = vmatprep.subr.mxu0 0.0
    %4829 = vmatpush1.msra.mxu0 0.0
    %4830 = vmatprep.subr.mxu0 0.0
    %4831 = vmatpush1.msra.mxu0 0.0
    %4832 = vmatprep.subr.mxu0 0.0
    %4833 = vmatpush1.msra.mxu0 0.0
    %4834 = vmatprep.subr.mxu0 0.0
    %4835 = vmatpush1.msra.mxu0 0.0
    %4836 = vmatprep.subr.mxu0 0.0
    %4837 = vmatpush1.msra.mxu0 0.0
    %4838 = vmatprep.subr.mxu0 0.0
    %4839 = vmatpush1.msra.mxu0 0.0
    %4840 = vmatprep.subr.mxu0 0.0
    %4841 = vmatpush1.msra.mxu0 0.0
    %4842 = vmatprep.subr.mxu0 0.0
    %4843 = vmatpush1.msra.mxu0 0.0
    %4844 = vmatprep.mubr.f32.mxu0 0.0
    %4845 = vmatmul.mubr.f32.gmra.mrb[0].mxu0 %v4778
    %v4846 = vpop.f32.mrb[0].mxu0
    %v4847 = vadd.f32 %v4774, %v4846
    %v4848 = vpop.f32.mrb[0].mxu0
    %4849 = vdwg.mxu0
    %v4850 = vadd.f32 %v4847, %v136
    %v4851 = vxor.u32 %v4850, 2147483648
    %v4852 = vmul.f32 %v4851, 1.442695
    %v4853 = vpow.pop %v4852
    %v4854 = vadd.f32 %v4853, 1.0
    %v4855 = vrcp.pop %v4854
    %v4856 = vmul.f32 1.0, %v4855
    %4857 = vmatprep.subr.mxu0 0.0
    %4858 = vmatpush1.msra.mxu0 %v362
    %4859 = vmatprep.subr.mxu0 0.0
    %4860 = vmatpush1.msra.mxu0 %v363
    %4861 = vmatprep.subr.mxu0 0.0
    %4862 = vmatpush1.msra.mxu0 %v364
    %4863 = vmatprep.subr.mxu0 0.0
    %4864 = vmatpush1.msra.mxu0 %v365
    %4865 = vmatprep.subr.mxu0 0.0
    %4866 = vmatpush1.msra.mxu0 0.0
    %4867 = vmatprep.subr.mxu0 0.0
    %4868 = vmatpush1.msra.mxu0 0.0
    %4869 = vmatprep.subr.mxu0 0.0
    %4870 = vmatpush1.msra.mxu0 0.0
    %4871 = vmatprep.subr.mxu0 0.0
    %4872 = vmatpush1.msra.mxu0 0.0
    %4873 = vmatprep.subr.mxu0 0.0
    %4874 = vmatpush1.msra.mxu0 0.0
    %4875 = vmatprep.subr.mxu0 0.0
    %4876 = vmatpush1.msra.mxu0 0.0
    %4877 = vmatprep.subr.mxu0 0.0
    %4878 = vmatpush1.msra.mxu0 0.0
    %4879 = vmatprep.subr.mxu0 0.0
    %4880 = vmatpush1.msra.mxu0 0.0
    %4881 = vmatprep.subr.mxu0 0.0
    %4882 = vmatpush1.msra.mxu0 0.0
    %4883 = vmatprep.subr.mxu0 0.0
    %4884 = vmatpush1.msra.mxu0 0.0
    %4885 = vmatprep.subr.mxu0 0.0
    %4886 = vmatpush1.msra.mxu0 0.0
    %4887 = vmatprep.subr.mxu0 0.0
    %4888 = vmatpush1.msra.mxu0 0.0
    %4889 = vmatprep.subr.mxu0 0.0
    %4890 = vmatpush1.msra.mxu0 0.0
    %4891 = vmatprep.subr.mxu0 0.0
    %4892 = vmatpush1.msra.mxu0 0.0
    %4893 = vmatprep.subr.mxu0 0.0
    %4894 = vmatpush1.msra.mxu0 0.0
    %4895 = vmatprep.subr.mxu0 0.0
    %4896 = vmatpush1.msra.mxu0 0.0
    %4897 = vmatprep.subr.mxu0 0.0
    %4898 = vmatpush1.msra.mxu0 0.0
    %4899 = vmatprep.subr.mxu0 0.0
    %4900 = vmatpush1.msra.mxu0 0.0
    %4901 = vmatprep.subr.mxu0 0.0
    %4902 = vmatpush1.msra.mxu0 0.0
    %4903 = vmatprep.subr.mxu0 0.0
    %4904 = vmatpush1.msra.mxu0 0.0
    %4905 = vmatprep.subr.mxu0 0.0
    %4906 = vmatpush1.msra.mxu0 0.0
    %4907 = vmatprep.subr.mxu0 0.0
    %4908 = vmatpush1.msra.mxu0 0.0
    %4909 = vmatprep.subr.mxu0 0.0
    %4910 = vmatpush1.msra.mxu0 0.0
    %4911 = vmatprep.subr.mxu0 0.0
    %4912 = vmatpush1.msra.mxu0 0.0
    %4913 = vmatprep.subr.mxu0 0.0
    %4914 = vmatpush1.msra.mxu0 0.0
    %4915 = vmatprep.subr.mxu0 0.0
    %4916 = vmatpush1.msra.mxu0 0.0
    %4917 = vmatprep.subr.mxu0 0.0
    %4918 = vmatpush1.msra.mxu0 0.0
    %4919 = vmatprep.subr.mxu0 0.0
    %4920 = vmatpush1.msra.mxu0 0.0
    %4921 = vmatprep.mubr.f32.mxu0 0.0
    %4922 = vmatmul.mubr.f32.gmra.mrb[0].mxu0 %v4333
    %v4923 = vpop.f32.mrb[0].mxu0
    %v4924 = vadd.f32 0.0, %v4923
    %v4925 = vpop.f32.mrb[0].mxu0
    %4926 = vdwg.mxu0
    %4927 = vmatprep.subr.mxu0 0.0
    %4928 = vmatpush1.msra.mxu0 %v359
    %4929 = vmatprep.subr.mxu0 0.0
    %4930 = vmatpush1.msra.mxu0 %v360
    %4931 = vmatprep.subr.mxu0 0.0
    %4932 = vmatpush1.msra.mxu0 0.0
    %4933 = vmatprep.subr.mxu0 0.0
    %4934 = vmatpush1.msra.mxu0 0.0
    %4935 = vmatprep.subr.mxu0 0.0
    %4936 = vmatpush1.msra.mxu0 0.0
    %4937 = vmatprep.subr.mxu0 0.0
    %4938 = vmatpush1.msra.mxu0 0.0
    %4939 = vmatprep.subr.mxu0 0.0
    %4940 = vmatpush1.msra.mxu0 0.0
    %4941 = vmatprep.subr.mxu0 0.0
    %4942 = vmatpush1.msra.mxu0 0.0
    %4943 = vmatprep.subr.mxu0 0.0
    %4944 = vmatpush1.msra.mxu0 0.0
    %4945 = vmatprep.subr.mxu0 0.0
    %4946 = vmatpush1.msra.mxu0 0.0
    %4947 = vmatprep.subr.mxu0 0.0
    %4948 = vmatpush1.msra.mxu0 0.0
    %4949 = vmatprep.subr.mxu0 0.0
    %4950 = vmatpush1.msra.mxu0 0.0
    %4951 = vmatprep.subr.mxu0 0.0
    %4952 = vmatpush1.msra.mxu0 0.0
    %4953 = vmatprep.subr.mxu0 0.0
    %4954 = vmatpush1.msra.mxu0 0.0
    %4955 = vmatprep.subr.mxu0 0.0
    %4956 = vmatpush1.msra.mxu0 0.0
    %4957 = vmatprep.subr.mxu0 0.0
    %4958 = vmatpush1.msra.mxu0 0.0
    %4959 = vmatprep.subr.mxu0 0.0
    %4960 = vmatpush1.msra.mxu0 0.0
    %4961 = vmatprep.subr.mxu0 0.0
    %4962 = vmatpush1.msra.mxu0 0.0
    %4963 = vmatprep.subr.mxu0 0.0
    %4964 = vmatpush1.msra.mxu0 0.0
    %4965 = vmatprep.subr.mxu0 0.0
    %4966 = vmatpush1.msra.mxu0 0.0
    %4967 = vmatprep.subr.mxu0 0.0
    %4968 = vmatpush1.msra.mxu0 0.0
    %4969 = vmatprep.subr.mxu0 0.0
    %4970 = vmatpush1.msra.mxu0 0.0
    %4971 = vmatprep.subr.mxu0 0.0
    %4972 = vmatpush1.msra.mxu0 0.0
    %4973 = vmatprep.subr.mxu0 0.0
    %4974 = vmatpush1.msra.mxu0 0.0
    %4975 = vmatprep.subr.mxu0 0.0
    %4976 = vmatpush1.msra.mxu0 0.0
    %4977 = vmatprep.subr.mxu0 0.0
    %4978 = vmatpush1.msra.mxu0 0.0
    %4979 = vmatprep.subr.mxu0 0.0
    %4980 = vmatpush1.msra.mxu0 0.0
    %4981 = vmatprep.subr.mxu0 0.0
    %4982 = vmatpush1.msra.mxu0 0.0
    %4983 = vmatprep.subr.mxu0 0.0
    %4984 = vmatpush1.msra.mxu0 0.0
    %4985 = vmatprep.subr.mxu0 0.0
    %4986 = vmatpush1.msra.mxu0 0.0
    %4987 = vmatprep.subr.mxu0 0.0
    %4988 = vmatpush1.msra.mxu0 0.0
    %4989 = vmatprep.subr.mxu0 0.0
    %4990 = vmatpush1.msra.mxu0 0.0
    %4991 = vmatprep.mubr.f32.mxu0 0.0
    %4992 = vmatmul.mubr.f32.gmra.mrb[0].mxu0 %v4778
    %v4993 = vpop.f32.mrb[0].mxu0
    %v4994 = vadd.f32 %v4924, %v4993
    %v4995 = vpop.f32.mrb[0].mxu0
    %4996 = vdwg.mxu0
    %v4997 = vadd.f32 %v4994, %v144
    %v4998 = vxor.u32 %v4997, 2147483648
    %v4999 = vmul.f32 %v4998, 1.442695
    %v5000 = vpow.pop %v4999
    %v5001 = vadd.f32 %v5000, 1.0
    %v5002 = vrcp.pop %v5001
    %v5003 = vmul.f32 1.0, %v5002
    %5004 = vmatprep.subr.mxu0 0.0
    %5005 = vmatpush1.msra.mxu0 %v514
    %5006 = vmatprep.subr.mxu0 0.0
    %5007 = vmatpush1.msra.mxu0 %v515
    %5008 = vmatprep.subr.mxu0 0.0
    %5009 = vmatpush1.msra.mxu0 0.0
    %5010 = vmatprep.subr.mxu0 0.0
    %5011 = vmatpush1.msra.mxu0 0.0
    %5012 = vmatprep.subr.mxu0 0.0
    %5013 = vmatpush1.msra.mxu0 0.0
    %5014 = vmatprep.subr.mxu0 0.0
    %5015 = vmatpush1.msra.mxu0 0.0
    %5016 = vmatprep.subr.mxu0 0.0
    %5017 = vmatpush1.msra.mxu0 0.0
    %5018 = vmatprep.subr.mxu0 0.0
    %5019 = vmatpush1.msra.mxu0 0.0
    %5020 = vmatprep.subr.mxu0 0.0
    %5021 = vmatpush1.msra.mxu0 0.0
    %5022 = vmatprep.subr.mxu0 0.0
    %5023 = vmatpush1.msra.mxu0 0.0
    %5024 = vmatprep.subr.mxu0 0.0
    %5025 = vmatpush1.msra.mxu0 0.0
    %5026 = vmatprep.subr.mxu0 0.0
    %5027 = vmatpush1.msra.mxu0 0.0
    %5028 = vmatprep.subr.mxu0 0.0
    %5029 = vmatpush1.msra.mxu0 0.0
    %5030 = vmatprep.subr.mxu0 0.0
    %5031 = vmatpush1.msra.mxu0 0.0
    %5032 = vmatprep.subr.mxu0 0.0
    %5033 = vmatpush1.msra.mxu0 0.0
    %5034 = vmatprep.subr.mxu0 0.0
    %5035 = vmatpush1.msra.mxu0 0.0
    %5036 = vmatprep.subr.mxu0 0.0
    %5037 = vmatpush1.msra.mxu0 0.0
    %5038 = vmatprep.subr.mxu0 0.0
    %5039 = vmatpush1.msra.mxu0 0.0
    %5040 = vmatprep.subr.mxu0 0.0
    %5041 = vmatpush1.msra.mxu0 0.0
    %5042 = vmatprep.subr.mxu0 0.0
    %5043 = vmatpush1.msra.mxu0 0.0
    %5044 = vmatprep.subr.mxu0 0.0
    %5045 = vmatpush1.msra.mxu0 0.0
    %5046 = vmatprep.subr.mxu0 0.0
    %5047 = vmatpush1.msra.mxu0 0.0
    %5048 = vmatprep.subr.mxu0 0.0
    %5049 = vmatpush1.msra.mxu0 0.0
    %5050 = vmatprep.subr.mxu0 0.0
    %5051 = vmatpush1.msra.mxu0 0.0
    %5052 = vmatprep.subr.mxu0 0.0
    %5053 = vmatpush1.msra.mxu0 0.0
    %5054 = vmatprep.subr.mxu0 0.0
    %5055 = vmatpush1.msra.mxu0 0.0
    %5056 = vmatprep.subr.mxu0 0.0
    %5057 = vmatpush1.msra.mxu0 0.0
    %5058 = vmatprep.subr.mxu0 0.0
    %5059 = vmatpush1.msra.mxu0 0.0
    %5060 = vmatprep.subr.mxu0 0.0
    %5061 = vmatpush1.msra.mxu0 0.0
    %5062 = vmatprep.subr.mxu0 0.0
    %5063 = vmatpush1.msra.mxu0 0.0
    %5064 = vmatprep.subr.mxu0 0.0
    %5065 = vmatpush1.msra.mxu0 0.0
    %5066 = vmatprep.subr.mxu0 0.0
    %5067 = vmatpush1.msra.mxu0 0.0
    %5068 = vmatprep.mubr.f32.mxu0 0.0
    %5069 = vmatmul.mubr.f32.gmra.mrb[0].mxu0 %v4778
    %v5070 = vpop.f32.mrb[0].mxu0
    %v5071 = vadd.f32 %v152, %v5070
    %v5072 = vpop.f32.mrb[0].mxu0
    %5073 = vdwg.mxu0
    %5074 = vmatprep.subr.mxu0 0.0
    %5075 = vmatpush1.msra.mxu0 %v587
    %5076 = vmatprep.subr.mxu0 0.0
    %5077 = vmatpush1.msra.mxu0 %v588
    %5078 = vmatprep.subr.mxu0 0.0
    %5079 = vmatpush1.msra.mxu0 %v589
    %5080 = vmatprep.subr.mxu0 0.0
    %5081 = vmatpush1.msra.mxu0 %v590
    %5082 = vmatprep.subr.mxu0 0.0
    %5083 = vmatpush1.msra.mxu0 0.0
    %5084 = vmatprep.subr.mxu0 0.0
    %5085 = vmatpush1.msra.mxu0 0.0
    %5086 = vmatprep.subr.mxu0 0.0
    %5087 = vmatpush1.msra.mxu0 0.0
    %5088 = vmatprep.subr.mxu0 0.0
    %5089 = vmatpush1.msra.mxu0 0.0
    %5090 = vmatprep.subr.mxu0 0.0
    %5091 = vmatpush1.msra.mxu0 0.0
    %5092 = vmatprep.subr.mxu0 0.0
    %5093 = vmatpush1.msra.mxu0 0.0
    %5094 = vmatprep.subr.mxu0 0.0
    %5095 = vmatpush1.msra.mxu0 0.0
    %5096 = vmatprep.subr.mxu0 0.0
    %5097 = vmatpush1.msra.mxu0 0.0
    %5098 = vmatprep.subr.mxu0 0.0
    %5099 = vmatpush1.msra.mxu0 0.0
    %5100 = vmatprep.subr.mxu0 0.0
    %5101 = vmatpush1.msra.mxu0 0.0
    %5102 = vmatprep.subr.mxu0 0.0
    %5103 = vmatpush1.msra.mxu0 0.0
    %5104 = vmatprep.subr.mxu0 0.0
    %5105 = vmatpush1.msra.mxu0 0.0
    %5106 = vmatprep.subr.mxu0 0.0
    %5107 = vmatpush1.msra.mxu0 0.0
    %5108 = vmatprep.subr.mxu0 0.0
    %5109 = vmatpush1.msra.mxu0 0.0
    %5110 = vmatprep.subr.mxu0 0.0
    %5111 = vmatpush1.msra.mxu0 0.0
    %5112 = vmatprep.subr.mxu0 0.0
    %5113 = vmatpush1.msra.mxu0 0.0
    %5114 = vmatprep.subr.mxu0 0.0
    %5115 = vmatpush1.msra.mxu0 0.0
    %5116 = vmatprep.subr.mxu0 0.0
    %5117 = vmatpush1.msra.mxu0 0.0
    %5118 = vmatprep.subr.mxu0 0.0
    %5119 = vmatpush1.msra.mxu0 0.0
    %5120 = vmatprep.subr.mxu0 0.0
    %5121 = vmatpush1.msra.mxu0 0.0
    %5122 = vmatprep.subr.mxu0 0.0
    %5123 = vmatpush1.msra.mxu0 0.0
    %5124 = vmatprep.subr.mxu0 0.0
    %5125 = vmatpush1.msra.mxu0 0.0
    %5126 = vmatprep.subr.mxu0 0.0
    %5127 = vmatpush1.msra.mxu0 0.0
    %5128 = vmatprep.subr.mxu0 0.0
    %5129 = vmatpush1.msra.mxu0 0.0
    %5130 = vmatprep.subr.mxu0 0.0
    %5131 = vmatpush1.msra.mxu0 0.0
    %5132 = vmatprep.subr.mxu0 0.0
    %5133 = vmatpush1.msra.mxu0 0.0
    %5134 = vmatprep.subr.mxu0 0.0
    %5135 = vmatpush1.msra.mxu0 0.0
    %5136 = vmatprep.subr.mxu0 0.0
    %5137 = vmatpush1.msra.mxu0 0.0
    %5138 = vmatprep.mubr.f32.mxu0 0.0
    %5139 = vmatmul.mubr.f32.gmra.mrb[0].mxu0 %v4333
    %v5140 = vpop.f32.mrb[0].mxu0
    %v5141 = vadd.f32 %v160, %v5140
    %v5142 = vpop.f32.mrb[0].mxu0
    %5143 = vdwg.mxu0
    %v5144 = vmul.f32 %v4856, %v5141
    %v5145 = vadd.f32 %v5071, %v5144
    %v5146 = vtanh.pop %v5145
    %v5147 = vsub.f32 %v4258, %v5146
    %v5148 = vmul.f32 %v5003, %v5147
    %v5149 = vadd.f32 %v5146, %v5148
    %v5151 = vsel %vm203, %v4704, 0
    %5153 = vmatprep.subr.mxu0 0.0
    %5154 = vmatpush1.msra.mxu0 %v671
    %5155 = vmatprep.subr.mxu0 0.0
    %5156 = vmatpush1.msra.mxu0 %v672
    %5157 = vmatprep.subr.mxu0 0.0
    %5158 = vmatpush1.msra.mxu0 %v673
    %5159 = vmatprep.subr.mxu0 0.0
    %5160 = vmatpush1.msra.mxu0 %v674
    %5161 = vmatprep.subr.mxu0 0.0
    %5162 = vmatpush1.msra.mxu0 0.0
    %5163 = vmatprep.subr.mxu0 0.0
    %5164 = vmatpush1.msra.mxu0 0.0
    %5165 = vmatprep.subr.mxu0 0.0
    %5166 = vmatpush1.msra.mxu0 0.0
    %5167 = vmatprep.subr.mxu0 0.0
    %5168 = vmatpush1.msra.mxu0 0.0
    %5169 = vmatprep.subr.mxu0 0.0
    %5170 = vmatpush1.msra.mxu0 0.0
    %5171 = vmatprep.subr.mxu0 0.0
    %5172 = vmatpush1.msra.mxu0 0.0
    %5173 = vmatprep.subr.mxu0 0.0
    %5174 = vmatpush1.msra.mxu0 0.0
    %5175 = vmatprep.subr.mxu0 0.0
    %5176 = vmatpush1.msra.mxu0 0.0
    %5177 = vmatprep.subr.mxu0 0.0
    %5178 = vmatpush1.msra.mxu0 0.0
    %5179 = vmatprep.subr.mxu0 0.0
    %5180 = vmatpush1.msra.mxu0 0.0
    %5181 = vmatprep.subr.mxu0 0.0
    %5182 = vmatpush1.msra.mxu0 0.0
    %5183 = vmatprep.subr.mxu0 0.0
    %5184 = vmatpush1.msra.mxu0 0.0
    %5185 = vmatprep.subr.mxu0 0.0
    %5186 = vmatpush1.msra.mxu0 0.0
    %5187 = vmatprep.subr.mxu0 0.0
    %5188 = vmatpush1.msra.mxu0 0.0
    %5189 = vmatprep.subr.mxu0 0.0
    %5190 = vmatpush1.msra.mxu0 0.0
    %5191 = vmatprep.subr.mxu0 0.0
    %5192 = vmatpush1.msra.mxu0 0.0
    %5193 = vmatprep.subr.mxu0 0.0
    %5194 = vmatpush1.msra.mxu0 0.0
    %5195 = vmatprep.subr.mxu0 0.0
    %5196 = vmatpush1.msra.mxu0 0.0
    %5197 = vmatprep.subr.mxu0 0.0
    %5198 = vmatpush1.msra.mxu0 0.0
    %5199 = vmatprep.subr.mxu0 0.0
    %5200 = vmatpush1.msra.mxu0 0.0
    %5201 = vmatprep.subr.mxu0 0.0
    %5202 = vmatpush1.msra.mxu0 0.0
    %5203 = vmatprep.subr.mxu0 0.0
    %5204 = vmatpush1.msra.mxu0 0.0
    %5205 = vmatprep.subr.mxu0 0.0
    %5206 = vmatpush1.msra.mxu0 0.0
    %5207 = vmatprep.subr.mxu0 0.0
    %5208 = vmatpush1.msra.mxu0 0.0
    %5209 = vmatprep.subr.mxu0 0.0
    %5210 = vmatpush1.msra.mxu0 0.0
    %5211 = vmatprep.subr.mxu0 0.0
    %5212 = vmatpush1.msra.mxu0 0.0
    %5213 = vmatprep.subr.mxu0 0.0
    %5214 = vmatpush1.msra.mxu0 0.0
    %5215 = vmatprep.subr.mxu0 0.0
    %5216 = vmatpush1.msra.mxu0 0.0
    %5217 = vmatprep.mubr.f32.mxu0 0.0
    %5218 = vmatmul.mubr.f32.gmra.mrb[0].mxu0 %v5151
    %v5219 = vpop.f32.mrb[0].mxu0
    %v5220 = vadd.f32 0.0, %v5219
    %v5221 = vpop.f32.mrb[0].mxu0
    %5222 = vdwg.mxu0
    %v5224 = vsel %vm203, %v5149, 0
    %5226 = vmatprep.subr.mxu0 0.0
    %5227 = vmatpush1.msra.mxu0 %v667
    %5228 = vmatprep.subr.mxu0 0.0
    %5229 = vmatpush1.msra.mxu0 %v668
    %5230 = vmatprep.subr.mxu0 0.0
    %5231 = vmatpush1.msra.mxu0 %v669
    %5232 = vmatprep.subr.mxu0 0.0
    %5233 = vmatpush1.msra.mxu0 %v670
    %5234 = vmatprep.subr.mxu0 0.0
    %5235 = vmatpush1.msra.mxu0 0.0
    %5236 = vmatprep.subr.mxu0 0.0
    %5237 = vmatpush1.msra.mxu0 0.0
    %5238 = vmatprep.subr.mxu0 0.0
    %5239 = vmatpush1.msra.mxu0 0.0
    %5240 = vmatprep.subr.mxu0 0.0
    %5241 = vmatpush1.msra.mxu0 0.0
    %5242 = vmatprep.subr.mxu0 0.0
    %5243 = vmatpush1.msra.mxu0 0.0
    %5244 = vmatprep.subr.mxu0 0.0
    %5245 = vmatpush1.msra.mxu0 0.0
    %5246 = vmatprep.subr.mxu0 0.0
    %5247 = vmatpush1.msra.mxu0 0.0
    %5248 = vmatprep.subr.mxu0 0.0
    %5249 = vmatpush1.msra.mxu0 0.0
    %5250 = vmatprep.subr.mxu0 0.0
    %5251 = vmatpush1.msra.mxu0 0.0
    %5252 = vmatprep.subr.mxu0 0.0
    %5253 = vmatpush1.msra.mxu0 0.0
    %5254 = vmatprep.subr.mxu0 0.0
    %5255 = vmatpush1.msra.mxu0 0.0
    %5256 = vmatprep.subr.mxu0 0.0
    %5257 = vmatpush1.msra.mxu0 0.0
    %5258 = vmatprep.subr.mxu0 0.0
    %5259 = vmatpush1.msra.mxu0 0.0
    %5260 = vmatprep.subr.mxu0 0.0
    %5261 = vmatpush1.msra.mxu0 0.0
    %5262 = vmatprep.subr.mxu0 0.0
    %5263 = vmatpush1.msra.mxu0 0.0
    %5264 = vmatprep.subr.mxu0 0.0
    %5265 = vmatpush1.msra.mxu0 0.0
    %5266 = vmatprep.subr.mxu0 0.0
    %5267 = vmatpush1.msra.mxu0 0.0
    %5268 = vmatprep.subr.mxu0 0.0
    %5269 = vmatpush1.msra.mxu0 0.0
    %5270 = vmatprep.subr.mxu0 0.0
    %5271 = vmatpush1.msra.mxu0 0.0
    %5272 = vmatprep.subr.mxu0 0.0
    %5273 = vmatpush1.msra.mxu0 0.0
    %5274 = vmatprep.subr.mxu0 0.0
    %5275 = vmatpush1.msra.mxu0 0.0
    %5276 = vmatprep.subr.mxu0 0.0
    %5277 = vmatpush1.msra.mxu0 0.0
    %5278 = vmatprep.subr.mxu0 0.0
    %5279 = vmatpush1.msra.mxu0 0.0
    %5280 = vmatprep.subr.mxu0 0.0
    %5281 = vmatpush1.msra.mxu0 0.0
    %5282 = vmatprep.subr.mxu0 0.0
    %5283 = vmatpush1.msra.mxu0 0.0
    %5284 = vmatprep.subr.mxu0 0.0
    %5285 = vmatpush1.msra.mxu0 0.0
    %5286 = vmatprep.subr.mxu0 0.0
    %5287 = vmatpush1.msra.mxu0 0.0
    %5288 = vmatprep.subr.mxu0 0.0
    %5289 = vmatpush1.msra.mxu0 0.0
    %5290 = vmatprep.mubr.f32.mxu0 0.0
    %5291 = vmatmul.mubr.f32.gmra.mrb[0].mxu0 %v5224
    %v5292 = vpop.f32.mrb[0].mxu0
    %v5293 = vadd.f32 %v5220, %v5292
    %v5294 = vpop.f32.mrb[0].mxu0
    %5295 = vdwg.mxu0
    %v5296 = vadd.f32 %v5293, %v167
    %v5297 = vxor.u32 %v5296, 2147483648
    %v5298 = vmul.f32 %v5297, 1.442695
    %v5299 = vpow.pop %v5298
    %v5300 = vadd.f32 %v5299, 1.0
    %v5301 = vrcp.pop %v5300
    %v5302 = vmul.f32 1.0, %v5301
    %5303 = vmatprep.subr.mxu0 0.0
    %5304 = vmatpush1.msra.mxu0 %v834
    %5305 = vmatprep.subr.mxu0 0.0
    %5306 = vmatpush1.msra.mxu0 %v835
    %5307 = vmatprep.subr.mxu0 0.0
    %5308 = vmatpush1.msra.mxu0 %v836
    %5309 = vmatprep.subr.mxu0 0.0
    %5310 = vmatpush1.msra.mxu0 %v837
    %5311 = vmatprep.subr.mxu0 0.0
    %5312 = vmatpush1.msra.mxu0 0.0
    %5313 = vmatprep.subr.mxu0 0.0
    %5314 = vmatpush1.msra.mxu0 0.0
    %5315 = vmatprep.subr.mxu0 0.0
    %5316 = vmatpush1.msra.mxu0 0.0
    %5317 = vmatprep.subr.mxu0 0.0
    %5318 = vmatpush1.msra.mxu0 0.0
    %5319 = vmatprep.subr.mxu0 0.0
    %5320 = vmatpush1.msra.mxu0 0.0
    %5321 = vmatprep.subr.mxu0 0.0
    %5322 = vmatpush1.msra.mxu0 0.0
    %5323 = vmatprep.subr.mxu0 0.0
    %5324 = vmatpush1.msra.mxu0 0.0
    %5325 = vmatprep.subr.mxu0 0.0
    %5326 = vmatpush1.msra.mxu0 0.0
    %5327 = vmatprep.subr.mxu0 0.0
    %5328 = vmatpush1.msra.mxu0 0.0
    %5329 = vmatprep.subr.mxu0 0.0
    %5330 = vmatpush1.msra.mxu0 0.0
    %5331 = vmatprep.subr.mxu0 0.0
    %5332 = vmatpush1.msra.mxu0 0.0
    %5333 = vmatprep.subr.mxu0 0.0
    %5334 = vmatpush1.msra.mxu0 0.0
    %5335 = vmatprep.subr.mxu0 0.0
    %5336 = vmatpush1.msra.mxu0 0.0
    %5337 = vmatprep.subr.mxu0 0.0
    %5338 = vmatpush1.msra.mxu0 0.0
    %5339 = vmatprep.subr.mxu0 0.0
    %5340 = vmatpush1.msra.mxu0 0.0
    %5341 = vmatprep.subr.mxu0 0.0
    %5342 = vmatpush1.msra.mxu0 0.0
    %5343 = vmatprep.subr.mxu0 0.0
    %5344 = vmatpush1.msra.mxu0 0.0
    %5345 = vmatprep.subr.mxu0 0.0
    %5346 = vmatpush1.msra.mxu0 0.0
    %5347 = vmatprep.subr.mxu0 0.0
    %5348 = vmatpush1.msra.mxu0 0.0
    %5349 = vmatprep.subr.mxu0 0.0
    %5350 = vmatpush1.msra.mxu0 0.0
    %5351 = vmatprep.subr.mxu0 0.0
    %5352 = vmatpush1.msra.mxu0 0.0
    %5353 = vmatprep.subr.mxu0 0.0
    %5354 = vmatpush1.msra.mxu0 0.0
    %5355 = vmatprep.subr.mxu0 0.0
    %5356 = vmatpush1.msra.mxu0 0.0
    %5357 = vmatprep.subr.mxu0 0.0
    %5358 = vmatpush1.msra.mxu0 0.0
    %5359 = vmatprep.subr.mxu0 0.0
    %5360 = vmatpush1.msra.mxu0 0.0
    %5361 = vmatprep.subr.mxu0 0.0
    %5362 = vmatpush1.msra.mxu0 0.0
    %5363 = vmatprep.subr.mxu0 0.0
    %5364 = vmatpush1.msra.mxu0 0.0
    %5365 = vmatprep.subr.mxu0 0.0
    %5366 = vmatpush1.msra.mxu0 0.0
    %5367 = vmatprep.mubr.f32.mxu0 0.0
    %5368 = vmatmul.mubr.f32.gmra.mrb[0].mxu0 %v5151
    %v5369 = vpop.f32.mrb[0].mxu0
    %v5370 = vadd.f32 0.0, %v5369
    %v5371 = vpop.f32.mrb[0].mxu0
    %5372 = vdwg.mxu0
    %5373 = vmatprep.subr.mxu0 0.0
    %5374 = vmatpush1.msra.mxu0 %v829
    %5375 = vmatprep.subr.mxu0 0.0
    %5376 = vmatpush1.msra.mxu0 %v830
    %5377 = vmatprep.subr.mxu0 0.0
    %5378 = vmatpush1.msra.mxu0 %v831
    %5379 = vmatprep.subr.mxu0 0.0
    %5380 = vmatpush1.msra.mxu0 %v832
    %5381 = vmatprep.subr.mxu0 0.0
    %5382 = vmatpush1.msra.mxu0 0.0
    %5383 = vmatprep.subr.mxu0 0.0
    %5384 = vmatpush1.msra.mxu0 0.0
    %5385 = vmatprep.subr.mxu0 0.0
    %5386 = vmatpush1.msra.mxu0 0.0
    %5387 = vmatprep.subr.mxu0 0.0
    %5388 = vmatpush1.msra.mxu0 0.0
    %5389 = vmatprep.subr.mxu0 0.0
    %5390 = vmatpush1.msra.mxu0 0.0
    %5391 = vmatprep.subr.mxu0 0.0
    %5392 = vmatpush1.msra.mxu0 0.0
    %5393 = vmatprep.subr.mxu0 0.0
    %5394 = vmatpush1.msra.mxu0 0.0
    %5395 = vmatprep.subr.mxu0 0.0
    %5396 = vmatpush1.msra.mxu0 0.0
    %5397 = vmatprep.subr.mxu0 0.0
    %5398 = vmatpush1.msra.mxu0 0.0
    %5399 = vmatprep.subr.mxu0 0.0
    %5400 = vmatpush1.msra.mxu0 0.0
    %5401 = vmatprep.subr.mxu0 0.0
    %5402 = vmatpush1.msra.mxu0 0.0
    %5403 = vmatprep.subr.mxu0 0.0
    %5404 = vmatpush1.msra.mxu0 0.0
    %5405 = vmatprep.subr.mxu0 0.0
    %5406 = vmatpush1.msra.mxu0 0.0
    %5407 = vmatprep.subr.mxu0 0.0
    %5408 = vmatpush1.msra.mxu0 0.0
    %5409 = vmatprep.subr.mxu0 0.0
    %5410 = vmatpush1.msra.mxu0 0.0
    %5411 = vmatprep.subr.mxu0 0.0
    %5412 = vmatpush1.msra.mxu0 0.0
    %5413 = vmatprep.subr.mxu0 0.0
    %5414 = vmatpush1.msra.mxu0 0.0
    %5415 = vmatprep.subr.mxu0 0.0
    %5416 = vmatpush1.msra.mxu0 0.0
    %5417 = vmatprep.subr.mxu0 0.0
    %5418 = vmatpush1.msra.mxu0 0.0
    %5419 = vmatprep.subr.mxu0 0.0
    %5420 = vmatpush1.msra.mxu0 0.0
    %5421 = vmatprep.subr.mxu0 0.0
    %5422 = vmatpush1.msra.mxu0 0.0
    %5423 = vmatprep.subr.mxu0 0.0
    %5424 = vmatpush1.msra.mxu0 0.0
    %5425 = vmatprep.subr.mxu0 0.0
    %5426 = vmatpush1.msra.mxu0 0.0
    %5427 = vmatprep.subr.mxu0 0.0
    %5428 = vmatpush1.msra.mxu0 0.0
    %5429 = vmatprep.subr.mxu0 0.0
    %5430 = vmatpush1.msra.mxu0 0.0
    %5431 = vmatprep.subr.mxu0 0.0
    %5432 = vmatpush1.msra.mxu0 0.0
    %5433 = vmatprep.subr.mxu0 0.0
    %5434 = vmatpush1.msra.mxu0 0.0
    %5435 = vmatprep.subr.mxu0 0.0
    %5436 = vmatpush1.msra.mxu0 0.0
    %5437 = vmatprep.mubr.f32.mxu0 0.0
    %5438 = vmatmul.mubr.f32.gmra.mrb[0].mxu0 %v5224
    %v5439 = vpop.f32.mrb[0].mxu0
    %v5440 = vadd.f32 %v5370, %v5439
    %v5441 = vpop.f32.mrb[0].mxu0
    %5442 = vdwg.mxu0
    %v5443 = vadd.f32 %v5440, %v175
    %v5444 = vxor.u32 %v5443, 2147483648
    %v5445 = vmul.f32 %v5444, 1.442695
    %v5446 = vpow.pop %v5445
    %v5447 = vadd.f32 %v5446, 1.0
    %v5448 = vrcp.pop %v5447
    %v5449 = vmul.f32 1.0, %v5448
    %5450 = vmatprep.subr.mxu0 0.0
    %5451 = vmatpush1.msra.mxu0 %v986
    %5452 = vmatprep.subr.mxu0 0.0
    %5453 = vmatpush1.msra.mxu0 %v987
    %5454 = vmatprep.subr.mxu0 0.0
    %5455 = vmatpush1.msra.mxu0 %v988
    %5456 = vmatprep.subr.mxu0 0.0
    %5457 = vmatpush1.msra.mxu0 %v989
    %5458 = vmatprep.subr.mxu0 0.0
    %5459 = vmatpush1.msra.mxu0 0.0
    %5460 = vmatprep.subr.mxu0 0.0
    %5461 = vmatpush1.msra.mxu0 0.0
    %5462 = vmatprep.subr.mxu0 0.0
    %5463 = vmatpush1.msra.mxu0 0.0
    %5464 = vmatprep.subr.mxu0 0.0
    %5465 = vmatpush1.msra.mxu0 0.0
    %5466 = vmatprep.subr.mxu0 0.0
    %5467 = vmatpush1.msra.mxu0 0.0
    %5468 = vmatprep.subr.mxu0 0.0
    %5469 = vmatpush1.msra.mxu0 0.0
    %5470 = vmatprep.subr.mxu0 0.0
    %5471 = vmatpush1.msra.mxu0 0.0
    %5472 = vmatprep.subr.mxu0 0.0
    %5473 = vmatpush1.msra.mxu0 0.0
    %5474 = vmatprep.subr.mxu0 0.0
    %5475 = vmatpush1.msra.mxu0 0.0
    %5476 = vmatprep.subr.mxu0 0.0
    %5477 = vmatpush1.msra.mxu0 0.0
    %5478 = vmatprep.subr.mxu0 0.0
    %5479 = vmatpush1.msra.mxu0 0.0
    %5480 = vmatprep.subr.mxu0 0.0
    %5481 = vmatpush1.msra.mxu0 0.0
    %5482 = vmatprep.subr.mxu0 0.0
    %5483 = vmatpush1.msra.mxu0 0.0
    %5484 = vmatprep.subr.mxu0 0.0
    %5485 = vmatpush1.msra.mxu0 0.0
    %5486 = vmatprep.subr.mxu0 0.0
    %5487 = vmatpush1.msra.mxu0 0.0
    %5488 = vmatprep.subr.mxu0 0.0
    %5489 = vmatpush1.msra.mxu0 0.0
    %5490 = vmatprep.subr.mxu0 0.0
    %5491 = vmatpush1.msra.mxu0 0.0
    %5492 = vmatprep.subr.mxu0 0.0
    %5493 = vmatpush1.msra.mxu0 0.0
    %5494 = vmatprep.subr.mxu0 0.0
    %5495 = vmatpush1.msra.mxu0 0.0
    %5496 = vmatprep.subr.mxu0 0.0
    %5497 = vmatpush1.msra.mxu0 0.0
    %5498 = vmatprep.subr.mxu0 0.0
    %5499 = vmatpush1.msra.mxu0 0.0
    %5500 = vmatprep.subr.mxu0 0.0
    %5501 = vmatpush1.msra.mxu0 0.0
    %5502 = vmatprep.subr.mxu0 0.0
    %5503 = vmatpush1.msra.mxu0 0.0
    %5504 = vmatprep.subr.mxu0 0.0
    %5505 = vmatpush1.msra.mxu0 0.0
    %5506 = vmatprep.subr.mxu0 0.0
    %5507 = vmatpush1.msra.mxu0 0.0
    %5508 = vmatprep.subr.mxu0 0.0
    %5509 = vmatpush1.msra.mxu0 0.0
    %5510 = vmatprep.subr.mxu0 0.0
    %5511 = vmatpush1.msra.mxu0 0.0
    %5512 = vmatprep.subr.mxu0 0.0
    %5513 = vmatpush1.msra.mxu0 0.0
    %5514 = vmatprep.mubr.f32.mxu0 0.0
    %5515 = vmatmul.mubr.f32.gmra.mrb[0].mxu0 %v5224
    %v5516 = vpop.f32.mrb[0].mxu0
    %v5517 = vadd.f32 %v183, %v5516
    %v5518 = vpop.f32.mrb[0].mxu0
    %5519 = vdwg.mxu0
    %5520 = vmatprep.subr.mxu0 0.0
    %5521 = vmatpush1.msra.mxu0 %v1061
    %5522 = vmatprep.subr.mxu0 0.0
    %5523 = vmatpush1.msra.mxu0 %v1062
    %5524 = vmatprep.subr.mxu0 0.0
    %5525 = vmatpush1.msra.mxu0 %v1063
    %5526 = vmatprep.subr.mxu0 0.0
    %5527 = vmatpush1.msra.mxu0 %v1064
    %5528 = vmatprep.subr.mxu0 0.0
    %5529 = vmatpush1.msra.mxu0 0.0
    %5530 = vmatprep.subr.mxu0 0.0
    %5531 = vmatpush1.msra.mxu0 0.0
    %5532 = vmatprep.subr.mxu0 0.0
    %5533 = vmatpush1.msra.mxu0 0.0
    %5534 = vmatprep.subr.mxu0 0.0
    %5535 = vmatpush1.msra.mxu0 0.0
    %5536 = vmatprep.subr.mxu0 0.0
    %5537 = vmatpush1.msra.mxu0 0.0
    %5538 = vmatprep.subr.mxu0 0.0
    %5539 = vmatpush1.msra.mxu0 0.0
    %5540 = vmatprep.subr.mxu0 0.0
    %5541 = vmatpush1.msra.mxu0 0.0
    %5542 = vmatprep.subr.mxu0 0.0
    %5543 = vmatpush1.msra.mxu0 0.0
    %5544 = vmatprep.subr.mxu0 0.0
    %5545 = vmatpush1.msra.mxu0 0.0
    %5546 = vmatprep.subr.mxu0 0.0
    %5547 = vmatpush1.msra.mxu0 0.0
    %5548 = vmatprep.subr.mxu0 0.0
    %5549 = vmatpush1.msra.mxu0 0.0
    %5550 = vmatprep.subr.mxu0 0.0
    %5551 = vmatpush1.msra.mxu0 0.0
    %5552 = vmatprep.subr.mxu0 0.0
    %5553 = vmatpush1.msra.mxu0 0.0
    %5554 = vmatprep.subr.mxu0 0.0
    %5555 = vmatpush1.msra.mxu0 0.0
    %5556 = vmatprep.subr.mxu0 0.0
    %5557 = vmatpush1.msra.mxu0 0.0
    %5558 = vmatprep.subr.mxu0 0.0
    %5559 = vmatpush1.msra.mxu0 0.0
    %5560 = vmatprep.subr.mxu0 0.0
    %5561 = vmatpush1.msra.mxu0 0.0
    %5562 = vmatprep.subr.mxu0 0.0
    %5563 = vmatpush1.msra.mxu0 0.0
    %5564 = vmatprep.subr.mxu0 0.0
    %5565 = vmatpush1.msra.mxu0 0.0
    %5566 = vmatprep.subr.mxu0 0.0
    %5567 = vmatpush1.msra.mxu0 0.0
    %5568 = vmatprep.subr.mxu0 0.0
    %5569 = vmatpush1.msra.mxu0 0.0
    %5570 = vmatprep.subr.mxu0 0.0
    %5571 = vmatpush1.msra.mxu0 0.0
    %5572 = vmatprep.subr.mxu0 0.0
    %5573 = vmatpush1.msra.mxu0 0.0
    %5574 = vmatprep.subr.mxu0 0.0
    %5575 = vmatpush1.msra.mxu0 0.0
    %5576 = vmatprep.subr.mxu0 0.0
    %5577 = vmatpush1.msra.mxu0 0.0
    %5578 = vmatprep.subr.mxu0 0.0
    %5579 = vmatpush1.msra.mxu0 0.0
    %5580 = vmatprep.subr.mxu0 0.0
    %5581 = vmatpush1.msra.mxu0 0.0
    %5582 = vmatprep.subr.mxu0 0.0
    %5583 = vmatpush1.msra.mxu0 0.0
    %5584 = vmatprep.mubr.f32.mxu0 0.0
    %5585 = vmatmul.mubr.f32.gmra.mrb[0].mxu0 %v5151
    %v5586 = vpop.f32.mrb[0].mxu0
    %v5587 = vadd.f32 %v191, %v5586
    %v5588 = vpop.f32.mrb[0].mxu0
    %5589 = vdwg.mxu0
    %v5590 = vmul.f32 %v5302, %v5587
    %v5591 = vadd.f32 %v5517, %v5590
    %v5592 = vtanh.pop %v5591
    %v5593 = vsub.f32 %v4704, %v5592
    %v5594 = vmul.f32 %v5449, %v5593
    %v5595 = vadd.f32 %v5592, %v5594
    %s5596 = scalar_lea.vmem [#allocation2], 48
    %v5597 = vld [vmem:[%s5596] sm:$0xff]
    %5598 = vmatprep.subr.mxu0 0.0
    %5599 = vmatpush1.msra.mxu0 %v199
    %5600 = vmatprep.subr.mxu0 0.0
    %5601 = vmatpush1.msra.mxu0 %v200
    %5602 = vmatprep.subr.mxu0 0.0
    %5603 = vmatpush1.msra.mxu0 %v201
    %5604 = vmatprep.subr.mxu0 0.0
    %5605 = vmatpush1.msra.mxu0 %v202
    %5606 = vmatprep.subr.mxu0 0.0
    %5607 = vmatpush1.msra.mxu0 0.0
    %5608 = vmatprep.subr.mxu0 0.0
    %5609 = vmatpush1.msra.mxu0 0.0
    %5610 = vmatprep.subr.mxu0 0.0
    %5611 = vmatpush1.msra.mxu0 0.0
    %5612 = vmatprep.subr.mxu0 0.0
    %5613 = vmatpush1.msra.mxu0 0.0
    %5614 = vmatprep.subr.mxu0 0.0
    %5615 = vmatpush1.msra.mxu0 0.0
    %5616 = vmatprep.subr.mxu0 0.0
    %5617 = vmatpush1.msra.mxu0 0.0
    %5618 = vmatprep.subr.mxu0 0.0
    %5619 = vmatpush1.msra.mxu0 0.0
    %5620 = vmatprep.subr.mxu0 0.0
    %5621 = vmatpush1.msra.mxu0 0.0
    %5622 = vmatprep.subr.mxu0 0.0
    %5623 = vmatpush1.msra.mxu0 0.0
    %5624 = vmatprep.subr.mxu0 0.0
    %5625 = vmatpush1.msra.mxu0 0.0
    %5626 = vmatprep.subr.mxu0 0.0
    %5627 = vmatpush1.msra.mxu0 0.0
    %5628 = vmatprep.subr.mxu0 0.0
    %5629 = vmatpush1.msra.mxu0 0.0
    %5630 = vmatprep.subr.mxu0 0.0
    %5631 = vmatpush1.msra.mxu0 0.0
    %5632 = vmatprep.subr.mxu0 0.0
    %5633 = vmatpush1.msra.mxu0 0.0
    %5634 = vmatprep.subr.mxu0 0.0
    %5635 = vmatpush1.msra.mxu0 0.0
    %5636 = vmatprep.subr.mxu0 0.0
    %5637 = vmatpush1.msra.mxu0 0.0
    %5638 = vmatprep.subr.mxu0 0.0
    %5639 = vmatpush1.msra.mxu0 0.0
    %5640 = vmatprep.subr.mxu0 0.0
    %5641 = vmatpush1.msra.mxu0 0.0
    %5642 = vmatprep.subr.mxu0 0.0
    %5643 = vmatpush1.msra.mxu0 0.0
    %5644 = vmatprep.subr.mxu0 0.0
    %5645 = vmatpush1.msra.mxu0 0.0
    %5646 = vmatprep.subr.mxu0 0.0
    %5647 = vmatpush1.msra.mxu0 0.0
    %5648 = vmatprep.subr.mxu0 0.0
    %5649 = vmatpush1.msra.mxu0 0.0
    %5650 = vmatprep.subr.mxu0 0.0
    %5651 = vmatpush1.msra.mxu0 0.0
    %5652 = vmatprep.subr.mxu0 0.0
    %5653 = vmatpush1.msra.mxu0 0.0
    %5654 = vmatprep.subr.mxu0 0.0
    %5655 = vmatpush1.msra.mxu0 0.0
    %5656 = vmatprep.subr.mxu0 0.0
    %5657 = vmatpush1.msra.mxu0 0.0
    %5658 = vmatprep.subr.mxu0 0.0
    %5659 = vmatpush1.msra.mxu0 0.0
    %5660 = vmatprep.subr.mxu0 0.0
    %5661 = vmatpush1.msra.mxu0 0.0
    %5662 = vmatprep.mubr.f32.mxu0 0.0
    %5663 = vmatmul.mubr.f32.gmra.mrb[0].mxu0 %v5224
    %v5664 = vpop.f32.mrb[0].mxu0
    %v5665 = vadd.f32 0.0, %v5664
    %v5666 = vpop.f32.mrb[0].mxu0
    %5667 = vdwg.mxu0
    %v5669 = vsel %vm277, %v5597, 0
    %5671 = vmatprep.subr.mxu0 0.0
    %5672 = vmatpush1.msra.mxu0 %v197
    %5673 = vmatprep.subr.mxu0 0.0
    %5674 = vmatpush1.msra.mxu0 %v198
    %5675 = vmatprep.subr.mxu0 0.0
    %5676 = vmatpush1.msra.mxu0 0.0
    %5677 = vmatprep.subr.mxu0 0.0
    %5678 = vmatpush1.msra.mxu0 0.0
    %5679 = vmatprep.subr.mxu0 0.0
    %5680 = vmatpush1.msra.mxu0 0.0
    %5681 = vmatprep.subr.mxu0 0.0
    %5682 = vmatpush1.msra.mxu0 0.0
    %5683 = vmatprep.subr.mxu0 0.0
    %5684 = vmatpush1.msra.mxu0 0.0
    %5685 = vmatprep.subr.mxu0 0.0
    %5686 = vmatpush1.msra.mxu0 0.0
    %5687 = vmatprep.subr.mxu0 0.0
    %5688 = vmatpush1.msra.mxu0 0.0
    %5689 = vmatprep.subr.mxu0 0.0
    %5690 = vmatpush1.msra.mxu0 0.0
    %5691 = vmatprep.subr.mxu0 0.0
    %5692 = vmatpush1.msra.mxu0 0.0
    %5693 = vmatprep.subr.mxu0 0.0
    %5694 = vmatpush1.msra.mxu0 0.0
    %5695 = vmatprep.subr.mxu0 0.0
    %5696 = vmatpush1.msra.mxu0 0.0
    %5697 = vmatprep.subr.mxu0 0.0
    %5698 = vmatpush1.msra.mxu0 0.0
    %5699 = vmatprep.subr.mxu0 0.0
    %5700 = vmatpush1.msra.mxu0 0.0
    %5701 = vmatprep.subr.mxu0 0.0
    %5702 = vmatpush1.msra.mxu0 0.0
    %5703 = vmatprep.subr.mxu0 0.0
    %5704 = vmatpush1.msra.mxu0 0.0
    %5705 = vmatprep.subr.mxu0 0.0
    %5706 = vmatpush1.msra.mxu0 0.0
    %5707 = vmatprep.subr.mxu0 0.0
    %5708 = vmatpush1.msra.mxu0 0.0
    %5709 = vmatprep.subr.mxu0 0.0
    %5710 = vmatpush1.msra.mxu0 0.0
    %5711 = vmatprep.subr.mxu0 0.0
    %5712 = vmatpush1.msra.mxu0 0.0
    %5713 = vmatprep.subr.mxu0 0.0
    %5714 = vmatpush1.msra.mxu0 0.0
    %5715 = vmatprep.subr.mxu0 0.0
    %5716 = vmatpush1.msra.mxu0 0.0
    %5717 = vmatprep.subr.mxu0 0.0
    %5718 = vmatpush1.msra.mxu0 0.0
    %5719 = vmatprep.subr.mxu0 0.0
    %5720 = vmatpush1.msra.mxu0 0.0
    %5721 = vmatprep.subr.mxu0 0.0
    %5722 = vmatpush1.msra.mxu0 0.0
    %5723 = vmatprep.subr.mxu0 0.0
    %5724 = vmatpush1.msra.mxu0 0.0
    %5725 = vmatprep.subr.mxu0 0.0
    %5726 = vmatpush1.msra.mxu0 0.0
    %5727 = vmatprep.subr.mxu0 0.0
    %5728 = vmatpush1.msra.mxu0 0.0
    %5729 = vmatprep.subr.mxu0 0.0
    %5730 = vmatpush1.msra.mxu0 0.0
    %5731 = vmatprep.subr.mxu0 0.0
    %5732 = vmatpush1.msra.mxu0 0.0
    %5733 = vmatprep.subr.mxu0 0.0
    %5734 = vmatpush1.msra.mxu0 0.0
    %5735 = vmatprep.mubr.f32.mxu0 0.0
    %5736 = vmatmul.mubr.f32.gmra.mrb[0].mxu0 %v5669
    %v5737 = vpop.f32.mrb[0].mxu0
    %v5738 = vadd.f32 %v5665, %v5737
    %v5739 = vpop.f32.mrb[0].mxu0
    %5740 = vdwg.mxu0
    %v5741 = vadd.f32 %v5738, %v136
    %v5742 = vxor.u32 %v5741, 2147483648
    %v5743 = vmul.f32 %v5742, 1.442695
    %v5744 = vpow.pop %v5743
    %v5745 = vadd.f32 %v5744, 1.0
    %v5746 = vrcp.pop %v5745
    %v5747 = vmul.f32 1.0, %v5746
    %5748 = vmatprep.subr.mxu0 0.0
    %5749 = vmatpush1.msra.mxu0 %v362
    %5750 = vmatprep.subr.mxu0 0.0
    %5751 = vmatpush1.msra.mxu0 %v363
    %5752 = vmatprep.subr.mxu0 0.0
    %5753 = vmatpush1.msra.mxu0 %v364
    %5754 = vmatprep.subr.mxu0 0.0
    %5755 = vmatpush1.msra.mxu0 %v365
    %5756 = vmatprep.subr.mxu0 0.0
    %5757 = vmatpush1.msra.mxu0 0.0
    %5758 = vmatprep.subr.mxu0 0.0
    %5759 = vmatpush1.msra.mxu0 0.0
    %5760 = vmatprep.subr.mxu0 0.0
    %5761 = vmatpush1.msra.mxu0 0.0
    %5762 = vmatprep.subr.mxu0 0.0
    %5763 = vmatpush1.msra.mxu0 0.0
    %5764 = vmatprep.subr.mxu0 0.0
    %5765 = vmatpush1.msra.mxu0 0.0
    %5766 = vmatprep.subr.mxu0 0.0
    %5767 = vmatpush1.msra.mxu0 0.0
    %5768 = vmatprep.subr.mxu0 0.0
    %5769 = vmatpush1.msra.mxu0 0.0
    %5770 = vmatprep.subr.mxu0 0.0
    %5771 = vmatpush1.msra.mxu0 0.0
    %5772 = vmatprep.subr.mxu0 0.0
    %5773 = vmatpush1.msra.mxu0 0.0
    %5774 = vmatprep.subr.mxu0 0.0
    %5775 = vmatpush1.msra.mxu0 0.0
    %5776 = vmatprep.subr.mxu0 0.0
    %5777 = vmatpush1.msra.mxu0 0.0
    %5778 = vmatprep.subr.mxu0 0.0
    %5779 = vmatpush1.msra.mxu0 0.0
    %5780 = vmatprep.subr.mxu0 0.0
    %5781 = vmatpush1.msra.mxu0 0.0
    %5782 = vmatprep.subr.mxu0 0.0
    %5783 = vmatpush1.msra.mxu0 0.0
    %5784 = vmatprep.subr.mxu0 0.0
    %5785 = vmatpush1.msra.mxu0 0.0
    %5786 = vmatprep.subr.mxu0 0.0
    %5787 = vmatpush1.msra.mxu0 0.0
    %5788 = vmatprep.subr.mxu0 0.0
    %5789 = vmatpush1.msra.mxu0 0.0
    %5790 = vmatprep.subr.mxu0 0.0
    %5791 = vmatpush1.msra.mxu0 0.0
    %5792 = vmatprep.subr.mxu0 0.0
    %5793 = vmatpush1.msra.mxu0 0.0
    %5794 = vmatprep.subr.mxu0 0.0
    %5795 = vmatpush1.msra.mxu0 0.0
    %5796 = vmatprep.subr.mxu0 0.0
    %5797 = vmatpush1.msra.mxu0 0.0
    %5798 = vmatprep.subr.mxu0 0.0
    %5799 = vmatpush1.msra.mxu0 0.0
    %5800 = vmatprep.subr.mxu0 0.0
    %5801 = vmatpush1.msra.mxu0 0.0
    %5802 = vmatprep.subr.mxu0 0.0
    %5803 = vmatpush1.msra.mxu0 0.0
    %5804 = vmatprep.subr.mxu0 0.0
    %5805 = vmatpush1.msra.mxu0 0.0
    %5806 = vmatprep.subr.mxu0 0.0
    %5807 = vmatpush1.msra.mxu0 0.0
    %5808 = vmatprep.subr.mxu0 0.0
    %5809 = vmatpush1.msra.mxu0 0.0
    %5810 = vmatprep.subr.mxu0 0.0
    %5811 = vmatpush1.msra.mxu0 0.0
    %5812 = vmatprep.mubr.f32.mxu0 0.0
    %5813 = vmatmul.mubr.f32.gmra.mrb[0].mxu0 %v5224
    %v5814 = vpop.f32.mrb[0].mxu0
    %v5815 = vadd.f32 0.0, %v5814
    %v5816 = vpop.f32.mrb[0].mxu0
    %5817 = vdwg.mxu0
    %5818 = vmatprep.subr.mxu0 0.0
    %5819 = vmatpush1.msra.mxu0 %v359
    %5820 = vmatprep.subr.mxu0 0.0
    %5821 = vmatpush1.msra.mxu0 %v360
    %5822 = vmatprep.subr.mxu0 0.0
    %5823 = vmatpush1.msra.mxu0 0.0
    %5824 = vmatprep.subr.mxu0 0.0
    %5825 = vmatpush1.msra.mxu0 0.0
    %5826 = vmatprep.subr.mxu0 0.0
    %5827 = vmatpush1.msra.mxu0 0.0
    %5828 = vmatprep.subr.mxu0 0.0
    %5829 = vmatpush1.msra.mxu0 0.0
    %5830 = vmatprep.subr.mxu0 0.0
    %5831 = vmatpush1.msra.mxu0 0.0
    %5832 = vmatprep.subr.mxu0 0.0
    %5833 = vmatpush1.msra.mxu0 0.0
    %5834 = vmatprep.subr.mxu0 0.0
    %5835 = vmatpush1.msra.mxu0 0.0
    %5836 = vmatprep.subr.mxu0 0.0
    %5837 = vmatpush1.msra.mxu0 0.0
    %5838 = vmatprep.subr.mxu0 0.0
    %5839 = vmatpush1.msra.mxu0 0.0
    %5840 = vmatprep.subr.mxu0 0.0
    %5841 = vmatpush1.msra.mxu0 0.0
    %5842 = vmatprep.subr.mxu0 0.0
    %5843 = vmatpush1.msra.mxu0 0.0
    %5844 = vmatprep.subr.mxu0 0.0
    %5845 = vmatpush1.msra.mxu0 0.0
    %5846 = vmatprep.subr.mxu0 0.0
    %5847 = vmatpush1.msra.mxu0 0.0
    %5848 = vmatprep.subr.mxu0 0.0
    %5849 = vmatpush1.msra.mxu0 0.0
    %5850 = vmatprep.subr.mxu0 0.0
    %5851 = vmatpush1.msra.mxu0 0.0
    %5852 = vmatprep.subr.mxu0 0.0
    %5853 = vmatpush1.msra.mxu0 0.0
    %5854 = vmatprep.subr.mxu0 0.0
    %5855 = vmatpush1.msra.mxu0 0.0
    %5856 = vmatprep.subr.mxu0 0.0
    %5857 = vmatpush1.msra.mxu0 0.0
    %5858 = vmatprep.subr.mxu0 0.0
    %5859 = vmatpush1.msra.mxu0 0.0
    %5860 = vmatprep.subr.mxu0 0.0
    %5861 = vmatpush1.msra.mxu0 0.0
    %5862 = vmatprep.subr.mxu0 0.0
    %5863 = vmatpush1.msra.mxu0 0.0
    %5864 = vmatprep.subr.mxu0 0.0
    %5865 = vmatpush1.msra.mxu0 0.0
    %5866 = vmatprep.subr.mxu0 0.0
    %5867 = vmatpush1.msra.mxu0 0.0
    %5868 = vmatprep.subr.mxu0 0.0
    %5869 = vmatpush1.msra.mxu0 0.0
    %5870 = vmatprep.subr.mxu0 0.0
    %5871 = vmatpush1.msra.mxu0 0.0
    %5872 = vmatprep.subr.mxu0 0.0
    %5873 = vmatpush1.msra.mxu0 0.0
    %5874 = vmatprep.subr.mxu0 0.0
    %5875 = vmatpush1.msra.mxu0 0.0
    %5876 = vmatprep.subr.mxu0 0.0
    %5877 = vmatpush1.msra.mxu0 0.0
    %5878 = vmatprep.subr.mxu0 0.0
    %5879 = vmatpush1.msra.mxu0 0.0
    %5880 = vmatprep.subr.mxu0 0.0
    %5881 = vmatpush1.msra.mxu0 0.0
    %5882 = vmatprep.mubr.f32.mxu0 0.0
    %5883 = vmatmul.mubr.f32.gmra.mrb[0].mxu0 %v5669
    %v5884 = vpop.f32.mrb[0].mxu0
    %v5885 = vadd.f32 %v5815, %v5884
    %v5886 = vpop.f32.mrb[0].mxu0
    %5887 = vdwg.mxu0
    %v5888 = vadd.f32 %v5885, %v144
    %v5889 = vxor.u32 %v5888, 2147483648
    %v5890 = vmul.f32 %v5889, 1.442695
    %v5891 = vpow.pop %v5890
    %v5892 = vadd.f32 %v5891, 1.0
    %v5893 = vrcp.pop %v5892
    %v5894 = vmul.f32 1.0, %v5893
    %5895 = vmatprep.subr.mxu0 0.0
    %5896 = vmatpush1.msra.mxu0 %v514
    %5897 = vmatprep.subr.mxu0 0.0
    %5898 = vmatpush1.msra.mxu0 %v515
    %5899 = vmatprep.subr.mxu0 0.0
    %5900 = vmatpush1.msra.mxu0 0.0
    %5901 = vmatprep.subr.mxu0 0.0
    %5902 = vmatpush1.msra.mxu0 0.0
    %5903 = vmatprep.subr.mxu0 0.0
    %5904 = vmatpush1.msra.mxu0 0.0
    %5905 = vmatprep.subr.mxu0 0.0
    %5906 = vmatpush1.msra.mxu0 0.0
    %5907 = vmatprep.subr.mxu0 0.0
    %5908 = vmatpush1.msra.mxu0 0.0
    %5909 = vmatprep.subr.mxu0 0.0
    %5910 = vmatpush1.msra.mxu0 0.0
    %5911 = vmatprep.subr.mxu0 0.0
    %5912 = vmatpush1.msra.mxu0 0.0
    %5913 = vmatprep.subr.mxu0 0.0
    %5914 = vmatpush1.msra.mxu0 0.0
    %5915 = vmatprep.subr.mxu0 0.0
    %5916 = vmatpush1.msra.mxu0 0.0
    %5917 = vmatprep.subr.mxu0 0.0
    %5918 = vmatpush1.msra.mxu0 0.0
    %5919 = vmatprep.subr.mxu0 0.0
    %5920 = vmatpush1.msra.mxu0 0.0
    %5921 = vmatprep.subr.mxu0 0.0
    %5922 = vmatpush1.msra.mxu0 0.0
    %5923 = vmatprep.subr.mxu0 0.0
    %5924 = vmatpush1.msra.mxu0 0.0
    %5925 = vmatprep.subr.mxu0 0.0
    %5926 = vmatpush1.msra.mxu0 0.0
    %5927 = vmatprep.subr.mxu0 0.0
    %5928 = vmatpush1.msra.mxu0 0.0
    %5929 = vmatprep.subr.mxu0 0.0
    %5930 = vmatpush1.msra.mxu0 0.0
    %5931 = vmatprep.subr.mxu0 0.0
    %5932 = vmatpush1.msra.mxu0 0.0
    %5933 = vmatprep.subr.mxu0 0.0
    %5934 = vmatpush1.msra.mxu0 0.0
    %5935 = vmatprep.subr.mxu0 0.0
    %5936 = vmatpush1.msra.mxu0 0.0
    %5937 = vmatprep.subr.mxu0 0.0
    %5938 = vmatpush1.msra.mxu0 0.0
    %5939 = vmatprep.subr.mxu0 0.0
    %5940 = vmatpush1.msra.mxu0 0.0
    %5941 = vmatprep.subr.mxu0 0.0
    %5942 = vmatpush1.msra.mxu0 0.0
    %5943 = vmatprep.subr.mxu0 0.0
    %5944 = vmatpush1.msra.mxu0 0.0
    %5945 = vmatprep.subr.mxu0 0.0
    %5946 = vmatpush1.msra.mxu0 0.0
    %5947 = vmatprep.subr.mxu0 0.0
    %5948 = vmatpush1.msra.mxu0 0.0
    %5949 = vmatprep.subr.mxu0 0.0
    %5950 = vmatpush1.msra.mxu0 0.0
    %5951 = vmatprep.subr.mxu0 0.0
    %5952 = vmatpush1.msra.mxu0 0.0
    %5953 = vmatprep.subr.mxu0 0.0
    %5954 = vmatpush1.msra.mxu0 0.0
    %5955 = vmatprep.subr.mxu0 0.0
    %5956 = vmatpush1.msra.mxu0 0.0
    %5957 = vmatprep.subr.mxu0 0.0
    %5958 = vmatpush1.msra.mxu0 0.0
    %5959 = vmatprep.mubr.f32.mxu0 0.0
    %5960 = vmatmul.mubr.f32.gmra.mrb[0].mxu0 %v5669
    %v5961 = vpop.f32.mrb[0].mxu0
    %v5962 = vadd.f32 %v152, %v5961
    %v5963 = vpop.f32.mrb[0].mxu0
    %5964 = vdwg.mxu0
    %5965 = vmatprep.subr.mxu0 0.0
    %5966 = vmatpush1.msra.mxu0 %v587
    %5967 = vmatprep.subr.mxu0 0.0
    %5968 = vmatpush1.msra.mxu0 %v588
    %5969 = vmatprep.subr.mxu0 0.0
    %5970 = vmatpush1.msra.mxu0 %v589
    %5971 = vmatprep.subr.mxu0 0.0
    %5972 = vmatpush1.msra.mxu0 %v590
    %5973 = vmatprep.subr.mxu0 0.0
    %5974 = vmatpush1.msra.mxu0 0.0
    %5975 = vmatprep.subr.mxu0 0.0
    %5976 = vmatpush1.msra.mxu0 0.0
    %5977 = vmatprep.subr.mxu0 0.0
    %5978 = vmatpush1.msra.mxu0 0.0
    %5979 = vmatprep.subr.mxu0 0.0
    %5980 = vmatpush1.msra.mxu0 0.0
    %5981 = vmatprep.subr.mxu0 0.0
    %5982 = vmatpush1.msra.mxu0 0.0
    %5983 = vmatprep.subr.mxu0 0.0
    %5984 = vmatpush1.msra.mxu0 0.0
    %5985 = vmatprep.subr.mxu0 0.0
    %5986 = vmatpush1.msra.mxu0 0.0
    %5987 = vmatprep.subr.mxu0 0.0
    %5988 = vmatpush1.msra.mxu0 0.0
    %5989 = vmatprep.subr.mxu0 0.0
    %5990 = vmatpush1.msra.mxu0 0.0
    %5991 = vmatprep.subr.mxu0 0.0
    %5992 = vmatpush1.msra.mxu0 0.0
    %5993 = vmatprep.subr.mxu0 0.0
    %5994 = vmatpush1.msra.mxu0 0.0
    %5995 = vmatprep.subr.mxu0 0.0
    %5996 = vmatpush1.msra.mxu0 0.0
    %5997 = vmatprep.subr.mxu0 0.0
    %5998 = vmatpush1.msra.mxu0 0.0
    %5999 = vmatprep.subr.mxu0 0.0
    %6000 = vmatpush1.msra.mxu0 0.0
    %6001 = vmatprep.subr.mxu0 0.0
    %6002 = vmatpush1.msra.mxu0 0.0
    %6003 = vmatprep.subr.mxu0 0.0
    %6004 = vmatpush1.msra.mxu0 0.0
    %6005 = vmatprep.subr.mxu0 0.0
    %6006 = vmatpush1.msra.mxu0 0.0
    %6007 = vmatprep.subr.mxu0 0.0
    %6008 = vmatpush1.msra.mxu0 0.0
    %6009 = vmatprep.subr.mxu0 0.0
    %6010 = vmatpush1.msra.mxu0 0.0
    %6011 = vmatprep.subr.mxu0 0.0
    %6012 = vmatpush1.msra.mxu0 0.0
    %6013 = vmatprep.subr.mxu0 0.0
    %6014 = vmatpush1.msra.mxu0 0.0
    %6015 = vmatprep.subr.mxu0 0.0
    %6016 = vmatpush1.msra.mxu0 0.0
    %6017 = vmatprep.subr.mxu0 0.0
    %6018 = vmatpush1.msra.mxu0 0.0
    %6019 = vmatprep.subr.mxu0 0.0
    %6020 = vmatpush1.msra.mxu0 0.0
    %6021 = vmatprep.subr.mxu0 0.0
    %6022 = vmatpush1.msra.mxu0 0.0
    %6023 = vmatprep.subr.mxu0 0.0
    %6024 = vmatpush1.msra.mxu0 0.0
    %6025 = vmatprep.subr.mxu0 0.0
    %6026 = vmatpush1.msra.mxu0 0.0
    %6027 = vmatprep.subr.mxu0 0.0
    %6028 = vmatpush1.msra.mxu0 0.0
    %6029 = vmatprep.mubr.f32.mxu0 0.0
    %6030 = vmatmul.mubr.f32.gmra.mrb[0].mxu0 %v5224
    %v6031 = vpop.f32.mrb[0].mxu0
    %v6032 = vadd.f32 %v160, %v6031
    %v6033 = vpop.f32.mrb[0].mxu0
    %6034 = vdwg.mxu0
    %v6035 = vmul.f32 %v5747, %v6032
    %v6036 = vadd.f32 %v5962, %v6035
    %v6037 = vtanh.pop %v6036
    %v6038 = vsub.f32 %v5149, %v6037
    %v6039 = vmul.f32 %v5894, %v6038
    %v6040 = vadd.f32 %v6037, %v6039
    %v6042 = vsel %vm203, %v5595, 0
    %6044 = vmatprep.subr.mxu0 0.0
    %6045 = vmatpush1.msra.mxu0 %v671
    %6046 = vmatprep.subr.mxu0 0.0
    %6047 = vmatpush1.msra.mxu0 %v672
    %6048 = vmatprep.subr.mxu0 0.0
    %6049 = vmatpush1.msra.mxu0 %v673
    %6050 = vmatprep.subr.mxu0 0.0
    %6051 = vmatpush1.msra.mxu0 %v674
    %6052 = vmatprep.subr.mxu0 0.0
    %6053 = vmatpush1.msra.mxu0 0.0
    %6054 = vmatprep.subr.mxu0 0.0
    %6055 = vmatpush1.msra.mxu0 0.0
    %6056 = vmatprep.subr.mxu0 0.0
    %6057 = vmatpush1.msra.mxu0 0.0
    %6058 = vmatprep.subr.mxu0 0.0
    %6059 = vmatpush1.msra.mxu0 0.0
    %6060 = vmatprep.subr.mxu0 0.0
    %6061 = vmatpush1.msra.mxu0 0.0
    %6062 = vmatprep.subr.mxu0 0.0
    %6063 = vmatpush1.msra.mxu0 0.0
    %6064 = vmatprep.subr.mxu0 0.0
    %6065 = vmatpush1.msra.mxu0 0.0
    %6066 = vmatprep.subr.mxu0 0.0
    %6067 = vmatpush1.msra.mxu0 0.0
    %6068 = vmatprep.subr.mxu0 0.0
    %6069 = vmatpush1.msra.mxu0 0.0
    %6070 = vmatprep.subr.mxu0 0.0
    %6071 = vmatpush1.msra.mxu0 0.0
    %6072 = vmatprep.subr.mxu0 0.0
    %6073 = vmatpush1.msra.mxu0 0.0
    %6074 = vmatprep.subr.mxu0 0.0
    %6075 = vmatpush1.msra.mxu0 0.0
    %6076 = vmatprep.subr.mxu0 0.0
    %6077 = vmatpush1.msra.mxu0 0.0
    %6078 = vmatprep.subr.mxu0 0.0
    %6079 = vmatpush1.msra.mxu0 0.0
    %6080 = vmatprep.subr.mxu0 0.0
    %6081 = vmatpush1.msra.mxu0 0.0
    %6082 = vmatprep.subr.mxu0 0.0
    %6083 = vmatpush1.msra.mxu0 0.0
    %6084 = vmatprep.subr.mxu0 0.0
    %6085 = vmatpush1.msra.mxu0 0.0
    %6086 = vmatprep.subr.mxu0 0.0
    %6087 = vmatpush1.msra.mxu0 0.0
    %6088 = vmatprep.subr.mxu0 0.0
    %6089 = vmatpush1.msra.mxu0 0.0
    %6090 = vmatprep.subr.mxu0 0.0
    %6091 = vmatpush1.msra.mxu0 0.0
    %6092 = vmatprep.subr.mxu0 0.0
    %6093 = vmatpush1.msra.mxu0 0.0
    %6094 = vmatprep.subr.mxu0 0.0
    %6095 = vmatpush1.msra.mxu0 0.0
    %6096 = vmatprep.subr.mxu0 0.0
    %6097 = vmatpush1.msra.mxu0 0.0
    %6098 = vmatprep.subr.mxu0 0.0
    %6099 = vmatpush1.msra.mxu0 0.0
    %6100 = vmatprep.subr.mxu0 0.0
    %6101 = vmatpush1.msra.mxu0 0.0
    %6102 = vmatprep.subr.mxu0 0.0
    %6103 = vmatpush1.msra.mxu0 0.0
    %6104 = vmatprep.subr.mxu0 0.0
    %6105 = vmatpush1.msra.mxu0 0.0
    %6106 = vmatprep.subr.mxu0 0.0
    %6107 = vmatpush1.msra.mxu0 0.0
    %6108 = vmatprep.mubr.f32.mxu0 0.0
    %6109 = vmatmul.mubr.f32.gmra.mrb[0].mxu0 %v6042
    %v6110 = vpop.f32.mrb[0].mxu0
    %v6111 = vadd.f32 0.0, %v6110
    %v6112 = vpop.f32.mrb[0].mxu0
    %6113 = vdwg.mxu0
    %v6115 = vsel %vm203, %v6040, 0
    %6117 = vmatprep.subr.mxu0 0.0
    %6118 = vmatpush1.msra.mxu0 %v667
    %6119 = vmatprep.subr.mxu0 0.0
    %6120 = vmatpush1.msra.mxu0 %v668
    %6121 = vmatprep.subr.mxu0 0.0
    %6122 = vmatpush1.msra.mxu0 %v669
    %6123 = vmatprep.subr.mxu0 0.0
    %6124 = vmatpush1.msra.mxu0 %v670
    %6125 = vmatprep.subr.mxu0 0.0
    %6126 = vmatpush1.msra.mxu0 0.0
    %6127 = vmatprep.subr.mxu0 0.0
    %6128 = vmatpush1.msra.mxu0 0.0
    %6129 = vmatprep.subr.mxu0 0.0
    %6130 = vmatpush1.msra.mxu0 0.0
    %6131 = vmatprep.subr.mxu0 0.0
    %6132 = vmatpush1.msra.mxu0 0.0
    %6133 = vmatprep.subr.mxu0 0.0
    %6134 = vmatpush1.msra.mxu0 0.0
    %6135 = vmatprep.subr.mxu0 0.0
    %6136 = vmatpush1.msra.mxu0 0.0
    %6137 = vmatprep.subr.mxu0 0.0
    %6138 = vmatpush1.msra.mxu0 0.0
    %6139 = vmatprep.subr.mxu0 0.0
    %6140 = vmatpush1.msra.mxu0 0.0
    %6141 = vmatprep.subr.mxu0 0.0
    %6142 = vmatpush1.msra.mxu0 0.0
    %6143 = vmatprep.subr.mxu0 0.0
    %6144 = vmatpush1.msra.mxu0 0.0
    %6145 = vmatprep.subr.mxu0 0.0
    %6146 = vmatpush1.msra.mxu0 0.0
    %6147 = vmatprep.subr.mxu0 0.0
    %6148 = vmatpush1.msra.mxu0 0.0
    %6149 = vmatprep.subr.mxu0 0.0
    %6150 = vmatpush1.msra.mxu0 0.0
    %6151 = vmatprep.subr.mxu0 0.0
    %6152 = vmatpush1.msra.mxu0 0.0
    %6153 = vmatprep.subr.mxu0 0.0
    %6154 = vmatpush1.msra.mxu0 0.0
    %6155 = vmatprep.subr.mxu0 0.0
    %6156 = vmatpush1.msra.mxu0 0.0
    %6157 = vmatprep.subr.mxu0 0.0
    %6158 = vmatpush1.msra.mxu0 0.0
    %6159 = vmatprep.subr.mxu0 0.0
    %6160 = vmatpush1.msra.mxu0 0.0
    %6161 = vmatprep.subr.mxu0 0.0
    %6162 = vmatpush1.msra.mxu0 0.0
    %6163 = vmatprep.subr.mxu0 0.0
    %6164 = vmatpush1.msra.mxu0 0.0
    %6165 = vmatprep.subr.mxu0 0.0
    %6166 = vmatpush1.msra.mxu0 0.0
    %6167 = vmatprep.subr.mxu0 0.0
    %6168 = vmatpush1.msra.mxu0 0.0
    %6169 = vmatprep.subr.mxu0 0.0
    %6170 = vmatpush1.msra.mxu0 0.0
    %6171 = vmatprep.subr.mxu0 0.0
    %6172 = vmatpush1.msra.mxu0 0.0
    %6173 = vmatprep.subr.mxu0 0.0
    %6174 = vmatpush1.msra.mxu0 0.0
    %6175 = vmatprep.subr.mxu0 0.0
    %6176 = vmatpush1.msra.mxu0 0.0
    %6177 = vmatprep.subr.mxu0 0.0
    %6178 = vmatpush1.msra.mxu0 0.0
    %6179 = vmatprep.subr.mxu0 0.0
    %6180 = vmatpush1.msra.mxu0 0.0
    %6181 = vmatprep.mubr.f32.mxu0 0.0
    %6182 = vmatmul.mubr.f32.gmra.mrb[0].mxu0 %v6115
    %v6183 = vpop.f32.mrb[0].mxu0
    %v6184 = vadd.f32 %v6111, %v6183
    %v6185 = vpop.f32.mrb[0].mxu0
    %6186 = vdwg.mxu0
    %v6187 = vadd.f32 %v6184, %v167
    %v6188 = vxor.u32 %v6187, 2147483648
    %v6189 = vmul.f32 %v6188, 1.442695
    %v6190 = vpow.pop %v6189
    %v6191 = vadd.f32 %v6190, 1.0
    %v6192 = vrcp.pop %v6191
    %v6193 = vmul.f32 1.0, %v6192
    %6194 = vmatprep.subr.mxu0 0.0
    %6195 = vmatpush1.msra.mxu0 %v834
    %6196 = vmatprep.subr.mxu0 0.0
    %6197 = vmatpush1.msra.mxu0 %v835
    %6198 = vmatprep.subr.mxu0 0.0
    %6199 = vmatpush1.msra.mxu0 %v836
    %6200 = vmatprep.subr.mxu0 0.0
    %6201 = vmatpush1.msra.mxu0 %v837
    %6202 = vmatprep.subr.mxu0 0.0
    %6203 = vmatpush1.msra.mxu0 0.0
    %6204 = vmatprep.subr.mxu0 0.0
    %6205 = vmatpush1.msra.mxu0 0.0
    %6206 = vmatprep.subr.mxu0 0.0
    %6207 = vmatpush1.msra.mxu0 0.0
    %6208 = vmatprep.subr.mxu0 0.0
    %6209 = vmatpush1.msra.mxu0 0.0
    %6210 = vmatprep.subr.mxu0 0.0
    %6211 = vmatpush1.msra.mxu0 0.0
    %6212 = vmatprep.subr.mxu0 0.0
    %6213 = vmatpush1.msra.mxu0 0.0
    %6214 = vmatprep.subr.mxu0 0.0
    %6215 = vmatpush1.msra.mxu0 0.0
    %6216 = vmatprep.subr.mxu0 0.0
    %6217 = vmatpush1.msra.mxu0 0.0
    %6218 = vmatprep.subr.mxu0 0.0
    %6219 = vmatpush1.msra.mxu0 0.0
    %6220 = vmatprep.subr.mxu0 0.0
    %6221 = vmatpush1.msra.mxu0 0.0
    %6222 = vmatprep.subr.mxu0 0.0
    %6223 = vmatpush1.msra.mxu0 0.0
    %6224 = vmatprep.subr.mxu0 0.0
    %6225 = vmatpush1.msra.mxu0 0.0
    %6226 = vmatprep.subr.mxu0 0.0
    %6227 = vmatpush1.msra.mxu0 0.0
    %6228 = vmatprep.subr.mxu0 0.0
    %6229 = vmatpush1.msra.mxu0 0.0
    %6230 = vmatprep.subr.mxu0 0.0
    %6231 = vmatpush1.msra.mxu0 0.0
    %6232 = vmatprep.subr.mxu0 0.0
    %6233 = vmatpush1.msra.mxu0 0.0
    %6234 = vmatprep.subr.mxu0 0.0
    %6235 = vmatpush1.msra.mxu0 0.0
    %6236 = vmatprep.subr.mxu0 0.0
    %6237 = vmatpush1.msra.mxu0 0.0
    %6238 = vmatprep.subr.mxu0 0.0
    %6239 = vmatpush1.msra.mxu0 0.0
    %6240 = vmatprep.subr.mxu0 0.0
    %6241 = vmatpush1.msra.mxu0 0.0
    %6242 = vmatprep.subr.mxu0 0.0
    %6243 = vmatpush1.msra.mxu0 0.0
    %6244 = vmatprep.subr.mxu0 0.0
    %6245 = vmatpush1.msra.mxu0 0.0
    %6246 = vmatprep.subr.mxu0 0.0
    %6247 = vmatpush1.msra.mxu0 0.0
    %6248 = vmatprep.subr.mxu0 0.0
    %6249 = vmatpush1.msra.mxu0 0.0
    %6250 = vmatprep.subr.mxu0 0.0
    %6251 = vmatpush1.msra.mxu0 0.0
    %6252 = vmatprep.subr.mxu0 0.0
    %6253 = vmatpush1.msra.mxu0 0.0
    %6254 = vmatprep.subr.mxu0 0.0
    %6255 = vmatpush1.msra.mxu0 0.0
    %6256 = vmatprep.subr.mxu0 0.0
    %6257 = vmatpush1.msra.mxu0 0.0
    %6258 = vmatprep.mubr.f32.mxu0 0.0
    %6259 = vmatmul.mubr.f32.gmra.mrb[0].mxu0 %v6042
    %v6260 = vpop.f32.mrb[0].mxu0
    %v6261 = vadd.f32 0.0, %v6260
    %v6262 = vpop.f32.mrb[0].mxu0
    %6263 = vdwg.mxu0
    %6264 = vmatprep.subr.mxu0 0.0
    %6265 = vmatpush1.msra.mxu0 %v829
    %6266 = vmatprep.subr.mxu0 0.0
    %6267 = vmatpush1.msra.mxu0 %v830
    %6268 = vmatprep.subr.mxu0 0.0
    %6269 = vmatpush1.msra.mxu0 %v831
    %6270 = vmatprep.subr.mxu0 0.0
    %6271 = vmatpush1.msra.mxu0 %v832
    %6272 = vmatprep.subr.mxu0 0.0
    %6273 = vmatpush1.msra.mxu0 0.0
    %6274 = vmatprep.subr.mxu0 0.0
    %6275 = vmatpush1.msra.mxu0 0.0
    %6276 = vmatprep.subr.mxu0 0.0
    %6277 = vmatpush1.msra.mxu0 0.0
    %6278 = vmatprep.subr.mxu0 0.0
    %6279 = vmatpush1.msra.mxu0 0.0
    %6280 = vmatprep.subr.mxu0 0.0
    %6281 = vmatpush1.msra.mxu0 0.0
    %6282 = vmatprep.subr.mxu0 0.0
    %6283 = vmatpush1.msra.mxu0 0.0
    %6284 = vmatprep.subr.mxu0 0.0
    %6285 = vmatpush1.msra.mxu0 0.0
    %6286 = vmatprep.subr.mxu0 0.0
    %6287 = vmatpush1.msra.mxu0 0.0
    %6288 = vmatprep.subr.mxu0 0.0
    %6289 = vmatpush1.msra.mxu0 0.0
    %6290 = vmatprep.subr.mxu0 0.0
    %6291 = vmatpush1.msra.mxu0 0.0
    %6292 = vmatprep.subr.mxu0 0.0
    %6293 = vmatpush1.msra.mxu0 0.0
    %6294 = vmatprep.subr.mxu0 0.0
    %6295 = vmatpush1.msra.mxu0 0.0
    %6296 = vmatprep.subr.mxu0 0.0
    %6297 = vmatpush1.msra.mxu0 0.0
    %6298 = vmatprep.subr.mxu0 0.0
    %6299 = vmatpush1.msra.mxu0 0.0
    %6300 = vmatprep.subr.mxu0 0.0
    %6301 = vmatpush1.msra.mxu0 0.0
    %6302 = vmatprep.subr.mxu0 0.0
    %6303 = vmatpush1.msra.mxu0 0.0
    %6304 = vmatprep.subr.mxu0 0.0
    %6305 = vmatpush1.msra.mxu0 0.0
    %6306 = vmatprep.subr.mxu0 0.0
    %6307 = vmatpush1.msra.mxu0 0.0
    %6308 = vmatprep.subr.mxu0 0.0
    %6309 = vmatpush1.msra.mxu0 0.0
    %6310 = vmatprep.subr.mxu0 0.0
    %6311 = vmatpush1.msra.mxu0 0.0
    %6312 = vmatprep.subr.mxu0 0.0
    %6313 = vmatpush1.msra.mxu0 0.0
    %6314 = vmatprep.subr.mxu0 0.0
    %6315 = vmatpush1.msra.mxu0 0.0
    %6316 = vmatprep.subr.mxu0 0.0
    %6317 = vmatpush1.msra.mxu0 0.0
    %6318 = vmatprep.subr.mxu0 0.0
    %6319 = vmatpush1.msra.mxu0 0.0
    %6320 = vmatprep.subr.mxu0 0.0
    %6321 = vmatpush1.msra.mxu0 0.0
    %6322 = vmatprep.subr.mxu0 0.0
    %6323 = vmatpush1.msra.mxu0 0.0
    %6324 = vmatprep.subr.mxu0 0.0
    %6325 = vmatpush1.msra.mxu0 0.0
    %6326 = vmatprep.subr.mxu0 0.0
    %6327 = vmatpush1.msra.mxu0 0.0
    %6328 = vmatprep.mubr.f32.mxu0 0.0
    %6329 = vmatmul.mubr.f32.gmra.mrb[0].mxu0 %v6115
    %v6330 = vpop.f32.mrb[0].mxu0
    %v6331 = vadd.f32 %v6261, %v6330
    %v6332 = vpop.f32.mrb[0].mxu0
    %6333 = vdwg.mxu0
    %v6334 = vadd.f32 %v6331, %v175
    %v6335 = vxor.u32 %v6334, 2147483648
    %v6336 = vmul.f32 %v6335, 1.442695
    %v6337 = vpow.pop %v6336
    %v6338 = vadd.f32 %v6337, 1.0
    %v6339 = vrcp.pop %v6338
    %v6340 = vmul.f32 1.0, %v6339
    %6341 = vmatprep.subr.mxu0 0.0
    %6342 = vmatpush1.msra.mxu0 %v986
    %6343 = vmatprep.subr.mxu0 0.0
    %6344 = vmatpush1.msra.mxu0 %v987
    %6345 = vmatprep.subr.mxu0 0.0
    %6346 = vmatpush1.msra.mxu0 %v988
    %6347 = vmatprep.subr.mxu0 0.0
    %6348 = vmatpush1.msra.mxu0 %v989
    %6349 = vmatprep.subr.mxu0 0.0
    %6350 = vmatpush1.msra.mxu0 0.0
    %6351 = vmatprep.subr.mxu0 0.0
    %6352 = vmatpush1.msra.mxu0 0.0
    %6353 = vmatprep.subr.mxu0 0.0
    %6354 = vmatpush1.msra.mxu0 0.0
    %6355 = vmatprep.subr.mxu0 0.0
    %6356 = vmatpush1.msra.mxu0 0.0
    %6357 = vmatprep.subr.mxu0 0.0
    %6358 = vmatpush1.msra.mxu0 0.0
    %6359 = vmatprep.subr.mxu0 0.0
    %6360 = vmatpush1.msra.mxu0 0.0
    %6361 = vmatprep.subr.mxu0 0.0
    %6362 = vmatpush1.msra.mxu0 0.0
    %6363 = vmatprep.subr.mxu0 0.0
    %6364 = vmatpush1.msra.mxu0 0.0
    %6365 = vmatprep.subr.mxu0 0.0
    %6366 = vmatpush1.msra.mxu0 0.0
    %6367 = vmatprep.subr.mxu0 0.0
    %6368 = vmatpush1.msra.mxu0 0.0
    %6369 = vmatprep.subr.mxu0 0.0
    %6370 = vmatpush1.msra.mxu0 0.0
    %6371 = vmatprep.subr.mxu0 0.0
    %6372 = vmatpush1.msra.mxu0 0.0
    %6373 = vmatprep.subr.mxu0 0.0
    %6374 = vmatpush1.msra.mxu0 0.0
    %6375 = vmatprep.subr.mxu0 0.0
    %6376 = vmatpush1.msra.mxu0 0.0
    %6377 = vmatprep.subr.mxu0 0.0
    %6378 = vmatpush1.msra.mxu0 0.0
    %6379 = vmatprep.subr.mxu0 0.0
    %6380 = vmatpush1.msra.mxu0 0.0
    %6381 = vmatprep.subr.mxu0 0.0
    %6382 = vmatpush1.msra.mxu0 0.0
    %6383 = vmatprep.subr.mxu0 0.0
    %6384 = vmatpush1.msra.mxu0 0.0
    %6385 = vmatprep.subr.mxu0 0.0
    %6386 = vmatpush1.msra.mxu0 0.0
    %6387 = vmatprep.subr.mxu0 0.0
    %6388 = vmatpush1.msra.mxu0 0.0
    %6389 = vmatprep.subr.mxu0 0.0
    %6390 = vmatpush1.msra.mxu0 0.0
    %6391 = vmatprep.subr.mxu0 0.0
    %6392 = vmatpush1.msra.mxu0 0.0
    %6393 = vmatprep.subr.mxu0 0.0
    %6394 = vmatpush1.msra.mxu0 0.0
    %6395 = vmatprep.subr.mxu0 0.0
    %6396 = vmatpush1.msra.mxu0 0.0
    %6397 = vmatprep.subr.mxu0 0.0
    %6398 = vmatpush1.msra.mxu0 0.0
    %6399 = vmatprep.subr.mxu0 0.0
    %6400 = vmatpush1.msra.mxu0 0.0
    %6401 = vmatprep.subr.mxu0 0.0
    %6402 = vmatpush1.msra.mxu0 0.0
    %6403 = vmatprep.subr.mxu0 0.0
    %6404 = vmatpush1.msra.mxu0 0.0
    %6405 = vmatprep.mubr.f32.mxu0 0.0
    %6406 = vmatmul.mubr.f32.gmra.mrb[0].mxu0 %v6115
    %v6407 = vpop.f32.mrb[0].mxu0
    %v6408 = vadd.f32 %v183, %v6407
    %v6409 = vpop.f32.mrb[0].mxu0
    %6410 = vdwg.mxu0
    %6411 = vmatprep.subr.mxu0 0.0
    %6412 = vmatpush1.msra.mxu0 %v1061
    %6413 = vmatprep.subr.mxu0 0.0
    %6414 = vmatpush1.msra.mxu0 %v1062
    %6415 = vmatprep.subr.mxu0 0.0
    %6416 = vmatpush1.msra.mxu0 %v1063
    %6417 = vmatprep.subr.mxu0 0.0
    %6418 = vmatpush1.msra.mxu0 %v1064
    %6419 = vmatprep.subr.mxu0 0.0
    %6420 = vmatpush1.msra.mxu0 0.0
    %6421 = vmatprep.subr.mxu0 0.0
    %6422 = vmatpush1.msra.mxu0 0.0
    %6423 = vmatprep.subr.mxu0 0.0
    %6424 = vmatpush1.msra.mxu0 0.0
    %6425 = vmatprep.subr.mxu0 0.0
    %6426 = vmatpush1.msra.mxu0 0.0
    %6427 = vmatprep.subr.mxu0 0.0
    %6428 = vmatpush1.msra.mxu0 0.0
    %6429 = vmatprep.subr.mxu0 0.0
    %6430 = vmatpush1.msra.mxu0 0.0
    %6431 = vmatprep.subr.mxu0 0.0
    %6432 = vmatpush1.msra.mxu0 0.0
    %6433 = vmatprep.subr.mxu0 0.0
    %6434 = vmatpush1.msra.mxu0 0.0
    %6435 = vmatprep.subr.mxu0 0.0
    %6436 = vmatpush1.msra.mxu0 0.0
    %6437 = vmatprep.subr.mxu0 0.0
    %6438 = vmatpush1.msra.mxu0 0.0
    %6439 = vmatprep.subr.mxu0 0.0
    %6440 = vmatpush1.msra.mxu0 0.0
    %6441 = vmatprep.subr.mxu0 0.0
    %6442 = vmatpush1.msra.mxu0 0.0
    %6443 = vmatprep.subr.mxu0 0.0
    %6444 = vmatpush1.msra.mxu0 0.0
    %6445 = vmatprep.subr.mxu0 0.0
    %6446 = vmatpush1.msra.mxu0 0.0
    %6447 = vmatprep.subr.mxu0 0.0
    %6448 = vmatpush1.msra.mxu0 0.0
    %6449 = vmatprep.subr.mxu0 0.0
    %6450 = vmatpush1.msra.mxu0 0.0
    %6451 = vmatprep.subr.mxu0 0.0
    %6452 = vmatpush1.msra.mxu0 0.0
    %6453 = vmatprep.subr.mxu0 0.0
    %6454 = vmatpush1.msra.mxu0 0.0
    %6455 = vmatprep.subr.mxu0 0.0
    %6456 = vmatpush1.msra.mxu0 0.0
    %6457 = vmatprep.subr.mxu0 0.0
    %6458 = vmatpush1.msra.mxu0 0.0
    %6459 = vmatprep.subr.mxu0 0.0
    %6460 = vmatpush1.msra.mxu0 0.0
    %6461 = vmatprep.subr.mxu0 0.0
    %6462 = vmatpush1.msra.mxu0 0.0
    %6463 = vmatprep.subr.mxu0 0.0
    %6464 = vmatpush1.msra.mxu0 0.0
    %6465 = vmatprep.subr.mxu0 0.0
    %6466 = vmatpush1.msra.mxu0 0.0
    %6467 = vmatprep.subr.mxu0 0.0
    %6468 = vmatpush1.msra.mxu0 0.0
    %6469 = vmatprep.subr.mxu0 0.0
    %6470 = vmatpush1.msra.mxu0 0.0
    %6471 = vmatprep.subr.mxu0 0.0
    %6472 = vmatpush1.msra.mxu0 0.0
    %6473 = vmatprep.subr.mxu0 0.0
    %6474 = vmatpush1.msra.mxu0 0.0
    %6475 = vmatprep.mubr.f32.mxu0 0.0
    %6476 = vmatmul.mubr.f32.gmra.mrb[0].mxu0 %v6042
    %v6477 = vpop.f32.mrb[0].mxu0
    %v6478 = vadd.f32 %v191, %v6477
    %v6479 = vpop.f32.mrb[0].mxu0
    %6480 = vdwg.mxu0
    %v6481 = vmul.f32 %v6193, %v6478
    %v6482 = vadd.f32 %v6408, %v6481
    %v6483 = vtanh.pop %v6482
    %v6484 = vsub.f32 %v5595, %v6483
    %v6485 = vmul.f32 %v6340, %v6484
    %v6486 = vadd.f32 %v6483, %v6485
    %v6487 = vld [vmem:[#allocation13] sm:$0xff]
    %v6488 = vld [vmem:[#allocation13 + $0x8] sm:$0xff]
    %v6489 = vld [vmem:[#allocation13 + $0x10] sm:$0xff]
    %v6490 = vld [vmem:[#allocation13 + $0x18] sm:$0xff]
    %v6491 = vld [vmem:[%s9] sm:$0x1]
    %v6493 = vlaneseq
    %v6494 = vshrl.u32 %v6493, 7
    %v6495 = vsub.s32 0, %v6494
    %v6496 = vrot.slane %v6491, %v6495
    %v6499 = vsel %vm203, %v6486, 0
    %6501 = vmatprep.subr.mxu0 0.0
    %6502 = vmatpush1.msra.mxu0 %v6487
    %6503 = vmatprep.subr.mxu0 0.0
    %6504 = vmatpush1.msra.mxu0 %v6488
    %6505 = vmatprep.subr.mxu0 0.0
    %6506 = vmatpush1.msra.mxu0 %v6489
    %6507 = vmatprep.subr.mxu0 0.0
    %6508 = vmatpush1.msra.mxu0 %v6490
    %6509 = vmatprep.subr.mxu0 0.0
    %6510 = vmatpush1.msra.mxu0 0.0
    %6511 = vmatprep.subr.mxu0 0.0
    %6512 = vmatpush1.msra.mxu0 0.0
    %6513 = vmatprep.subr.mxu0 0.0
    %6514 = vmatpush1.msra.mxu0 0.0
    %6515 = vmatprep.subr.mxu0 0.0
    %6516 = vmatpush1.msra.mxu0 0.0
    %6517 = vmatprep.subr.mxu0 0.0
    %6518 = vmatpush1.msra.mxu0 0.0
    %6519 = vmatprep.subr.mxu0 0.0
    %6520 = vmatpush1.msra.mxu0 0.0
    %6521 = vmatprep.subr.mxu0 0.0
    %6522 = vmatpush1.msra.mxu0 0.0
    %6523 = vmatprep.subr.mxu0 0.0
    %6524 = vmatpush1.msra.mxu0 0.0
    %6525 = vmatprep.subr.mxu0 0.0
    %6526 = vmatpush1.msra.mxu0 0.0
    %6527 = vmatprep.subr.mxu0 0.0
    %6528 = vmatpush1.msra.mxu0 0.0
    %6529 = vmatprep.subr.mxu0 0.0
    %6530 = vmatpush1.msra.mxu0 0.0
    %6531 = vmatprep.subr.mxu0 0.0
    %6532 = vmatpush1.msra.mxu0 0.0
    %6533 = vmatprep.subr.mxu0 0.0
    %6534 = vmatpush1.msra.mxu0 0.0
    %6535 = vmatprep.subr.mxu0 0.0
    %6536 = vmatpush1.msra.mxu0 0.0
    %6537 = vmatprep.subr.mxu0 0.0
    %6538 = vmatpush1.msra.mxu0 0.0
    %6539 = vmatprep.subr.mxu0 0.0
    %6540 = vmatpush1.msra.mxu0 0.0
    %6541 = vmatprep.subr.mxu0 0.0
    %6542 = vmatpush1.msra.mxu0 0.0
    %6543 = vmatprep.subr.mxu0 0.0
    %6544 = vmatpush1.msra.mxu0 0.0
    %6545 = vmatprep.subr.mxu0 0.0
    %6546 = vmatpush1.msra.mxu0 0.0
    %6547 = vmatprep.subr.mxu0 0.0
    %6548 = vmatpush1.msra.mxu0 0.0
    %6549 = vmatprep.subr.mxu0 0.0
    %6550 = vmatpush1.msra.mxu0 0.0
    %6551 = vmatprep.subr.mxu0 0.0
    %6552 = vmatpush1.msra.mxu0 0.0
    %6553 = vmatprep.subr.mxu0 0.0
    %6554 = vmatpush1.msra.mxu0 0.0
    %6555 = vmatprep.subr.mxu0 0.0
    %6556 = vmatpush1.msra.mxu0 0.0
    %6557 = vmatprep.subr.mxu0 0.0
    %6558 = vmatpush1.msra.mxu0 0.0
    %6559 = vmatprep.subr.mxu0 0.0
    %6560 = vmatpush1.msra.mxu0 0.0
    %6561 = vmatprep.subr.mxu0 0.0
    %6562 = vmatpush1.msra.mxu0 0.0
    %6563 = vmatprep.subr.mxu0 0.0
    %6564 = vmatpush1.msra.mxu0 0.0
    %6565 = vmatprep.mubr.f32.mxu0 0.0
    %6566 = vmatmul.mubr.f32.gmra.mrb[0].mxu0 %v1587
    %v6567 = vpop.f32.mrb[0].mxu0
    %v6568 = vadd.f32 %v6496, %v6567
    %v6569 = vpop.f32.mrb[0].mxu0
    %6570 = vmatprep.mubr.f32.mxu0 0.0
    %6571 = vmatmul.mubr.f32.gmra.mrb[0].mxu0 %v2478
    %v6572 = vpop.f32.mrb[0].mxu0
    %v6573 = vadd.f32 %v6496, %v6572
    %v6574 = vpop.f32.mrb[0].mxu0
    %6575 = vmatprep.mubr.f32.mxu0 0.0
    %6576 = vmatmul.mubr.f32.gmra.mrb[0].mxu0 %v3369
    %v6577 = vpop.f32.mrb[0].mxu0
    %v6578 = vadd.f32 %v6496, %v6577
    %v6579 = vpop.f32.mrb[0].mxu0
    %6580 = vmatprep.mubr.f32.mxu0 0.0
    %6581 = vmatmul.mubr.f32.gmra.mrb[0].mxu0 %v4260
    %v6582 = vpop.f32.mrb[0].mxu0
    %v6583 = vadd.f32 %v6496, %v6582
    %v6584 = vpop.f32.mrb[0].mxu0
    %6585 = vmatprep.mubr.f32.mxu0 0.0
    %6586 = vmatmul.mubr.f32.gmra.mrb[0].mxu0 %v5151
    %v6587 = vpop.f32.mrb[0].mxu0
    %v6588 = vadd.f32 %v6496, %v6587
    %v6589 = vpop.f32.mrb[0].mxu0
    %6590 = vmatprep.mubr.f32.mxu0 0.0
    %6591 = vmatmul.mubr.f32.gmra.mrb[0].mxu0 %v6042
    %v6592 = vpop.f32.mrb[0].mxu0
    %v6593 = vadd.f32 %v6496, %v6592
    %v6594 = vpop.f32.mrb[0].mxu0
    %6595 = vmatprep.mubr.f32.mxu0 0.0
    %6596 = vmatmul.mubr.f32.gmra.mrb[0].mxu0 %v6499
    %v6597 = vpop.f32.mrb[0].mxu0
    %v6598 = vadd.f32 %v6496, %v6597
    %v6599 = vpop.f32.mrb[0].mxu0
    %6600 = vdwg.mxu0
    %6601 = vst [vmem:[#allocation14] sm:$0xff] %v6568
    %6602 = vst [vmem:[#allocation14 + $0x8] sm:$0xff] %v6573
    %6603 = vst [vmem:[#allocation14 + $0x10] sm:$0xff] %v6578
    %6604 = vst [vmem:[#allocation14 + $0x18] sm:$0xff] %v6583
    %6605 = vst [vmem:[#allocation14 + $0x20] sm:$0xff] %v6588
    %6606 = vst [vmem:[#allocation14 + $0x28] sm:$0xff] %v6593
    %6607 = vst [vmem:[#allocation14 + $0x30] sm:$0xff] %v6598
    // Predicated region
    $region70: #{tpu_custom_call.1} parent=1 // pred_check
      _
    $region71: #{tpu_custom_call.1} parent=1 // pred_check_branch
      %6609 = sbr.rel (0) target = $region73
    $region72: #{tpu_custom_call.1} parent=1 // pred_region
      %s6611 = ssub.s32 896, 896
      %6612 = vsyncadd [#allocation4], %s6611
      %s6613 = sshll.u32 [#allocation14], 4
      %s6614 = int_to_ptr.vmem [resolvable:$true] %s6613
      %6619 = dma.vmem_to_hbm [thread:$0]  %s6614, 896, %s10, [#allocation4], 128, 128, 8
    $region73: #{tpu_custom_call.1} parent=1 // pred_fallthru
      _
    // Predicated region
    $region74: #{tpu_custom_call.1} parent=1 // pred_check
      _
    $region75: #{tpu_custom_call.1} parent=1 // pred_check_branch
      %6621 = sbr.rel (0) target = $region77
    $region76: #{tpu_custom_call.1} parent=1 // pred_region
      %6622 = dma.done [#allocation4], 896
    $region77: #{tpu_custom_call.1} parent=1 // pred_fallthru
      _
    %6623 = vsyncpa [#allocation3], 1
    %6624 = vsyncpa [#allocation6], 1
    %6625 = vsyncpa [#allocation9], 1
    %6626 = vsyncpa [#allocation12], 1
    %6627 = vsyncpa [#allocation4], 1

</llo_original>
